<compile_context>
chip_gen: v7x
topology: tpu7x:2x2x1
jax: 0.10.0
libtpu: 0.0.40
codegen_flags: <defaults>
</compile_context>

<pallas_src>
import functools

import jax
import jax.numpy as jnp
from jax.experimental import pallas as pl
from jax.experimental.pallas import tpu as pltpu

EPS = 1e-5


def _bn_relu(y, gamma, beta):
    """Training-mode BatchNorm2d + ReLU on a (N, C, H*W) f32 conv output.

    Per-channel batch statistics over (N, H*W), biased variance, two-pass
    (centered) variance to avoid E[x^2]-E[x]^2 cancellation.
    gamma/beta are (1, C, 1).
    """
    n, c, p = y.shape
    count = n * p
    # Lane-axis reduction per (n, c) row, then the tiny cross-batch sum.
    mean = jnp.sum(jnp.sum(y, axis=2, keepdims=True), axis=0, keepdims=True) / count
    centered = y - mean
    var = jnp.sum(jnp.sum(centered * centered, axis=2, keepdims=True),
                  axis=0, keepdims=True) / count
    out = centered * jax.lax.rsqrt(var + EPS) * gamma + beta
    return jnp.maximum(out, 0.0)


def _down_block_kernel(x_ref, w1_ref, g1_ref, be1_ref, w2_ref, g2_ref, be2_ref,
                       o_ref, xp1_ref, pt1_ref, xp2_ref, pt2_ref, *, K, stride, pad):
    # x_ref:   (N, Cin, H, W)            NCHW input (used as-is, no transpose)
    # w1_ref:  (Cout, K*K*Cin)           conv1 taps, (kh, kw, ci) minor order
    # w2_ref:  (Cout, 9*Cout)            conv2 taps, (kh, kw, ci) minor order
    # g*/be*:  (1, Cout, 1)              BatchNorm weight / bias
    # o_ref:   (N, Cout, Ho2*Wo2)        NCHW output with spatial flattened (lane-dense)
    # xp*_ref: zero-padded activations;  pt*_ref: im2col patch buffers.
    N, Cin, H, W = x_ref.shape
    Cout = w1_ref.shape[0]
    _, KKC1, Ho1, Wo1 = pt1_ref.shape
    _, KKC2, Ho2, Wo2 = pt2_ref.shape
    P1 = Ho1 * Wo1
    P2 = Ho2 * Wo2

    # ---------------- stage 1: conv(K, stride, pad=1) + BN + ReLU ----------------
    # In-kernel zero padding (VMEM scratch, no jnp.pad / HBM round trip).
    xp1_ref[...] = jnp.zeros_like(xp1_ref)
    xp1_ref[:, :, pad:pad + H, pad:pad + W] = x_ref[...]
    xp1 = xp1_ref[...]

    # Build the im2col patch buffer once with slice-writes (no per-tap reshape).
    for kh in range(K):
        for kw in range(K):
            t = kh * K + kw
            pt1_ref[:, t * Cin:(t + 1) * Cin, :, :] = xp1[
                :, :, kh:kh + (Ho1 - 1) * stride + 1:stride,
                      kw:kw + (Wo1 - 1) * stride + 1:stride]

    # Single matmul per batch image, contraction K*K*Cin, spatial on the lane axis.
    patches1 = pt1_ref[...].reshape(N, KKC1, P1)
    w1b = jnp.broadcast_to(w1_ref[...], (N, Cout, KKC1))
    y1 = jnp.einsum('nck,nkp->ncp', w1b, patches1,
                    preferred_element_type=jnp.float32)
    # Conv bias omitted: exactly cancelled by the BN mean subtraction below.
    h1 = _bn_relu(y1, g1_ref[...], be1_ref[...])            # (N, Cout, P1), stays in VMEM

    # ---------------- stage 2: conv(3, 1, pad=1) + BN + ReLU ----------------------
    xp2_ref[...] = jnp.zeros_like(xp2_ref)
    xp2_ref[:, :, 1:1 + Ho1, 1:1 + Wo1] = h1.reshape(N, Cout, Ho1, Wo1)
    xp2 = xp2_ref[...]

    for kh in range(3):
        for kw in range(3):
            t = kh * 3 + kw
            pt2_ref[:, t * Cout:(t + 1) * Cout, :, :] = xp2[:, :, kh:kh + Ho2, kw:kw + Wo2]

    patches2 = pt2_ref[...].reshape(N, KKC2, P2)
    w2b = jnp.broadcast_to(w2_ref[...], (N, Cout, KKC2))
    y2 = jnp.einsum('nck,nkp->ncp', w2b, patches2,
                    preferred_element_type=jnp.float32)
    # Lane-dense store: last dim is Ho2*Wo2 (256 at demo size), already NCHW order.
    o_ref[...] = _bn_relu(y2, g2_ref[...], be2_ref[...])


def unet_down_block(x_nchw, params, *, kernel_size, stride):
    """Pallas implementation of UNetDownBlock.forward (NCHW in / NCHW out).

    Note: the PyTorch module never forwards self.padding to conv1 (conv() default
    padding=1 is used), and conv2 is always kernel=3, stride=1, padding=1.
    """
    N, Cin, H, W = x_nchw.shape
    K = kernel_size
    pad1 = 1
    Cout = params["w1"].shape[0]
    Ho1 = (H + 2 * pad1 - K) // stride + 1
    Wo1 = (W + 2 * pad1 - K) // stride + 1
    Ho2, Wo2 = Ho1, Wo1                      # conv2 (k=3, s=1, p=1) keeps spatial size

    # One-time weight pre-pack (tiny): OIHW -> (Cout, K*K*Cin), (kh, kw, ci) minor
    # order, matching the im2col rows built inside the kernel.
    w1t = jnp.transpose(params["w1"], (0, 2, 3, 1)).reshape(Cout, K * K * Cin)
    w2t = jnp.transpose(params["w2"], (0, 2, 3, 1)).reshape(Cout, 9 * Cout)

    kernel = functools.partial(_down_block_kernel, K=K, stride=stride, pad=pad1)
    out = pl.pallas_call(
        kernel,
        out_shape=jax.ShapeDtypeStruct((N, Cout, Ho2 * Wo2), jnp.float32),
        in_specs=[pl.BlockSpec(memory_space=pltpu.MemorySpace.VMEM)] * 7,
        out_specs=pl.BlockSpec(memory_space=pltpu.MemorySpace.VMEM),
        scratch_shapes=[
            pltpu.VMEM((N, Cin, H + 2 * pad1, W + 2 * pad1), jnp.float32),   # padded input
            pltpu.VMEM((N, K * K * Cin, Ho1, Wo1), jnp.float32),             # im2col stage 1
            pltpu.VMEM((N, Cout, Ho1 + 2, Wo1 + 2), jnp.float32),            # padded stage-1 act
            pltpu.VMEM((N, 9 * Cout, Ho2, Wo2), jnp.float32),                # im2col stage 2
        ],
        # Explicit (conservative) scoped-VMEM budget; safe on v5e/v6e/v7x.
        compiler_params=pltpu.CompilerParams(vmem_limit_bytes=32 * 1024 * 1024),
    )(x_nchw, w1t,
      params["g1"].reshape(1, Cout, 1), params["be1"].reshape(1, Cout, 1),
      w2t,
      params["g2"].reshape(1, Cout, 1), params["be2"].reshape(1, Cout, 1))
    # Free row-major reshape: output is already in NCHW element order.
    return out.reshape(N, Cout, Ho2, Wo2)


def _reference(x, params, *, stride):
    """Pure-JAX reference (correctness check only). Keeps the conv bias to confirm
    that dropping it inside the kernel is exactly cancelled by training-mode BN."""
    def stage(x, w, b, g, be, s):
        y = jax.lax.conv_general_dilated(
            x, w, window_strides=(s, s), padding=[(1, 1), (1, 1)],
            dimension_numbers=("NCHW", "OIHW", "NCHW"))
        y = y + b.reshape(1, -1, 1, 1)
        m = jnp.mean(y, axis=(0, 2, 3), keepdims=True)
        v = jnp.mean((y - m) ** 2, axis=(0, 2, 3), keepdims=True)
        y = (y - m) * jax.lax.rsqrt(v + EPS) * g.reshape(1, -1, 1, 1) + be.reshape(1, -1, 1, 1)
        return jnp.maximum(y, 0.0)

    x = stage(x, params["w1"], params["b1"], params["g1"], params["be1"], stride)
    x = stage(x, params["w2"], params["b2"], params["g2"], params["be2"], 1)
    return x


def make_params(key, in_channels, out_channels, kernel_size):
    ks = jax.random.split(key, 8)
    # Conv weights stored OIHW, like PyTorch.
    w1 = 0.1 * jax.random.normal(ks[0], (out_channels, in_channels, kernel_size, kernel_size), jnp.float32)
    b1 = 0.1 * jax.random.normal(ks[1], (out_channels,), jnp.float32)
    g1 = 1.0 + 0.1 * jax.random.normal(ks[2], (out_channels,), jnp.float32)
    be1 = 0.1 * jax.random.normal(ks[3], (out_channels,), jnp.float32)
    w2 = 0.1 * jax.random.normal(ks[4], (out_channels, out_channels, 3, 3), jnp.float32)
    b2 = 0.1 * jax.random.normal(ks[5], (out_channels,), jnp.float32)
    g2 = 1.0 + 0.1 * jax.random.normal(ks[6], (out_channels,), jnp.float32)
    be2 = 0.1 * jax.random.normal(ks[7], (out_channels,), jnp.float32)
    return dict(w1=w1, b1=b1, g1=g1, be1=be1, w2=w2, b2=b2, g2=g2, be2=be2)


if __name__ == "__main__":
    in_channels, out_channels = 4, 8
    kernel_size, stride, padding = 3, 1, 1   # `padding` is unused by the module's forward
    N, H, W = 2, 16, 16

    key = jax.random.PRNGKey(0)
    k_x, k_p = jax.random.split(key)
    x = jax.random.normal(k_x, (N, in_channels, H, W), jnp.float32)  # NCHW, like PyTorch
    params = make_params(k_p, in_channels, out_channels, kernel_size)

    out = unet_down_block(x, params, kernel_size=kernel_size, stride=stride)
    out = jax.block_until_ready(out)

    ref = jax.block_until_ready(_reference(x, params, stride=stride))
    assert out.shape == (N, out_channels, H, W), out.shape
    max_err = float(jnp.max(jnp.abs(out - ref)))
    assert jnp.allclose(out, ref, atol=1e-4, rtol=1e-4), max_err

    print("KERNEL_OK")
</pallas_src>

<mosaic_0001>
module attributes {stable_mosaic.version = 11 : i64} {
  func.func @_down_block_kernel(%arg0: memref<2x4x16x16xf32, #tpu.memory_space<vmem>>, %arg1: memref<8x36xf32, #tpu.memory_space<vmem>>, %arg2: memref<1x8x1xf32, #tpu.memory_space<vmem>>, %arg3: memref<1x8x1xf32, #tpu.memory_space<vmem>>, %arg4: memref<8x72xf32, #tpu.memory_space<vmem>>, %arg5: memref<1x8x1xf32, #tpu.memory_space<vmem>>, %arg6: memref<1x8x1xf32, #tpu.memory_space<vmem>>, %arg7: memref<2x8x256xf32, #tpu.memory_space<vmem>>, %arg8: memref<2x4x18x18xf32, #tpu.memory_space<vmem>>, %arg9: memref<2x36x16x16xf32, #tpu.memory_space<vmem>>, %arg10: memref<2x8x18x18xf32, #tpu.memory_space<vmem>>, %arg11: memref<2x72x16x16xf32, #tpu.memory_space<vmem>>) attributes {dimension_semantics = [], scalar_prefetch = 0 : i64, scratch_operands = 4 : i64, tpu.core_type = #tpu.core_type<tc>} {
    %cst = arith.constant 0.000000e+00 : f32
    %0 = vector.broadcast %cst : f32 to vector<2x4x18x18xf32>
    %c0 = arith.constant 0 : index
    %c0_0 = arith.constant 0 : index
    %c0_1 = arith.constant 0 : index
    %c0_2 = arith.constant 0 : index
    %1 = vector.load %arg8[%c0, %c0_0, %c0_1, %c0_2] : memref<2x4x18x18xf32, #tpu.memory_space<vmem>>, vector<2x4x18x18xf32>
    tpu.vector_store %arg8[%c0, %c0_0, %c0_1, %c0_2], %0 {strides = array<i32>} : memref<2x4x18x18xf32, #tpu.memory_space<vmem>>, vector<2x4x18x18xf32>,
    %c0_3 = arith.constant 0 : index
    %c0_4 = arith.constant 0 : index
    %c0_5 = arith.constant 0 : index
    %c0_6 = arith.constant 0 : index
    %2 = vector.load %arg0[%c0_3, %c0_4, %c0_5, %c0_6] : memref<2x4x16x16xf32, #tpu.memory_space<vmem>>, vector<2x4x16x16xf32>
    %c0_7 = arith.constant 0 : index
    %c0_8 = arith.constant 0 : index
    %c1 = arith.constant 1 : index
    %c1_9 = arith.constant 1 : index
    %3 = vector.load %arg8[%c0_7, %c0_8, %c1, %c1_9] : memref<2x4x18x18xf32, #tpu.memory_space<vmem>>, vector<2x4x16x16xf32>
    tpu.vector_store %arg8[%c0_7, %c0_8, %c1, %c1_9], %2 {strides = array<i32>} : memref<2x4x18x18xf32, #tpu.memory_space<vmem>>, vector<2x4x16x16xf32>,
    %c0_10 = arith.constant 0 : index
    %c0_11 = arith.constant 0 : index
    %c0_12 = arith.constant 0 : index
    %c0_13 = arith.constant 0 : index
    %4 = vector.load %arg8[%c0_10, %c0_11, %c0_12, %c0_13] : memref<2x4x18x18xf32, #tpu.memory_space<vmem>>, vector<2x4x18x18xf32>
    %5 = vector.extract_strided_slice %4 {offsets = [0, 0, 0, 0], sizes = [2, 4, 16, 16], strides = [1, 1, 1, 1]} : vector<2x4x18x18xf32> to vector<2x4x16x16xf32>
    %c0_14 = arith.constant 0 : index
    %c0_15 = arith.constant 0 : index
    %c0_16 = arith.constant 0 : index
    %c0_17 = arith.constant 0 : index
    %6 = vector.load %arg9[%c0_14, %c0_15, %c0_16, %c0_17] : memref<2x36x16x16xf32, #tpu.memory_space<vmem>>, vector<2x4x16x16xf32>
    tpu.vector_store %arg9[%c0_14, %c0_15, %c0_16, %c0_17], %5 {strides = array<i32>} : memref<2x36x16x16xf32, #tpu.memory_space<vmem>>, vector<2x4x16x16xf32>,
    %7 = vector.extract_strided_slice %4 {offsets = [0, 0, 0, 1], sizes = [2, 4, 16, 16], strides = [1, 1, 1, 1]} : vector<2x4x18x18xf32> to vector<2x4x16x16xf32>
    %c0_18 = arith.constant 0 : index
    %c4 = arith.constant 4 : index
    %c0_19 = arith.constant 0 : index
    %c0_20 = arith.constant 0 : index
    %8 = vector.load %arg9[%c0_18, %c4, %c0_19, %c0_20] : memref<2x36x16x16xf32, #tpu.memory_space<vmem>>, vector<2x4x16x16xf32>
    tpu.vector_store %arg9[%c0_18, %c4, %c0_19, %c0_20], %7 {strides = array<i32>} : memref<2x36x16x16xf32, #tpu.memory_space<vmem>>, vector<2x4x16x16xf32>,
    %9 = vector.extract_strided_slice %4 {offsets = [0, 0, 0, 2], sizes = [2, 4, 16, 16], strides = [1, 1, 1, 1]} : vector<2x4x18x18xf32> to vector<2x4x16x16xf32>
    %c0_21 = arith.constant 0 : index
    %c8 = arith.constant 8 : index
    %c0_22 = arith.constant 0 : index
    %c0_23 = arith.constant 0 : index
    %10 = vector.load %arg9[%c0_21, %c8, %c0_22, %c0_23] : memref<2x36x16x16xf32, #tpu.memory_space<vmem>>, vector<2x4x16x16xf32>
    tpu.vector_store %arg9[%c0_21, %c8, %c0_22, %c0_23], %9 {strides = array<i32>} : memref<2x36x16x16xf32, #tpu.memory_space<vmem>>, vector<2x4x16x16xf32>,
    %11 = vector.extract_strided_slice %4 {offsets = [0, 0, 1, 0], sizes = [2, 4, 16, 16], strides = [1, 1, 1, 1]} : vector<2x4x18x18xf32> to vector<2x4x16x16xf32>
    %c0_24 = arith.constant 0 : index
    %c12 = arith.constant 12 : index
    %c0_25 = arith.constant 0 : index
    %c0_26 = arith.constant 0 : index
    %12 = vector.load %arg9[%c0_24, %c12, %c0_25, %c0_26] : memref<2x36x16x16xf32, #tpu.memory_space<vmem>>, vector<2x4x16x16xf32>
    tpu.vector_store %arg9[%c0_24, %c12, %c0_25, %c0_26], %11 {strides = array<i32>} : memref<2x36x16x16xf32, #tpu.memory_space<vmem>>, vector<2x4x16x16xf32>,
    %13 = vector.extract_strided_slice %4 {offsets = [0, 0, 1, 1], sizes = [2, 4, 16, 16], strides = [1, 1, 1, 1]} : vector<2x4x18x18xf32> to vector<2x4x16x16xf32>
    %c0_27 = arith.constant 0 : index
    %c16 = arith.constant 16 : index
    %c0_28 = arith.constant 0 : index
    %c0_29 = arith.constant 0 : index
    %14 = vector.load %arg9[%c0_27, %c16, %c0_28, %c0_29] : memref<2x36x16x16xf32, #tpu.memory_space<vmem>>, vector<2x4x16x16xf32>
    tpu.vector_store %arg9[%c0_27, %c16, %c0_28, %c0_29], %13 {strides = array<i32>} : memref<2x36x16x16xf32, #tpu.memory_space<vmem>>, vector<2x4x16x16xf32>,
    %15 = vector.extract_strided_slice %4 {offsets = [0, 0, 1, 2], sizes = [2, 4, 16, 16], strides = [1, 1, 1, 1]} : vector<2x4x18x18xf32> to vector<2x4x16x16xf32>
    %c0_30 = arith.constant 0 : index
    %c20 = arith.constant 20 : index
    %c0_31 = arith.constant 0 : index
    %c0_32 = arith.constant 0 : index
    %16 = vector.load %arg9[%c0_30, %c20, %c0_31, %c0_32] : memref<2x36x16x16xf32, #tpu.memory_space<vmem>>, vector<2x4x16x16xf32>
    tpu.vector_store %arg9[%c0_30, %c20, %c0_31, %c0_32], %15 {strides = array<i32>} : memref<2x36x16x16xf32, #tpu.memory_space<vmem>>, vector<2x4x16x16xf32>,
    %17 = vector.extract_strided_slice %4 {offsets = [0, 0, 2, 0], sizes = [2, 4, 16, 16], strides = [1, 1, 1, 1]} : vector<2x4x18x18xf32> to vector<2x4x16x16xf32>
    %c0_33 = arith.constant 0 : index
    %c24 = arith.constant 24 : index
    %c0_34 = arith.constant 0 : index
    %c0_35 = arith.constant 0 : index
    %18 = vector.load %arg9[%c0_33, %c24, %c0_34, %c0_35] : memref<2x36x16x16xf32, #tpu.memory_space<vmem>>, vector<2x4x16x16xf32>
    tpu.vector_store %arg9[%c0_33, %c24, %c0_34, %c0_35], %17 {strides = array<i32>} : memref<2x36x16x16xf32, #tpu.memory_space<vmem>>, vector<2x4x16x16xf32>,
    %19 = vector.extract_strided_slice %4 {offsets = [0, 0, 2, 1], sizes = [2, 4, 16, 16], strides = [1, 1, 1, 1]} : vector<2x4x18x18xf32> to vector<2x4x16x16xf32>
    %c0_36 = arith.constant 0 : index
    %c28 = arith.constant 28 : index
    %c0_37 = arith.constant 0 : index
    %c0_38 = arith.constant 0 : index
    %20 = vector.load %arg9[%c0_36, %c28, %c0_37, %c0_38] : memref<2x36x16x16xf32, #tpu.memory_space<vmem>>, vector<2x4x16x16xf32>
    tpu.vector_store %arg9[%c0_36, %c28, %c0_37, %c0_38], %19 {strides = array<i32>} : memref<2x36x16x16xf32, #tpu.memory_space<vmem>>, vector<2x4x16x16xf32>,
    %21 = vector.extract_strided_slice %4 {offsets = [0, 0, 2, 2], sizes = [2, 4, 16, 16], strides = [1, 1, 1, 1]} : vector<2x4x18x18xf32> to vector<2x4x16x16xf32>
    %c0_39 = arith.constant 0 : index
    %c32 = arith.constant 32 : index
    %c0_40 = arith.constant 0 : index
    %c0_41 = arith.constant 0 : index
    %22 = vector.load %arg9[%c0_39, %c32, %c0_40, %c0_41] : memref<2x36x16x16xf32, #tpu.memory_space<vmem>>, vector<2x4x16x16xf32>
    tpu.vector_store %arg9[%c0_39, %c32, %c0_40, %c0_41], %21 {strides = array<i32>} : memref<2x36x16x16xf32, #tpu.memory_space<vmem>>, vector<2x4x16x16xf32>,
    %c0_42 = arith.constant 0 : index
    %c0_43 = arith.constant 0 : index
    %c0_44 = arith.constant 0 : index
    %c0_45 = arith.constant 0 : index
    %23 = vector.load %arg9[%c0_42, %c0_43, %c0_44, %c0_45] : memref<2x36x16x16xf32, #tpu.memory_space<vmem>>, vector<2x36x16x16xf32>
    %24 = vector.shape_cast %23 : vector<2x36x16x16xf32> to vector<2x36x256xf32>
    %c0_46 = arith.constant 0 : index
    %c0_47 = arith.constant 0 : index
    %25 = vector.load %arg1[%c0_46, %c0_47] : memref<8x36xf32, #tpu.memory_space<vmem>>, vector<8x36xf32>
    %26 = vector.shape_cast %25 : vector<8x36xf32> to vector<1x8x36xf32>
    %27 = vector.broadcast %26 : vector<1x8x36xf32> to vector<2x8x36xf32>
    "tpu.trace_start"() <{level = 10 : i32, message = "nck,nkp->ncp"}> : () -> ()
    %cst_48 = arith.constant dense<0.000000e+00> : vector<2x8x256xf32>
    %28 = tpu.matmul %27, %24, %cst_48 {dimension_numbers = #tpu.dot_dimension_numbers<[2], [1], [1], [2], [0, 0, 0, 1, 1, 2], [0], [0]>} : vector<2x8x36xf32>, vector<2x36x256xf32>, vector<2x8x256xf32> -> vector<2x8x256xf32>
    "tpu.trace_stop"() : () -> ()
    %c0_49 = arith.constant 0 : index
    %c0_50 = arith.constant 0 : index
    %c0_51 = arith.constant 0 : index
    %29 = vector.load %arg2[%c0_49, %c0_50, %c0_51] : memref<1x8x1xf32, #tpu.memory_space<vmem>>, vector<1x8x1xf32>
    %c0_52 = arith.constant 0 : index
    %c0_53 = arith.constant 0 : index
    %c0_54 = arith.constant 0 : index
    %30 = vector.load %arg3[%c0_52, %c0_53, %c0_54] : memref<1x8x1xf32, #tpu.memory_space<vmem>>, vector<1x8x1xf32>
    %cst_55 = arith.constant dense<0.000000e+00> : vector<2x8xf32>
    %31 = vector.multi_reduction <add>, %28, %cst_55 [2] : vector<2x8x256xf32> to vector<2x8xf32>
    %32 = vector.shape_cast %31 : vector<2x8xf32> to vector<2x8x1xf32>
    %cst_56 = arith.constant dense<0.000000e+00> : vector<8x1xf32>
    %33 = vector.multi_reduction <add>, %32, %cst_56 [0] : vector<2x8x1xf32> to vector<8x1xf32>
    %34 = vector.shape_cast %33 : vector<8x1xf32> to vector<1x8x1xf32>
    %cst_57 = arith.constant 5.120000e+02 : f32
    %35 = vector.broadcast %cst_57 : f32 to vector<1x8x1xf32>
    %36 = arith.divf %34, %35 : vector<1x8x1xf32>
    %37 = vector.broadcast %36 : vector<1x8x1xf32> to vector<2x8x256xf32>
    %38 = arith.subf %28, %37 : vector<2x8x256xf32>
    %39 = arith.mulf %38, %38 : vector<2x8x256xf32>
    %cst_58 = arith.constant dense<0.000000e+00> : vector<2x8xf32>
    %40 = vector.multi_reduction <add>, %39, %cst_58 [2] : vector<2x8x256xf32> to vector<2x8xf32>
    %41 = vector.shape_cast %40 : vector<2x8xf32> to vector<2x8x1xf32>
    %cst_59 = arith.constant dense<0.000000e+00> : vector<8x1xf32>
    %42 = vector.multi_reduction <add>, %41, %cst_59 [0] : vector<2x8x1xf32> to vector<8x1xf32>
    %43 = vector.shape_cast %42 : vector<8x1xf32> to vector<1x8x1xf32>
    %cst_60 = arith.constant 5.120000e+02 : f32
    %44 = vector.broadcast %cst_60 : f32 to vector<1x8x1xf32>
    %45 = arith.divf %43, %44 : vector<1x8x1xf32>
    %cst_61 = arith.constant 9.99999974E-6 : f32
    %46 = vector.broadcast %cst_61 : f32 to vector<1x8x1xf32>
    %47 = arith.addf %45, %46 : vector<1x8x1xf32>
    %48 = math.rsqrt %47 : vector<1x8x1xf32>
    %49 = vector.broadcast %48 : vector<1x8x1xf32> to vector<2x8x256xf32>
    %50 = arith.mulf %38, %49 : vector<2x8x256xf32>
    %51 = vector.broadcast %29 : vector<1x8x1xf32> to vector<2x8x256xf32>
    %52 = arith.mulf %50, %51 : vector<2x8x256xf32>
    %53 = vector.broadcast %30 : vector<1x8x1xf32> to vector<2x8x256xf32>
    %54 = arith.addf %52, %53 : vector<2x8x256xf32>
    %cst_62 = arith.constant 0.000000e+00 : f32
    %55 = vector.broadcast %cst_62 : f32 to vector<2x8x256xf32>
    %56 = arith.maximumf %54, %55 : vector<2x8x256xf32>
    %cst_63 = arith.constant 0.000000e+00 : f32
    %57 = vector.broadcast %cst_63 : f32 to vector<2x8x18x18xf32>
    %c0_64 = arith.constant 0 : index
    %c0_65 = arith.constant 0 : index
    %c0_66 = arith.constant 0 : index
    %c0_67 = arith.constant 0 : index
    %58 = vector.load %arg10[%c0_64, %c0_65, %c0_66, %c0_67] : memref<2x8x18x18xf32, #tpu.memory_space<vmem>>, vector<2x8x18x18xf32>
    tpu.vector_store %arg10[%c0_64, %c0_65, %c0_66, %c0_67], %57 {strides = array<i32>} : memref<2x8x18x18xf32, #tpu.memory_space<vmem>>, vector<2x8x18x18xf32>,
    %59 = vector.shape_cast %56 : vector<2x8x256xf32> to vector<2x8x16x16xf32>
    %c0_68 = arith.constant 0 : index
    %c0_69 = arith.constant 0 : index
    %c1_70 = arith.constant 1 : index
    %c1_71 = arith.constant 1 : index
    %60 = vector.load %arg10[%c0_68, %c0_69, %c1_70, %c1_71] : memref<2x8x18x18xf32, #tpu.memory_space<vmem>>, vector<2x8x16x16xf32>
    tpu.vector_store %arg10[%c0_68, %c0_69, %c1_70, %c1_71], %59 {strides = array<i32>} : memref<2x8x18x18xf32, #tpu.memory_space<vmem>>, vector<2x8x16x16xf32>,
    %c0_72 = arith.constant 0 : index
    %c0_73 = arith.constant 0 : index
    %c0_74 = arith.constant 0 : index
    %c0_75 = arith.constant 0 : index
    %61 = vector.load %arg10[%c0_72, %c0_73, %c0_74, %c0_75] : memref<2x8x18x18xf32, #tpu.memory_space<vmem>>, vector<2x8x18x18xf32>
    %62 = vector.extract_strided_slice %61 {offsets = [0, 0, 0, 0], sizes = [2, 8, 16, 16], strides = [1, 1, 1, 1]} : vector<2x8x18x18xf32> to vector<2x8x16x16xf32>
    %c0_76 = arith.constant 0 : index
    %c0_77 = arith.constant 0 : index
    %c0_78 = arith.constant 0 : index
    %c0_79 = arith.constant 0 : index
    %63 = vector.load %arg11[%c0_76, %c0_77, %c0_78, %c0_79] : memref<2x72x16x16xf32, #tpu.memory_space<vmem>>, vector<2x8x16x16xf32>
    tpu.vector_store %arg11[%c0_76, %c0_77, %c0_78, %c0_79], %62 {strides = array<i32>} : memref<2x72x16x16xf32, #tpu.memory_space<vmem>>, vector<2x8x16x16xf32>,
    %64 = vector.extract_strided_slice %61 {offsets = [0, 0, 0, 1], sizes = [2, 8, 16, 16], strides = [1, 1, 1, 1]} : vector<2x8x18x18xf32> to vector<2x8x16x16xf32>
    %c0_80 = arith.constant 0 : index
    %c8_81 = arith.constant 8 : index
    %c0_82 = arith.constant 0 : index
    %c0_83 = arith.constant 0 : index
    %65 = vector.load %arg11[%c0_80, %c8_81, %c0_82, %c0_83] : memref<2x72x16x16xf32, #tpu.memory_space<vmem>>, vector<2x8x16x16xf32>
    tpu.vector_store %arg11[%c0_80, %c8_81, %c0_82, %c0_83], %64 {strides = array<i32>} : memref<2x72x16x16xf32, #tpu.memory_space<vmem>>, vector<2x8x16x16xf32>,
    %66 = vector.extract_strided_slice %61 {offsets = [0, 0, 0, 2], sizes = [2, 8, 16, 16], strides = [1, 1, 1, 1]} : vector<2x8x18x18xf32> to vector<2x8x16x16xf32>
    %c0_84 = arith.constant 0 : index
    %c16_85 = arith.constant 16 : index
    %c0_86 = arith.constant 0 : index
    %c0_87 = arith.constant 0 : index
    %67 = vector.load %arg11[%c0_84, %c16_85, %c0_86, %c0_87] : memref<2x72x16x16xf32, #tpu.memory_space<vmem>>, vector<2x8x16x16xf32>
    tpu.vector_store %arg11[%c0_84, %c16_85, %c0_86, %c0_87], %66 {strides = array<i32>} : memref<2x72x16x16xf32, #tpu.memory_space<vmem>>, vector<2x8x16x16xf32>,
    %68 = vector.extract_strided_slice %61 {offsets = [0, 0, 1, 0], sizes = [2, 8, 16, 16], strides = [1, 1, 1, 1]} : vector<2x8x18x18xf32> to vector<2x8x16x16xf32>
    %c0_88 = arith.constant 0 : index
    %c24_89 = arith.constant 24 : index
    %c0_90 = arith.constant 0 : index
    %c0_91 = arith.constant 0 : index
    %69 = vector.load %arg11[%c0_88, %c24_89, %c0_90, %c0_91] : memref<2x72x16x16xf32, #tpu.memory_space<vmem>>, vector<2x8x16x16xf32>
    tpu.vector_store %arg11[%c0_88, %c24_89, %c0_90, %c0_91], %68 {strides = array<i32>} : memref<2x72x16x16xf32, #tpu.memory_space<vmem>>, vector<2x8x16x16xf32>,
    %70 = vector.extract_strided_slice %61 {offsets = [0, 0, 1, 1], sizes = [2, 8, 16, 16], strides = [1, 1, 1, 1]} : vector<2x8x18x18xf32> to vector<2x8x16x16xf32>
    %c0_92 = arith.constant 0 : index
    %c32_93 = arith.constant 32 : index
    %c0_94 = arith.constant 0 : index
    %c0_95 = arith.constant 0 : index
    %71 = vector.load %arg11[%c0_92, %c32_93, %c0_94, %c0_95] : memref<2x72x16x16xf32, #tpu.memory_space<vmem>>, vector<2x8x16x16xf32>
    tpu.vector_store %arg11[%c0_92, %c32_93, %c0_94, %c0_95], %70 {strides = array<i32>} : memref<2x72x16x16xf32, #tpu.memory_space<vmem>>, vector<2x8x16x16xf32>,
    %72 = vector.extract_strided_slice %61 {offsets = [0, 0, 1, 2], sizes = [2, 8, 16, 16], strides = [1, 1, 1, 1]} : vector<2x8x18x18xf32> to vector<2x8x16x16xf32>
    %c0_96 = arith.constant 0 : index
    %c40 = arith.constant 40 : index
    %c0_97 = arith.constant 0 : index
    %c0_98 = arith.constant 0 : index
    %73 = vector.load %arg11[%c0_96, %c40, %c0_97, %c0_98] : memref<2x72x16x16xf32, #tpu.memory_space<vmem>>, vector<2x8x16x16xf32>
    tpu.vector_store %arg11[%c0_96, %c40, %c0_97, %c0_98], %72 {strides = array<i32>} : memref<2x72x16x16xf32, #tpu.memory_space<vmem>>, vector<2x8x16x16xf32>,
    %74 = vector.extract_strided_slice %61 {offsets = [0, 0, 2, 0], sizes = [2, 8, 16, 16], strides = [1, 1, 1, 1]} : vector<2x8x18x18xf32> to vector<2x8x16x16xf32>
    %c0_99 = arith.constant 0 : index
    %c48 = arith.constant 48 : index
    %c0_100 = arith.constant 0 : index
    %c0_101 = arith.constant 0 : index
    %75 = vector.load %arg11[%c0_99, %c48, %c0_100, %c0_101] : memref<2x72x16x16xf32, #tpu.memory_space<vmem>>, vector<2x8x16x16xf32>
    tpu.vector_store %arg11[%c0_99, %c48, %c0_100, %c0_101], %74 {strides = array<i32>} : memref<2x72x16x16xf32, #tpu.memory_space<vmem>>, vector<2x8x16x16xf32>,
    %76 = vector.extract_strided_slice %61 {offsets = [0, 0, 2, 1], sizes = [2, 8, 16, 16], strides = [1, 1, 1, 1]} : vector<2x8x18x18xf32> to vector<2x8x16x16xf32>
    %c0_102 = arith.constant 0 : index
    %c56 = arith.constant 56 : index
    %c0_103 = arith.constant 0 : index
    %c0_104 = arith.constant 0 : index
    %77 = vector.load %arg11[%c0_102, %c56, %c0_103, %c0_104] : memref<2x72x16x16xf32, #tpu.memory_space<vmem>>, vector<2x8x16x16xf32>
    tpu.vector_store %arg11[%c0_102, %c56, %c0_103, %c0_104], %76 {strides = array<i32>} : memref<2x72x16x16xf32, #tpu.memory_space<vmem>>, vector<2x8x16x16xf32>,
    %78 = vector.extract_strided_slice %61 {offsets = [0, 0, 2, 2], sizes = [2, 8, 16, 16], strides = [1, 1, 1, 1]} : vector<2x8x18x18xf32> to vector<2x8x16x16xf32>
    %c0_105 = arith.constant 0 : index
    %c64 = arith.constant 64 : index
    %c0_106 = arith.constant 0 : index
    %c0_107 = arith.constant 0 : index
    %79 = vector.load %arg11[%c0_105, %c64, %c0_106, %c0_107] : memref<2x72x16x16xf32, #tpu.memory_space<vmem>>, vector<2x8x16x16xf32>
    tpu.vector_store %arg11[%c0_105, %c64, %c0_106, %c0_107], %78 {strides = array<i32>} : memref<2x72x16x16xf32, #tpu.memory_space<vmem>>, vector<2x8x16x16xf32>,
    %c0_108 = arith.constant 0 : index
    %c0_109 = arith.constant 0 : index
    %c0_110 = arith.constant 0 : index
    %c0_111 = arith.constant 0 : index
    %80 = vector.load %arg11[%c0_108, %c0_109, %c0_110, %c0_111] : memref<2x72x16x16xf32, #tpu.memory_space<vmem>>, vector<2x72x16x16xf32>
    %81 = vector.shape_cast %80 : vector<2x72x16x16xf32> to vector<2x72x256xf32>
    %c0_112 = arith.constant 0 : index
    %c0_113 = arith.constant 0 : index
    %82 = vector.load %arg4[%c0_112, %c0_113] : memref<8x72xf32, #tpu.memory_space<vmem>>, vector<8x72xf32>
    %83 = vector.shape_cast %82 : vector<8x72xf32> to vector<1x8x72xf32>
    %84 = vector.broadcast %83 : vector<1x8x72xf32> to vector<2x8x72xf32>
    "tpu.trace_start"() <{level = 10 : i32, message = "nck,nkp->ncp"}> : () -> ()
    %cst_114 = arith.constant dense<0.000000e+00> : vector<2x8x256xf32>
    %85 = tpu.matmul %84, %81, %cst_114 {dimension_numbers = #tpu.dot_dimension_numbers<[2], [1], [1], [2], [0, 0, 0, 1, 1, 2], [0], [0]>} : vector<2x8x72xf32>, vector<2x72x256xf32>, vector<2x8x256xf32> -> vector<2x8x256xf32>
    "tpu.trace_stop"() : () -> ()
    %c0_115 = arith.constant 0 : index
    %c0_116 = arith.constant 0 : index
    %c0_117 = arith.constant 0 : index
    %86 = vector.load %arg5[%c0_115, %c0_116, %c0_117] : memref<1x8x1xf32, #tpu.memory_space<vmem>>, vector<1x8x1xf32>
    %c0_118 = arith.constant 0 : index
    %c0_119 = arith.constant 0 : index
    %c0_120 = arith.constant 0 : index
    %87 = vector.load %arg6[%c0_118, %c0_119, %c0_120] : memref<1x8x1xf32, #tpu.memory_space<vmem>>, vector<1x8x1xf32>
    %cst_121 = arith.constant dense<0.000000e+00> : vector<2x8xf32>
    %88 = vector.multi_reduction <add>, %85, %cst_121 [2] : vector<2x8x256xf32> to vector<2x8xf32>
    %89 = vector.shape_cast %88 : vector<2x8xf32> to vector<2x8x1xf32>
    %cst_122 = arith.constant dense<0.000000e+00> : vector<8x1xf32>
    %90 = vector.multi_reduction <add>, %89, %cst_122 [0] : vector<2x8x1xf32> to vector<8x1xf32>
    %91 = vector.shape_cast %90 : vector<8x1xf32> to vector<1x8x1xf32>
    %cst_123 = arith.constant 5.120000e+02 : f32
    %92 = vector.broadcast %cst_123 : f32 to vector<1x8x1xf32>
    %93 = arith.divf %91, %92 : vector<1x8x1xf32>
    %94 = vector.broadcast %93 : vector<1x8x1xf32> to vector<2x8x256xf32>
    %95 = arith.subf %85, %94 : vector<2x8x256xf32>
    %96 = arith.mulf %95, %95 : vector<2x8x256xf32>
    %cst_124 = arith.constant dense<0.000000e+00> : vector<2x8xf32>
    %97 = vector.multi_reduction <add>, %96, %cst_124 [2] : vector<2x8x256xf32> to vector<2x8xf32>
    %98 = vector.shape_cast %97 : vector<2x8xf32> to vector<2x8x1xf32>
    %cst_125 = arith.constant dense<0.000000e+00> : vector<8x1xf32>
    %99 = vector.multi_reduction <add>, %98, %cst_125 [0] : vector<2x8x1xf32> to vector<8x1xf32>
    %100 = vector.shape_cast %99 : vector<8x1xf32> to vector<1x8x1xf32>
    %cst_126 = arith.constant 5.120000e+02 : f32
    %101 = vector.broadcast %cst_126 : f32 to vector<1x8x1xf32>
    %102 = arith.divf %100, %101 : vector<1x8x1xf32>
    %cst_127 = arith.constant 9.99999974E-6 : f32
    %103 = vector.broadcast %cst_127 : f32 to vector<1x8x1xf32>
    %104 = arith.addf %102, %103 : vector<1x8x1xf32>
    %105 = math.rsqrt %104 : vector<1x8x1xf32>
    %106 = vector.broadcast %105 : vector<1x8x1xf32> to vector<2x8x256xf32>
    %107 = arith.mulf %95, %106 : vector<2x8x256xf32>
    %108 = vector.broadcast %86 : vector<1x8x1xf32> to vector<2x8x256xf32>
    %109 = arith.mulf %107, %108 : vector<2x8x256xf32>
    %110 = vector.broadcast %87 : vector<1x8x1xf32> to vector<2x8x256xf32>
    %111 = arith.addf %109, %110 : vector<2x8x256xf32>
    %cst_128 = arith.constant 0.000000e+00 : f32
    %112 = vector.broadcast %cst_128 : f32 to vector<2x8x256xf32>
    %113 = arith.maximumf %111, %112 : vector<2x8x256xf32>
    %c0_129 = arith.constant 0 : index
    %c0_130 = arith.constant 0 : index
    %c0_131 = arith.constant 0 : index
    %114 = vector.load %arg7[%c0_129, %c0_130, %c0_131] : memref<2x8x256xf32, #tpu.memory_space<vmem>>, vector<2x8x256xf32>
    tpu.vector_store %arg7[%c0_129, %c0_130, %c0_131], %113 {strides = array<i32>} : memref<2x8x256xf32, #tpu.memory_space<vmem>>, vector<2x8x256xf32>,
    return
  }
}

</mosaic_0001>

<llo_original>
// kernel: tpu_custom_call.1
$region0: #{tpu_custom_call.1}
  #allocation0 [shape = 'u32[]', space=smem, size = 0x4, offset = 0x4, fixed_abs, tag = 'smem constant byte address 0x4 - core index']
  #allocation1 [shape = 'u32[144,128]{1,0:T(1,128)}', space=vmem, size = 0x12000, scoped, tag = 'internal scratch']
  #allocation2 [shape = 'f32[2,4,18,18]{3,2,1,0:T(8,128)}', space=vmem, size = 0x18000, scoped, tag = 'scratch operand']
  #allocation3 [shape = 'f32[2,36,16,16]{3,2,1,0:T(8,128)}', space=vmem, size = 0x90000, scoped, tag = 'scratch operand']
  #allocation4 [shape = 'f32[2,8,18,18]{3,2,1,0:T(8,128)}', space=vmem, size = 0x30000, scoped, tag = 'scratch operand']
  #allocation5 [shape = 'f32[2,72,16,16]{3,2,1,0:T(8,128)}', space=vmem, size = 0x120000, scoped, tag = 'scratch operand']
  %s0 = inlined_call_operand.hbm [shape: f32[2,4,16,16], index: 0, kind: input, shape index: {}]
  %s1 = inlined_call_operand.vmem [shape: f32[8,36], index: 1, kind: input, shape index: {}]
  %s2 = inlined_call_operand.vmem [shape: f32[1,8,1], index: 2, kind: input, shape index: {}]
  %s3 = inlined_call_operand.vmem [shape: f32[1,8,1], index: 3, kind: input, shape index: {}]
  %s4 = inlined_call_operand.vmem [shape: f32[8,72], index: 4, kind: input, shape index: {}]
  %s5 = inlined_call_operand.vmem [shape: f32[1,8,1], index: 5, kind: input, shape index: {}]
  %s6 = inlined_call_operand.vmem [shape: f32[1,8,1], index: 6, kind: input, shape index: {}]
  %s7 = inlined_call_operand.hbm [shape: f32[2,8,256], index: 7, kind: output, shape index: {}]
  %s8 = sld [smem:[#allocation0]]
  $region42: #{tpu_custom_call.1} parent=0
    _
  %s10 = ssub.s32 1, %s8
  %s11 = scalar_select 0, %s10, %s8
  $region1: #{tpu_custom_call.1} parent=0
    #allocation6 [shape = 'u8[65536]{0}', space=vmem, size = 0x10000, scoped, tag = 'input window, operand 0, single buffered']
    #allocation7 [shape = 's32[1]{0}', space=sflag, size = 0x4, scoped, tag = 'scoped memory for tpu_custom_call.1']
    #allocation8 [shape = 's32[1]{0}', space=sflag, size = 0x4, scoped, tag = 'scoped memory for tpu_custom_call.1']
    #allocation9 [shape = 'u8[16384]{0}', space=vmem, size = 0x4000, scoped, tag = 'output window, operand 0, single buffered']
    %12 = vsyncpa [#allocation7], 0
    %13 = vsyncpa [#allocation8], 0
    // Predicated region
    $region2: #{tpu_custom_call.1} parent=1 // pred_check
      _
    $region3: #{tpu_custom_call.1} parent=1 // pred_check_branch
      %15 = sbr.rel (0) target = $region5
    $region4: #{tpu_custom_call.1} parent=1 // pred_region
      %s17 = ssub.s32 2048, 2048
      %18 = vsyncadd [#allocation7], %s17
      %s19 = sshll.u32 [#allocation6], 4
      %s20 = int_to_ptr.vmem [resolvable:$true] %s19
      %25 = dma.hbm_to_vmem [thread:$0]  %s0, 2048, %s20, [#allocation7], 128, 128, 8
    $region5: #{tpu_custom_call.1} parent=1 // pred_fallthru
      _
    // Predicated region
    $region6: #{tpu_custom_call.1} parent=1 // pred_check
      _
    $region7: #{tpu_custom_call.1} parent=1 // pred_check_branch
      %27 = sbr.rel (0) target = $region9
    $region8: #{tpu_custom_call.1} parent=1 // pred_region
      _
    $region9: #{tpu_custom_call.1} parent=1 // pred_fallthru
      _
    // Predicated region
    $region10: #{tpu_custom_call.1} parent=1 // pred_check
      _
    $region11: #{tpu_custom_call.1} parent=1 // pred_check_branch
      %29 = sbr.rel (0) target = $region13
    $region12: #{tpu_custom_call.1} parent=1 // pred_region
      _
    $region13: #{tpu_custom_call.1} parent=1 // pred_fallthru
      _
    // Predicated region
    $region14: #{tpu_custom_call.1} parent=1 // pred_check
      _
    $region15: #{tpu_custom_call.1} parent=1 // pred_check_branch
      %31 = sbr.rel (0) target = $region17
    $region16: #{tpu_custom_call.1} parent=1 // pred_region
      _
    $region17: #{tpu_custom_call.1} parent=1 // pred_fallthru
      _
    // Predicated region
    $region18: #{tpu_custom_call.1} parent=1 // pred_check
      _
    $region19: #{tpu_custom_call.1} parent=1 // pred_check_branch
      %33 = sbr.rel (0) target = $region21
    $region20: #{tpu_custom_call.1} parent=1 // pred_region
      _
    $region21: #{tpu_custom_call.1} parent=1 // pred_fallthru
      _
    // Predicated region
    $region22: #{tpu_custom_call.1} parent=1 // pred_check
      _
    $region23: #{tpu_custom_call.1} parent=1 // pred_check_branch
      %35 = sbr.rel (0) target = $region25
    $region24: #{tpu_custom_call.1} parent=1 // pred_region
      _
    $region25: #{tpu_custom_call.1} parent=1 // pred_fallthru
      _
    // Predicated region
    $region26: #{tpu_custom_call.1} parent=1 // pred_check
      _
    $region27: #{tpu_custom_call.1} parent=1 // pred_check_branch
      %37 = sbr.rel (0) target = $region29
    $region28: #{tpu_custom_call.1} parent=1 // pred_region
      _
    $region29: #{tpu_custom_call.1} parent=1 // pred_fallthru
      _
    // Predicated region
    $region30: #{tpu_custom_call.1} parent=1 // pred_check
      _
    $region31: #{tpu_custom_call.1} parent=1 // pred_check_branch
      %39 = sbr.rel (0) target = $region33
    $region32: #{tpu_custom_call.1} parent=1 // pred_region
      %40 = dma.done [#allocation7], 2048
    $region33: #{tpu_custom_call.1} parent=1 // pred_fallthru
      _
    %vm41 = vcmask 146432
    %42 = vst.msk [vmem:[#allocation2] sm:$0xff] %vm41, 0.0
    %43 = vst.msk [vmem:[#allocation2 + $0x8] sm:$0xff] %vm41, 0.0
    %vm44 = vcmask 140288
    %45 = vst.msk [vmem:[#allocation2 + $0x10] sm:$0x3] %vm44, 0.0
    %46 = vst.msk [vmem:[#allocation2 + $0x18] sm:$0xff] %vm41, 0.0
    %47 = vst.msk [vmem:[#allocation2 + $0x20] sm:$0xff] %vm41, 0.0
    %48 = vst.msk [vmem:[#allocation2 + $0x28] sm:$0x3] %vm44, 0.0
    %49 = vst.msk [vmem:[#allocation2 + $0x30] sm:$0xff] %vm41, 0.0
    %50 = vst.msk [vmem:[#allocation2 + $0x38] sm:$0xff] %vm41, 0.0
    %51 = vst.msk [vmem:[#allocation2 + $0x40] sm:$0x3] %vm44, 0.0
    %52 = vst.msk [vmem:[#allocation2 + $0x48] sm:$0xff] %vm41, 0.0
    %53 = vst.msk [vmem:[#allocation2 + $0x50] sm:$0xff] %vm41, 0.0
    %54 = vst.msk [vmem:[#allocation2 + $0x58] sm:$0x3] %vm44, 0.0
    %55 = vst.msk [vmem:[#allocation2 + $0x60] sm:$0xff] %vm41, 0.0
    %56 = vst.msk [vmem:[#allocation2 + $0x68] sm:$0xff] %vm41, 0.0
    %57 = vst.msk [vmem:[#allocation2 + $0x70] sm:$0x3] %vm44, 0.0
    %58 = vst.msk [vmem:[#allocation2 + $0x78] sm:$0xff] %vm41, 0.0
    %59 = vst.msk [vmem:[#allocation2 + $0x80] sm:$0xff] %vm41, 0.0
    %60 = vst.msk [vmem:[#allocation2 + $0x88] sm:$0x3] %vm44, 0.0
    %61 = vst.msk [vmem:[#allocation2 + $0x90] sm:$0xff] %vm41, 0.0
    %62 = vst.msk [vmem:[#allocation2 + $0x98] sm:$0xff] %vm41, 0.0
    %63 = vst.msk [vmem:[#allocation2 + $0xa0] sm:$0x3] %vm44, 0.0
    %64 = vst.msk [vmem:[#allocation2 + $0xa8] sm:$0xff] %vm41, 0.0
    %65 = vst.msk [vmem:[#allocation2 + $0xb0] sm:$0xff] %vm41, 0.0
    %66 = vst.msk [vmem:[#allocation2 + $0xb8] sm:$0x3] %vm44, 0.0
    %v67 = vld [vmem:[#allocation6] sm:$0xff]
    %v68 = vld [vmem:[#allocation6 + $0x8] sm:$0xff]
    %v69 = vld [vmem:[#allocation6 + $0x10] sm:$0xff]
    %v70 = vld [vmem:[#allocation6 + $0x18] sm:$0xff]
    %v71 = vld [vmem:[#allocation6 + $0x20] sm:$0xff]
    %v72 = vld [vmem:[#allocation6 + $0x28] sm:$0xff]
    %v73 = vld [vmem:[#allocation6 + $0x30] sm:$0xff]
    %v74 = vld [vmem:[#allocation6 + $0x38] sm:$0xff]
    %v75 = vld [vmem:[#allocation6 + $0x40] sm:$0xff]
    %v76 = vld [vmem:[#allocation6 + $0x48] sm:$0xff]
    %v77 = vld [vmem:[#allocation6 + $0x50] sm:$0xff]
    %v78 = vld [vmem:[#allocation6 + $0x58] sm:$0xff]
    %v79 = vld [vmem:[#allocation6 + $0x60] sm:$0xff]
    %v80 = vld [vmem:[#allocation6 + $0x68] sm:$0xff]
    %v81 = vld [vmem:[#allocation6 + $0x70] sm:$0xff]
    %v82 = vld [vmem:[#allocation6 + $0x78] sm:$0xff]
    %99 = vrot.lane.b32.xlu0 %v67, 1
    %v100 = vpop.permute.xlu0 %99
    %101 = vrot.lane.b32.xlu0 %v68, 1
    %v102 = vpop.permute.xlu0 %101
    %103 = vrot.lane.b32.xlu0 %v69, 1
    %v104 = vpop.permute.xlu0 %103
    %105 = vrot.lane.b32.xlu0 %v70, 1
    %v106 = vpop.permute.xlu0 %105
    %107 = vrot.lane.b32.xlu0 %v71, 1
    %v108 = vpop.permute.xlu0 %107
    %109 = vrot.lane.b32.xlu0 %v72, 1
    %v110 = vpop.permute.xlu0 %109
    %111 = vrot.lane.b32.xlu0 %v73, 1
    %v112 = vpop.permute.xlu0 %111
    %113 = vrot.lane.b32.xlu0 %v74, 1
    %v114 = vpop.permute.xlu0 %113
    %115 = vrot.lane.b32.xlu0 %v75, 1
    %v116 = vpop.permute.xlu0 %115
    %117 = vrot.lane.b32.xlu0 %v76, 1
    %v118 = vpop.permute.xlu0 %117
    %119 = vrot.lane.b32.xlu0 %v77, 1
    %v120 = vpop.permute.xlu0 %119
    %121 = vrot.lane.b32.xlu0 %v78, 1
    %v122 = vpop.permute.xlu0 %121
    %123 = vrot.lane.b32.xlu0 %v79, 1
    %v124 = vpop.permute.xlu0 %123
    %125 = vrot.lane.b32.xlu0 %v80, 1
    %v126 = vpop.permute.xlu0 %125
    %127 = vrot.lane.b32.xlu0 %v81, 1
    %v128 = vpop.permute.xlu0 %127
    %129 = vrot.lane.b32.xlu0 %v82, 1
    %v130 = vpop.permute.xlu0 %129
    %vm147 = vcmask 138248
    %148 = vst.msk [vmem:[#allocation2 + $0x1] sm:$0xff] %vm147, %v100
    %149 = vst.msk [vmem:[#allocation2 + $0x9] sm:$0xff] %vm147, %v102
    %150 = vst.msk [vmem:[#allocation2 + $0x19] sm:$0xff] %vm147, %v104
    %151 = vst.msk [vmem:[#allocation2 + $0x21] sm:$0xff] %vm147, %v106
    %152 = vst.msk [vmem:[#allocation2 + $0x31] sm:$0xff] %vm147, %v108
    %153 = vst.msk [vmem:[#allocation2 + $0x39] sm:$0xff] %vm147, %v110
    %154 = vst.msk [vmem:[#allocation2 + $0x49] sm:$0xff] %vm147, %v112
    %155 = vst.msk [vmem:[#allocation2 + $0x51] sm:$0xff] %vm147, %v114
    %156 = vst.msk [vmem:[#allocation2 + $0x61] sm:$0xff] %vm147, %v116
    %157 = vst.msk [vmem:[#allocation2 + $0x69] sm:$0xff] %vm147, %v118
    %158 = vst.msk [vmem:[#allocation2 + $0x79] sm:$0xff] %vm147, %v120
    %159 = vst.msk [vmem:[#allocation2 + $0x81] sm:$0xff] %vm147, %v122
    %160 = vst.msk [vmem:[#allocation2 + $0x91] sm:$0xff] %vm147, %v124
    %161 = vst.msk [vmem:[#allocation2 + $0x99] sm:$0xff] %vm147, %v126
    %162 = vst.msk [vmem:[#allocation2 + $0xa9] sm:$0xff] %vm147, %v128
    %163 = vst.msk [vmem:[#allocation2 + $0xb1] sm:$0xff] %vm147, %v130
    %v164 = vld [vmem:[#allocation2] sm:$0xff]
    %v165 = vld [vmem:[#allocation2 + $0x8] sm:$0xff]
    %v166 = vld [vmem:[#allocation2 + $0x10] sm:$0x3]
    %v167 = vld [vmem:[#allocation2 + $0x18] sm:$0xff]
    %v168 = vld [vmem:[#allocation2 + $0x20] sm:$0xff]
    %v169 = vld [vmem:[#allocation2 + $0x28] sm:$0x3]
    %v170 = vld [vmem:[#allocation2 + $0x30] sm:$0xff]
    %v171 = vld [vmem:[#allocation2 + $0x38] sm:$0xff]
    %v172 = vld [vmem:[#allocation2 + $0x40] sm:$0x3]
    %v173 = vld [vmem:[#allocation2 + $0x48] sm:$0xff]
    %v174 = vld [vmem:[#allocation2 + $0x50] sm:$0xff]
    %v175 = vld [vmem:[#allocation2 + $0x58] sm:$0x3]
    %v176 = vld [vmem:[#allocation2 + $0x60] sm:$0xff]
    %v177 = vld [vmem:[#allocation2 + $0x68] sm:$0xff]
    %v178 = vld [vmem:[#allocation2 + $0x70] sm:$0x3]
    %v179 = vld [vmem:[#allocation2 + $0x78] sm:$0xff]
    %v180 = vld [vmem:[#allocation2 + $0x80] sm:$0xff]
    %v181 = vld [vmem:[#allocation2 + $0x88] sm:$0x3]
    %v182 = vld [vmem:[#allocation2 + $0x90] sm:$0xff]
    %v183 = vld [vmem:[#allocation2 + $0x98] sm:$0xff]
    %v184 = vld [vmem:[#allocation2 + $0xa0] sm:$0x3]
    %v185 = vld [vmem:[#allocation2 + $0xa8] sm:$0xff]
    %v186 = vld [vmem:[#allocation2 + $0xb0] sm:$0xff]
    %v187 = vld [vmem:[#allocation2 + $0xb8] sm:$0x3]
    %vm188 = vcmask 130048
    %189 = vst.msk [vmem:[#allocation3] sm:$0xff] %vm188, %v164
    %190 = vst.msk [vmem:[#allocation3 + $0x8] sm:$0xff] %vm188, %v165
    %191 = vst.msk [vmem:[#allocation3 + $0x10] sm:$0xff] %vm188, %v167
    %192 = vst.msk [vmem:[#allocation3 + $0x18] sm:$0xff] %vm188, %v168
    %193 = vst.msk [vmem:[#allocation3 + $0x20] sm:$0xff] %vm188, %v170
    %194 = vst.msk [vmem:[#allocation3 + $0x28] sm:$0xff] %vm188, %v171
    %195 = vst.msk [vmem:[#allocation3 + $0x30] sm:$0xff] %vm188, %v173
    %196 = vst.msk [vmem:[#allocation3 + $0x38] sm:$0xff] %vm188, %v174
    %197 = vst.msk [vmem:[#allocation3 + $0x240] sm:$0xff] %vm188, %v176
    %198 = vst.msk [vmem:[#allocation3 + $0x248] sm:$0xff] %vm188, %v177
    %199 = vst.msk [vmem:[#allocation3 + $0x250] sm:$0xff] %vm188, %v179
    %200 = vst.msk [vmem:[#allocation3 + $0x258] sm:$0xff] %vm188, %v180
    %201 = vst.msk [vmem:[#allocation3 + $0x260] sm:$0xff] %vm188, %v182
    %202 = vst.msk [vmem:[#allocation3 + $0x268] sm:$0xff] %vm188, %v183
    %203 = vst.msk [vmem:[#allocation3 + $0x270] sm:$0xff] %vm188, %v185
    %204 = vst.msk [vmem:[#allocation3 + $0x278] sm:$0xff] %vm188, %v186
    %221 = vrot.lane.b32.xlu0 %v164, 127
    %v222 = vpop.permute.xlu0 %221
    %223 = vrot.lane.b32.xlu0 %v165, 127
    %v224 = vpop.permute.xlu0 %223
    %225 = vrot.lane.b32.xlu0 %v167, 127
    %v226 = vpop.permute.xlu0 %225
    %227 = vrot.lane.b32.xlu0 %v168, 127
    %v228 = vpop.permute.xlu0 %227
    %229 = vrot.lane.b32.xlu0 %v170, 127
    %v230 = vpop.permute.xlu0 %229
    %231 = vrot.lane.b32.xlu0 %v171, 127
    %v232 = vpop.permute.xlu0 %231
    %233 = vrot.lane.b32.xlu0 %v173, 127
    %v234 = vpop.permute.xlu0 %233
    %235 = vrot.lane.b32.xlu0 %v174, 127
    %v236 = vpop.permute.xlu0 %235
    %237 = vrot.lane.b32.xlu0 %v176, 127
    %v238 = vpop.permute.xlu0 %237
    %239 = vrot.lane.b32.xlu0 %v177, 127
    %v240 = vpop.permute.xlu0 %239
    %241 = vrot.lane.b32.xlu0 %v179, 127
    %v242 = vpop.permute.xlu0 %241
    %243 = vrot.lane.b32.xlu0 %v180, 127
    %v244 = vpop.permute.xlu0 %243
    %245 = vrot.lane.b32.xlu0 %v182, 127
    %v246 = vpop.permute.xlu0 %245
    %247 = vrot.lane.b32.xlu0 %v183, 127
    %v248 = vpop.permute.xlu0 %247
    %249 = vrot.lane.b32.xlu0 %v185, 127
    %v250 = vpop.permute.xlu0 %249
    %251 = vrot.lane.b32.xlu0 %v186, 127
    %v252 = vpop.permute.xlu0 %251
    %s269 = scalar_lea.vmem [#allocation3], 64
    %270 = vst.msk [vmem:[%s269] sm:$0xff] %vm188, %v222
    %271 = vst.msk [vmem:[%s269 + $0x8] sm:$0xff] %vm188, %v224
    %272 = vst.msk [vmem:[%s269 + $0x10] sm:$0xff] %vm188, %v226
    %273 = vst.msk [vmem:[%s269 + $0x18] sm:$0xff] %vm188, %v228
    %274 = vst.msk [vmem:[%s269 + $0x20] sm:$0xff] %vm188, %v230
    %275 = vst.msk [vmem:[%s269 + $0x28] sm:$0xff] %vm188, %v232
    %276 = vst.msk [vmem:[%s269 + $0x30] sm:$0xff] %vm188, %v234
    %277 = vst.msk [vmem:[%s269 + $0x38] sm:$0xff] %vm188, %v236
    %278 = vst.msk [vmem:[%s269 + $0x240] sm:$0xff] %vm188, %v238
    %279 = vst.msk [vmem:[%s269 + $0x248] sm:$0xff] %vm188, %v240
    %280 = vst.msk [vmem:[%s269 + $0x250] sm:$0xff] %vm188, %v242
    %281 = vst.msk [vmem:[%s269 + $0x258] sm:$0xff] %vm188, %v244
    %282 = vst.msk [vmem:[%s269 + $0x260] sm:$0xff] %vm188, %v246
    %283 = vst.msk [vmem:[%s269 + $0x268] sm:$0xff] %vm188, %v248
    %284 = vst.msk [vmem:[%s269 + $0x270] sm:$0xff] %vm188, %v250
    %285 = vst.msk [vmem:[%s269 + $0x278] sm:$0xff] %vm188, %v252
    %286 = vrot.lane.b32.xlu0 %v164, 126
    %v287 = vpop.permute.xlu0 %286
    %288 = vrot.lane.b32.xlu0 %v165, 126
    %v289 = vpop.permute.xlu0 %288
    %290 = vrot.lane.b32.xlu0 %v167, 126
    %v291 = vpop.permute.xlu0 %290
    %292 = vrot.lane.b32.xlu0 %v168, 126
    %v293 = vpop.permute.xlu0 %292
    %294 = vrot.lane.b32.xlu0 %v170, 126
    %v295 = vpop.permute.xlu0 %294
    %296 = vrot.lane.b32.xlu0 %v171, 126
    %v297 = vpop.permute.xlu0 %296
    %298 = vrot.lane.b32.xlu0 %v173, 126
    %v299 = vpop.permute.xlu0 %298
    %300 = vrot.lane.b32.xlu0 %v174, 126
    %v301 = vpop.permute.xlu0 %300
    %302 = vrot.lane.b32.xlu0 %v176, 126
    %v303 = vpop.permute.xlu0 %302
    %304 = vrot.lane.b32.xlu0 %v177, 126
    %v305 = vpop.permute.xlu0 %304
    %306 = vrot.lane.b32.xlu0 %v179, 126
    %v307 = vpop.permute.xlu0 %306
    %308 = vrot.lane.b32.xlu0 %v180, 126
    %v309 = vpop.permute.xlu0 %308
    %310 = vrot.lane.b32.xlu0 %v182, 126
    %v311 = vpop.permute.xlu0 %310
    %312 = vrot.lane.b32.xlu0 %v183, 126
    %v313 = vpop.permute.xlu0 %312
    %314 = vrot.lane.b32.xlu0 %v185, 126
    %v315 = vpop.permute.xlu0 %314
    %316 = vrot.lane.b32.xlu0 %v186, 126
    %v317 = vpop.permute.xlu0 %316
    %s334 = scalar_lea.vmem [#allocation3], 128
    %335 = vst.msk [vmem:[%s334] sm:$0xff] %vm188, %v287
    %336 = vst.msk [vmem:[%s334 + $0x8] sm:$0xff] %vm188, %v289
    %337 = vst.msk [vmem:[%s334 + $0x10] sm:$0xff] %vm188, %v291
    %338 = vst.msk [vmem:[%s334 + $0x18] sm:$0xff] %vm188, %v293
    %339 = vst.msk [vmem:[%s334 + $0x20] sm:$0xff] %vm188, %v295
    %340 = vst.msk [vmem:[%s334 + $0x28] sm:$0xff] %vm188, %v297
    %341 = vst.msk [vmem:[%s334 + $0x30] sm:$0xff] %vm188, %v299
    %342 = vst.msk [vmem:[%s334 + $0x38] sm:$0xff] %vm188, %v301
    %343 = vst.msk [vmem:[%s334 + $0x240] sm:$0xff] %vm188, %v303
    %344 = vst.msk [vmem:[%s334 + $0x248] sm:$0xff] %vm188, %v305
    %345 = vst.msk [vmem:[%s334 + $0x250] sm:$0xff] %vm188, %v307
    %346 = vst.msk [vmem:[%s334 + $0x258] sm:$0xff] %vm188, %v309
    %347 = vst.msk [vmem:[%s334 + $0x260] sm:$0xff] %vm188, %v311
    %348 = vst.msk [vmem:[%s334 + $0x268] sm:$0xff] %vm188, %v313
    %349 = vst.msk [vmem:[%s334 + $0x270] sm:$0xff] %vm188, %v315
    %350 = vst.msk [vmem:[%s334 + $0x278] sm:$0xff] %vm188, %v317
    %s351 = scalar_lea.vmem [#allocation3], 192
    %vm352 = vcmask 130049
    %353 = vst.msk [vmem:[%s351 - $0x1] sm:$0xfe] %vm352, %v164
    %354 = vst.msk [vmem:[%s351 + $0x7] sm:$0xff] %vm188, %v165
    %vm355 = vcmask 122880
    %356 = vst.msk [vmem:[%s351 + $0xf] sm:$0x1] %vm355, %v166
    %357 = vst.msk [vmem:[%s351 + $0xf] sm:$0xfe] %vm352, %v167
    %358 = vst.msk [vmem:[%s351 + $0x17] sm:$0xff] %vm188, %v168
    %359 = vst.msk [vmem:[%s351 + $0x1f] sm:$0x1] %vm355, %v169
    %360 = vst.msk [vmem:[%s351 + $0x1f] sm:$0xfe] %vm352, %v170
    %361 = vst.msk [vmem:[%s351 + $0x27] sm:$0xff] %vm188, %v171
    %362 = vst.msk [vmem:[%s351 + $0x2f] sm:$0x1] %vm355, %v172
    %363 = vst.msk [vmem:[%s351 + $0x2f] sm:$0xfe] %vm352, %v173
    %364 = vst.msk [vmem:[%s351 + $0x37] sm:$0xff] %vm188, %v174
    %365 = vst.msk [vmem:[%s351 + $0x3f] sm:$0x1] %vm355, %v175
    %366 = vst.msk [vmem:[%s351 + $0x23f] sm:$0xfe] %vm352, %v176
    %367 = vst.msk [vmem:[%s351 + $0x247] sm:$0xff] %vm188, %v177
    %368 = vst.msk [vmem:[%s351 + $0x24f] sm:$0x1] %vm355, %v178
    %369 = vst.msk [vmem:[%s351 + $0x24f] sm:$0xfe] %vm352, %v179
    %370 = vst.msk [vmem:[%s351 + $0x257] sm:$0xff] %vm188, %v180
    %371 = vst.msk [vmem:[%s351 + $0x25f] sm:$0x1] %vm355, %v181
    %372 = vst.msk [vmem:[%s351 + $0x25f] sm:$0xfe] %vm352, %v182
    %373 = vst.msk [vmem:[%s351 + $0x267] sm:$0xff] %vm188, %v183
    %374 = vst.msk [vmem:[%s351 + $0x26f] sm:$0x1] %vm355, %v184
    %375 = vst.msk [vmem:[%s351 + $0x26f] sm:$0xfe] %vm352, %v185
    %376 = vst.msk [vmem:[%s351 + $0x277] sm:$0xff] %vm188, %v186
    %377 = vst.msk [vmem:[%s351 + $0x27f] sm:$0x1] %vm355, %v187
    %386 = vrot.lane.b32.xlu0 %v166, 127
    %v387 = vpop.permute.xlu0 %386
    %388 = vrot.lane.b32.xlu0 %v169, 127
    %v389 = vpop.permute.xlu0 %388
    %390 = vrot.lane.b32.xlu0 %v172, 127
    %v391 = vpop.permute.xlu0 %390
    %392 = vrot.lane.b32.xlu0 %v175, 127
    %v393 = vpop.permute.xlu0 %392
    %394 = vrot.lane.b32.xlu0 %v178, 127
    %v395 = vpop.permute.xlu0 %394
    %396 = vrot.lane.b32.xlu0 %v181, 127
    %v397 = vpop.permute.xlu0 %396
    %398 = vrot.lane.b32.xlu0 %v184, 127
    %v399 = vpop.permute.xlu0 %398
    %400 = vrot.lane.b32.xlu0 %v187, 127
    %v401 = vpop.permute.xlu0 %400
    %s410 = scalar_lea.vmem [#allocation3], 256
    %411 = vst.msk [vmem:[%s410 - $0x1] sm:$0xfe] %vm352, %v222
    %412 = vst.msk [vmem:[%s410 + $0x7] sm:$0xff] %vm188, %v224
    %413 = vst.msk [vmem:[%s410 + $0xf] sm:$0x1] %vm355, %v387
    %414 = vst.msk [vmem:[%s410 + $0xf] sm:$0xfe] %vm352, %v226
    %415 = vst.msk [vmem:[%s410 + $0x17] sm:$0xff] %vm188, %v228
    %416 = vst.msk [vmem:[%s410 + $0x1f] sm:$0x1] %vm355, %v389
    %417 = vst.msk [vmem:[%s410 + $0x1f] sm:$0xfe] %vm352, %v230
    %418 = vst.msk [vmem:[%s410 + $0x27] sm:$0xff] %vm188, %v232
    %419 = vst.msk [vmem:[%s410 + $0x2f] sm:$0x1] %vm355, %v391
    %420 = vst.msk [vmem:[%s410 + $0x2f] sm:$0xfe] %vm352, %v234
    %421 = vst.msk [vmem:[%s410 + $0x37] sm:$0xff] %vm188, %v236
    %422 = vst.msk [vmem:[%s410 + $0x3f] sm:$0x1] %vm355, %v393
    %423 = vst.msk [vmem:[%s410 + $0x23f] sm:$0xfe] %vm352, %v238
    %424 = vst.msk [vmem:[%s410 + $0x247] sm:$0xff] %vm188, %v240
    %425 = vst.msk [vmem:[%s410 + $0x24f] sm:$0x1] %vm355, %v395
    %426 = vst.msk [vmem:[%s410 + $0x24f] sm:$0xfe] %vm352, %v242
    %427 = vst.msk [vmem:[%s410 + $0x257] sm:$0xff] %vm188, %v244
    %428 = vst.msk [vmem:[%s410 + $0x25f] sm:$0x1] %vm355, %v397
    %429 = vst.msk [vmem:[%s410 + $0x25f] sm:$0xfe] %vm352, %v246
    %430 = vst.msk [vmem:[%s410 + $0x267] sm:$0xff] %vm188, %v248
    %431 = vst.msk [vmem:[%s410 + $0x26f] sm:$0x1] %vm355, %v399
    %432 = vst.msk [vmem:[%s410 + $0x26f] sm:$0xfe] %vm352, %v250
    %433 = vst.msk [vmem:[%s410 + $0x277] sm:$0xff] %vm188, %v252
    %434 = vst.msk [vmem:[%s410 + $0x27f] sm:$0x1] %vm355, %v401
    %435 = vrot.lane.b32.xlu0 %v166, 126
    %v436 = vpop.permute.xlu0 %435
    %437 = vrot.lane.b32.xlu0 %v169, 126
    %v438 = vpop.permute.xlu0 %437
    %439 = vrot.lane.b32.xlu0 %v172, 126
    %v440 = vpop.permute.xlu0 %439
    %441 = vrot.lane.b32.xlu0 %v175, 126
    %v442 = vpop.permute.xlu0 %441
    %443 = vrot.lane.b32.xlu0 %v178, 126
    %v444 = vpop.permute.xlu0 %443
    %445 = vrot.lane.b32.xlu0 %v181, 126
    %v446 = vpop.permute.xlu0 %445
    %447 = vrot.lane.b32.xlu0 %v184, 126
    %v448 = vpop.permute.xlu0 %447
    %449 = vrot.lane.b32.xlu0 %v187, 126
    %v450 = vpop.permute.xlu0 %449
    %s459 = scalar_lea.vmem [#allocation3], 320
    %460 = vst.msk [vmem:[%s459 - $0x1] sm:$0xfe] %vm352, %v287
    %461 = vst.msk [vmem:[%s459 + $0x7] sm:$0xff] %vm188, %v289
    %462 = vst.msk [vmem:[%s459 + $0xf] sm:$0x1] %vm355, %v436
    %463 = vst.msk [vmem:[%s459 + $0xf] sm:$0xfe] %vm352, %v291
    %464 = vst.msk [vmem:[%s459 + $0x17] sm:$0xff] %vm188, %v293
    %465 = vst.msk [vmem:[%s459 + $0x1f] sm:$0x1] %vm355, %v438
    %466 = vst.msk [vmem:[%s459 + $0x1f] sm:$0xfe] %vm352, %v295
    %467 = vst.msk [vmem:[%s459 + $0x27] sm:$0xff] %vm188, %v297
    %468 = vst.msk [vmem:[%s459 + $0x2f] sm:$0x1] %vm355, %v440
    %469 = vst.msk [vmem:[%s459 + $0x2f] sm:$0xfe] %vm352, %v299
    %470 = vst.msk [vmem:[%s459 + $0x37] sm:$0xff] %vm188, %v301
    %471 = vst.msk [vmem:[%s459 + $0x3f] sm:$0x1] %vm355, %v442
    %472 = vst.msk [vmem:[%s459 + $0x23f] sm:$0xfe] %vm352, %v303
    %473 = vst.msk [vmem:[%s459 + $0x247] sm:$0xff] %vm188, %v305
    %474 = vst.msk [vmem:[%s459 + $0x24f] sm:$0x1] %vm355, %v444
    %475 = vst.msk [vmem:[%s459 + $0x24f] sm:$0xfe] %vm352, %v307
    %476 = vst.msk [vmem:[%s459 + $0x257] sm:$0xff] %vm188, %v309
    %477 = vst.msk [vmem:[%s459 + $0x25f] sm:$0x1] %vm355, %v446
    %478 = vst.msk [vmem:[%s459 + $0x25f] sm:$0xfe] %vm352, %v311
    %479 = vst.msk [vmem:[%s459 + $0x267] sm:$0xff] %vm188, %v313
    %480 = vst.msk [vmem:[%s459 + $0x26f] sm:$0x1] %vm355, %v448
    %481 = vst.msk [vmem:[%s459 + $0x26f] sm:$0xfe] %vm352, %v315
    %482 = vst.msk [vmem:[%s459 + $0x277] sm:$0xff] %vm188, %v317
    %483 = vst.msk [vmem:[%s459 + $0x27f] sm:$0x1] %vm355, %v450
    %s484 = scalar_lea.vmem [#allocation3], 384
    %vm485 = vcmask 130050
    %486 = vst.msk [vmem:[%s484 - $0x2] sm:$0xfc] %vm485, %v164
    %487 = vst.msk [vmem:[%s484 + $0x6] sm:$0xff] %vm188, %v165
    %vm488 = vcmask 123904
    %489 = vst.msk [vmem:[%s484 + $0xe] sm:$0x3] %vm488, %v166
    %490 = vst.msk [vmem:[%s484 + $0xe] sm:$0xfc] %vm485, %v167
    %491 = vst.msk [vmem:[%s484 + $0x16] sm:$0xff] %vm188, %v168
    %492 = vst.msk [vmem:[%s484 + $0x1e] sm:$0x3] %vm488, %v169
    %493 = vst.msk [vmem:[%s484 + $0x1e] sm:$0xfc] %vm485, %v170
    %494 = vst.msk [vmem:[%s484 + $0x26] sm:$0xff] %vm188, %v171
    %495 = vst.msk [vmem:[%s484 + $0x2e] sm:$0x3] %vm488, %v172
    %496 = vst.msk [vmem:[%s484 + $0x2e] sm:$0xfc] %vm485, %v173
    %497 = vst.msk [vmem:[%s484 + $0x36] sm:$0xff] %vm188, %v174
    %498 = vst.msk [vmem:[%s484 + $0x3e] sm:$0x3] %vm488, %v175
    %499 = vst.msk [vmem:[%s484 + $0x23e] sm:$0xfc] %vm485, %v176
    %500 = vst.msk [vmem:[%s484 + $0x246] sm:$0xff] %vm188, %v177
    %501 = vst.msk [vmem:[%s484 + $0x24e] sm:$0x3] %vm488, %v178
    %502 = vst.msk [vmem:[%s484 + $0x24e] sm:$0xfc] %vm485, %v179
    %503 = vst.msk [vmem:[%s484 + $0x256] sm:$0xff] %vm188, %v180
    %504 = vst.msk [vmem:[%s484 + $0x25e] sm:$0x3] %vm488, %v181
    %505 = vst.msk [vmem:[%s484 + $0x25e] sm:$0xfc] %vm485, %v182
    %506 = vst.msk [vmem:[%s484 + $0x266] sm:$0xff] %vm188, %v183
    %507 = vst.msk [vmem:[%s484 + $0x26e] sm:$0x3] %vm488, %v184
    %508 = vst.msk [vmem:[%s484 + $0x26e] sm:$0xfc] %vm485, %v185
    %509 = vst.msk [vmem:[%s484 + $0x276] sm:$0xff] %vm188, %v186
    %510 = vst.msk [vmem:[%s484 + $0x27e] sm:$0x3] %vm488, %v187
    %s511 = scalar_lea.vmem [#allocation3], 448
    %512 = vst.msk [vmem:[%s511 - $0x2] sm:$0xfc] %vm485, %v222
    %513 = vst.msk [vmem:[%s511 + $0x6] sm:$0xff] %vm188, %v224
    %514 = vst.msk [vmem:[%s511 + $0xe] sm:$0x3] %vm488, %v387
    %515 = vst.msk [vmem:[%s511 + $0xe] sm:$0xfc] %vm485, %v226
    %516 = vst.msk [vmem:[%s511 + $0x16] sm:$0xff] %vm188, %v228
    %517 = vst.msk [vmem:[%s511 + $0x1e] sm:$0x3] %vm488, %v389
    %518 = vst.msk [vmem:[%s511 + $0x1e] sm:$0xfc] %vm485, %v230
    %519 = vst.msk [vmem:[%s511 + $0x26] sm:$0xff] %vm188, %v232
    %520 = vst.msk [vmem:[%s511 + $0x2e] sm:$0x3] %vm488, %v391
    %521 = vst.msk [vmem:[%s511 + $0x2e] sm:$0xfc] %vm485, %v234
    %522 = vst.msk [vmem:[%s511 + $0x36] sm:$0xff] %vm188, %v236
    %523 = vst.msk [vmem:[%s511 + $0x3e] sm:$0x3] %vm488, %v393
    %524 = vst.msk [vmem:[%s511 + $0x23e] sm:$0xfc] %vm485, %v238
    %525 = vst.msk [vmem:[%s511 + $0x246] sm:$0xff] %vm188, %v240
    %526 = vst.msk [vmem:[%s511 + $0x24e] sm:$0x3] %vm488, %v395
    %527 = vst.msk [vmem:[%s511 + $0x24e] sm:$0xfc] %vm485, %v242
    %528 = vst.msk [vmem:[%s511 + $0x256] sm:$0xff] %vm188, %v244
    %529 = vst.msk [vmem:[%s511 + $0x25e] sm:$0x3] %vm488, %v397
    %530 = vst.msk [vmem:[%s511 + $0x25e] sm:$0xfc] %vm485, %v246
    %531 = vst.msk [vmem:[%s511 + $0x266] sm:$0xff] %vm188, %v248
    %532 = vst.msk [vmem:[%s511 + $0x26e] sm:$0x3] %vm488, %v399
    %533 = vst.msk [vmem:[%s511 + $0x26e] sm:$0xfc] %vm485, %v250
    %534 = vst.msk [vmem:[%s511 + $0x276] sm:$0xff] %vm188, %v252
    %535 = vst.msk [vmem:[%s511 + $0x27e] sm:$0x3] %vm488, %v401
    %s536 = scalar_lea.vmem [#allocation3], 512
    %537 = vst.msk [vmem:[%s536 - $0x2] sm:$0xfc] %vm485, %v287
    %538 = vst.msk [vmem:[%s536 + $0x6] sm:$0xff] %vm188, %v289
    %539 = vst.msk [vmem:[%s536 + $0xe] sm:$0x3] %vm488, %v436
    %540 = vst.msk [vmem:[%s536 + $0xe] sm:$0xfc] %vm485, %v291
    %541 = vst.msk [vmem:[%s536 + $0x16] sm:$0xff] %vm188, %v293
    %542 = vst.msk [vmem:[%s536 + $0x1e] sm:$0x3] %vm488, %v438
    %543 = vst.msk [vmem:[%s536 + $0x1e] sm:$0xfc] %vm485, %v295
    %544 = vst.msk [vmem:[%s536 + $0x26] sm:$0xff] %vm188, %v297
    %545 = vst.msk [vmem:[%s536 + $0x2e] sm:$0x3] %vm488, %v440
    %546 = vst.msk [vmem:[%s536 + $0x2e] sm:$0xfc] %vm485, %v299
    %547 = vst.msk [vmem:[%s536 + $0x36] sm:$0xff] %vm188, %v301
    %548 = vst.msk [vmem:[%s536 + $0x3e] sm:$0x3] %vm488, %v442
    %549 = vst.msk [vmem:[%s536 + $0x23e] sm:$0xfc] %vm485, %v303
    %550 = vst.msk [vmem:[%s536 + $0x246] sm:$0xff] %vm188, %v305
    %551 = vst.msk [vmem:[%s536 + $0x24e] sm:$0x3] %vm488, %v444
    %552 = vst.msk [vmem:[%s536 + $0x24e] sm:$0xfc] %vm485, %v307
    %553 = vst.msk [vmem:[%s536 + $0x256] sm:$0xff] %vm188, %v309
    %554 = vst.msk [vmem:[%s536 + $0x25e] sm:$0x3] %vm488, %v446
    %555 = vst.msk [vmem:[%s536 + $0x25e] sm:$0xfc] %vm485, %v311
    %556 = vst.msk [vmem:[%s536 + $0x266] sm:$0xff] %vm188, %v313
    %557 = vst.msk [vmem:[%s536 + $0x26e] sm:$0x3] %vm488, %v448
    %558 = vst.msk [vmem:[%s536 + $0x26e] sm:$0xfc] %vm485, %v315
    %559 = vst.msk [vmem:[%s536 + $0x276] sm:$0xff] %vm188, %v317
    %560 = vst.msk [vmem:[%s536 + $0x27e] sm:$0x3] %vm488, %v450
    %v561 = vld [vmem:[#allocation3] sm:$0xff]
    %v562 = vld [vmem:[#allocation3 + $0x8] sm:$0xff]
    %v563 = vld [vmem:[#allocation3 + $0x10] sm:$0xff]
    %v564 = vld [vmem:[#allocation3 + $0x18] sm:$0xff]
    %v565 = vld [vmem:[#allocation3 + $0x20] sm:$0xff]
    %v566 = vld [vmem:[#allocation3 + $0x28] sm:$0xff]
    %v567 = vld [vmem:[#allocation3 + $0x30] sm:$0xff]
    %v568 = vld [vmem:[#allocation3 + $0x38] sm:$0xff]
    %v569 = vld [vmem:[#allocation3 + $0x40] sm:$0xff]
    %v570 = vld [vmem:[#allocation3 + $0x48] sm:$0xff]
    %v571 = vld [vmem:[#allocation3 + $0x50] sm:$0xff]
    %v572 = vld [vmem:[#allocation3 + $0x58] sm:$0xff]
    %v573 = vld [vmem:[#allocation3 + $0x60] sm:$0xff]
    %v574 = vld [vmem:[#allocation3 + $0x68] sm:$0xff]
    %v575 = vld [vmem:[#allocation3 + $0x70] sm:$0xff]
    %v576 = vld [vmem:[#allocation3 + $0x78] sm:$0xff]
    %v577 = vld [vmem:[#allocation3 + $0x80] sm:$0xff]
    %v578 = vld [vmem:[#allocation3 + $0x88] sm:$0xff]
    %v579 = vld [vmem:[#allocation3 + $0x90] sm:$0xff]
    %v580 = vld [vmem:[#allocation3 + $0x98] sm:$0xff]
    %v581 = vld [vmem:[#allocation3 + $0xa0] sm:$0xff]
    %v582 = vld [vmem:[#allocation3 + $0xa8] sm:$0xff]
    %v583 = vld [vmem:[#allocation3 + $0xb0] sm:$0xff]
    %v584 = vld [vmem:[#allocation3 + $0xb8] sm:$0xff]
    %v585 = vld [vmem:[#allocation3 + $0xc0] sm:$0xff]
    %v586 = vld [vmem:[#allocation3 + $0xc8] sm:$0xff]
    %v587 = vld [vmem:[#allocation3 + $0xd0] sm:$0xff]
    %v588 = vld [vmem:[#allocation3 + $0xd8] sm:$0xff]
    %v589 = vld [vmem:[#allocation3 + $0xe0] sm:$0xff]
    %v590 = vld [vmem:[#allocation3 + $0xe8] sm:$0xff]
    %v591 = vld [vmem:[#allocation3 + $0xf0] sm:$0xff]
    %v592 = vld [vmem:[#allocation3 + $0xf8] sm:$0xff]
    %v593 = vld [vmem:[#allocation3 + $0x100] sm:$0xff]
    %v594 = vld [vmem:[#allocation3 + $0x108] sm:$0xff]
    %v595 = vld [vmem:[#allocation3 + $0x110] sm:$0xff]
    %v596 = vld [vmem:[#allocation3 + $0x118] sm:$0xff]
    %v597 = vld [vmem:[#allocation3 + $0x120] sm:$0xff]
    %v598 = vld [vmem:[#allocation3 + $0x128] sm:$0xff]
    %v599 = vld [vmem:[#allocation3 + $0x130] sm:$0xff]
    %v600 = vld [vmem:[#allocation3 + $0x138] sm:$0xff]
    %v601 = vld [vmem:[#allocation3 + $0x140] sm:$0xff]
    %v602 = vld [vmem:[#allocation3 + $0x148] sm:$0xff]
    %v603 = vld [vmem:[#allocation3 + $0x150] sm:$0xff]
    %v604 = vld [vmem:[#allocation3 + $0x158] sm:$0xff]
    %v605 = vld [vmem:[#allocation3 + $0x160] sm:$0xff]
    %v606 = vld [vmem:[#allocation3 + $0x168] sm:$0xff]
    %v607 = vld [vmem:[#allocation3 + $0x170] sm:$0xff]
    %v608 = vld [vmem:[#allocation3 + $0x178] sm:$0xff]
    %v609 = vld [vmem:[#allocation3 + $0x180] sm:$0xff]
    %v610 = vld [vmem:[#allocation3 + $0x188] sm:$0xff]
    %v611 = vld [vmem:[#allocation3 + $0x190] sm:$0xff]
    %v612 = vld [vmem:[#allocation3 + $0x198] sm:$0xff]
    %v613 = vld [vmem:[#allocation3 + $0x1a0] sm:$0xff]
    %v614 = vld [vmem:[#allocation3 + $0x1a8] sm:$0xff]
    %v615 = vld [vmem:[#allocation3 + $0x1b0] sm:$0xff]
    %v616 = vld [vmem:[#allocation3 + $0x1b8] sm:$0xff]
    %v617 = vld [vmem:[#allocation3 + $0x1c0] sm:$0xff]
    %v618 = vld [vmem:[#allocation3 + $0x1c8] sm:$0xff]
    %v619 = vld [vmem:[#allocation3 + $0x1d0] sm:$0xff]
    %v620 = vld [vmem:[#allocation3 + $0x1d8] sm:$0xff]
    %v621 = vld [vmem:[#allocation3 + $0x1e0] sm:$0xff]
    %v622 = vld [vmem:[#allocation3 + $0x1e8] sm:$0xff]
    %v623 = vld [vmem:[#allocation3 + $0x1f0] sm:$0xff]
    %v624 = vld [vmem:[#allocation3 + $0x1f8] sm:$0xff]
    %v625 = vld [vmem:[#allocation3 + $0x200] sm:$0xff]
    %v626 = vld [vmem:[#allocation3 + $0x208] sm:$0xff]
    %v627 = vld [vmem:[#allocation3 + $0x210] sm:$0xff]
    %v628 = vld [vmem:[#allocation3 + $0x218] sm:$0xff]
    %v629 = vld [vmem:[#allocation3 + $0x220] sm:$0xff]
    %v630 = vld [vmem:[#allocation3 + $0x228] sm:$0xff]
    %v631 = vld [vmem:[#allocation3 + $0x230] sm:$0xff]
    %v632 = vld [vmem:[#allocation3 + $0x238] sm:$0xff]
    %v633 = vld [vmem:[#allocation3 + $0x240] sm:$0xff]
    %v634 = vld [vmem:[#allocation3 + $0x248] sm:$0xff]
    %v635 = vld [vmem:[#allocation3 + $0x250] sm:$0xff]
    %v636 = vld [vmem:[#allocation3 + $0x258] sm:$0xff]
    %v637 = vld [vmem:[#allocation3 + $0x260] sm:$0xff]
    %v638 = vld [vmem:[#allocation3 + $0x268] sm:$0xff]
    %v639 = vld [vmem:[#allocation3 + $0x270] sm:$0xff]
    %v640 = vld [vmem:[#allocation3 + $0x278] sm:$0xff]
    %v641 = vld [vmem:[#allocation3 + $0x280] sm:$0xff]
    %v642 = vld [vmem:[#allocation3 + $0x288] sm:$0xff]
    %v643 = vld [vmem:[#allocation3 + $0x290] sm:$0xff]
    %v644 = vld [vmem:[#allocation3 + $0x298] sm:$0xff]
    %v645 = vld [vmem:[#allocation3 + $0x2a0] sm:$0xff]
    %v646 = vld [vmem:[#allocation3 + $0x2a8] sm:$0xff]
    %v647 = vld [vmem:[#allocation3 + $0x2b0] sm:$0xff]
    %v648 = vld [vmem:[#allocation3 + $0x2b8] sm:$0xff]
    %v649 = vld [vmem:[#allocation3 + $0x2c0] sm:$0xff]
    %v650 = vld [vmem:[#allocation3 + $0x2c8] sm:$0xff]
    %v651 = vld [vmem:[#allocation3 + $0x2d0] sm:$0xff]
    %v652 = vld [vmem:[#allocation3 + $0x2d8] sm:$0xff]
    %v653 = vld [vmem:[#allocation3 + $0x2e0] sm:$0xff]
    %v654 = vld [vmem:[#allocation3 + $0x2e8] sm:$0xff]
    %v655 = vld [vmem:[#allocation3 + $0x2f0] sm:$0xff]
    %v656 = vld [vmem:[#allocation3 + $0x2f8] sm:$0xff]
    %v657 = vld [vmem:[#allocation3 + $0x300] sm:$0xff]
    %v658 = vld [vmem:[#allocation3 + $0x308] sm:$0xff]
    %v659 = vld [vmem:[#allocation3 + $0x310] sm:$0xff]
    %v660 = vld [vmem:[#allocation3 + $0x318] sm:$0xff]
    %v661 = vld [vmem:[#allocation3 + $0x320] sm:$0xff]
    %v662 = vld [vmem:[#allocation3 + $0x328] sm:$0xff]
    %v663 = vld [vmem:[#allocation3 + $0x330] sm:$0xff]
    %v664 = vld [vmem:[#allocation3 + $0x338] sm:$0xff]
    %v665 = vld [vmem:[#allocation3 + $0x340] sm:$0xff]
    %v666 = vld [vmem:[#allocation3 + $0x348] sm:$0xff]
    %v667 = vld [vmem:[#allocation3 + $0x350] sm:$0xff]
    %v668 = vld [vmem:[#allocation3 + $0x358] sm:$0xff]
    %v669 = vld [vmem:[#allocation3 + $0x360] sm:$0xff]
    %v670 = vld [vmem:[#allocation3 + $0x368] sm:$0xff]
    %v671 = vld [vmem:[#allocation3 + $0x370] sm:$0xff]
    %v672 = vld [vmem:[#allocation3 + $0x378] sm:$0xff]
    %v673 = vld [vmem:[#allocation3 + $0x380] sm:$0xff]
    %v674 = vld [vmem:[#allocation3 + $0x388] sm:$0xff]
    %v675 = vld [vmem:[#allocation3 + $0x390] sm:$0xff]
    %v676 = vld [vmem:[#allocation3 + $0x398] sm:$0xff]
    %v677 = vld [vmem:[#allocation3 + $0x3a0] sm:$0xff]
    %v678 = vld [vmem:[#allocation3 + $0x3a8] sm:$0xff]
    %v679 = vld [vmem:[#allocation3 + $0x3b0] sm:$0xff]
    %v680 = vld [vmem:[#allocation3 + $0x3b8] sm:$0xff]
    %v681 = vld [vmem:[#allocation3 + $0x3c0] sm:$0xff]
    %v682 = vld [vmem:[#allocation3 + $0x3c8] sm:$0xff]
    %v683 = vld [vmem:[#allocation3 + $0x3d0] sm:$0xff]
    %v684 = vld [vmem:[#allocation3 + $0x3d8] sm:$0xff]
    %v685 = vld [vmem:[#allocation3 + $0x3e0] sm:$0xff]
    %v686 = vld [vmem:[#allocation3 + $0x3e8] sm:$0xff]
    %v687 = vld [vmem:[#allocation3 + $0x3f0] sm:$0xff]
    %v688 = vld [vmem:[#allocation3 + $0x3f8] sm:$0xff]
    %v689 = vld [vmem:[#allocation3 + $0x400] sm:$0xff]
    %v690 = vld [vmem:[#allocation3 + $0x408] sm:$0xff]
    %v691 = vld [vmem:[#allocation3 + $0x410] sm:$0xff]
    %v692 = vld [vmem:[#allocation3 + $0x418] sm:$0xff]
    %v693 = vld [vmem:[#allocation3 + $0x420] sm:$0xff]
    %v694 = vld [vmem:[#allocation3 + $0x428] sm:$0xff]
    %v695 = vld [vmem:[#allocation3 + $0x430] sm:$0xff]
    %v696 = vld [vmem:[#allocation3 + $0x438] sm:$0xff]
    %v697 = vld [vmem:[#allocation3 + $0x440] sm:$0xff]
    %v698 = vld [vmem:[#allocation3 + $0x448] sm:$0xff]
    %v699 = vld [vmem:[#allocation3 + $0x450] sm:$0xff]
    %v700 = vld [vmem:[#allocation3 + $0x458] sm:$0xff]
    %v701 = vld [vmem:[#allocation3 + $0x460] sm:$0xff]
    %v702 = vld [vmem:[#allocation3 + $0x468] sm:$0xff]
    %v703 = vld [vmem:[#allocation3 + $0x470] sm:$0xff]
    %v704 = vld [vmem:[#allocation3 + $0x478] sm:$0xff]
    %v705 = vcombine.low %v561, %v565
    %v706 = vcombine.high %v561, %v565
    %v708 = vunpack.c.l.s4 1983009808
    %v709 = vunpack.c.0.s8 %v708
    %v710 = vlaneseq
    %v711 = vshrl.u32 %v710, 7
    %v712 = vsub.s32 %v709, %v711
    %v713 = vrot.slane %v705, %v712
    %v715 = vunpack.c.l.s4 1983009808
    %v716 = vunpack.c.0.s8 %v715
    %v717 = vlaneseq
    %v718 = vshrl.u32 %v717, 7
    %v719 = vsub.s32 %v716, %v718
    %v720 = vrot.slane %v706, %v719
    %v721 = vcombine.low %v563, %v567
    %v722 = vcombine.high %v563, %v567
    %v724 = vunpack.c.l.s4 1983009808
    %v725 = vunpack.c.0.s8 %v724
    %v726 = vlaneseq
    %v727 = vshrl.u32 %v726, 7
    %v728 = vsub.s32 %v725, %v727
    %v729 = vrot.slane %v721, %v728
    %v731 = vunpack.c.l.s4 1983009808
    %v732 = vunpack.c.0.s8 %v731
    %v733 = vlaneseq
    %v734 = vshrl.u32 %v733, 7
    %v735 = vsub.s32 %v732, %v734
    %v736 = vrot.slane %v722, %v735
    %v737 = vcombine.low %v569, %v573
    %v738 = vcombine.high %v569, %v573
    %v740 = vunpack.c.l.s4 1983009808
    %v741 = vunpack.c.0.s8 %v740
    %v742 = vlaneseq
    %v743 = vshrl.u32 %v742, 7
    %v744 = vsub.s32 %v741, %v743
    %v745 = vrot.slane %v737, %v744
    %v747 = vunpack.c.l.s4 1983009808
    %v748 = vunpack.c.0.s8 %v747
    %v749 = vlaneseq
    %v750 = vshrl.u32 %v749, 7
    %v751 = vsub.s32 %v748, %v750
    %v752 = vrot.slane %v738, %v751
    %v753 = vcombine.low %v571, %v575
    %v754 = vcombine.high %v571, %v575
    %v756 = vunpack.c.l.s4 1983009808
    %v757 = vunpack.c.0.s8 %v756
    %v758 = vlaneseq
    %v759 = vshrl.u32 %v758, 7
    %v760 = vsub.s32 %v757, %v759
    %v761 = vrot.slane %v753, %v760
    %v763 = vunpack.c.l.s4 1983009808
    %v764 = vunpack.c.0.s8 %v763
    %v765 = vlaneseq
    %v766 = vshrl.u32 %v765, 7
    %v767 = vsub.s32 %v764, %v766
    %v768 = vrot.slane %v754, %v767
    %v769 = vcombine.low %v713, %v729
    %v770 = vcombine.high %v713, %v729
    %v772 = vunpack.c.l.s4 1934713408
    %v773 = vunpack.c.0.s8 %v772
    %v774 = vlaneseq
    %v775 = vshrl.u32 %v774, 7
    %v776 = vsub.s32 %v773, %v775
    %v777 = vrot.slane %v769, %v776
    %v779 = vunpack.c.l.s4 1934713408
    %v780 = vunpack.c.0.s8 %v779
    %v781 = vlaneseq
    %v782 = vshrl.u32 %v781, 7
    %v783 = vsub.s32 %v780, %v782
    %v784 = vrot.slane %v770, %v783
    %v785 = vcombine.low %v720, %v736
    %v786 = vcombine.high %v720, %v736
    %v788 = vunpack.c.l.s4 1934713408
    %v789 = vunpack.c.0.s8 %v788
    %v790 = vlaneseq
    %v791 = vshrl.u32 %v790, 7
    %v792 = vsub.s32 %v789, %v791
    %v793 = vrot.slane %v785, %v792
    %v795 = vunpack.c.l.s4 1934713408
    %v796 = vunpack.c.0.s8 %v795
    %v797 = vlaneseq
    %v798 = vshrl.u32 %v797, 7
    %v799 = vsub.s32 %v796, %v798
    %v800 = vrot.slane %v786, %v799
    %v801 = vcombine.low %v745, %v761
    %v802 = vcombine.high %v745, %v761
    %v804 = vunpack.c.l.s4 1934713408
    %v805 = vunpack.c.0.s8 %v804
    %v806 = vlaneseq
    %v807 = vshrl.u32 %v806, 7
    %v808 = vsub.s32 %v805, %v807
    %v809 = vrot.slane %v801, %v808
    %v811 = vunpack.c.l.s4 1934713408
    %v812 = vunpack.c.0.s8 %v811
    %v813 = vlaneseq
    %v814 = vshrl.u32 %v813, 7
    %v815 = vsub.s32 %v812, %v814
    %v816 = vrot.slane %v802, %v815
    %v817 = vcombine.low %v752, %v768
    %v818 = vcombine.high %v752, %v768
    %v820 = vunpack.c.l.s4 1934713408
    %v821 = vunpack.c.0.s8 %v820
    %v822 = vlaneseq
    %v823 = vshrl.u32 %v822, 7
    %v824 = vsub.s32 %v821, %v823
    %v825 = vrot.slane %v817, %v824
    %v827 = vunpack.c.l.s4 1934713408
    %v828 = vunpack.c.0.s8 %v827
    %v829 = vlaneseq
    %v830 = vshrl.u32 %v829, 7
    %v831 = vsub.s32 %v828, %v830
    %v832 = vrot.slane %v818, %v831
    %v833 = vcombine.low %v777, %v809
    %v834 = vcombine.high %v777, %v809
    %v835 = vcombine.low %v784, %v816
    %v836 = vcombine.high %v784, %v816
    %v837 = vcombine.low %v793, %v825
    %v838 = vcombine.high %v793, %v825
    %v839 = vcombine.low %v800, %v832
    %v840 = vcombine.high %v800, %v832
    %v841 = vcombine.low %v577, %v581
    %v842 = vcombine.high %v577, %v581
    %v844 = vunpack.c.l.s4 1983009808
    %v845 = vunpack.c.0.s8 %v844
    %v846 = vlaneseq
    %v847 = vshrl.u32 %v846, 7
    %v848 = vsub.s32 %v845, %v847
    %v849 = vrot.slane %v841, %v848
    %v851 = vunpack.c.l.s4 1983009808
    %v852 = vunpack.c.0.s8 %v851
    %v853 = vlaneseq
    %v854 = vshrl.u32 %v853, 7
    %v855 = vsub.s32 %v852, %v854
    %v856 = vrot.slane %v842, %v855
    %v857 = vcombine.low %v579, %v583
    %v858 = vcombine.high %v579, %v583
    %v860 = vunpack.c.l.s4 1983009808
    %v861 = vunpack.c.0.s8 %v860
    %v862 = vlaneseq
    %v863 = vshrl.u32 %v862, 7
    %v864 = vsub.s32 %v861, %v863
    %v865 = vrot.slane %v857, %v864
    %v867 = vunpack.c.l.s4 1983009808
    %v868 = vunpack.c.0.s8 %v867
    %v869 = vlaneseq
    %v870 = vshrl.u32 %v869, 7
    %v871 = vsub.s32 %v868, %v870
    %v872 = vrot.slane %v858, %v871
    %v873 = vcombine.low %v585, %v589
    %v874 = vcombine.high %v585, %v589
    %v876 = vunpack.c.l.s4 1983009808
    %v877 = vunpack.c.0.s8 %v876
    %v878 = vlaneseq
    %v879 = vshrl.u32 %v878, 7
    %v880 = vsub.s32 %v877, %v879
    %v881 = vrot.slane %v873, %v880
    %v883 = vunpack.c.l.s4 1983009808
    %v884 = vunpack.c.0.s8 %v883
    %v885 = vlaneseq
    %v886 = vshrl.u32 %v885, 7
    %v887 = vsub.s32 %v884, %v886
    %v888 = vrot.slane %v874, %v887
    %v889 = vcombine.low %v587, %v591
    %v890 = vcombine.high %v587, %v591
    %v892 = vunpack.c.l.s4 1983009808
    %v893 = vunpack.c.0.s8 %v892
    %v894 = vlaneseq
    %v895 = vshrl.u32 %v894, 7
    %v896 = vsub.s32 %v893, %v895
    %v897 = vrot.slane %v889, %v896
    %v899 = vunpack.c.l.s4 1983009808
    %v900 = vunpack.c.0.s8 %v899
    %v901 = vlaneseq
    %v902 = vshrl.u32 %v901, 7
    %v903 = vsub.s32 %v900, %v902
    %v904 = vrot.slane %v890, %v903
    %v905 = vcombine.low %v849, %v865
    %v906 = vcombine.high %v849, %v865
    %v908 = vunpack.c.l.s4 1934713408
    %v909 = vunpack.c.0.s8 %v908
    %v910 = vlaneseq
    %v911 = vshrl.u32 %v910, 7
    %v912 = vsub.s32 %v909, %v911
    %v913 = vrot.slane %v905, %v912
    %v915 = vunpack.c.l.s4 1934713408
    %v916 = vunpack.c.0.s8 %v915
    %v917 = vlaneseq
    %v918 = vshrl.u32 %v917, 7
    %v919 = vsub.s32 %v916, %v918
    %v920 = vrot.slane %v906, %v919
    %v921 = vcombine.low %v856, %v872
    %v922 = vcombine.high %v856, %v872
    %v924 = vunpack.c.l.s4 1934713408
    %v925 = vunpack.c.0.s8 %v924
    %v926 = vlaneseq
    %v927 = vshrl.u32 %v926, 7
    %v928 = vsub.s32 %v925, %v927
    %v929 = vrot.slane %v921, %v928
    %v931 = vunpack.c.l.s4 1934713408
    %v932 = vunpack.c.0.s8 %v931
    %v933 = vlaneseq
    %v934 = vshrl.u32 %v933, 7
    %v935 = vsub.s32 %v932, %v934
    %v936 = vrot.slane %v922, %v935
    %v937 = vcombine.low %v881, %v897
    %v938 = vcombine.high %v881, %v897
    %v940 = vunpack.c.l.s4 1934713408
    %v941 = vunpack.c.0.s8 %v940
    %v942 = vlaneseq
    %v943 = vshrl.u32 %v942, 7
    %v944 = vsub.s32 %v941, %v943
    %v945 = vrot.slane %v937, %v944
    %v947 = vunpack.c.l.s4 1934713408
    %v948 = vunpack.c.0.s8 %v947
    %v949 = vlaneseq
    %v950 = vshrl.u32 %v949, 7
    %v951 = vsub.s32 %v948, %v950
    %v952 = vrot.slane %v938, %v951
    %v953 = vcombine.low %v888, %v904
    %v954 = vcombine.high %v888, %v904
    %v956 = vunpack.c.l.s4 1934713408
    %v957 = vunpack.c.0.s8 %v956
    %v958 = vlaneseq
    %v959 = vshrl.u32 %v958, 7
    %v960 = vsub.s32 %v957, %v959
    %v961 = vrot.slane %v953, %v960
    %v963 = vunpack.c.l.s4 1934713408
    %v964 = vunpack.c.0.s8 %v963
    %v965 = vlaneseq
    %v966 = vshrl.u32 %v965, 7
    %v967 = vsub.s32 %v964, %v966
    %v968 = vrot.slane %v954, %v967
    %v969 = vcombine.low %v913, %v945
    %v970 = vcombine.high %v913, %v945
    %v971 = vcombine.low %v920, %v952
    %v972 = vcombine.high %v920, %v952
    %v973 = vcombine.low %v929, %v961
    %v974 = vcombine.high %v929, %v961
    %v975 = vcombine.low %v936, %v968
    %v976 = vcombine.high %v936, %v968
    %v977 = vcombine.low %v593, %v597
    %v978 = vcombine.high %v593, %v597
    %v980 = vunpack.c.l.s4 1983009808
    %v981 = vunpack.c.0.s8 %v980
    %v982 = vlaneseq
    %v983 = vshrl.u32 %v982, 7
    %v984 = vsub.s32 %v981, %v983
    %v985 = vrot.slane %v977, %v984
    %v987 = vunpack.c.l.s4 1983009808
    %v988 = vunpack.c.0.s8 %v987
    %v989 = vlaneseq
    %v990 = vshrl.u32 %v989, 7
    %v991 = vsub.s32 %v988, %v990
    %v992 = vrot.slane %v978, %v991
    %v993 = vcombine.low %v595, %v599
    %v994 = vcombine.high %v595, %v599
    %v996 = vunpack.c.l.s4 1983009808
    %v997 = vunpack.c.0.s8 %v996
    %v998 = vlaneseq
    %v999 = vshrl.u32 %v998, 7
    %v1000 = vsub.s32 %v997, %v999
    %v1001 = vrot.slane %v993, %v1000
    %v1003 = vunpack.c.l.s4 1983009808
    %v1004 = vunpack.c.0.s8 %v1003
    %v1005 = vlaneseq
    %v1006 = vshrl.u32 %v1005, 7
    %v1007 = vsub.s32 %v1004, %v1006
    %v1008 = vrot.slane %v994, %v1007
    %v1009 = vcombine.low %v601, %v605
    %v1010 = vcombine.high %v601, %v605
    %v1012 = vunpack.c.l.s4 1983009808
    %v1013 = vunpack.c.0.s8 %v1012
    %v1014 = vlaneseq
    %v1015 = vshrl.u32 %v1014, 7
    %v1016 = vsub.s32 %v1013, %v1015
    %v1017 = vrot.slane %v1009, %v1016
    %v1019 = vunpack.c.l.s4 1983009808
    %v1020 = vunpack.c.0.s8 %v1019
    %v1021 = vlaneseq
    %v1022 = vshrl.u32 %v1021, 7
    %v1023 = vsub.s32 %v1020, %v1022
    %v1024 = vrot.slane %v1010, %v1023
    %v1025 = vcombine.low %v603, %v607
    %v1026 = vcombine.high %v603, %v607
    %v1028 = vunpack.c.l.s4 1983009808
    %v1029 = vunpack.c.0.s8 %v1028
    %v1030 = vlaneseq
    %v1031 = vshrl.u32 %v1030, 7
    %v1032 = vsub.s32 %v1029, %v1031
    %v1033 = vrot.slane %v1025, %v1032
    %v1035 = vunpack.c.l.s4 1983009808
    %v1036 = vunpack.c.0.s8 %v1035
    %v1037 = vlaneseq
    %v1038 = vshrl.u32 %v1037, 7
    %v1039 = vsub.s32 %v1036, %v1038
    %v1040 = vrot.slane %v1026, %v1039
    %v1041 = vcombine.low %v985, %v1001
    %v1042 = vcombine.high %v985, %v1001
    %v1044 = vunpack.c.l.s4 1934713408
    %v1045 = vunpack.c.0.s8 %v1044
    %v1046 = vlaneseq
    %v1047 = vshrl.u32 %v1046, 7
    %v1048 = vsub.s32 %v1045, %v1047
    %v1049 = vrot.slane %v1041, %v1048
    %v1051 = vunpack.c.l.s4 1934713408
    %v1052 = vunpack.c.0.s8 %v1051
    %v1053 = vlaneseq
    %v1054 = vshrl.u32 %v1053, 7
    %v1055 = vsub.s32 %v1052, %v1054
    %v1056 = vrot.slane %v1042, %v1055
    %v1057 = vcombine.low %v992, %v1008
    %v1058 = vcombine.high %v992, %v1008
    %v1060 = vunpack.c.l.s4 1934713408
    %v1061 = vunpack.c.0.s8 %v1060
    %v1062 = vlaneseq
    %v1063 = vshrl.u32 %v1062, 7
    %v1064 = vsub.s32 %v1061, %v1063
    %v1065 = vrot.slane %v1057, %v1064
    %v1067 = vunpack.c.l.s4 1934713408
    %v1068 = vunpack.c.0.s8 %v1067
    %v1069 = vlaneseq
    %v1070 = vshrl.u32 %v1069, 7
    %v1071 = vsub.s32 %v1068, %v1070
    %v1072 = vrot.slane %v1058, %v1071
    %v1073 = vcombine.low %v1017, %v1033
    %v1074 = vcombine.high %v1017, %v1033
    %v1076 = vunpack.c.l.s4 1934713408
    %v1077 = vunpack.c.0.s8 %v1076
    %v1078 = vlaneseq
    %v1079 = vshrl.u32 %v1078, 7
    %v1080 = vsub.s32 %v1077, %v1079
    %v1081 = vrot.slane %v1073, %v1080
    %v1083 = vunpack.c.l.s4 1934713408
    %v1084 = vunpack.c.0.s8 %v1083
    %v1085 = vlaneseq
    %v1086 = vshrl.u32 %v1085, 7
    %v1087 = vsub.s32 %v1084, %v1086
    %v1088 = vrot.slane %v1074, %v1087
    %v1089 = vcombine.low %v1024, %v1040
    %v1090 = vcombine.high %v1024, %v1040
    %v1092 = vunpack.c.l.s4 1934713408
    %v1093 = vunpack.c.0.s8 %v1092
    %v1094 = vlaneseq
    %v1095 = vshrl.u32 %v1094, 7
    %v1096 = vsub.s32 %v1093, %v1095
    %v1097 = vrot.slane %v1089, %v1096
    %v1099 = vunpack.c.l.s4 1934713408
    %v1100 = vunpack.c.0.s8 %v1099
    %v1101 = vlaneseq
    %v1102 = vshrl.u32 %v1101, 7
    %v1103 = vsub.s32 %v1100, %v1102
    %v1104 = vrot.slane %v1090, %v1103
    %v1105 = vcombine.low %v1049, %v1081
    %v1106 = vcombine.high %v1049, %v1081
    %v1107 = vcombine.low %v1056, %v1088
    %v1108 = vcombine.high %v1056, %v1088
    %v1109 = vcombine.low %v1065, %v1097
    %v1110 = vcombine.high %v1065, %v1097
    %v1111 = vcombine.low %v1072, %v1104
    %v1112 = vcombine.high %v1072, %v1104
    %v1113 = vcombine.low %v609, %v613
    %v1114 = vcombine.high %v609, %v613
    %v1116 = vunpack.c.l.s4 1983009808
    %v1117 = vunpack.c.0.s8 %v1116
    %v1118 = vlaneseq
    %v1119 = vshrl.u32 %v1118, 7
    %v1120 = vsub.s32 %v1117, %v1119
    %v1121 = vrot.slane %v1113, %v1120
    %v1123 = vunpack.c.l.s4 1983009808
    %v1124 = vunpack.c.0.s8 %v1123
    %v1125 = vlaneseq
    %v1126 = vshrl.u32 %v1125, 7
    %v1127 = vsub.s32 %v1124, %v1126
    %v1128 = vrot.slane %v1114, %v1127
    %v1129 = vcombine.low %v611, %v615
    %v1130 = vcombine.high %v611, %v615
    %v1132 = vunpack.c.l.s4 1983009808
    %v1133 = vunpack.c.0.s8 %v1132
    %v1134 = vlaneseq
    %v1135 = vshrl.u32 %v1134, 7
    %v1136 = vsub.s32 %v1133, %v1135
    %v1137 = vrot.slane %v1129, %v1136
    %v1139 = vunpack.c.l.s4 1983009808
    %v1140 = vunpack.c.0.s8 %v1139
    %v1141 = vlaneseq
    %v1142 = vshrl.u32 %v1141, 7
    %v1143 = vsub.s32 %v1140, %v1142
    %v1144 = vrot.slane %v1130, %v1143
    %v1145 = vcombine.low %v617, %v621
    %v1146 = vcombine.high %v617, %v621
    %v1148 = vunpack.c.l.s4 1983009808
    %v1149 = vunpack.c.0.s8 %v1148
    %v1150 = vlaneseq
    %v1151 = vshrl.u32 %v1150, 7
    %v1152 = vsub.s32 %v1149, %v1151
    %v1153 = vrot.slane %v1145, %v1152
    %v1155 = vunpack.c.l.s4 1983009808
    %v1156 = vunpack.c.0.s8 %v1155
    %v1157 = vlaneseq
    %v1158 = vshrl.u32 %v1157, 7
    %v1159 = vsub.s32 %v1156, %v1158
    %v1160 = vrot.slane %v1146, %v1159
    %v1161 = vcombine.low %v619, %v623
    %v1162 = vcombine.high %v619, %v623
    %v1164 = vunpack.c.l.s4 1983009808
    %v1165 = vunpack.c.0.s8 %v1164
    %v1166 = vlaneseq
    %v1167 = vshrl.u32 %v1166, 7
    %v1168 = vsub.s32 %v1165, %v1167
    %v1169 = vrot.slane %v1161, %v1168
    %v1171 = vunpack.c.l.s4 1983009808
    %v1172 = vunpack.c.0.s8 %v1171
    %v1173 = vlaneseq
    %v1174 = vshrl.u32 %v1173, 7
    %v1175 = vsub.s32 %v1172, %v1174
    %v1176 = vrot.slane %v1162, %v1175
    %v1177 = vcombine.low %v1121, %v1137
    %v1178 = vcombine.high %v1121, %v1137
    %v1180 = vunpack.c.l.s4 1934713408
    %v1181 = vunpack.c.0.s8 %v1180
    %v1182 = vlaneseq
    %v1183 = vshrl.u32 %v1182, 7
    %v1184 = vsub.s32 %v1181, %v1183
    %v1185 = vrot.slane %v1177, %v1184
    %v1187 = vunpack.c.l.s4 1934713408
    %v1188 = vunpack.c.0.s8 %v1187
    %v1189 = vlaneseq
    %v1190 = vshrl.u32 %v1189, 7
    %v1191 = vsub.s32 %v1188, %v1190
    %v1192 = vrot.slane %v1178, %v1191
    %v1193 = vcombine.low %v1128, %v1144
    %v1194 = vcombine.high %v1128, %v1144
    %v1196 = vunpack.c.l.s4 1934713408
    %v1197 = vunpack.c.0.s8 %v1196
    %v1198 = vlaneseq
    %v1199 = vshrl.u32 %v1198, 7
    %v1200 = vsub.s32 %v1197, %v1199
    %v1201 = vrot.slane %v1193, %v1200
    %v1203 = vunpack.c.l.s4 1934713408
    %v1204 = vunpack.c.0.s8 %v1203
    %v1205 = vlaneseq
    %v1206 = vshrl.u32 %v1205, 7
    %v1207 = vsub.s32 %v1204, %v1206
    %v1208 = vrot.slane %v1194, %v1207
    %v1209 = vcombine.low %v1153, %v1169
    %v1210 = vcombine.high %v1153, %v1169
    %v1212 = vunpack.c.l.s4 1934713408
    %v1213 = vunpack.c.0.s8 %v1212
    %v1214 = vlaneseq
    %v1215 = vshrl.u32 %v1214, 7
    %v1216 = vsub.s32 %v1213, %v1215
    %v1217 = vrot.slane %v1209, %v1216
    %v1219 = vunpack.c.l.s4 1934713408
    %v1220 = vunpack.c.0.s8 %v1219
    %v1221 = vlaneseq
    %v1222 = vshrl.u32 %v1221, 7
    %v1223 = vsub.s32 %v1220, %v1222
    %v1224 = vrot.slane %v1210, %v1223
    %v1225 = vcombine.low %v1160, %v1176
    %v1226 = vcombine.high %v1160, %v1176
    %v1228 = vunpack.c.l.s4 1934713408
    %v1229 = vunpack.c.0.s8 %v1228
    %v1230 = vlaneseq
    %v1231 = vshrl.u32 %v1230, 7
    %v1232 = vsub.s32 %v1229, %v1231
    %v1233 = vrot.slane %v1225, %v1232
    %v1235 = vunpack.c.l.s4 1934713408
    %v1236 = vunpack.c.0.s8 %v1235
    %v1237 = vlaneseq
    %v1238 = vshrl.u32 %v1237, 7
    %v1239 = vsub.s32 %v1236, %v1238
    %v1240 = vrot.slane %v1226, %v1239
    %v1241 = vcombine.low %v1185, %v1217
    %v1242 = vcombine.high %v1185, %v1217
    %v1243 = vcombine.low %v1192, %v1224
    %v1244 = vcombine.high %v1192, %v1224
    %v1245 = vcombine.low %v1201, %v1233
    %v1246 = vcombine.high %v1201, %v1233
    %v1247 = vcombine.low %v1208, %v1240
    %v1248 = vcombine.high %v1208, %v1240
    %v1249 = vcombine.low %v625, %v629
    %v1250 = vcombine.high %v625, %v629
    %v1252 = vunpack.c.l.s4 1983009808
    %v1253 = vunpack.c.0.s8 %v1252
    %v1254 = vlaneseq
    %v1255 = vshrl.u32 %v1254, 7
    %v1256 = vsub.s32 %v1253, %v1255
    %v1257 = vrot.slane %v1249, %v1256
    %v1259 = vunpack.c.l.s4 1983009808
    %v1260 = vunpack.c.0.s8 %v1259
    %v1261 = vlaneseq
    %v1262 = vshrl.u32 %v1261, 7
    %v1263 = vsub.s32 %v1260, %v1262
    %v1264 = vrot.slane %v1250, %v1263
    %v1265 = vcombine.low %v627, %v631
    %v1266 = vcombine.high %v627, %v631
    %v1268 = vunpack.c.l.s4 1983009808
    %v1269 = vunpack.c.0.s8 %v1268
    %v1270 = vlaneseq
    %v1271 = vshrl.u32 %v1270, 7
    %v1272 = vsub.s32 %v1269, %v1271
    %v1273 = vrot.slane %v1265, %v1272
    %v1275 = vunpack.c.l.s4 1983009808
    %v1276 = vunpack.c.0.s8 %v1275
    %v1277 = vlaneseq
    %v1278 = vshrl.u32 %v1277, 7
    %v1279 = vsub.s32 %v1276, %v1278
    %v1280 = vrot.slane %v1266, %v1279
    %v1281 = vcombine.low %v1257, %v1273
    %v1282 = vcombine.high %v1257, %v1273
    %v1284 = vunpack.c.l.s4 1934713408
    %v1285 = vunpack.c.0.s8 %v1284
    %v1286 = vlaneseq
    %v1287 = vshrl.u32 %v1286, 7
    %v1288 = vsub.s32 %v1285, %v1287
    %v1289 = vrot.slane %v1281, %v1288
    %v1291 = vunpack.c.l.s4 1934713408
    %v1292 = vunpack.c.0.s8 %v1291
    %v1293 = vlaneseq
    %v1294 = vshrl.u32 %v1293, 7
    %v1295 = vsub.s32 %v1292, %v1294
    %v1296 = vrot.slane %v1282, %v1295
    %v1297 = vcombine.low %v1264, %v1280
    %v1298 = vcombine.high %v1264, %v1280
    %v1300 = vunpack.c.l.s4 1934713408
    %v1301 = vunpack.c.0.s8 %v1300
    %v1302 = vlaneseq
    %v1303 = vshrl.u32 %v1302, 7
    %v1304 = vsub.s32 %v1301, %v1303
    %v1305 = vrot.slane %v1297, %v1304
    %v1307 = vunpack.c.l.s4 1934713408
    %v1308 = vunpack.c.0.s8 %v1307
    %v1309 = vlaneseq
    %v1310 = vshrl.u32 %v1309, 7
    %v1311 = vsub.s32 %v1308, %v1310
    %v1312 = vrot.slane %v1298, %v1311
    %v1313 = vcombine.high %v1289, 0.0
    %v1314 = vcombine.high %v1296, 0.0
    %v1315 = vcombine.high %v1305, 0.0
    %v1316 = vcombine.high %v1312, 0.0
    %v1317 = vcombine.low %v562, %v566
    %v1318 = vcombine.high %v562, %v566
    %v1320 = vunpack.c.l.s4 1983009808
    %v1321 = vunpack.c.0.s8 %v1320
    %v1322 = vlaneseq
    %v1323 = vshrl.u32 %v1322, 7
    %v1324 = vsub.s32 %v1321, %v1323
    %v1325 = vrot.slane %v1317, %v1324
    %v1327 = vunpack.c.l.s4 1983009808
    %v1328 = vunpack.c.0.s8 %v1327
    %v1329 = vlaneseq
    %v1330 = vshrl.u32 %v1329, 7
    %v1331 = vsub.s32 %v1328, %v1330
    %v1332 = vrot.slane %v1318, %v1331
    %v1333 = vcombine.low %v564, %v568
    %v1334 = vcombine.high %v564, %v568
    %v1336 = vunpack.c.l.s4 1983009808
    %v1337 = vunpack.c.0.s8 %v1336
    %v1338 = vlaneseq
    %v1339 = vshrl.u32 %v1338, 7
    %v1340 = vsub.s32 %v1337, %v1339
    %v1341 = vrot.slane %v1333, %v1340
    %v1343 = vunpack.c.l.s4 1983009808
    %v1344 = vunpack.c.0.s8 %v1343
    %v1345 = vlaneseq
    %v1346 = vshrl.u32 %v1345, 7
    %v1347 = vsub.s32 %v1344, %v1346
    %v1348 = vrot.slane %v1334, %v1347
    %v1349 = vcombine.low %v570, %v574
    %v1350 = vcombine.high %v570, %v574
    %v1352 = vunpack.c.l.s4 1983009808
    %v1353 = vunpack.c.0.s8 %v1352
    %v1354 = vlaneseq
    %v1355 = vshrl.u32 %v1354, 7
    %v1356 = vsub.s32 %v1353, %v1355
    %v1357 = vrot.slane %v1349, %v1356
    %v1359 = vunpack.c.l.s4 1983009808
    %v1360 = vunpack.c.0.s8 %v1359
    %v1361 = vlaneseq
    %v1362 = vshrl.u32 %v1361, 7
    %v1363 = vsub.s32 %v1360, %v1362
    %v1364 = vrot.slane %v1350, %v1363
    %v1365 = vcombine.low %v572, %v576
    %v1366 = vcombine.high %v572, %v576
    %v1368 = vunpack.c.l.s4 1983009808
    %v1369 = vunpack.c.0.s8 %v1368
    %v1370 = vlaneseq
    %v1371 = vshrl.u32 %v1370, 7
    %v1372 = vsub.s32 %v1369, %v1371
    %v1373 = vrot.slane %v1365, %v1372
    %v1375 = vunpack.c.l.s4 1983009808
    %v1376 = vunpack.c.0.s8 %v1375
    %v1377 = vlaneseq
    %v1378 = vshrl.u32 %v1377, 7
    %v1379 = vsub.s32 %v1376, %v1378
    %v1380 = vrot.slane %v1366, %v1379
    %v1381 = vcombine.low %v1325, %v1341
    %v1382 = vcombine.high %v1325, %v1341
    %v1384 = vunpack.c.l.s4 1934713408
    %v1385 = vunpack.c.0.s8 %v1384
    %v1386 = vlaneseq
    %v1387 = vshrl.u32 %v1386, 7
    %v1388 = vsub.s32 %v1385, %v1387
    %v1389 = vrot.slane %v1381, %v1388
    %v1391 = vunpack.c.l.s4 1934713408
    %v1392 = vunpack.c.0.s8 %v1391
    %v1393 = vlaneseq
    %v1394 = vshrl.u32 %v1393, 7
    %v1395 = vsub.s32 %v1392, %v1394
    %v1396 = vrot.slane %v1382, %v1395
    %v1397 = vcombine.low %v1332, %v1348
    %v1398 = vcombine.high %v1332, %v1348
    %v1400 = vunpack.c.l.s4 1934713408
    %v1401 = vunpack.c.0.s8 %v1400
    %v1402 = vlaneseq
    %v1403 = vshrl.u32 %v1402, 7
    %v1404 = vsub.s32 %v1401, %v1403
    %v1405 = vrot.slane %v1397, %v1404
    %v1407 = vunpack.c.l.s4 1934713408
    %v1408 = vunpack.c.0.s8 %v1407
    %v1409 = vlaneseq
    %v1410 = vshrl.u32 %v1409, 7
    %v1411 = vsub.s32 %v1408, %v1410
    %v1412 = vrot.slane %v1398, %v1411
    %v1413 = vcombine.low %v1357, %v1373
    %v1414 = vcombine.high %v1357, %v1373
    %v1416 = vunpack.c.l.s4 1934713408
    %v1417 = vunpack.c.0.s8 %v1416
    %v1418 = vlaneseq
    %v1419 = vshrl.u32 %v1418, 7
    %v1420 = vsub.s32 %v1417, %v1419
    %v1421 = vrot.slane %v1413, %v1420
    %v1423 = vunpack.c.l.s4 1934713408
    %v1424 = vunpack.c.0.s8 %v1423
    %v1425 = vlaneseq
    %v1426 = vshrl.u32 %v1425, 7
    %v1427 = vsub.s32 %v1424, %v1426
    %v1428 = vrot.slane %v1414, %v1427
    %v1429 = vcombine.low %v1364, %v1380
    %v1430 = vcombine.high %v1364, %v1380
    %v1432 = vunpack.c.l.s4 1934713408
    %v1433 = vunpack.c.0.s8 %v1432
    %v1434 = vlaneseq
    %v1435 = vshrl.u32 %v1434, 7
    %v1436 = vsub.s32 %v1433, %v1435
    %v1437 = vrot.slane %v1429, %v1436
    %v1439 = vunpack.c.l.s4 1934713408
    %v1440 = vunpack.c.0.s8 %v1439
    %v1441 = vlaneseq
    %v1442 = vshrl.u32 %v1441, 7
    %v1443 = vsub.s32 %v1440, %v1442
    %v1444 = vrot.slane %v1430, %v1443
    %v1445 = vcombine.low %v1389, %v1421
    %v1446 = vcombine.high %v1389, %v1421
    %v1447 = vcombine.low %v1396, %v1428
    %v1448 = vcombine.high %v1396, %v1428
    %v1449 = vcombine.low %v1405, %v1437
    %v1450 = vcombine.high %v1405, %v1437
    %v1451 = vcombine.low %v1412, %v1444
    %v1452 = vcombine.high %v1412, %v1444
    %v1453 = vcombine.low %v578, %v582
    %v1454 = vcombine.high %v578, %v582
    %v1456 = vunpack.c.l.s4 1983009808
    %v1457 = vunpack.c.0.s8 %v1456
    %v1458 = vlaneseq
    %v1459 = vshrl.u32 %v1458, 7
    %v1460 = vsub.s32 %v1457, %v1459
    %v1461 = vrot.slane %v1453, %v1460
    %v1463 = vunpack.c.l.s4 1983009808
    %v1464 = vunpack.c.0.s8 %v1463
    %v1465 = vlaneseq
    %v1466 = vshrl.u32 %v1465, 7
    %v1467 = vsub.s32 %v1464, %v1466
    %v1468 = vrot.slane %v1454, %v1467
    %v1469 = vcombine.low %v580, %v584
    %v1470 = vcombine.high %v580, %v584
    %v1472 = vunpack.c.l.s4 1983009808
    %v1473 = vunpack.c.0.s8 %v1472
    %v1474 = vlaneseq
    %v1475 = vshrl.u32 %v1474, 7
    %v1476 = vsub.s32 %v1473, %v1475
    %v1477 = vrot.slane %v1469, %v1476
    %v1479 = vunpack.c.l.s4 1983009808
    %v1480 = vunpack.c.0.s8 %v1479
    %v1481 = vlaneseq
    %v1482 = vshrl.u32 %v1481, 7
    %v1483 = vsub.s32 %v1480, %v1482
    %v1484 = vrot.slane %v1470, %v1483
    %v1485 = vcombine.low %v586, %v590
    %v1486 = vcombine.high %v586, %v590
    %v1488 = vunpack.c.l.s4 1983009808
    %v1489 = vunpack.c.0.s8 %v1488
    %v1490 = vlaneseq
    %v1491 = vshrl.u32 %v1490, 7
    %v1492 = vsub.s32 %v1489, %v1491
    %v1493 = vrot.slane %v1485, %v1492
    %v1495 = vunpack.c.l.s4 1983009808
    %v1496 = vunpack.c.0.s8 %v1495
    %v1497 = vlaneseq
    %v1498 = vshrl.u32 %v1497, 7
    %v1499 = vsub.s32 %v1496, %v1498
    %v1500 = vrot.slane %v1486, %v1499
    %v1501 = vcombine.low %v588, %v592
    %v1502 = vcombine.high %v588, %v592
    %v1504 = vunpack.c.l.s4 1983009808
    %v1505 = vunpack.c.0.s8 %v1504
    %v1506 = vlaneseq
    %v1507 = vshrl.u32 %v1506, 7
    %v1508 = vsub.s32 %v1505, %v1507
    %v1509 = vrot.slane %v1501, %v1508
    %v1511 = vunpack.c.l.s4 1983009808
    %v1512 = vunpack.c.0.s8 %v1511
    %v1513 = vlaneseq
    %v1514 = vshrl.u32 %v1513, 7
    %v1515 = vsub.s32 %v1512, %v1514
    %v1516 = vrot.slane %v1502, %v1515
    %v1517 = vcombine.low %v1461, %v1477
    %v1518 = vcombine.high %v1461, %v1477
    %v1520 = vunpack.c.l.s4 1934713408
    %v1521 = vunpack.c.0.s8 %v1520
    %v1522 = vlaneseq
    %v1523 = vshrl.u32 %v1522, 7
    %v1524 = vsub.s32 %v1521, %v1523
    %v1525 = vrot.slane %v1517, %v1524
    %v1527 = vunpack.c.l.s4 1934713408
    %v1528 = vunpack.c.0.s8 %v1527
    %v1529 = vlaneseq
    %v1530 = vshrl.u32 %v1529, 7
    %v1531 = vsub.s32 %v1528, %v1530
    %v1532 = vrot.slane %v1518, %v1531
    %v1533 = vcombine.low %v1468, %v1484
    %v1534 = vcombine.high %v1468, %v1484
    %v1536 = vunpack.c.l.s4 1934713408
    %v1537 = vunpack.c.0.s8 %v1536
    %v1538 = vlaneseq
    %v1539 = vshrl.u32 %v1538, 7
    %v1540 = vsub.s32 %v1537, %v1539
    %v1541 = vrot.slane %v1533, %v1540
    %v1543 = vunpack.c.l.s4 1934713408
    %v1544 = vunpack.c.0.s8 %v1543
    %v1545 = vlaneseq
    %v1546 = vshrl.u32 %v1545, 7
    %v1547 = vsub.s32 %v1544, %v1546
    %v1548 = vrot.slane %v1534, %v1547
    %v1549 = vcombine.low %v1493, %v1509
    %v1550 = vcombine.high %v1493, %v1509
    %v1552 = vunpack.c.l.s4 1934713408
    %v1553 = vunpack.c.0.s8 %v1552
    %v1554 = vlaneseq
    %v1555 = vshrl.u32 %v1554, 7
    %v1556 = vsub.s32 %v1553, %v1555
    %v1557 = vrot.slane %v1549, %v1556
    %v1559 = vunpack.c.l.s4 1934713408
    %v1560 = vunpack.c.0.s8 %v1559
    %v1561 = vlaneseq
    %v1562 = vshrl.u32 %v1561, 7
    %v1563 = vsub.s32 %v1560, %v1562
    %v1564 = vrot.slane %v1550, %v1563
    %v1565 = vcombine.low %v1500, %v1516
    %v1566 = vcombine.high %v1500, %v1516
    %v1568 = vunpack.c.l.s4 1934713408
    %v1569 = vunpack.c.0.s8 %v1568
    %v1570 = vlaneseq
    %v1571 = vshrl.u32 %v1570, 7
    %v1572 = vsub.s32 %v1569, %v1571
    %v1573 = vrot.slane %v1565, %v1572
    %v1575 = vunpack.c.l.s4 1934713408
    %v1576 = vunpack.c.0.s8 %v1575
    %v1577 = vlaneseq
    %v1578 = vshrl.u32 %v1577, 7
    %v1579 = vsub.s32 %v1576, %v1578
    %v1580 = vrot.slane %v1566, %v1579
    %v1581 = vcombine.low %v1525, %v1557
    %v1582 = vcombine.high %v1525, %v1557
    %v1583 = vcombine.low %v1532, %v1564
    %v1584 = vcombine.high %v1532, %v1564
    %v1585 = vcombine.low %v1541, %v1573
    %v1586 = vcombine.high %v1541, %v1573
    %v1587 = vcombine.low %v1548, %v1580
    %v1588 = vcombine.high %v1548, %v1580
    %v1589 = vcombine.low %v594, %v598
    %v1590 = vcombine.high %v594, %v598
    %v1592 = vunpack.c.l.s4 1983009808
    %v1593 = vunpack.c.0.s8 %v1592
    %v1594 = vlaneseq
    %v1595 = vshrl.u32 %v1594, 7
    %v1596 = vsub.s32 %v1593, %v1595
    %v1597 = vrot.slane %v1589, %v1596
    %v1599 = vunpack.c.l.s4 1983009808
    %v1600 = vunpack.c.0.s8 %v1599
    %v1601 = vlaneseq
    %v1602 = vshrl.u32 %v1601, 7
    %v1603 = vsub.s32 %v1600, %v1602
    %v1604 = vrot.slane %v1590, %v1603
    %v1605 = vcombine.low %v596, %v600
    %v1606 = vcombine.high %v596, %v600
    %v1608 = vunpack.c.l.s4 1983009808
    %v1609 = vunpack.c.0.s8 %v1608
    %v1610 = vlaneseq
    %v1611 = vshrl.u32 %v1610, 7
    %v1612 = vsub.s32 %v1609, %v1611
    %v1613 = vrot.slane %v1605, %v1612
    %v1615 = vunpack.c.l.s4 1983009808
    %v1616 = vunpack.c.0.s8 %v1615
    %v1617 = vlaneseq
    %v1618 = vshrl.u32 %v1617, 7
    %v1619 = vsub.s32 %v1616, %v1618
    %v1620 = vrot.slane %v1606, %v1619
    %v1621 = vcombine.low %v602, %v606
    %v1622 = vcombine.high %v602, %v606
    %v1624 = vunpack.c.l.s4 1983009808
    %v1625 = vunpack.c.0.s8 %v1624
    %v1626 = vlaneseq
    %v1627 = vshrl.u32 %v1626, 7
    %v1628 = vsub.s32 %v1625, %v1627
    %v1629 = vrot.slane %v1621, %v1628
    %v1631 = vunpack.c.l.s4 1983009808
    %v1632 = vunpack.c.0.s8 %v1631
    %v1633 = vlaneseq
    %v1634 = vshrl.u32 %v1633, 7
    %v1635 = vsub.s32 %v1632, %v1634
    %v1636 = vrot.slane %v1622, %v1635
    %v1637 = vcombine.low %v604, %v608
    %v1638 = vcombine.high %v604, %v608
    %v1640 = vunpack.c.l.s4 1983009808
    %v1641 = vunpack.c.0.s8 %v1640
    %v1642 = vlaneseq
    %v1643 = vshrl.u32 %v1642, 7
    %v1644 = vsub.s32 %v1641, %v1643
    %v1645 = vrot.slane %v1637, %v1644
    %v1647 = vunpack.c.l.s4 1983009808
    %v1648 = vunpack.c.0.s8 %v1647
    %v1649 = vlaneseq
    %v1650 = vshrl.u32 %v1649, 7
    %v1651 = vsub.s32 %v1648, %v1650
    %v1652 = vrot.slane %v1638, %v1651
    %v1653 = vcombine.low %v1597, %v1613
    %v1654 = vcombine.high %v1597, %v1613
    %v1656 = vunpack.c.l.s4 1934713408
    %v1657 = vunpack.c.0.s8 %v1656
    %v1658 = vlaneseq
    %v1659 = vshrl.u32 %v1658, 7
    %v1660 = vsub.s32 %v1657, %v1659
    %v1661 = vrot.slane %v1653, %v1660
    %v1663 = vunpack.c.l.s4 1934713408
    %v1664 = vunpack.c.0.s8 %v1663
    %v1665 = vlaneseq
    %v1666 = vshrl.u32 %v1665, 7
    %v1667 = vsub.s32 %v1664, %v1666
    %v1668 = vrot.slane %v1654, %v1667
    %v1669 = vcombine.low %v1604, %v1620
    %v1670 = vcombine.high %v1604, %v1620
    %v1672 = vunpack.c.l.s4 1934713408
    %v1673 = vunpack.c.0.s8 %v1672
    %v1674 = vlaneseq
    %v1675 = vshrl.u32 %v1674, 7
    %v1676 = vsub.s32 %v1673, %v1675
    %v1677 = vrot.slane %v1669, %v1676
    %v1679 = vunpack.c.l.s4 1934713408
    %v1680 = vunpack.c.0.s8 %v1679
    %v1681 = vlaneseq
    %v1682 = vshrl.u32 %v1681, 7
    %v1683 = vsub.s32 %v1680, %v1682
    %v1684 = vrot.slane %v1670, %v1683
    %v1685 = vcombine.low %v1629, %v1645
    %v1686 = vcombine.high %v1629, %v1645
    %v1688 = vunpack.c.l.s4 1934713408
    %v1689 = vunpack.c.0.s8 %v1688
    %v1690 = vlaneseq
    %v1691 = vshrl.u32 %v1690, 7
    %v1692 = vsub.s32 %v1689, %v1691
    %v1693 = vrot.slane %v1685, %v1692
    %v1695 = vunpack.c.l.s4 1934713408
    %v1696 = vunpack.c.0.s8 %v1695
    %v1697 = vlaneseq
    %v1698 = vshrl.u32 %v1697, 7
    %v1699 = vsub.s32 %v1696, %v1698
    %v1700 = vrot.slane %v1686, %v1699
    %v1701 = vcombine.low %v1636, %v1652
    %v1702 = vcombine.high %v1636, %v1652
    %v1704 = vunpack.c.l.s4 1934713408
    %v1705 = vunpack.c.0.s8 %v1704
    %v1706 = vlaneseq
    %v1707 = vshrl.u32 %v1706, 7
    %v1708 = vsub.s32 %v1705, %v1707
    %v1709 = vrot.slane %v1701, %v1708
    %v1711 = vunpack.c.l.s4 1934713408
    %v1712 = vunpack.c.0.s8 %v1711
    %v1713 = vlaneseq
    %v1714 = vshrl.u32 %v1713, 7
    %v1715 = vsub.s32 %v1712, %v1714
    %v1716 = vrot.slane %v1702, %v1715
    %v1717 = vcombine.low %v1661, %v1693
    %v1718 = vcombine.high %v1661, %v1693
    %v1719 = vcombine.low %v1668, %v1700
    %v1720 = vcombine.high %v1668, %v1700
    %v1721 = vcombine.low %v1677, %v1709
    %v1722 = vcombine.high %v1677, %v1709
    %v1723 = vcombine.low %v1684, %v1716
    %v1724 = vcombine.high %v1684, %v1716
    %v1725 = vcombine.low %v610, %v614
    %v1726 = vcombine.high %v610, %v614
    %v1728 = vunpack.c.l.s4 1983009808
    %v1729 = vunpack.c.0.s8 %v1728
    %v1730 = vlaneseq
    %v1731 = vshrl.u32 %v1730, 7
    %v1732 = vsub.s32 %v1729, %v1731
    %v1733 = vrot.slane %v1725, %v1732
    %v1735 = vunpack.c.l.s4 1983009808
    %v1736 = vunpack.c.0.s8 %v1735
    %v1737 = vlaneseq
    %v1738 = vshrl.u32 %v1737, 7
    %v1739 = vsub.s32 %v1736, %v1738
    %v1740 = vrot.slane %v1726, %v1739
    %v1741 = vcombine.low %v612, %v616
    %v1742 = vcombine.high %v612, %v616
    %v1744 = vunpack.c.l.s4 1983009808
    %v1745 = vunpack.c.0.s8 %v1744
    %v1746 = vlaneseq
    %v1747 = vshrl.u32 %v1746, 7
    %v1748 = vsub.s32 %v1745, %v1747
    %v1749 = vrot.slane %v1741, %v1748
    %v1751 = vunpack.c.l.s4 1983009808
    %v1752 = vunpack.c.0.s8 %v1751
    %v1753 = vlaneseq
    %v1754 = vshrl.u32 %v1753, 7
    %v1755 = vsub.s32 %v1752, %v1754
    %v1756 = vrot.slane %v1742, %v1755
    %v1757 = vcombine.low %v618, %v622
    %v1758 = vcombine.high %v618, %v622
    %v1760 = vunpack.c.l.s4 1983009808
    %v1761 = vunpack.c.0.s8 %v1760
    %v1762 = vlaneseq
    %v1763 = vshrl.u32 %v1762, 7
    %v1764 = vsub.s32 %v1761, %v1763
    %v1765 = vrot.slane %v1757, %v1764
    %v1767 = vunpack.c.l.s4 1983009808
    %v1768 = vunpack.c.0.s8 %v1767
    %v1769 = vlaneseq
    %v1770 = vshrl.u32 %v1769, 7
    %v1771 = vsub.s32 %v1768, %v1770
    %v1772 = vrot.slane %v1758, %v1771
    %v1773 = vcombine.low %v620, %v624
    %v1774 = vcombine.high %v620, %v624
    %v1776 = vunpack.c.l.s4 1983009808
    %v1777 = vunpack.c.0.s8 %v1776
    %v1778 = vlaneseq
    %v1779 = vshrl.u32 %v1778, 7
    %v1780 = vsub.s32 %v1777, %v1779
    %v1781 = vrot.slane %v1773, %v1780
    %v1783 = vunpack.c.l.s4 1983009808
    %v1784 = vunpack.c.0.s8 %v1783
    %v1785 = vlaneseq
    %v1786 = vshrl.u32 %v1785, 7
    %v1787 = vsub.s32 %v1784, %v1786
    %v1788 = vrot.slane %v1774, %v1787
    %v1789 = vcombine.low %v1733, %v1749
    %v1790 = vcombine.high %v1733, %v1749
    %v1792 = vunpack.c.l.s4 1934713408
    %v1793 = vunpack.c.0.s8 %v1792
    %v1794 = vlaneseq
    %v1795 = vshrl.u32 %v1794, 7
    %v1796 = vsub.s32 %v1793, %v1795
    %v1797 = vrot.slane %v1789, %v1796
    %v1799 = vunpack.c.l.s4 1934713408
    %v1800 = vunpack.c.0.s8 %v1799
    %v1801 = vlaneseq
    %v1802 = vshrl.u32 %v1801, 7
    %v1803 = vsub.s32 %v1800, %v1802
    %v1804 = vrot.slane %v1790, %v1803
    %v1805 = vcombine.low %v1740, %v1756
    %v1806 = vcombine.high %v1740, %v1756
    %v1808 = vunpack.c.l.s4 1934713408
    %v1809 = vunpack.c.0.s8 %v1808
    %v1810 = vlaneseq
    %v1811 = vshrl.u32 %v1810, 7
    %v1812 = vsub.s32 %v1809, %v1811
    %v1813 = vrot.slane %v1805, %v1812
    %v1815 = vunpack.c.l.s4 1934713408
    %v1816 = vunpack.c.0.s8 %v1815
    %v1817 = vlaneseq
    %v1818 = vshrl.u32 %v1817, 7
    %v1819 = vsub.s32 %v1816, %v1818
    %v1820 = vrot.slane %v1806, %v1819
    %v1821 = vcombine.low %v1765, %v1781
    %v1822 = vcombine.high %v1765, %v1781
    %v1824 = vunpack.c.l.s4 1934713408
    %v1825 = vunpack.c.0.s8 %v1824
    %v1826 = vlaneseq
    %v1827 = vshrl.u32 %v1826, 7
    %v1828 = vsub.s32 %v1825, %v1827
    %v1829 = vrot.slane %v1821, %v1828
    %v1831 = vunpack.c.l.s4 1934713408
    %v1832 = vunpack.c.0.s8 %v1831
    %v1833 = vlaneseq
    %v1834 = vshrl.u32 %v1833, 7
    %v1835 = vsub.s32 %v1832, %v1834
    %v1836 = vrot.slane %v1822, %v1835
    %v1837 = vcombine.low %v1772, %v1788
    %v1838 = vcombine.high %v1772, %v1788
    %v1840 = vunpack.c.l.s4 1934713408
    %v1841 = vunpack.c.0.s8 %v1840
    %v1842 = vlaneseq
    %v1843 = vshrl.u32 %v1842, 7
    %v1844 = vsub.s32 %v1841, %v1843
    %v1845 = vrot.slane %v1837, %v1844
    %v1847 = vunpack.c.l.s4 1934713408
    %v1848 = vunpack.c.0.s8 %v1847
    %v1849 = vlaneseq
    %v1850 = vshrl.u32 %v1849, 7
    %v1851 = vsub.s32 %v1848, %v1850
    %v1852 = vrot.slane %v1838, %v1851
    %v1853 = vcombine.low %v1797, %v1829
    %v1854 = vcombine.high %v1797, %v1829
    %v1855 = vcombine.low %v1804, %v1836
    %v1856 = vcombine.high %v1804, %v1836
    %v1857 = vcombine.low %v1813, %v1845
    %v1858 = vcombine.high %v1813, %v1845
    %v1859 = vcombine.low %v1820, %v1852
    %v1860 = vcombine.high %v1820, %v1852
    %v1861 = vcombine.low %v626, %v630
    %v1862 = vcombine.high %v626, %v630
    %v1864 = vunpack.c.l.s4 1983009808
    %v1865 = vunpack.c.0.s8 %v1864
    %v1866 = vlaneseq
    %v1867 = vshrl.u32 %v1866, 7
    %v1868 = vsub.s32 %v1865, %v1867
    %v1869 = vrot.slane %v1861, %v1868
    %v1871 = vunpack.c.l.s4 1983009808
    %v1872 = vunpack.c.0.s8 %v1871
    %v1873 = vlaneseq
    %v1874 = vshrl.u32 %v1873, 7
    %v1875 = vsub.s32 %v1872, %v1874
    %v1876 = vrot.slane %v1862, %v1875
    %v1877 = vcombine.low %v628, %v632
    %v1878 = vcombine.high %v628, %v632
    %v1880 = vunpack.c.l.s4 1983009808
    %v1881 = vunpack.c.0.s8 %v1880
    %v1882 = vlaneseq
    %v1883 = vshrl.u32 %v1882, 7
    %v1884 = vsub.s32 %v1881, %v1883
    %v1885 = vrot.slane %v1877, %v1884
    %v1887 = vunpack.c.l.s4 1983009808
    %v1888 = vunpack.c.0.s8 %v1887
    %v1889 = vlaneseq
    %v1890 = vshrl.u32 %v1889, 7
    %v1891 = vsub.s32 %v1888, %v1890
    %v1892 = vrot.slane %v1878, %v1891
    %v1893 = vcombine.low %v1869, %v1885
    %v1894 = vcombine.high %v1869, %v1885
    %v1896 = vunpack.c.l.s4 1934713408
    %v1897 = vunpack.c.0.s8 %v1896
    %v1898 = vlaneseq
    %v1899 = vshrl.u32 %v1898, 7
    %v1900 = vsub.s32 %v1897, %v1899
    %v1901 = vrot.slane %v1893, %v1900
    %v1903 = vunpack.c.l.s4 1934713408
    %v1904 = vunpack.c.0.s8 %v1903
    %v1905 = vlaneseq
    %v1906 = vshrl.u32 %v1905, 7
    %v1907 = vsub.s32 %v1904, %v1906
    %v1908 = vrot.slane %v1894, %v1907
    %v1909 = vcombine.low %v1876, %v1892
    %v1910 = vcombine.high %v1876, %v1892
    %v1912 = vunpack.c.l.s4 1934713408
    %v1913 = vunpack.c.0.s8 %v1912
    %v1914 = vlaneseq
    %v1915 = vshrl.u32 %v1914, 7
    %v1916 = vsub.s32 %v1913, %v1915
    %v1917 = vrot.slane %v1909, %v1916
    %v1919 = vunpack.c.l.s4 1934713408
    %v1920 = vunpack.c.0.s8 %v1919
    %v1921 = vlaneseq
    %v1922 = vshrl.u32 %v1921, 7
    %v1923 = vsub.s32 %v1920, %v1922
    %v1924 = vrot.slane %v1910, %v1923
    %v1925 = vcombine.high %v1901, 0.0
    %v1926 = vcombine.high %v1908, 0.0
    %v1927 = vcombine.high %v1917, 0.0
    %v1928 = vcombine.high %v1924, 0.0
    %v1929 = vcombine.low %v633, %v637
    %v1930 = vcombine.high %v633, %v637
    %v1932 = vunpack.c.l.s4 1983009808
    %v1933 = vunpack.c.0.s8 %v1932
    %v1934 = vlaneseq
    %v1935 = vshrl.u32 %v1934, 7
    %v1936 = vsub.s32 %v1933, %v1935
    %v1937 = vrot.slane %v1929, %v1936
    %v1939 = vunpack.c.l.s4 1983009808
    %v1940 = vunpack.c.0.s8 %v1939
    %v1941 = vlaneseq
    %v1942 = vshrl.u32 %v1941, 7
    %v1943 = vsub.s32 %v1940, %v1942
    %v1944 = vrot.slane %v1930, %v1943
    %v1945 = vcombine.low %v635, %v639
    %v1946 = vcombine.high %v635, %v639
    %v1948 = vunpack.c.l.s4 1983009808
    %v1949 = vunpack.c.0.s8 %v1948
    %v1950 = vlaneseq
    %v1951 = vshrl.u32 %v1950, 7
    %v1952 = vsub.s32 %v1949, %v1951
    %v1953 = vrot.slane %v1945, %v1952
    %v1955 = vunpack.c.l.s4 1983009808
    %v1956 = vunpack.c.0.s8 %v1955
    %v1957 = vlaneseq
    %v1958 = vshrl.u32 %v1957, 7
    %v1959 = vsub.s32 %v1956, %v1958
    %v1960 = vrot.slane %v1946, %v1959
    %v1961 = vcombine.low %v641, %v645
    %v1962 = vcombine.high %v641, %v645
    %v1964 = vunpack.c.l.s4 1983009808
    %v1965 = vunpack.c.0.s8 %v1964
    %v1966 = vlaneseq
    %v1967 = vshrl.u32 %v1966, 7
    %v1968 = vsub.s32 %v1965, %v1967
    %v1969 = vrot.slane %v1961, %v1968
    %v1971 = vunpack.c.l.s4 1983009808
    %v1972 = vunpack.c.0.s8 %v1971
    %v1973 = vlaneseq
    %v1974 = vshrl.u32 %v1973, 7
    %v1975 = vsub.s32 %v1972, %v1974
    %v1976 = vrot.slane %v1962, %v1975
    %v1977 = vcombine.low %v643, %v647
    %v1978 = vcombine.high %v643, %v647
    %v1980 = vunpack.c.l.s4 1983009808
    %v1981 = vunpack.c.0.s8 %v1980
    %v1982 = vlaneseq
    %v1983 = vshrl.u32 %v1982, 7
    %v1984 = vsub.s32 %v1981, %v1983
    %v1985 = vrot.slane %v1977, %v1984
    %v1987 = vunpack.c.l.s4 1983009808
    %v1988 = vunpack.c.0.s8 %v1987
    %v1989 = vlaneseq
    %v1990 = vshrl.u32 %v1989, 7
    %v1991 = vsub.s32 %v1988, %v1990
    %v1992 = vrot.slane %v1978, %v1991
    %v1993 = vcombine.low %v1937, %v1953
    %v1994 = vcombine.high %v1937, %v1953
    %v1996 = vunpack.c.l.s4 1934713408
    %v1997 = vunpack.c.0.s8 %v1996
    %v1998 = vlaneseq
    %v1999 = vshrl.u32 %v1998, 7
    %v2000 = vsub.s32 %v1997, %v1999
    %v2001 = vrot.slane %v1993, %v2000
    %v2003 = vunpack.c.l.s4 1934713408
    %v2004 = vunpack.c.0.s8 %v2003
    %v2005 = vlaneseq
    %v2006 = vshrl.u32 %v2005, 7
    %v2007 = vsub.s32 %v2004, %v2006
    %v2008 = vrot.slane %v1994, %v2007
    %v2009 = vcombine.low %v1944, %v1960
    %v2010 = vcombine.high %v1944, %v1960
    %v2012 = vunpack.c.l.s4 1934713408
    %v2013 = vunpack.c.0.s8 %v2012
    %v2014 = vlaneseq
    %v2015 = vshrl.u32 %v2014, 7
    %v2016 = vsub.s32 %v2013, %v2015
    %v2017 = vrot.slane %v2009, %v2016
    %v2019 = vunpack.c.l.s4 1934713408
    %v2020 = vunpack.c.0.s8 %v2019
    %v2021 = vlaneseq
    %v2022 = vshrl.u32 %v2021, 7
    %v2023 = vsub.s32 %v2020, %v2022
    %v2024 = vrot.slane %v2010, %v2023
    %v2025 = vcombine.low %v1969, %v1985
    %v2026 = vcombine.high %v1969, %v1985
    %v2028 = vunpack.c.l.s4 1934713408
    %v2029 = vunpack.c.0.s8 %v2028
    %v2030 = vlaneseq
    %v2031 = vshrl.u32 %v2030, 7
    %v2032 = vsub.s32 %v2029, %v2031
    %v2033 = vrot.slane %v2025, %v2032
    %v2035 = vunpack.c.l.s4 1934713408
    %v2036 = vunpack.c.0.s8 %v2035
    %v2037 = vlaneseq
    %v2038 = vshrl.u32 %v2037, 7
    %v2039 = vsub.s32 %v2036, %v2038
    %v2040 = vrot.slane %v2026, %v2039
    %v2041 = vcombine.low %v1976, %v1992
    %v2042 = vcombine.high %v1976, %v1992
    %v2044 = vunpack.c.l.s4 1934713408
    %v2045 = vunpack.c.0.s8 %v2044
    %v2046 = vlaneseq
    %v2047 = vshrl.u32 %v2046, 7
    %v2048 = vsub.s32 %v2045, %v2047
    %v2049 = vrot.slane %v2041, %v2048
    %v2051 = vunpack.c.l.s4 1934713408
    %v2052 = vunpack.c.0.s8 %v2051
    %v2053 = vlaneseq
    %v2054 = vshrl.u32 %v2053, 7
    %v2055 = vsub.s32 %v2052, %v2054
    %v2056 = vrot.slane %v2042, %v2055
    %v2057 = vcombine.low %v2001, %v2033
    %v2058 = vcombine.high %v2001, %v2033
    %v2059 = vcombine.low %v2008, %v2040
    %v2060 = vcombine.high %v2008, %v2040
    %v2061 = vcombine.low %v2017, %v2049
    %v2062 = vcombine.high %v2017, %v2049
    %v2063 = vcombine.low %v2024, %v2056
    %v2064 = vcombine.high %v2024, %v2056
    %v2065 = vcombine.low %v649, %v653
    %v2066 = vcombine.high %v649, %v653
    %v2068 = vunpack.c.l.s4 1983009808
    %v2069 = vunpack.c.0.s8 %v2068
    %v2070 = vlaneseq
    %v2071 = vshrl.u32 %v2070, 7
    %v2072 = vsub.s32 %v2069, %v2071
    %v2073 = vrot.slane %v2065, %v2072
    %v2075 = vunpack.c.l.s4 1983009808
    %v2076 = vunpack.c.0.s8 %v2075
    %v2077 = vlaneseq
    %v2078 = vshrl.u32 %v2077, 7
    %v2079 = vsub.s32 %v2076, %v2078
    %v2080 = vrot.slane %v2066, %v2079
    %v2081 = vcombine.low %v651, %v655
    %v2082 = vcombine.high %v651, %v655
    %v2084 = vunpack.c.l.s4 1983009808
    %v2085 = vunpack.c.0.s8 %v2084
    %v2086 = vlaneseq
    %v2087 = vshrl.u32 %v2086, 7
    %v2088 = vsub.s32 %v2085, %v2087
    %v2089 = vrot.slane %v2081, %v2088
    %v2091 = vunpack.c.l.s4 1983009808
    %v2092 = vunpack.c.0.s8 %v2091
    %v2093 = vlaneseq
    %v2094 = vshrl.u32 %v2093, 7
    %v2095 = vsub.s32 %v2092, %v2094
    %v2096 = vrot.slane %v2082, %v2095
    %v2097 = vcombine.low %v657, %v661
    %v2098 = vcombine.high %v657, %v661
    %v2100 = vunpack.c.l.s4 1983009808
    %v2101 = vunpack.c.0.s8 %v2100
    %v2102 = vlaneseq
    %v2103 = vshrl.u32 %v2102, 7
    %v2104 = vsub.s32 %v2101, %v2103
    %v2105 = vrot.slane %v2097, %v2104
    %v2107 = vunpack.c.l.s4 1983009808
    %v2108 = vunpack.c.0.s8 %v2107
    %v2109 = vlaneseq
    %v2110 = vshrl.u32 %v2109, 7
    %v2111 = vsub.s32 %v2108, %v2110
    %v2112 = vrot.slane %v2098, %v2111
    %v2113 = vcombine.low %v659, %v663
    %v2114 = vcombine.high %v659, %v663
    %v2116 = vunpack.c.l.s4 1983009808
    %v2117 = vunpack.c.0.s8 %v2116
    %v2118 = vlaneseq
    %v2119 = vshrl.u32 %v2118, 7
    %v2120 = vsub.s32 %v2117, %v2119
    %v2121 = vrot.slane %v2113, %v2120
    %v2123 = vunpack.c.l.s4 1983009808
    %v2124 = vunpack.c.0.s8 %v2123
    %v2125 = vlaneseq
    %v2126 = vshrl.u32 %v2125, 7
    %v2127 = vsub.s32 %v2124, %v2126
    %v2128 = vrot.slane %v2114, %v2127
    %v2129 = vcombine.low %v2073, %v2089
    %v2130 = vcombine.high %v2073, %v2089
    %v2132 = vunpack.c.l.s4 1934713408
    %v2133 = vunpack.c.0.s8 %v2132
    %v2134 = vlaneseq
    %v2135 = vshrl.u32 %v2134, 7
    %v2136 = vsub.s32 %v2133, %v2135
    %v2137 = vrot.slane %v2129, %v2136
    %v2139 = vunpack.c.l.s4 1934713408
    %v2140 = vunpack.c.0.s8 %v2139
    %v2141 = vlaneseq
    %v2142 = vshrl.u32 %v2141, 7
    %v2143 = vsub.s32 %v2140, %v2142
    %v2144 = vrot.slane %v2130, %v2143
    %v2145 = vcombine.low %v2080, %v2096
    %v2146 = vcombine.high %v2080, %v2096
    %v2148 = vunpack.c.l.s4 1934713408
    %v2149 = vunpack.c.0.s8 %v2148
    %v2150 = vlaneseq
    %v2151 = vshrl.u32 %v2150, 7
    %v2152 = vsub.s32 %v2149, %v2151
    %v2153 = vrot.slane %v2145, %v2152
    %v2155 = vunpack.c.l.s4 1934713408
    %v2156 = vunpack.c.0.s8 %v2155
    %v2157 = vlaneseq
    %v2158 = vshrl.u32 %v2157, 7
    %v2159 = vsub.s32 %v2156, %v2158
    %v2160 = vrot.slane %v2146, %v2159
    %v2161 = vcombine.low %v2105, %v2121
    %v2162 = vcombine.high %v2105, %v2121
    %v2164 = vunpack.c.l.s4 1934713408
    %v2165 = vunpack.c.0.s8 %v2164
    %v2166 = vlaneseq
    %v2167 = vshrl.u32 %v2166, 7
    %v2168 = vsub.s32 %v2165, %v2167
    %v2169 = vrot.slane %v2161, %v2168
    %v2171 = vunpack.c.l.s4 1934713408
    %v2172 = vunpack.c.0.s8 %v2171
    %v2173 = vlaneseq
    %v2174 = vshrl.u32 %v2173, 7
    %v2175 = vsub.s32 %v2172, %v2174
    %v2176 = vrot.slane %v2162, %v2175
    %v2177 = vcombine.low %v2112, %v2128
    %v2178 = vcombine.high %v2112, %v2128
    %v2180 = vunpack.c.l.s4 1934713408
    %v2181 = vunpack.c.0.s8 %v2180
    %v2182 = vlaneseq
    %v2183 = vshrl.u32 %v2182, 7
    %v2184 = vsub.s32 %v2181, %v2183
    %v2185 = vrot.slane %v2177, %v2184
    %v2187 = vunpack.c.l.s4 1934713408
    %v2188 = vunpack.c.0.s8 %v2187
    %v2189 = vlaneseq
    %v2190 = vshrl.u32 %v2189, 7
    %v2191 = vsub.s32 %v2188, %v2190
    %v2192 = vrot.slane %v2178, %v2191
    %v2193 = vcombine.low %v2137, %v2169
    %v2194 = vcombine.high %v2137, %v2169
    %v2195 = vcombine.low %v2144, %v2176
    %v2196 = vcombine.high %v2144, %v2176
    %v2197 = vcombine.low %v2153, %v2185
    %v2198 = vcombine.high %v2153, %v2185
    %v2199 = vcombine.low %v2160, %v2192
    %v2200 = vcombine.high %v2160, %v2192
    %v2201 = vcombine.low %v665, %v669
    %v2202 = vcombine.high %v665, %v669
    %v2204 = vunpack.c.l.s4 1983009808
    %v2205 = vunpack.c.0.s8 %v2204
    %v2206 = vlaneseq
    %v2207 = vshrl.u32 %v2206, 7
    %v2208 = vsub.s32 %v2205, %v2207
    %v2209 = vrot.slane %v2201, %v2208
    %v2211 = vunpack.c.l.s4 1983009808
    %v2212 = vunpack.c.0.s8 %v2211
    %v2213 = vlaneseq
    %v2214 = vshrl.u32 %v2213, 7
    %v2215 = vsub.s32 %v2212, %v2214
    %v2216 = vrot.slane %v2202, %v2215
    %v2217 = vcombine.low %v667, %v671
    %v2218 = vcombine.high %v667, %v671
    %v2220 = vunpack.c.l.s4 1983009808
    %v2221 = vunpack.c.0.s8 %v2220
    %v2222 = vlaneseq
    %v2223 = vshrl.u32 %v2222, 7
    %v2224 = vsub.s32 %v2221, %v2223
    %v2225 = vrot.slane %v2217, %v2224
    %v2227 = vunpack.c.l.s4 1983009808
    %v2228 = vunpack.c.0.s8 %v2227
    %v2229 = vlaneseq
    %v2230 = vshrl.u32 %v2229, 7
    %v2231 = vsub.s32 %v2228, %v2230
    %v2232 = vrot.slane %v2218, %v2231
    %v2233 = vcombine.low %v673, %v677
    %v2234 = vcombine.high %v673, %v677
    %v2236 = vunpack.c.l.s4 1983009808
    %v2237 = vunpack.c.0.s8 %v2236
    %v2238 = vlaneseq
    %v2239 = vshrl.u32 %v2238, 7
    %v2240 = vsub.s32 %v2237, %v2239
    %v2241 = vrot.slane %v2233, %v2240
    %v2243 = vunpack.c.l.s4 1983009808
    %v2244 = vunpack.c.0.s8 %v2243
    %v2245 = vlaneseq
    %v2246 = vshrl.u32 %v2245, 7
    %v2247 = vsub.s32 %v2244, %v2246
    %v2248 = vrot.slane %v2234, %v2247
    %v2249 = vcombine.low %v675, %v679
    %v2250 = vcombine.high %v675, %v679
    %v2252 = vunpack.c.l.s4 1983009808
    %v2253 = vunpack.c.0.s8 %v2252
    %v2254 = vlaneseq
    %v2255 = vshrl.u32 %v2254, 7
    %v2256 = vsub.s32 %v2253, %v2255
    %v2257 = vrot.slane %v2249, %v2256
    %v2259 = vunpack.c.l.s4 1983009808
    %v2260 = vunpack.c.0.s8 %v2259
    %v2261 = vlaneseq
    %v2262 = vshrl.u32 %v2261, 7
    %v2263 = vsub.s32 %v2260, %v2262
    %v2264 = vrot.slane %v2250, %v2263
    %v2265 = vcombine.low %v2209, %v2225
    %v2266 = vcombine.high %v2209, %v2225
    %v2268 = vunpack.c.l.s4 1934713408
    %v2269 = vunpack.c.0.s8 %v2268
    %v2270 = vlaneseq
    %v2271 = vshrl.u32 %v2270, 7
    %v2272 = vsub.s32 %v2269, %v2271
    %v2273 = vrot.slane %v2265, %v2272
    %v2275 = vunpack.c.l.s4 1934713408
    %v2276 = vunpack.c.0.s8 %v2275
    %v2277 = vlaneseq
    %v2278 = vshrl.u32 %v2277, 7
    %v2279 = vsub.s32 %v2276, %v2278
    %v2280 = vrot.slane %v2266, %v2279
    %v2281 = vcombine.low %v2216, %v2232
    %v2282 = vcombine.high %v2216, %v2232
    %v2284 = vunpack.c.l.s4 1934713408
    %v2285 = vunpack.c.0.s8 %v2284
    %v2286 = vlaneseq
    %v2287 = vshrl.u32 %v2286, 7
    %v2288 = vsub.s32 %v2285, %v2287
    %v2289 = vrot.slane %v2281, %v2288
    %v2291 = vunpack.c.l.s4 1934713408
    %v2292 = vunpack.c.0.s8 %v2291
    %v2293 = vlaneseq
    %v2294 = vshrl.u32 %v2293, 7
    %v2295 = vsub.s32 %v2292, %v2294
    %v2296 = vrot.slane %v2282, %v2295
    %v2297 = vcombine.low %v2241, %v2257
    %v2298 = vcombine.high %v2241, %v2257
    %v2300 = vunpack.c.l.s4 1934713408
    %v2301 = vunpack.c.0.s8 %v2300
    %v2302 = vlaneseq
    %v2303 = vshrl.u32 %v2302, 7
    %v2304 = vsub.s32 %v2301, %v2303
    %v2305 = vrot.slane %v2297, %v2304
    %v2307 = vunpack.c.l.s4 1934713408
    %v2308 = vunpack.c.0.s8 %v2307
    %v2309 = vlaneseq
    %v2310 = vshrl.u32 %v2309, 7
    %v2311 = vsub.s32 %v2308, %v2310
    %v2312 = vrot.slane %v2298, %v2311
    %v2313 = vcombine.low %v2248, %v2264
    %v2314 = vcombine.high %v2248, %v2264
    %v2316 = vunpack.c.l.s4 1934713408
    %v2317 = vunpack.c.0.s8 %v2316
    %v2318 = vlaneseq
    %v2319 = vshrl.u32 %v2318, 7
    %v2320 = vsub.s32 %v2317, %v2319
    %v2321 = vrot.slane %v2313, %v2320
    %v2323 = vunpack.c.l.s4 1934713408
    %v2324 = vunpack.c.0.s8 %v2323
    %v2325 = vlaneseq
    %v2326 = vshrl.u32 %v2325, 7
    %v2327 = vsub.s32 %v2324, %v2326
    %v2328 = vrot.slane %v2314, %v2327
    %v2329 = vcombine.low %v2273, %v2305
    %v2330 = vcombine.high %v2273, %v2305
    %v2331 = vcombine.low %v2280, %v2312
    %v2332 = vcombine.high %v2280, %v2312
    %v2333 = vcombine.low %v2289, %v2321
    %v2334 = vcombine.high %v2289, %v2321
    %v2335 = vcombine.low %v2296, %v2328
    %v2336 = vcombine.high %v2296, %v2328
    %v2337 = vcombine.low %v681, %v685
    %v2338 = vcombine.high %v681, %v685
    %v2340 = vunpack.c.l.s4 1983009808
    %v2341 = vunpack.c.0.s8 %v2340
    %v2342 = vlaneseq
    %v2343 = vshrl.u32 %v2342, 7
    %v2344 = vsub.s32 %v2341, %v2343
    %v2345 = vrot.slane %v2337, %v2344
    %v2347 = vunpack.c.l.s4 1983009808
    %v2348 = vunpack.c.0.s8 %v2347
    %v2349 = vlaneseq
    %v2350 = vshrl.u32 %v2349, 7
    %v2351 = vsub.s32 %v2348, %v2350
    %v2352 = vrot.slane %v2338, %v2351
    %v2353 = vcombine.low %v683, %v687
    %v2354 = vcombine.high %v683, %v687
    %v2356 = vunpack.c.l.s4 1983009808
    %v2357 = vunpack.c.0.s8 %v2356
    %v2358 = vlaneseq
    %v2359 = vshrl.u32 %v2358, 7
    %v2360 = vsub.s32 %v2357, %v2359
    %v2361 = vrot.slane %v2353, %v2360
    %v2363 = vunpack.c.l.s4 1983009808
    %v2364 = vunpack.c.0.s8 %v2363
    %v2365 = vlaneseq
    %v2366 = vshrl.u32 %v2365, 7
    %v2367 = vsub.s32 %v2364, %v2366
    %v2368 = vrot.slane %v2354, %v2367
    %v2369 = vcombine.low %v689, %v693
    %v2370 = vcombine.high %v689, %v693
    %v2372 = vunpack.c.l.s4 1983009808
    %v2373 = vunpack.c.0.s8 %v2372
    %v2374 = vlaneseq
    %v2375 = vshrl.u32 %v2374, 7
    %v2376 = vsub.s32 %v2373, %v2375
    %v2377 = vrot.slane %v2369, %v2376
    %v2379 = vunpack.c.l.s4 1983009808
    %v2380 = vunpack.c.0.s8 %v2379
    %v2381 = vlaneseq
    %v2382 = vshrl.u32 %v2381, 7
    %v2383 = vsub.s32 %v2380, %v2382
    %v2384 = vrot.slane %v2370, %v2383
    %v2385 = vcombine.low %v691, %v695
    %v2386 = vcombine.high %v691, %v695
    %v2388 = vunpack.c.l.s4 1983009808
    %v2389 = vunpack.c.0.s8 %v2388
    %v2390 = vlaneseq
    %v2391 = vshrl.u32 %v2390, 7
    %v2392 = vsub.s32 %v2389, %v2391
    %v2393 = vrot.slane %v2385, %v2392
    %v2395 = vunpack.c.l.s4 1983009808
    %v2396 = vunpack.c.0.s8 %v2395
    %v2397 = vlaneseq
    %v2398 = vshrl.u32 %v2397, 7
    %v2399 = vsub.s32 %v2396, %v2398
    %v2400 = vrot.slane %v2386, %v2399
    %v2401 = vcombine.low %v2345, %v2361
    %v2402 = vcombine.high %v2345, %v2361
    %v2404 = vunpack.c.l.s4 1934713408
    %v2405 = vunpack.c.0.s8 %v2404
    %v2406 = vlaneseq
    %v2407 = vshrl.u32 %v2406, 7
    %v2408 = vsub.s32 %v2405, %v2407
    %v2409 = vrot.slane %v2401, %v2408
    %v2411 = vunpack.c.l.s4 1934713408
    %v2412 = vunpack.c.0.s8 %v2411
    %v2413 = vlaneseq
    %v2414 = vshrl.u32 %v2413, 7
    %v2415 = vsub.s32 %v2412, %v2414
    %v2416 = vrot.slane %v2402, %v2415
    %v2417 = vcombine.low %v2352, %v2368
    %v2418 = vcombine.high %v2352, %v2368
    %v2420 = vunpack.c.l.s4 1934713408
    %v2421 = vunpack.c.0.s8 %v2420
    %v2422 = vlaneseq
    %v2423 = vshrl.u32 %v2422, 7
    %v2424 = vsub.s32 %v2421, %v2423
    %v2425 = vrot.slane %v2417, %v2424
    %v2427 = vunpack.c.l.s4 1934713408
    %v2428 = vunpack.c.0.s8 %v2427
    %v2429 = vlaneseq
    %v2430 = vshrl.u32 %v2429, 7
    %v2431 = vsub.s32 %v2428, %v2430
    %v2432 = vrot.slane %v2418, %v2431
    %v2433 = vcombine.low %v2377, %v2393
    %v2434 = vcombine.high %v2377, %v2393
    %v2436 = vunpack.c.l.s4 1934713408
    %v2437 = vunpack.c.0.s8 %v2436
    %v2438 = vlaneseq
    %v2439 = vshrl.u32 %v2438, 7
    %v2440 = vsub.s32 %v2437, %v2439
    %v2441 = vrot.slane %v2433, %v2440
    %v2443 = vunpack.c.l.s4 1934713408
    %v2444 = vunpack.c.0.s8 %v2443
    %v2445 = vlaneseq
    %v2446 = vshrl.u32 %v2445, 7
    %v2447 = vsub.s32 %v2444, %v2446
    %v2448 = vrot.slane %v2434, %v2447
    %v2449 = vcombine.low %v2384, %v2400
    %v2450 = vcombine.high %v2384, %v2400
    %v2452 = vunpack.c.l.s4 1934713408
    %v2453 = vunpack.c.0.s8 %v2452
    %v2454 = vlaneseq
    %v2455 = vshrl.u32 %v2454, 7
    %v2456 = vsub.s32 %v2453, %v2455
    %v2457 = vrot.slane %v2449, %v2456
    %v2459 = vunpack.c.l.s4 1934713408
    %v2460 = vunpack.c.0.s8 %v2459
    %v2461 = vlaneseq
    %v2462 = vshrl.u32 %v2461, 7
    %v2463 = vsub.s32 %v2460, %v2462
    %v2464 = vrot.slane %v2450, %v2463
    %v2465 = vcombine.low %v2409, %v2441
    %v2466 = vcombine.high %v2409, %v2441
    %v2467 = vcombine.low %v2416, %v2448
    %v2468 = vcombine.high %v2416, %v2448
    %v2469 = vcombine.low %v2425, %v2457
    %v2470 = vcombine.high %v2425, %v2457
    %v2471 = vcombine.low %v2432, %v2464
    %v2472 = vcombine.high %v2432, %v2464
    %v2473 = vcombine.low %v697, %v701
    %v2474 = vcombine.high %v697, %v701
    %v2476 = vunpack.c.l.s4 1983009808
    %v2477 = vunpack.c.0.s8 %v2476
    %v2478 = vlaneseq
    %v2479 = vshrl.u32 %v2478, 7
    %v2480 = vsub.s32 %v2477, %v2479
    %v2481 = vrot.slane %v2473, %v2480
    %v2483 = vunpack.c.l.s4 1983009808
    %v2484 = vunpack.c.0.s8 %v2483
    %v2485 = vlaneseq
    %v2486 = vshrl.u32 %v2485, 7
    %v2487 = vsub.s32 %v2484, %v2486
    %v2488 = vrot.slane %v2474, %v2487
    %v2489 = vcombine.low %v699, %v703
    %v2490 = vcombine.high %v699, %v703
    %v2492 = vunpack.c.l.s4 1983009808
    %v2493 = vunpack.c.0.s8 %v2492
    %v2494 = vlaneseq
    %v2495 = vshrl.u32 %v2494, 7
    %v2496 = vsub.s32 %v2493, %v2495
    %v2497 = vrot.slane %v2489, %v2496
    %v2499 = vunpack.c.l.s4 1983009808
    %v2500 = vunpack.c.0.s8 %v2499
    %v2501 = vlaneseq
    %v2502 = vshrl.u32 %v2501, 7
    %v2503 = vsub.s32 %v2500, %v2502
    %v2504 = vrot.slane %v2490, %v2503
    %v2505 = vcombine.low %v2481, %v2497
    %v2506 = vcombine.high %v2481, %v2497
    %v2508 = vunpack.c.l.s4 1934713408
    %v2509 = vunpack.c.0.s8 %v2508
    %v2510 = vlaneseq
    %v2511 = vshrl.u32 %v2510, 7
    %v2512 = vsub.s32 %v2509, %v2511
    %v2513 = vrot.slane %v2505, %v2512
    %v2515 = vunpack.c.l.s4 1934713408
    %v2516 = vunpack.c.0.s8 %v2515
    %v2517 = vlaneseq
    %v2518 = vshrl.u32 %v2517, 7
    %v2519 = vsub.s32 %v2516, %v2518
    %v2520 = vrot.slane %v2506, %v2519
    %v2521 = vcombine.low %v2488, %v2504
    %v2522 = vcombine.high %v2488, %v2504
    %v2524 = vunpack.c.l.s4 1934713408
    %v2525 = vunpack.c.0.s8 %v2524
    %v2526 = vlaneseq
    %v2527 = vshrl.u32 %v2526, 7
    %v2528 = vsub.s32 %v2525, %v2527
    %v2529 = vrot.slane %v2521, %v2528
    %v2531 = vunpack.c.l.s4 1934713408
    %v2532 = vunpack.c.0.s8 %v2531
    %v2533 = vlaneseq
    %v2534 = vshrl.u32 %v2533, 7
    %v2535 = vsub.s32 %v2532, %v2534
    %v2536 = vrot.slane %v2522, %v2535
    %v2537 = vcombine.high %v2513, 0.0
    %v2538 = vcombine.high %v2520, 0.0
    %v2539 = vcombine.high %v2529, 0.0
    %v2540 = vcombine.high %v2536, 0.0
    %v2541 = vcombine.low %v634, %v638
    %v2542 = vcombine.high %v634, %v638
    %v2544 = vunpack.c.l.s4 1983009808
    %v2545 = vunpack.c.0.s8 %v2544
    %v2546 = vlaneseq
    %v2547 = vshrl.u32 %v2546, 7
    %v2548 = vsub.s32 %v2545, %v2547
    %v2549 = vrot.slane %v2541, %v2548
    %v2551 = vunpack.c.l.s4 1983009808
    %v2552 = vunpack.c.0.s8 %v2551
    %v2553 = vlaneseq
    %v2554 = vshrl.u32 %v2553, 7
    %v2555 = vsub.s32 %v2552, %v2554
    %v2556 = vrot.slane %v2542, %v2555
    %v2557 = vcombine.low %v636, %v640
    %v2558 = vcombine.high %v636, %v640
    %v2560 = vunpack.c.l.s4 1983009808
    %v2561 = vunpack.c.0.s8 %v2560
    %v2562 = vlaneseq
    %v2563 = vshrl.u32 %v2562, 7
    %v2564 = vsub.s32 %v2561, %v2563
    %v2565 = vrot.slane %v2557, %v2564
    %v2567 = vunpack.c.l.s4 1983009808
    %v2568 = vunpack.c.0.s8 %v2567
    %v2569 = vlaneseq
    %v2570 = vshrl.u32 %v2569, 7
    %v2571 = vsub.s32 %v2568, %v2570
    %v2572 = vrot.slane %v2558, %v2571
    %v2573 = vcombine.low %v642, %v646
    %v2574 = vcombine.high %v642, %v646
    %v2576 = vunpack.c.l.s4 1983009808
    %v2577 = vunpack.c.0.s8 %v2576
    %v2578 = vlaneseq
    %v2579 = vshrl.u32 %v2578, 7
    %v2580 = vsub.s32 %v2577, %v2579
    %v2581 = vrot.slane %v2573, %v2580
    %v2583 = vunpack.c.l.s4 1983009808
    %v2584 = vunpack.c.0.s8 %v2583
    %v2585 = vlaneseq
    %v2586 = vshrl.u32 %v2585, 7
    %v2587 = vsub.s32 %v2584, %v2586
    %v2588 = vrot.slane %v2574, %v2587
    %v2589 = vcombine.low %v644, %v648
    %v2590 = vcombine.high %v644, %v648
    %v2592 = vunpack.c.l.s4 1983009808
    %v2593 = vunpack.c.0.s8 %v2592
    %v2594 = vlaneseq
    %v2595 = vshrl.u32 %v2594, 7
    %v2596 = vsub.s32 %v2593, %v2595
    %v2597 = vrot.slane %v2589, %v2596
    %v2599 = vunpack.c.l.s4 1983009808
    %v2600 = vunpack.c.0.s8 %v2599
    %v2601 = vlaneseq
    %v2602 = vshrl.u32 %v2601, 7
    %v2603 = vsub.s32 %v2600, %v2602
    %v2604 = vrot.slane %v2590, %v2603
    %v2605 = vcombine.low %v2549, %v2565
    %v2606 = vcombine.high %v2549, %v2565
    %v2608 = vunpack.c.l.s4 1934713408
    %v2609 = vunpack.c.0.s8 %v2608
    %v2610 = vlaneseq
    %v2611 = vshrl.u32 %v2610, 7
    %v2612 = vsub.s32 %v2609, %v2611
    %v2613 = vrot.slane %v2605, %v2612
    %v2615 = vunpack.c.l.s4 1934713408
    %v2616 = vunpack.c.0.s8 %v2615
    %v2617 = vlaneseq
    %v2618 = vshrl.u32 %v2617, 7
    %v2619 = vsub.s32 %v2616, %v2618
    %v2620 = vrot.slane %v2606, %v2619
    %v2621 = vcombine.low %v2556, %v2572
    %v2622 = vcombine.high %v2556, %v2572
    %v2624 = vunpack.c.l.s4 1934713408
    %v2625 = vunpack.c.0.s8 %v2624
    %v2626 = vlaneseq
    %v2627 = vshrl.u32 %v2626, 7
    %v2628 = vsub.s32 %v2625, %v2627
    %v2629 = vrot.slane %v2621, %v2628
    %v2631 = vunpack.c.l.s4 1934713408
    %v2632 = vunpack.c.0.s8 %v2631
    %v2633 = vlaneseq
    %v2634 = vshrl.u32 %v2633, 7
    %v2635 = vsub.s32 %v2632, %v2634
    %v2636 = vrot.slane %v2622, %v2635
    %v2637 = vcombine.low %v2581, %v2597
    %v2638 = vcombine.high %v2581, %v2597
    %v2640 = vunpack.c.l.s4 1934713408
    %v2641 = vunpack.c.0.s8 %v2640
    %v2642 = vlaneseq
    %v2643 = vshrl.u32 %v2642, 7
    %v2644 = vsub.s32 %v2641, %v2643
    %v2645 = vrot.slane %v2637, %v2644
    %v2647 = vunpack.c.l.s4 1934713408
    %v2648 = vunpack.c.0.s8 %v2647
    %v2649 = vlaneseq
    %v2650 = vshrl.u32 %v2649, 7
    %v2651 = vsub.s32 %v2648, %v2650
    %v2652 = vrot.slane %v2638, %v2651
    %v2653 = vcombine.low %v2588, %v2604
    %v2654 = vcombine.high %v2588, %v2604
    %v2656 = vunpack.c.l.s4 1934713408
    %v2657 = vunpack.c.0.s8 %v2656
    %v2658 = vlaneseq
    %v2659 = vshrl.u32 %v2658, 7
    %v2660 = vsub.s32 %v2657, %v2659
    %v2661 = vrot.slane %v2653, %v2660
    %v2663 = vunpack.c.l.s4 1934713408
    %v2664 = vunpack.c.0.s8 %v2663
    %v2665 = vlaneseq
    %v2666 = vshrl.u32 %v2665, 7
    %v2667 = vsub.s32 %v2664, %v2666
    %v2668 = vrot.slane %v2654, %v2667
    %v2669 = vcombine.low %v2613, %v2645
    %v2670 = vcombine.high %v2613, %v2645
    %v2671 = vcombine.low %v2620, %v2652
    %v2672 = vcombine.high %v2620, %v2652
    %v2673 = vcombine.low %v2629, %v2661
    %v2674 = vcombine.high %v2629, %v2661
    %v2675 = vcombine.low %v2636, %v2668
    %v2676 = vcombine.high %v2636, %v2668
    %v2677 = vcombine.low %v650, %v654
    %v2678 = vcombine.high %v650, %v654
    %v2680 = vunpack.c.l.s4 1983009808
    %v2681 = vunpack.c.0.s8 %v2680
    %v2682 = vlaneseq
    %v2683 = vshrl.u32 %v2682, 7
    %v2684 = vsub.s32 %v2681, %v2683
    %v2685 = vrot.slane %v2677, %v2684
    %v2687 = vunpack.c.l.s4 1983009808
    %v2688 = vunpack.c.0.s8 %v2687
    %v2689 = vlaneseq
    %v2690 = vshrl.u32 %v2689, 7
    %v2691 = vsub.s32 %v2688, %v2690
    %v2692 = vrot.slane %v2678, %v2691
    %v2693 = vcombine.low %v652, %v656
    %v2694 = vcombine.high %v652, %v656
    %v2696 = vunpack.c.l.s4 1983009808
    %v2697 = vunpack.c.0.s8 %v2696
    %v2698 = vlaneseq
    %v2699 = vshrl.u32 %v2698, 7
    %v2700 = vsub.s32 %v2697, %v2699
    %v2701 = vrot.slane %v2693, %v2700
    %v2703 = vunpack.c.l.s4 1983009808
    %v2704 = vunpack.c.0.s8 %v2703
    %v2705 = vlaneseq
    %v2706 = vshrl.u32 %v2705, 7
    %v2707 = vsub.s32 %v2704, %v2706
    %v2708 = vrot.slane %v2694, %v2707
    %v2709 = vcombine.low %v658, %v662
    %v2710 = vcombine.high %v658, %v662
    %v2712 = vunpack.c.l.s4 1983009808
    %v2713 = vunpack.c.0.s8 %v2712
    %v2714 = vlaneseq
    %v2715 = vshrl.u32 %v2714, 7
    %v2716 = vsub.s32 %v2713, %v2715
    %v2717 = vrot.slane %v2709, %v2716
    %v2719 = vunpack.c.l.s4 1983009808
    %v2720 = vunpack.c.0.s8 %v2719
    %v2721 = vlaneseq
    %v2722 = vshrl.u32 %v2721, 7
    %v2723 = vsub.s32 %v2720, %v2722
    %v2724 = vrot.slane %v2710, %v2723
    %v2725 = vcombine.low %v660, %v664
    %v2726 = vcombine.high %v660, %v664
    %v2728 = vunpack.c.l.s4 1983009808
    %v2729 = vunpack.c.0.s8 %v2728
    %v2730 = vlaneseq
    %v2731 = vshrl.u32 %v2730, 7
    %v2732 = vsub.s32 %v2729, %v2731
    %v2733 = vrot.slane %v2725, %v2732
    %v2735 = vunpack.c.l.s4 1983009808
    %v2736 = vunpack.c.0.s8 %v2735
    %v2737 = vlaneseq
    %v2738 = vshrl.u32 %v2737, 7
    %v2739 = vsub.s32 %v2736, %v2738
    %v2740 = vrot.slane %v2726, %v2739
    %v2741 = vcombine.low %v2685, %v2701
    %v2742 = vcombine.high %v2685, %v2701
    %v2744 = vunpack.c.l.s4 1934713408
    %v2745 = vunpack.c.0.s8 %v2744
    %v2746 = vlaneseq
    %v2747 = vshrl.u32 %v2746, 7
    %v2748 = vsub.s32 %v2745, %v2747
    %v2749 = vrot.slane %v2741, %v2748
    %v2751 = vunpack.c.l.s4 1934713408
    %v2752 = vunpack.c.0.s8 %v2751
    %v2753 = vlaneseq
    %v2754 = vshrl.u32 %v2753, 7
    %v2755 = vsub.s32 %v2752, %v2754
    %v2756 = vrot.slane %v2742, %v2755
    %v2757 = vcombine.low %v2692, %v2708
    %v2758 = vcombine.high %v2692, %v2708
    %v2760 = vunpack.c.l.s4 1934713408
    %v2761 = vunpack.c.0.s8 %v2760
    %v2762 = vlaneseq
    %v2763 = vshrl.u32 %v2762, 7
    %v2764 = vsub.s32 %v2761, %v2763
    %v2765 = vrot.slane %v2757, %v2764
    %v2767 = vunpack.c.l.s4 1934713408
    %v2768 = vunpack.c.0.s8 %v2767
    %v2769 = vlaneseq
    %v2770 = vshrl.u32 %v2769, 7
    %v2771 = vsub.s32 %v2768, %v2770
    %v2772 = vrot.slane %v2758, %v2771
    %v2773 = vcombine.low %v2717, %v2733
    %v2774 = vcombine.high %v2717, %v2733
    %v2776 = vunpack.c.l.s4 1934713408
    %v2777 = vunpack.c.0.s8 %v2776
    %v2778 = vlaneseq
    %v2779 = vshrl.u32 %v2778, 7
    %v2780 = vsub.s32 %v2777, %v2779
    %v2781 = vrot.slane %v2773, %v2780
    %v2783 = vunpack.c.l.s4 1934713408
    %v2784 = vunpack.c.0.s8 %v2783
    %v2785 = vlaneseq
    %v2786 = vshrl.u32 %v2785, 7
    %v2787 = vsub.s32 %v2784, %v2786
    %v2788 = vrot.slane %v2774, %v2787
    %v2789 = vcombine.low %v2724, %v2740
    %v2790 = vcombine.high %v2724, %v2740
    %v2792 = vunpack.c.l.s4 1934713408
    %v2793 = vunpack.c.0.s8 %v2792
    %v2794 = vlaneseq
    %v2795 = vshrl.u32 %v2794, 7
    %v2796 = vsub.s32 %v2793, %v2795
    %v2797 = vrot.slane %v2789, %v2796
    %v2799 = vunpack.c.l.s4 1934713408
    %v2800 = vunpack.c.0.s8 %v2799
    %v2801 = vlaneseq
    %v2802 = vshrl.u32 %v2801, 7
    %v2803 = vsub.s32 %v2800, %v2802
    %v2804 = vrot.slane %v2790, %v2803
    %v2805 = vcombine.low %v2749, %v2781
    %v2806 = vcombine.high %v2749, %v2781
    %v2807 = vcombine.low %v2756, %v2788
    %v2808 = vcombine.high %v2756, %v2788
    %v2809 = vcombine.low %v2765, %v2797
    %v2810 = vcombine.high %v2765, %v2797
    %v2811 = vcombine.low %v2772, %v2804
    %v2812 = vcombine.high %v2772, %v2804
    %v2813 = vcombine.low %v666, %v670
    %v2814 = vcombine.high %v666, %v670
    %v2816 = vunpack.c.l.s4 1983009808
    %v2817 = vunpack.c.0.s8 %v2816
    %v2818 = vlaneseq
    %v2819 = vshrl.u32 %v2818, 7
    %v2820 = vsub.s32 %v2817, %v2819
    %v2821 = vrot.slane %v2813, %v2820
    %v2823 = vunpack.c.l.s4 1983009808
    %v2824 = vunpack.c.0.s8 %v2823
    %v2825 = vlaneseq
    %v2826 = vshrl.u32 %v2825, 7
    %v2827 = vsub.s32 %v2824, %v2826
    %v2828 = vrot.slane %v2814, %v2827
    %v2829 = vcombine.low %v668, %v672
    %v2830 = vcombine.high %v668, %v672
    %v2832 = vunpack.c.l.s4 1983009808
    %v2833 = vunpack.c.0.s8 %v2832
    %v2834 = vlaneseq
    %v2835 = vshrl.u32 %v2834, 7
    %v2836 = vsub.s32 %v2833, %v2835
    %v2837 = vrot.slane %v2829, %v2836
    %v2839 = vunpack.c.l.s4 1983009808
    %v2840 = vunpack.c.0.s8 %v2839
    %v2841 = vlaneseq
    %v2842 = vshrl.u32 %v2841, 7
    %v2843 = vsub.s32 %v2840, %v2842
    %v2844 = vrot.slane %v2830, %v2843
    %v2845 = vcombine.low %v674, %v678
    %v2846 = vcombine.high %v674, %v678
    %v2848 = vunpack.c.l.s4 1983009808
    %v2849 = vunpack.c.0.s8 %v2848
    %v2850 = vlaneseq
    %v2851 = vshrl.u32 %v2850, 7
    %v2852 = vsub.s32 %v2849, %v2851
    %v2853 = vrot.slane %v2845, %v2852
    %v2855 = vunpack.c.l.s4 1983009808
    %v2856 = vunpack.c.0.s8 %v2855
    %v2857 = vlaneseq
    %v2858 = vshrl.u32 %v2857, 7
    %v2859 = vsub.s32 %v2856, %v2858
    %v2860 = vrot.slane %v2846, %v2859
    %v2861 = vcombine.low %v676, %v680
    %v2862 = vcombine.high %v676, %v680
    %v2864 = vunpack.c.l.s4 1983009808
    %v2865 = vunpack.c.0.s8 %v2864
    %v2866 = vlaneseq
    %v2867 = vshrl.u32 %v2866, 7
    %v2868 = vsub.s32 %v2865, %v2867
    %v2869 = vrot.slane %v2861, %v2868
    %v2871 = vunpack.c.l.s4 1983009808
    %v2872 = vunpack.c.0.s8 %v2871
    %v2873 = vlaneseq
    %v2874 = vshrl.u32 %v2873, 7
    %v2875 = vsub.s32 %v2872, %v2874
    %v2876 = vrot.slane %v2862, %v2875
    %v2877 = vcombine.low %v2821, %v2837
    %v2878 = vcombine.high %v2821, %v2837
    %v2880 = vunpack.c.l.s4 1934713408
    %v2881 = vunpack.c.0.s8 %v2880
    %v2882 = vlaneseq
    %v2883 = vshrl.u32 %v2882, 7
    %v2884 = vsub.s32 %v2881, %v2883
    %v2885 = vrot.slane %v2877, %v2884
    %v2887 = vunpack.c.l.s4 1934713408
    %v2888 = vunpack.c.0.s8 %v2887
    %v2889 = vlaneseq
    %v2890 = vshrl.u32 %v2889, 7
    %v2891 = vsub.s32 %v2888, %v2890
    %v2892 = vrot.slane %v2878, %v2891
    %v2893 = vcombine.low %v2828, %v2844
    %v2894 = vcombine.high %v2828, %v2844
    %v2896 = vunpack.c.l.s4 1934713408
    %v2897 = vunpack.c.0.s8 %v2896
    %v2898 = vlaneseq
    %v2899 = vshrl.u32 %v2898, 7
    %v2900 = vsub.s32 %v2897, %v2899
    %v2901 = vrot.slane %v2893, %v2900
    %v2903 = vunpack.c.l.s4 1934713408
    %v2904 = vunpack.c.0.s8 %v2903
    %v2905 = vlaneseq
    %v2906 = vshrl.u32 %v2905, 7
    %v2907 = vsub.s32 %v2904, %v2906
    %v2908 = vrot.slane %v2894, %v2907
    %v2909 = vcombine.low %v2853, %v2869
    %v2910 = vcombine.high %v2853, %v2869
    %v2912 = vunpack.c.l.s4 1934713408
    %v2913 = vunpack.c.0.s8 %v2912
    %v2914 = vlaneseq
    %v2915 = vshrl.u32 %v2914, 7
    %v2916 = vsub.s32 %v2913, %v2915
    %v2917 = vrot.slane %v2909, %v2916
    %v2919 = vunpack.c.l.s4 1934713408
    %v2920 = vunpack.c.0.s8 %v2919
    %v2921 = vlaneseq
    %v2922 = vshrl.u32 %v2921, 7
    %v2923 = vsub.s32 %v2920, %v2922
    %v2924 = vrot.slane %v2910, %v2923
    %v2925 = vcombine.low %v2860, %v2876
    %v2926 = vcombine.high %v2860, %v2876
    %v2928 = vunpack.c.l.s4 1934713408
    %v2929 = vunpack.c.0.s8 %v2928
    %v2930 = vlaneseq
    %v2931 = vshrl.u32 %v2930, 7
    %v2932 = vsub.s32 %v2929, %v2931
    %v2933 = vrot.slane %v2925, %v2932
    %v2935 = vunpack.c.l.s4 1934713408
    %v2936 = vunpack.c.0.s8 %v2935
    %v2937 = vlaneseq
    %v2938 = vshrl.u32 %v2937, 7
    %v2939 = vsub.s32 %v2936, %v2938
    %v2940 = vrot.slane %v2926, %v2939
    %v2941 = vcombine.low %v2885, %v2917
    %v2942 = vcombine.high %v2885, %v2917
    %v2943 = vcombine.low %v2892, %v2924
    %v2944 = vcombine.high %v2892, %v2924
    %v2945 = vcombine.low %v2901, %v2933
    %v2946 = vcombine.high %v2901, %v2933
    %v2947 = vcombine.low %v2908, %v2940
    %v2948 = vcombine.high %v2908, %v2940
    %v2949 = vcombine.low %v682, %v686
    %v2950 = vcombine.high %v682, %v686
    %v2952 = vunpack.c.l.s4 1983009808
    %v2953 = vunpack.c.0.s8 %v2952
    %v2954 = vlaneseq
    %v2955 = vshrl.u32 %v2954, 7
    %v2956 = vsub.s32 %v2953, %v2955
    %v2957 = vrot.slane %v2949, %v2956
    %v2959 = vunpack.c.l.s4 1983009808
    %v2960 = vunpack.c.0.s8 %v2959
    %v2961 = vlaneseq
    %v2962 = vshrl.u32 %v2961, 7
    %v2963 = vsub.s32 %v2960, %v2962
    %v2964 = vrot.slane %v2950, %v2963
    %v2965 = vcombine.low %v684, %v688
    %v2966 = vcombine.high %v684, %v688
    %v2968 = vunpack.c.l.s4 1983009808
    %v2969 = vunpack.c.0.s8 %v2968
    %v2970 = vlaneseq
    %v2971 = vshrl.u32 %v2970, 7
    %v2972 = vsub.s32 %v2969, %v2971
    %v2973 = vrot.slane %v2965, %v2972
    %v2975 = vunpack.c.l.s4 1983009808
    %v2976 = vunpack.c.0.s8 %v2975
    %v2977 = vlaneseq
    %v2978 = vshrl.u32 %v2977, 7
    %v2979 = vsub.s32 %v2976, %v2978
    %v2980 = vrot.slane %v2966, %v2979
    %v2981 = vcombine.low %v690, %v694
    %v2982 = vcombine.high %v690, %v694
    %v2984 = vunpack.c.l.s4 1983009808
    %v2985 = vunpack.c.0.s8 %v2984
    %v2986 = vlaneseq
    %v2987 = vshrl.u32 %v2986, 7
    %v2988 = vsub.s32 %v2985, %v2987
    %v2989 = vrot.slane %v2981, %v2988
    %v2991 = vunpack.c.l.s4 1983009808
    %v2992 = vunpack.c.0.s8 %v2991
    %v2993 = vlaneseq
    %v2994 = vshrl.u32 %v2993, 7
    %v2995 = vsub.s32 %v2992, %v2994
    %v2996 = vrot.slane %v2982, %v2995
    %v2997 = vcombine.low %v692, %v696
    %v2998 = vcombine.high %v692, %v696
    %v3000 = vunpack.c.l.s4 1983009808
    %v3001 = vunpack.c.0.s8 %v3000
    %v3002 = vlaneseq
    %v3003 = vshrl.u32 %v3002, 7
    %v3004 = vsub.s32 %v3001, %v3003
    %v3005 = vrot.slane %v2997, %v3004
    %v3007 = vunpack.c.l.s4 1983009808
    %v3008 = vunpack.c.0.s8 %v3007
    %v3009 = vlaneseq
    %v3010 = vshrl.u32 %v3009, 7
    %v3011 = vsub.s32 %v3008, %v3010
    %v3012 = vrot.slane %v2998, %v3011
    %v3013 = vcombine.low %v2957, %v2973
    %v3014 = vcombine.high %v2957, %v2973
    %v3016 = vunpack.c.l.s4 1934713408
    %v3017 = vunpack.c.0.s8 %v3016
    %v3018 = vlaneseq
    %v3019 = vshrl.u32 %v3018, 7
    %v3020 = vsub.s32 %v3017, %v3019
    %v3021 = vrot.slane %v3013, %v3020
    %v3023 = vunpack.c.l.s4 1934713408
    %v3024 = vunpack.c.0.s8 %v3023
    %v3025 = vlaneseq
    %v3026 = vshrl.u32 %v3025, 7
    %v3027 = vsub.s32 %v3024, %v3026
    %v3028 = vrot.slane %v3014, %v3027
    %v3029 = vcombine.low %v2964, %v2980
    %v3030 = vcombine.high %v2964, %v2980
    %v3032 = vunpack.c.l.s4 1934713408
    %v3033 = vunpack.c.0.s8 %v3032
    %v3034 = vlaneseq
    %v3035 = vshrl.u32 %v3034, 7
    %v3036 = vsub.s32 %v3033, %v3035
    %v3037 = vrot.slane %v3029, %v3036
    %v3039 = vunpack.c.l.s4 1934713408
    %v3040 = vunpack.c.0.s8 %v3039
    %v3041 = vlaneseq
    %v3042 = vshrl.u32 %v3041, 7
    %v3043 = vsub.s32 %v3040, %v3042
    %v3044 = vrot.slane %v3030, %v3043
    %v3045 = vcombine.low %v2989, %v3005
    %v3046 = vcombine.high %v2989, %v3005
    %v3048 = vunpack.c.l.s4 1934713408
    %v3049 = vunpack.c.0.s8 %v3048
    %v3050 = vlaneseq
    %v3051 = vshrl.u32 %v3050, 7
    %v3052 = vsub.s32 %v3049, %v3051
    %v3053 = vrot.slane %v3045, %v3052
    %v3055 = vunpack.c.l.s4 1934713408
    %v3056 = vunpack.c.0.s8 %v3055
    %v3057 = vlaneseq
    %v3058 = vshrl.u32 %v3057, 7
    %v3059 = vsub.s32 %v3056, %v3058
    %v3060 = vrot.slane %v3046, %v3059
    %v3061 = vcombine.low %v2996, %v3012
    %v3062 = vcombine.high %v2996, %v3012
    %v3064 = vunpack.c.l.s4 1934713408
    %v3065 = vunpack.c.0.s8 %v3064
    %v3066 = vlaneseq
    %v3067 = vshrl.u32 %v3066, 7
    %v3068 = vsub.s32 %v3065, %v3067
    %v3069 = vrot.slane %v3061, %v3068
    %v3071 = vunpack.c.l.s4 1934713408
    %v3072 = vunpack.c.0.s8 %v3071
    %v3073 = vlaneseq
    %v3074 = vshrl.u32 %v3073, 7
    %v3075 = vsub.s32 %v3072, %v3074
    %v3076 = vrot.slane %v3062, %v3075
    %v3077 = vcombine.low %v3021, %v3053
    %v3078 = vcombine.high %v3021, %v3053
    %v3079 = vcombine.low %v3028, %v3060
    %v3080 = vcombine.high %v3028, %v3060
    %v3081 = vcombine.low %v3037, %v3069
    %v3082 = vcombine.high %v3037, %v3069
    %v3083 = vcombine.low %v3044, %v3076
    %v3084 = vcombine.high %v3044, %v3076
    %v3085 = vcombine.low %v698, %v702
    %v3086 = vcombine.high %v698, %v702
    %v3088 = vunpack.c.l.s4 1983009808
    %v3089 = vunpack.c.0.s8 %v3088
    %v3090 = vlaneseq
    %v3091 = vshrl.u32 %v3090, 7
    %v3092 = vsub.s32 %v3089, %v3091
    %v3093 = vrot.slane %v3085, %v3092
    %v3095 = vunpack.c.l.s4 1983009808
    %v3096 = vunpack.c.0.s8 %v3095
    %v3097 = vlaneseq
    %v3098 = vshrl.u32 %v3097, 7
    %v3099 = vsub.s32 %v3096, %v3098
    %v3100 = vrot.slane %v3086, %v3099
    %v3101 = vcombine.low %v700, %v704
    %v3102 = vcombine.high %v700, %v704
    %v3104 = vunpack.c.l.s4 1983009808
    %v3105 = vunpack.c.0.s8 %v3104
    %v3106 = vlaneseq
    %v3107 = vshrl.u32 %v3106, 7
    %v3108 = vsub.s32 %v3105, %v3107
    %v3109 = vrot.slane %v3101, %v3108
    %v3111 = vunpack.c.l.s4 1983009808
    %v3112 = vunpack.c.0.s8 %v3111
    %v3113 = vlaneseq
    %v3114 = vshrl.u32 %v3113, 7
    %v3115 = vsub.s32 %v3112, %v3114
    %v3116 = vrot.slane %v3102, %v3115
    %v3117 = vcombine.low %v3093, %v3109
    %v3118 = vcombine.high %v3093, %v3109
    %v3120 = vunpack.c.l.s4 1934713408
    %v3121 = vunpack.c.0.s8 %v3120
    %v3122 = vlaneseq
    %v3123 = vshrl.u32 %v3122, 7
    %v3124 = vsub.s32 %v3121, %v3123
    %v3125 = vrot.slane %v3117, %v3124
    %v3127 = vunpack.c.l.s4 1934713408
    %v3128 = vunpack.c.0.s8 %v3127
    %v3129 = vlaneseq
    %v3130 = vshrl.u32 %v3129, 7
    %v3131 = vsub.s32 %v3128, %v3130
    %v3132 = vrot.slane %v3118, %v3131
    %v3133 = vcombine.low %v3100, %v3116
    %v3134 = vcombine.high %v3100, %v3116
    %v3136 = vunpack.c.l.s4 1934713408
    %v3137 = vunpack.c.0.s8 %v3136
    %v3138 = vlaneseq
    %v3139 = vshrl.u32 %v3138, 7
    %v3140 = vsub.s32 %v3137, %v3139
    %v3141 = vrot.slane %v3133, %v3140
    %v3143 = vunpack.c.l.s4 1934713408
    %v3144 = vunpack.c.0.s8 %v3143
    %v3145 = vlaneseq
    %v3146 = vshrl.u32 %v3145, 7
    %v3147 = vsub.s32 %v3144, %v3146
    %v3148 = vrot.slane %v3134, %v3147
    %v3149 = vcombine.high %v3125, 0.0
    %v3150 = vcombine.high %v3132, 0.0
    %v3151 = vcombine.high %v3141, 0.0
    %v3152 = vcombine.high %v3148, 0.0
    %3163 = vrot.lane.b32.xlu0 %v834, 16
    %v3164 = vpop.permute.xlu0 %3163
    %3165 = vrot.lane.b32.xlu0 %v970, 16
    %v3166 = vpop.permute.xlu0 %3165
    %3167 = vrot.lane.b32.xlu0 %v1106, 16
    %v3168 = vpop.permute.xlu0 %3167
    %3169 = vrot.lane.b32.xlu0 %v1242, 16
    %v3170 = vpop.permute.xlu0 %3169
    %3171 = vrot.lane.b32.xlu0 %v1313, 16
    %v3172 = vpop.permute.xlu0 %3171
    %3173 = vrot.lane.b32.xlu0 %v2058, 16
    %v3174 = vpop.permute.xlu0 %3173
    %3175 = vrot.lane.b32.xlu0 %v2194, 16
    %v3176 = vpop.permute.xlu0 %3175
    %3177 = vrot.lane.b32.xlu0 %v2330, 16
    %v3178 = vpop.permute.xlu0 %3177
    %3179 = vrot.lane.b32.xlu0 %v2466, 16
    %v3180 = vpop.permute.xlu0 %3179
    %3181 = vrot.lane.b32.xlu0 %v2537, 16
    %v3182 = vpop.permute.xlu0 %3181
    %3203 = vrot.lane.b32.xlu0 %v835, 32
    %v3204 = vpop.permute.xlu0 %3203
    %3205 = vrot.lane.b32.xlu0 %v971, 32
    %v3206 = vpop.permute.xlu0 %3205
    %3207 = vrot.lane.b32.xlu0 %v1107, 32
    %v3208 = vpop.permute.xlu0 %3207
    %3209 = vrot.lane.b32.xlu0 %v1243, 32
    %v3210 = vpop.permute.xlu0 %3209
    %3211 = vrot.lane.b32.xlu0 %v1296, 32
    %v3212 = vpop.permute.xlu0 %3211
    %3213 = vrot.lane.b32.xlu0 %v2059, 32
    %v3214 = vpop.permute.xlu0 %3213
    %3215 = vrot.lane.b32.xlu0 %v2195, 32
    %v3216 = vpop.permute.xlu0 %3215
    %3217 = vrot.lane.b32.xlu0 %v2331, 32
    %v3218 = vpop.permute.xlu0 %3217
    %3219 = vrot.lane.b32.xlu0 %v2467, 32
    %v3220 = vpop.permute.xlu0 %3219
    %3221 = vrot.lane.b32.xlu0 %v2520, 32
    %v3222 = vpop.permute.xlu0 %3221
    %3243 = vrot.lane.b32.xlu0 %v836, 48
    %v3244 = vpop.permute.xlu0 %3243
    %3245 = vrot.lane.b32.xlu0 %v972, 48
    %v3246 = vpop.permute.xlu0 %3245
    %3247 = vrot.lane.b32.xlu0 %v1108, 48
    %v3248 = vpop.permute.xlu0 %3247
    %3249 = vrot.lane.b32.xlu0 %v1244, 48
    %v3250 = vpop.permute.xlu0 %3249
    %3251 = vrot.lane.b32.xlu0 %v1314, 48
    %v3252 = vpop.permute.xlu0 %3251
    %3253 = vrot.lane.b32.xlu0 %v2060, 48
    %v3254 = vpop.permute.xlu0 %3253
    %3255 = vrot.lane.b32.xlu0 %v2196, 48
    %v3256 = vpop.permute.xlu0 %3255
    %3257 = vrot.lane.b32.xlu0 %v2332, 48
    %v3258 = vpop.permute.xlu0 %3257
    %3259 = vrot.lane.b32.xlu0 %v2468, 48
    %v3260 = vpop.permute.xlu0 %3259
    %3261 = vrot.lane.b32.xlu0 %v2538, 48
    %v3262 = vpop.permute.xlu0 %3261
    %3283 = vrot.lane.b32.xlu0 %v837, 64
    %v3284 = vpop.permute.xlu0 %3283
    %3285 = vrot.lane.b32.xlu0 %v973, 64
    %v3286 = vpop.permute.xlu0 %3285
    %3287 = vrot.lane.b32.xlu0 %v1109, 64
    %v3288 = vpop.permute.xlu0 %3287
    %3289 = vrot.lane.b32.xlu0 %v1245, 64
    %v3290 = vpop.permute.xlu0 %3289
    %3291 = vrot.lane.b32.xlu0 %v1305, 64
    %v3292 = vpop.permute.xlu0 %3291
    %3293 = vrot.lane.b32.xlu0 %v2061, 64
    %v3294 = vpop.permute.xlu0 %3293
    %3295 = vrot.lane.b32.xlu0 %v2197, 64
    %v3296 = vpop.permute.xlu0 %3295
    %3297 = vrot.lane.b32.xlu0 %v2333, 64
    %v3298 = vpop.permute.xlu0 %3297
    %3299 = vrot.lane.b32.xlu0 %v2469, 64
    %v3300 = vpop.permute.xlu0 %3299
    %3301 = vrot.lane.b32.xlu0 %v2529, 64
    %v3302 = vpop.permute.xlu0 %3301
    %3323 = vrot.lane.b32.xlu0 %v838, 80
    %v3324 = vpop.permute.xlu0 %3323
    %3325 = vrot.lane.b32.xlu0 %v974, 80
    %v3326 = vpop.permute.xlu0 %3325
    %3327 = vrot.lane.b32.xlu0 %v1110, 80
    %v3328 = vpop.permute.xlu0 %3327
    %3329 = vrot.lane.b32.xlu0 %v1246, 80
    %v3330 = vpop.permute.xlu0 %3329
    %3331 = vrot.lane.b32.xlu0 %v1315, 80
    %v3332 = vpop.permute.xlu0 %3331
    %3333 = vrot.lane.b32.xlu0 %v2062, 80
    %v3334 = vpop.permute.xlu0 %3333
    %3335 = vrot.lane.b32.xlu0 %v2198, 80
    %v3336 = vpop.permute.xlu0 %3335
    %3337 = vrot.lane.b32.xlu0 %v2334, 80
    %v3338 = vpop.permute.xlu0 %3337
    %3339 = vrot.lane.b32.xlu0 %v2470, 80
    %v3340 = vpop.permute.xlu0 %3339
    %3341 = vrot.lane.b32.xlu0 %v2539, 80
    %v3342 = vpop.permute.xlu0 %3341
    %3363 = vrot.lane.b32.xlu0 %v839, 96
    %v3364 = vpop.permute.xlu0 %3363
    %3365 = vrot.lane.b32.xlu0 %v975, 96
    %v3366 = vpop.permute.xlu0 %3365
    %3367 = vrot.lane.b32.xlu0 %v1111, 96
    %v3368 = vpop.permute.xlu0 %3367
    %3369 = vrot.lane.b32.xlu0 %v1247, 96
    %v3370 = vpop.permute.xlu0 %3369
    %3371 = vrot.lane.b32.xlu0 %v1312, 96
    %v3372 = vpop.permute.xlu0 %3371
    %3373 = vrot.lane.b32.xlu0 %v2063, 96
    %v3374 = vpop.permute.xlu0 %3373
    %3375 = vrot.lane.b32.xlu0 %v2199, 96
    %v3376 = vpop.permute.xlu0 %3375
    %3377 = vrot.lane.b32.xlu0 %v2335, 96
    %v3378 = vpop.permute.xlu0 %3377
    %3379 = vrot.lane.b32.xlu0 %v2471, 96
    %v3380 = vpop.permute.xlu0 %3379
    %3381 = vrot.lane.b32.xlu0 %v2536, 96
    %v3382 = vpop.permute.xlu0 %3381
    %3403 = vrot.lane.b32.xlu0 %v840, 112
    %v3404 = vpop.permute.xlu0 %3403
    %3405 = vrot.lane.b32.xlu0 %v976, 112
    %v3406 = vpop.permute.xlu0 %3405
    %3407 = vrot.lane.b32.xlu0 %v1112, 112
    %v3408 = vpop.permute.xlu0 %3407
    %3409 = vrot.lane.b32.xlu0 %v1248, 112
    %v3410 = vpop.permute.xlu0 %3409
    %3411 = vrot.lane.b32.xlu0 %v1316, 112
    %v3412 = vpop.permute.xlu0 %3411
    %3413 = vrot.lane.b32.xlu0 %v2064, 112
    %v3414 = vpop.permute.xlu0 %3413
    %3415 = vrot.lane.b32.xlu0 %v2200, 112
    %v3416 = vpop.permute.xlu0 %3415
    %3417 = vrot.lane.b32.xlu0 %v2336, 112
    %v3418 = vpop.permute.xlu0 %3417
    %3419 = vrot.lane.b32.xlu0 %v2472, 112
    %v3420 = vpop.permute.xlu0 %3419
    %3421 = vrot.lane.b32.xlu0 %v2540, 112
    %v3422 = vpop.permute.xlu0 %3421
    %3443 = vrot.lane.b32.xlu0 %v1446, 16
    %v3444 = vpop.permute.xlu0 %3443
    %3445 = vrot.lane.b32.xlu0 %v1582, 16
    %v3446 = vpop.permute.xlu0 %3445
    %3447 = vrot.lane.b32.xlu0 %v1718, 16
    %v3448 = vpop.permute.xlu0 %3447
    %3449 = vrot.lane.b32.xlu0 %v1854, 16
    %v3450 = vpop.permute.xlu0 %3449
    %3451 = vrot.lane.b32.xlu0 %v1925, 16
    %v3452 = vpop.permute.xlu0 %3451
    %3453 = vrot.lane.b32.xlu0 %v2670, 16
    %v3454 = vpop.permute.xlu0 %3453
    %3455 = vrot.lane.b32.xlu0 %v2806, 16
    %v3456 = vpop.permute.xlu0 %3455
    %3457 = vrot.lane.b32.xlu0 %v2942, 16
    %v3458 = vpop.permute.xlu0 %3457
    %3459 = vrot.lane.b32.xlu0 %v3078, 16
    %v3460 = vpop.permute.xlu0 %3459
    %3461 = vrot.lane.b32.xlu0 %v3149, 16
    %v3462 = vpop.permute.xlu0 %3461
    %3483 = vrot.lane.b32.xlu0 %v1447, 32
    %v3484 = vpop.permute.xlu0 %3483
    %3485 = vrot.lane.b32.xlu0 %v1583, 32
    %v3486 = vpop.permute.xlu0 %3485
    %3487 = vrot.lane.b32.xlu0 %v1719, 32
    %v3488 = vpop.permute.xlu0 %3487
    %3489 = vrot.lane.b32.xlu0 %v1855, 32
    %v3490 = vpop.permute.xlu0 %3489
    %3491 = vrot.lane.b32.xlu0 %v1908, 32
    %v3492 = vpop.permute.xlu0 %3491
    %3493 = vrot.lane.b32.xlu0 %v2671, 32
    %v3494 = vpop.permute.xlu0 %3493
    %3495 = vrot.lane.b32.xlu0 %v2807, 32
    %v3496 = vpop.permute.xlu0 %3495
    %3497 = vrot.lane.b32.xlu0 %v2943, 32
    %v3498 = vpop.permute.xlu0 %3497
    %3499 = vrot.lane.b32.xlu0 %v3079, 32
    %v3500 = vpop.permute.xlu0 %3499
    %3501 = vrot.lane.b32.xlu0 %v3132, 32
    %v3502 = vpop.permute.xlu0 %3501
    %3523 = vrot.lane.b32.xlu0 %v1448, 48
    %v3524 = vpop.permute.xlu0 %3523
    %3525 = vrot.lane.b32.xlu0 %v1584, 48
    %v3526 = vpop.permute.xlu0 %3525
    %3527 = vrot.lane.b32.xlu0 %v1720, 48
    %v3528 = vpop.permute.xlu0 %3527
    %3529 = vrot.lane.b32.xlu0 %v1856, 48
    %v3530 = vpop.permute.xlu0 %3529
    %3531 = vrot.lane.b32.xlu0 %v1926, 48
    %v3532 = vpop.permute.xlu0 %3531
    %3533 = vrot.lane.b32.xlu0 %v2672, 48
    %v3534 = vpop.permute.xlu0 %3533
    %3535 = vrot.lane.b32.xlu0 %v2808, 48
    %v3536 = vpop.permute.xlu0 %3535
    %3537 = vrot.lane.b32.xlu0 %v2944, 48
    %v3538 = vpop.permute.xlu0 %3537
    %3539 = vrot.lane.b32.xlu0 %v3080, 48
    %v3540 = vpop.permute.xlu0 %3539
    %3541 = vrot.lane.b32.xlu0 %v3150, 48
    %v3542 = vpop.permute.xlu0 %3541
    %3563 = vrot.lane.b32.xlu0 %v1449, 64
    %v3564 = vpop.permute.xlu0 %3563
    %3565 = vrot.lane.b32.xlu0 %v1585, 64
    %v3566 = vpop.permute.xlu0 %3565
    %3567 = vrot.lane.b32.xlu0 %v1721, 64
    %v3568 = vpop.permute.xlu0 %3567
    %3569 = vrot.lane.b32.xlu0 %v1857, 64
    %v3570 = vpop.permute.xlu0 %3569
    %3571 = vrot.lane.b32.xlu0 %v1917, 64
    %v3572 = vpop.permute.xlu0 %3571
    %3573 = vrot.lane.b32.xlu0 %v2673, 64
    %v3574 = vpop.permute.xlu0 %3573
    %3575 = vrot.lane.b32.xlu0 %v2809, 64
    %v3576 = vpop.permute.xlu0 %3575
    %3577 = vrot.lane.b32.xlu0 %v2945, 64
    %v3578 = vpop.permute.xlu0 %3577
    %3579 = vrot.lane.b32.xlu0 %v3081, 64
    %v3580 = vpop.permute.xlu0 %3579
    %3581 = vrot.lane.b32.xlu0 %v3141, 64
    %v3582 = vpop.permute.xlu0 %3581
    %3603 = vrot.lane.b32.xlu0 %v1450, 80
    %v3604 = vpop.permute.xlu0 %3603
    %3605 = vrot.lane.b32.xlu0 %v1586, 80
    %v3606 = vpop.permute.xlu0 %3605
    %3607 = vrot.lane.b32.xlu0 %v1722, 80
    %v3608 = vpop.permute.xlu0 %3607
    %3609 = vrot.lane.b32.xlu0 %v1858, 80
    %v3610 = vpop.permute.xlu0 %3609
    %3611 = vrot.lane.b32.xlu0 %v1927, 80
    %v3612 = vpop.permute.xlu0 %3611
    %3613 = vrot.lane.b32.xlu0 %v2674, 80
    %v3614 = vpop.permute.xlu0 %3613
    %3615 = vrot.lane.b32.xlu0 %v2810, 80
    %v3616 = vpop.permute.xlu0 %3615
    %3617 = vrot.lane.b32.xlu0 %v2946, 80
    %v3618 = vpop.permute.xlu0 %3617
    %3619 = vrot.lane.b32.xlu0 %v3082, 80
    %v3620 = vpop.permute.xlu0 %3619
    %3621 = vrot.lane.b32.xlu0 %v3151, 80
    %v3622 = vpop.permute.xlu0 %3621
    %3643 = vrot.lane.b32.xlu0 %v1451, 96
    %v3644 = vpop.permute.xlu0 %3643
    %3645 = vrot.lane.b32.xlu0 %v1587, 96
    %v3646 = vpop.permute.xlu0 %3645
    %3647 = vrot.lane.b32.xlu0 %v1723, 96
    %v3648 = vpop.permute.xlu0 %3647
    %3649 = vrot.lane.b32.xlu0 %v1859, 96
    %v3650 = vpop.permute.xlu0 %3649
    %3651 = vrot.lane.b32.xlu0 %v1924, 96
    %v3652 = vpop.permute.xlu0 %3651
    %3653 = vrot.lane.b32.xlu0 %v2675, 96
    %v3654 = vpop.permute.xlu0 %3653
    %3655 = vrot.lane.b32.xlu0 %v2811, 96
    %v3656 = vpop.permute.xlu0 %3655
    %3657 = vrot.lane.b32.xlu0 %v2947, 96
    %v3658 = vpop.permute.xlu0 %3657
    %3659 = vrot.lane.b32.xlu0 %v3083, 96
    %v3660 = vpop.permute.xlu0 %3659
    %3661 = vrot.lane.b32.xlu0 %v3148, 96
    %v3662 = vpop.permute.xlu0 %3661
    %3683 = vrot.lane.b32.xlu0 %v1452, 112
    %v3684 = vpop.permute.xlu0 %3683
    %3685 = vrot.lane.b32.xlu0 %v1588, 112
    %v3686 = vpop.permute.xlu0 %3685
    %3687 = vrot.lane.b32.xlu0 %v1724, 112
    %v3688 = vpop.permute.xlu0 %3687
    %3689 = vrot.lane.b32.xlu0 %v1860, 112
    %v3690 = vpop.permute.xlu0 %3689
    %3691 = vrot.lane.b32.xlu0 %v1928, 112
    %v3692 = vpop.permute.xlu0 %3691
    %3693 = vrot.lane.b32.xlu0 %v2676, 112
    %v3694 = vpop.permute.xlu0 %3693
    %3695 = vrot.lane.b32.xlu0 %v2812, 112
    %v3696 = vpop.permute.xlu0 %3695
    %3697 = vrot.lane.b32.xlu0 %v2948, 112
    %v3698 = vpop.permute.xlu0 %3697
    %3699 = vrot.lane.b32.xlu0 %v3084, 112
    %v3700 = vpop.permute.xlu0 %3699
    %3701 = vrot.lane.b32.xlu0 %v3152, 112
    %v3702 = vpop.permute.xlu0 %3701
    %v3713 = vsel %vm188, %v833, %v3164
    %v3714 = vsel %vm188, %v969, %v3166
    %v3715 = vsel %vm188, %v1105, %v3168
    %v3716 = vsel %vm188, %v1241, %v3170
    %v3717 = vsel %vm188, %v1289, %v3172
    %v3718 = vsel %vm188, %v2057, %v3174
    %v3719 = vsel %vm188, %v2193, %v3176
    %v3720 = vsel %vm188, %v2329, %v3178
    %v3721 = vsel %vm188, %v2465, %v3180
    %v3722 = vsel %vm188, %v2513, %v3182
    %vm3723 = vcmask 261120
    %v3724 = vsel %vm3723, %v3713, %v3204
    %v3725 = vsel %vm3723, %v3714, %v3206
    %v3726 = vsel %vm3723, %v3715, %v3208
    %v3727 = vsel %vm3723, %v3716, %v3210
    %v3728 = vsel %vm3723, %v3717, %v3212
    %v3729 = vsel %vm3723, %v3718, %v3214
    %v3730 = vsel %vm3723, %v3719, %v3216
    %v3731 = vsel %vm3723, %v3720, %v3218
    %v3732 = vsel %vm3723, %v3721, %v3220
    %v3733 = vsel %vm3723, %v3722, %v3222
    %vm3734 = vcmask 392192
    %v3735 = vsel %vm3734, %v3724, %v3244
    %v3736 = vsel %vm3734, %v3725, %v3246
    %v3737 = vsel %vm3734, %v3726, %v3248
    %v3738 = vsel %vm3734, %v3727, %v3250
    %v3739 = vsel %vm3734, %v3728, %v3252
    %v3740 = vsel %vm3734, %v3729, %v3254
    %v3741 = vsel %vm3734, %v3730, %v3256
    %v3742 = vsel %vm3734, %v3731, %v3258
    %v3743 = vsel %vm3734, %v3732, %v3260
    %v3744 = vsel %vm3734, %v3733, %v3262
    %vm3745 = vcmask 523264
    %v3746 = vsel %vm3745, %v3735, %v3284
    %v3747 = vsel %vm3745, %v3736, %v3286
    %v3748 = vsel %vm3745, %v3737, %v3288
    %v3749 = vsel %vm3745, %v3738, %v3290
    %v3750 = vsel %vm3745, %v3739, %v3292
    %v3751 = vsel %vm3745, %v3740, %v3294
    %v3752 = vsel %vm3745, %v3741, %v3296
    %v3753 = vsel %vm3745, %v3742, %v3298
    %v3754 = vsel %vm3745, %v3743, %v3300
    %v3755 = vsel %vm3745, %v3744, %v3302
    %vm3756 = vcmask 654336
    %v3757 = vsel %vm3756, %v3746, %v3324
    %v3758 = vsel %vm3756, %v3747, %v3326
    %v3759 = vsel %vm3756, %v3748, %v3328
    %v3760 = vsel %vm3756, %v3749, %v3330
    %v3761 = vsel %vm3756, %v3750, %v3332
    %v3762 = vsel %vm3756, %v3751, %v3334
    %v3763 = vsel %vm3756, %v3752, %v3336
    %v3764 = vsel %vm3756, %v3753, %v3338
    %v3765 = vsel %vm3756, %v3754, %v3340
    %v3766 = vsel %vm3756, %v3755, %v3342
    %vm3767 = vcmask 785408
    %v3768 = vsel %vm3767, %v3757, %v3364
    %v3769 = vsel %vm3767, %v3758, %v3366
    %v3770 = vsel %vm3767, %v3759, %v3368
    %v3771 = vsel %vm3767, %v3760, %v3370
    %v3772 = vsel %vm3767, %v3761, %v3372
    %v3773 = vsel %vm3767, %v3762, %v3374
    %v3774 = vsel %vm3767, %v3763, %v3376
    %v3775 = vsel %vm3767, %v3764, %v3378
    %v3776 = vsel %vm3767, %v3765, %v3380
    %v3777 = vsel %vm3767, %v3766, %v3382
    %vm3778 = vcmask 916480
    %v3779 = vsel %vm3778, %v3768, %v3404
    %v3780 = vsel %vm3778, %v3769, %v3406
    %v3781 = vsel %vm3778, %v3770, %v3408
    %v3782 = vsel %vm3778, %v3771, %v3410
    %v3783 = vsel %vm3778, %v3772, %v3412
    %v3784 = vsel %vm3778, %v3773, %v3414
    %v3785 = vsel %vm3778, %v3774, %v3416
    %v3786 = vsel %vm3778, %v3775, %v3418
    %v3787 = vsel %vm3778, %v3776, %v3420
    %v3788 = vsel %vm3778, %v3777, %v3422
    %v3789 = vsel %vm188, %v1445, %v3444
    %v3790 = vsel %vm188, %v1581, %v3446
    %v3791 = vsel %vm188, %v1717, %v3448
    %v3792 = vsel %vm188, %v1853, %v3450
    %v3793 = vsel %vm188, %v1901, %v3452
    %v3794 = vsel %vm188, %v2669, %v3454
    %v3795 = vsel %vm188, %v2805, %v3456
    %v3796 = vsel %vm188, %v2941, %v3458
    %v3797 = vsel %vm188, %v3077, %v3460
    %v3798 = vsel %vm188, %v3125, %v3462
    %v3799 = vsel %vm3723, %v3789, %v3484
    %v3800 = vsel %vm3723, %v3790, %v3486
    %v3801 = vsel %vm3723, %v3791, %v3488
    %v3802 = vsel %vm3723, %v3792, %v3490
    %v3803 = vsel %vm3723, %v3793, %v3492
    %v3804 = vsel %vm3723, %v3794, %v3494
    %v3805 = vsel %vm3723, %v3795, %v3496
    %v3806 = vsel %vm3723, %v3796, %v3498
    %v3807 = vsel %vm3723, %v3797, %v3500
    %v3808 = vsel %vm3723, %v3798, %v3502
    %v3809 = vsel %vm3734, %v3799, %v3524
    %v3810 = vsel %vm3734, %v3800, %v3526
    %v3811 = vsel %vm3734, %v3801, %v3528
    %v3812 = vsel %vm3734, %v3802, %v3530
    %v3813 = vsel %vm3734, %v3803, %v3532
    %v3814 = vsel %vm3734, %v3804, %v3534
    %v3815 = vsel %vm3734, %v3805, %v3536
    %v3816 = vsel %vm3734, %v3806, %v3538
    %v3817 = vsel %vm3734, %v3807, %v3540
    %v3818 = vsel %vm3734, %v3808, %v3542
    %v3819 = vsel %vm3745, %v3809, %v3564
    %v3820 = vsel %vm3745, %v3810, %v3566
    %v3821 = vsel %vm3745, %v3811, %v3568
    %v3822 = vsel %vm3745, %v3812, %v3570
    %v3823 = vsel %vm3745, %v3813, %v3572
    %v3824 = vsel %vm3745, %v3814, %v3574
    %v3825 = vsel %vm3745, %v3815, %v3576
    %v3826 = vsel %vm3745, %v3816, %v3578
    %v3827 = vsel %vm3745, %v3817, %v3580
    %v3828 = vsel %vm3745, %v3818, %v3582
    %v3829 = vsel %vm3756, %v3819, %v3604
    %v3830 = vsel %vm3756, %v3820, %v3606
    %v3831 = vsel %vm3756, %v3821, %v3608
    %v3832 = vsel %vm3756, %v3822, %v3610
    %v3833 = vsel %vm3756, %v3823, %v3612
    %v3834 = vsel %vm3756, %v3824, %v3614
    %v3835 = vsel %vm3756, %v3825, %v3616
    %v3836 = vsel %vm3756, %v3826, %v3618
    %v3837 = vsel %vm3756, %v3827, %v3620
    %v3838 = vsel %vm3756, %v3828, %v3622
    %v3839 = vsel %vm3767, %v3829, %v3644
    %v3840 = vsel %vm3767, %v3830, %v3646
    %v3841 = vsel %vm3767, %v3831, %v3648
    %v3842 = vsel %vm3767, %v3832, %v3650
    %v3843 = vsel %vm3767, %v3833, %v3652
    %v3844 = vsel %vm3767, %v3834, %v3654
    %v3845 = vsel %vm3767, %v3835, %v3656
    %v3846 = vsel %vm3767, %v3836, %v3658
    %v3847 = vsel %vm3767, %v3837, %v3660
    %v3848 = vsel %vm3767, %v3838, %v3662
    %v3849 = vsel %vm3778, %v3839, %v3684
    %v3850 = vsel %vm3778, %v3840, %v3686
    %v3851 = vsel %vm3778, %v3841, %v3688
    %v3852 = vsel %vm3778, %v3842, %v3690
    %v3853 = vsel %vm3778, %v3843, %v3692
    %v3854 = vsel %vm3778, %v3844, %v3694
    %v3855 = vsel %vm3778, %v3845, %v3696
    %v3856 = vsel %vm3778, %v3846, %v3698
    %v3857 = vsel %vm3778, %v3847, %v3700
    %v3858 = vsel %vm3778, %v3848, %v3702
    %v3859 = vld [vmem:[%s1] sm:$0xff]
    %vm3860 = vcmask 293888
    %v3862 = vsel %vm3860, %v3859, 0
    %vm3864 = vcmask 1043456
    %v3866 = vsel %vm3864, %v3783, 0
    %v3869 = vsel %vm3864, %v3853, 0
    %3871 = vmatprep.subr.mxu0 %v3849
    %3872 = vmatpush1.msra.mxu0 %v3779
    %3873 = vmatprep.subr.mxu0 %v3850
    %3874 = vmatpush1.msra.mxu0 %v3780
    %3875 = vmatprep.subr.mxu0 %v3851
    %3876 = vmatpush1.msra.mxu0 %v3781
    %3877 = vmatprep.subr.mxu0 %v3852
    %3878 = vmatpush1.msra.mxu0 %v3782
    %3879 = vmatprep.subr.mxu0 %v3869
    %3880 = vmatpush1.msra.mxu0 %v3866
    %3881 = vmatprep.subr.mxu0 0.0
    %3882 = vmatpush1.msra.mxu0 0.0
    %3883 = vmatprep.subr.mxu0 0.0
    %3884 = vmatpush1.msra.mxu0 0.0
    %3885 = vmatprep.subr.mxu0 0.0
    %3886 = vmatpush1.msra.mxu0 0.0
    %3887 = vmatprep.subr.mxu0 0.0
    %3888 = vmatpush1.msra.mxu0 0.0
    %3889 = vmatprep.subr.mxu0 0.0
    %3890 = vmatpush1.msra.mxu0 0.0
    %3891 = vmatprep.subr.mxu0 0.0
    %3892 = vmatpush1.msra.mxu0 0.0
    %3893 = vmatprep.subr.mxu0 0.0
    %3894 = vmatpush1.msra.mxu0 0.0
    %3895 = vmatprep.subr.mxu0 0.0
    %3896 = vmatpush1.msra.mxu0 0.0
    %3897 = vmatprep.subr.mxu0 0.0
    %3898 = vmatpush1.msra.mxu0 0.0
    %3899 = vmatprep.subr.mxu0 0.0
    %3900 = vmatpush1.msra.mxu0 0.0
    %3901 = vmatprep.subr.mxu0 0.0
    %3902 = vmatpush1.msra.mxu0 0.0
    %3903 = vmatprep.subr.mxu0 0.0
    %3904 = vmatpush1.msra.mxu0 0.0
    %3905 = vmatprep.subr.mxu0 0.0
    %3906 = vmatpush1.msra.mxu0 0.0
    %3907 = vmatprep.subr.mxu0 0.0
    %3908 = vmatpush1.msra.mxu0 0.0
    %3909 = vmatprep.subr.mxu0 0.0
    %3910 = vmatpush1.msra.mxu0 0.0
    %3911 = vmatprep.subr.mxu0 0.0
    %3912 = vmatpush1.msra.mxu0 0.0
    %3913 = vmatprep.subr.mxu0 0.0
    %3914 = vmatpush1.msra.mxu0 0.0
    %3915 = vmatprep.subr.mxu0 0.0
    %3916 = vmatpush1.msra.mxu0 0.0
    %3917 = vmatprep.subr.mxu0 0.0
    %3918 = vmatpush1.msra.mxu0 0.0
    %3919 = vmatprep.subr.mxu0 0.0
    %3920 = vmatpush1.msra.mxu0 0.0
    %3921 = vmatprep.subr.mxu0 0.0
    %3922 = vmatpush1.msra.mxu0 0.0
    %3923 = vmatprep.subr.mxu0 0.0
    %3924 = vmatpush1.msra.mxu0 0.0
    %3925 = vmatprep.subr.mxu0 0.0
    %3926 = vmatpush1.msra.mxu0 0.0
    %3927 = vmatprep.subr.mxu0 0.0
    %3928 = vmatpush1.msra.mxu0 0.0
    %3929 = vmatprep.subr.mxu0 0.0
    %3930 = vmatpush1.msra.mxu0 0.0
    %3931 = vmatprep.subr.mxu0 0.0
    %3932 = vmatpush1.msra.mxu0 0.0
    %3933 = vmatprep.subr.mxu0 0.0
    %3934 = vmatpush1.msra.mxu0 0.0
    %3935 = vmatprep.mubr.f32.mxu0 0.0
    %3936 = vmatmul.mubr.f32.gmra.mrb[0].mxu0 %v3862
    %v3937 = vpop.f32.mrb[0].mxu0
    %v3938 = vadd.f32 0.0, %v3937
    %v3939 = vpop.f32.mrb[0].mxu0
    %v3940 = vadd.f32 0.0, %v3939
    %3941 = vdwg.mxu0
    %v3943 = vsel %vm3864, %v3788, 0
    %v3946 = vsel %vm3864, %v3858, 0
    %3948 = vmatprep.subr.mxu0 %v3854
    %3949 = vmatpush1.msra.mxu0 %v3784
    %3950 = vmatprep.subr.mxu0 %v3855
    %3951 = vmatpush1.msra.mxu0 %v3785
    %3952 = vmatprep.subr.mxu0 %v3856
    %3953 = vmatpush1.msra.mxu0 %v3786
    %3954 = vmatprep.subr.mxu0 %v3857
    %3955 = vmatpush1.msra.mxu0 %v3787
    %3956 = vmatprep.subr.mxu0 %v3946
    %3957 = vmatpush1.msra.mxu0 %v3943
    %3958 = vmatprep.subr.mxu0 0.0
    %3959 = vmatpush1.msra.mxu0 0.0
    %3960 = vmatprep.subr.mxu0 0.0
    %3961 = vmatpush1.msra.mxu0 0.0
    %3962 = vmatprep.subr.mxu0 0.0
    %3963 = vmatpush1.msra.mxu0 0.0
    %3964 = vmatprep.subr.mxu0 0.0
    %3965 = vmatpush1.msra.mxu0 0.0
    %3966 = vmatprep.subr.mxu0 0.0
    %3967 = vmatpush1.msra.mxu0 0.0
    %3968 = vmatprep.subr.mxu0 0.0
    %3969 = vmatpush1.msra.mxu0 0.0
    %3970 = vmatprep.subr.mxu0 0.0
    %3971 = vmatpush1.msra.mxu0 0.0
    %3972 = vmatprep.subr.mxu0 0.0
    %3973 = vmatpush1.msra.mxu0 0.0
    %3974 = vmatprep.subr.mxu0 0.0
    %3975 = vmatpush1.msra.mxu0 0.0
    %3976 = vmatprep.subr.mxu0 0.0
    %3977 = vmatpush1.msra.mxu0 0.0
    %3978 = vmatprep.subr.mxu0 0.0
    %3979 = vmatpush1.msra.mxu0 0.0
    %3980 = vmatprep.subr.mxu0 0.0
    %3981 = vmatpush1.msra.mxu0 0.0
    %3982 = vmatprep.subr.mxu0 0.0
    %3983 = vmatpush1.msra.mxu0 0.0
    %3984 = vmatprep.subr.mxu0 0.0
    %3985 = vmatpush1.msra.mxu0 0.0
    %3986 = vmatprep.subr.mxu0 0.0
    %3987 = vmatpush1.msra.mxu0 0.0
    %3988 = vmatprep.subr.mxu0 0.0
    %3989 = vmatpush1.msra.mxu0 0.0
    %3990 = vmatprep.subr.mxu0 0.0
    %3991 = vmatpush1.msra.mxu0 0.0
    %3992 = vmatprep.subr.mxu0 0.0
    %3993 = vmatpush1.msra.mxu0 0.0
    %3994 = vmatprep.subr.mxu0 0.0
    %3995 = vmatpush1.msra.mxu0 0.0
    %3996 = vmatprep.subr.mxu0 0.0
    %3997 = vmatpush1.msra.mxu0 0.0
    %3998 = vmatprep.subr.mxu0 0.0
    %3999 = vmatpush1.msra.mxu0 0.0
    %4000 = vmatprep.subr.mxu0 0.0
    %4001 = vmatpush1.msra.mxu0 0.0
    %4002 = vmatprep.subr.mxu0 0.0
    %4003 = vmatpush1.msra.mxu0 0.0
    %4004 = vmatprep.subr.mxu0 0.0
    %4005 = vmatpush1.msra.mxu0 0.0
    %4006 = vmatprep.subr.mxu0 0.0
    %4007 = vmatpush1.msra.mxu0 0.0
    %4008 = vmatprep.subr.mxu0 0.0
    %4009 = vmatpush1.msra.mxu0 0.0
    %4010 = vmatprep.subr.mxu0 0.0
    %4011 = vmatpush1.msra.mxu0 0.0
    %4012 = vmatprep.mubr.f32.mxu0 0.0
    %4013 = vmatmul.mubr.f32.gmra.mrb[0].mxu0 %v3862
    %v4014 = vpop.f32.mrb[0].mxu0
    %v4015 = vadd.f32 0.0, %v4014
    %v4016 = vpop.f32.mrb[0].mxu0
    %v4017 = vadd.f32 0.0, %v4016
    %4018 = vdwg.mxu0
    %v4019 = vld [vmem:[%s2] sm:$0xff]
    %v4020 = vld [vmem:[%s3] sm:$0xff]
    %v4021 = vadd.f32 %v3938, %v3940
    %4022 = vadd.xlane.f32.xlu0 %v4021
    %v4023 = vpop.xlane.xlu0 %4022
    %v4024 = vadd.f32 %v4015, %v4017
    %4025 = vadd.xlane.f32.xlu0 %v4024
    %v4026 = vpop.xlane.xlu0 %4025
    %v4027 = vadd.f32 %v4023, %v4026
    %v4028 = vrcp.pop 512.0
    %v4029 = vmul.f32 %v4027, %v4028
    %v4030 = vsub.f32 %v3938, %v4029
    %v4031 = vsub.f32 %v3940, %v4029
    %v4032 = vsub.f32 %v4015, %v4029
    %v4033 = vsub.f32 %v4017, %v4029
    %v4034 = vmul.f32 %v4030, %v4030
    %v4035 = vmul.f32 %v4031, %v4031
    %v4036 = vmul.f32 %v4032, %v4032
    %v4037 = vmul.f32 %v4033, %v4033
    %v4038 = vadd.f32 %v4034, %v4035
    %4039 = vadd.xlane.f32.xlu0 %v4038
    %v4040 = vpop.xlane.xlu0 %4039
    %v4041 = vadd.f32 %v4036, %v4037
    %4042 = vadd.xlane.f32.xlu0 %v4041
    %v4043 = vpop.xlane.xlu0 %4042
    %v4044 = vadd.f32 %v4040, %v4043
    %v4045 = vmul.f32 %v4044, %v4028
    %v4046 = vadd.f32 %v4045, 1e-05
    %v4047 = vrsqrt.pop %v4046
    %v4048 = vmul.f32 %v4030, %v4047
    %v4049 = vmul.f32 %v4031, %v4047
    %v4050 = vmul.f32 %v4032, %v4047
    %v4051 = vmul.f32 %v4033, %v4047
    %4053 = vset.pattern.permute.xlu0 0
    %4054 = vperm.xlu0 %4053, %v4019
    %v4055 = vpop.permute.xlu0 %4054
    %v4057 = vmul.f32 %v4048, %v4055
    %v4058 = vmul.f32 %v4049, %v4055
    %v4059 = vmul.f32 %v4050, %v4055
    %v4060 = vmul.f32 %v4051, %v4055
    %4062 = vset.pattern.permute.xlu0 0
    %4063 = vperm.xlu0 %4062, %v4020
    %v4064 = vpop.permute.xlu0 %4063
    %v4066 = vadd.f32 %v4057, %v4064
    %v4067 = vadd.f32 %v4058, %v4064
    %v4068 = vadd.f32 %v4059, %v4064
    %v4069 = vadd.f32 %v4060, %v4064
    %v4070 = vmax.f32 %v4066, 0.0
    %v4071 = vmax.f32 %v4067, 0.0
    %v4072 = vmax.f32 %v4068, 0.0
    %v4073 = vmax.f32 %v4069, 0.0
    %4074 = vst.msk [vmem:[#allocation4] sm:$0xff] %vm41, 0.0
    %4075 = vst.msk [vmem:[#allocation4 + $0x8] sm:$0xff] %vm41, 0.0
    %4076 = vst.msk [vmem:[#allocation4 + $0x10] sm:$0x3] %vm44, 0.0
    %4077 = vst.msk [vmem:[#allocation4 + $0x18] sm:$0xff] %vm41, 0.0
    %4078 = vst.msk [vmem:[#allocation4 + $0x20] sm:$0xff] %vm41, 0.0
    %4079 = vst.msk [vmem:[#allocation4 + $0x28] sm:$0x3] %vm44, 0.0
    %4080 = vst.msk [vmem:[#allocation4 + $0x30] sm:$0xff] %vm41, 0.0
    %4081 = vst.msk [vmem:[#allocation4 + $0x38] sm:$0xff] %vm41, 0.0
    %4082 = vst.msk [vmem:[#allocation4 + $0x40] sm:$0x3] %vm44, 0.0
    %4083 = vst.msk [vmem:[#allocation4 + $0x48] sm:$0xff] %vm41, 0.0
    %4084 = vst.msk [vmem:[#allocation4 + $0x50] sm:$0xff] %vm41, 0.0
    %4085 = vst.msk [vmem:[#allocation4 + $0x58] sm:$0x3] %vm44, 0.0
    %4086 = vst.msk [vmem:[#allocation4 + $0x60] sm:$0xff] %vm41, 0.0
    %4087 = vst.msk [vmem:[#allocation4 + $0x68] sm:$0xff] %vm41, 0.0
    %4088 = vst.msk [vmem:[#allocation4 + $0x70] sm:$0x3] %vm44, 0.0
    %4089 = vst.msk [vmem:[#allocation4 + $0x78] sm:$0xff] %vm41, 0.0
    %4090 = vst.msk [vmem:[#allocation4 + $0x80] sm:$0xff] %vm41, 0.0
    %4091 = vst.msk [vmem:[#allocation4 + $0x88] sm:$0x3] %vm44, 0.0
    %4092 = vst.msk [vmem:[#allocation4 + $0x90] sm:$0xff] %vm41, 0.0
    %4093 = vst.msk [vmem:[#allocation4 + $0x98] sm:$0xff] %vm41, 0.0
    %4094 = vst.msk [vmem:[#allocation4 + $0xa0] sm:$0x3] %vm44, 0.0
    %4095 = vst.msk [vmem:[#allocation4 + $0xa8] sm:$0xff] %vm41, 0.0
    %4096 = vst.msk [vmem:[#allocation4 + $0xb0] sm:$0xff] %vm41, 0.0
    %4097 = vst.msk [vmem:[#allocation4 + $0xb8] sm:$0x3] %vm44, 0.0
    %4098 = vst.msk [vmem:[#allocation4 + $0xc0] sm:$0xff] %vm41, 0.0
    %4099 = vst.msk [vmem:[#allocation4 + $0xc8] sm:$0xff] %vm41, 0.0
    %4100 = vst.msk [vmem:[#allocation4 + $0xd0] sm:$0x3] %vm44, 0.0
    %4101 = vst.msk [vmem:[#allocation4 + $0xd8] sm:$0xff] %vm41, 0.0
    %4102 = vst.msk [vmem:[#allocation4 + $0xe0] sm:$0xff] %vm41, 0.0
    %4103 = vst.msk [vmem:[#allocation4 + $0xe8] sm:$0x3] %vm44, 0.0
    %4104 = vst.msk [vmem:[#allocation4 + $0xf0] sm:$0xff] %vm41, 0.0
    %4105 = vst.msk [vmem:[#allocation4 + $0xf8] sm:$0xff] %vm41, 0.0
    %4106 = vst.msk [vmem:[#allocation4 + $0x100] sm:$0x3] %vm44, 0.0
    %4107 = vst.msk [vmem:[#allocation4 + $0x108] sm:$0xff] %vm41, 0.0
    %4108 = vst.msk [vmem:[#allocation4 + $0x110] sm:$0xff] %vm41, 0.0
    %4109 = vst.msk [vmem:[#allocation4 + $0x118] sm:$0x3] %vm44, 0.0
    %4110 = vst.msk [vmem:[#allocation4 + $0x120] sm:$0xff] %vm41, 0.0
    %4111 = vst.msk [vmem:[#allocation4 + $0x128] sm:$0xff] %vm41, 0.0
    %4112 = vst.msk [vmem:[#allocation4 + $0x130] sm:$0x3] %vm44, 0.0
    %4113 = vst.msk [vmem:[#allocation4 + $0x138] sm:$0xff] %vm41, 0.0
    %4114 = vst.msk [vmem:[#allocation4 + $0x140] sm:$0xff] %vm41, 0.0
    %4115 = vst.msk [vmem:[#allocation4 + $0x148] sm:$0x3] %vm44, 0.0
    %4116 = vst.msk [vmem:[#allocation4 + $0x150] sm:$0xff] %vm41, 0.0
    %4117 = vst.msk [vmem:[#allocation4 + $0x158] sm:$0xff] %vm41, 0.0
    %4118 = vst.msk [vmem:[#allocation4 + $0x160] sm:$0x3] %vm44, 0.0
    %4119 = vst.msk [vmem:[#allocation4 + $0x168] sm:$0xff] %vm41, 0.0
    %4120 = vst.msk [vmem:[#allocation4 + $0x170] sm:$0xff] %vm41, 0.0
    %4121 = vst.msk [vmem:[#allocation4 + $0x178] sm:$0x3] %vm44, 0.0
    %4124 = vrot.lane.b32.xlu0 %v4070, 112
    %v4125 = vpop.permute.xlu0 %4124
    %4126 = vrot.lane.b32.xlu0 %v4072, 112
    %v4127 = vpop.permute.xlu0 %4126
    %4130 = vrot.lane.b32.xlu0 %v4070, 96
    %v4131 = vpop.permute.xlu0 %4130
    %4132 = vrot.lane.b32.xlu0 %v4072, 96
    %v4133 = vpop.permute.xlu0 %4132
    %4136 = vrot.lane.b32.xlu0 %v4070, 80
    %v4137 = vpop.permute.xlu0 %4136
    %4138 = vrot.lane.b32.xlu0 %v4072, 80
    %v4139 = vpop.permute.xlu0 %4138
    %4142 = vrot.lane.b32.xlu0 %v4070, 64
    %v4143 = vpop.permute.xlu0 %4142
    %4144 = vrot.lane.b32.xlu0 %v4072, 64
    %v4145 = vpop.permute.xlu0 %4144
    %4148 = vrot.lane.b32.xlu0 %v4070, 48
    %v4149 = vpop.permute.xlu0 %4148
    %4150 = vrot.lane.b32.xlu0 %v4072, 48
    %v4151 = vpop.permute.xlu0 %4150
    %4154 = vrot.lane.b32.xlu0 %v4070, 32
    %v4155 = vpop.permute.xlu0 %4154
    %4156 = vrot.lane.b32.xlu0 %v4072, 32
    %v4157 = vpop.permute.xlu0 %4156
    %4160 = vrot.lane.b32.xlu0 %v4070, 16
    %v4161 = vpop.permute.xlu0 %4160
    %4162 = vrot.lane.b32.xlu0 %v4072, 16
    %v4163 = vpop.permute.xlu0 %4162
    %4168 = vrot.lane.b32.xlu0 %v4071, 112
    %v4169 = vpop.permute.xlu0 %4168
    %4170 = vrot.lane.b32.xlu0 %v4073, 112
    %v4171 = vpop.permute.xlu0 %4170
    %4174 = vrot.lane.b32.xlu0 %v4071, 96
    %v4175 = vpop.permute.xlu0 %4174
    %4176 = vrot.lane.b32.xlu0 %v4073, 96
    %v4177 = vpop.permute.xlu0 %4176
    %4180 = vrot.lane.b32.xlu0 %v4071, 80
    %v4181 = vpop.permute.xlu0 %4180
    %4182 = vrot.lane.b32.xlu0 %v4073, 80
    %v4183 = vpop.permute.xlu0 %4182
    %4186 = vrot.lane.b32.xlu0 %v4071, 64
    %v4187 = vpop.permute.xlu0 %4186
    %4188 = vrot.lane.b32.xlu0 %v4073, 64
    %v4189 = vpop.permute.xlu0 %4188
    %4192 = vrot.lane.b32.xlu0 %v4071, 48
    %v4193 = vpop.permute.xlu0 %4192
    %4194 = vrot.lane.b32.xlu0 %v4073, 48
    %v4195 = vpop.permute.xlu0 %4194
    %4198 = vrot.lane.b32.xlu0 %v4071, 32
    %v4199 = vpop.permute.xlu0 %4198
    %4200 = vrot.lane.b32.xlu0 %v4073, 32
    %v4201 = vpop.permute.xlu0 %4200
    %4204 = vrot.lane.b32.xlu0 %v4071, 16
    %v4205 = vpop.permute.xlu0 %4204
    %4206 = vrot.lane.b32.xlu0 %v4073, 16
    %v4207 = vpop.permute.xlu0 %4206
    %v4210 = vcombine.low %v4070, %v4131
    %v4211 = vcombine.high %v4070, %v4131
    %v4213 = vunpack.c.l.s4 1983009808
    %v4214 = vunpack.c.0.s8 %v4213
    %v4215 = vlaneseq
    %v4216 = vshrl.u32 %v4215, 7
    %v4217 = vsub.s32 %v4214, %v4216
    %v4218 = vrot.slane %v4210, %v4217
    %v4220 = vunpack.c.l.s4 1983009808
    %v4221 = vunpack.c.0.s8 %v4220
    %v4222 = vlaneseq
    %v4223 = vshrl.u32 %v4222, 7
    %v4224 = vsub.s32 %v4221, %v4223
    %v4225 = vrot.slane %v4211, %v4224
    %v4226 = vcombine.low %v4125, %v4137
    %v4227 = vcombine.high %v4125, %v4137
    %v4229 = vunpack.c.l.s4 1983009808
    %v4230 = vunpack.c.0.s8 %v4229
    %v4231 = vlaneseq
    %v4232 = vshrl.u32 %v4231, 7
    %v4233 = vsub.s32 %v4230, %v4232
    %v4234 = vrot.slane %v4226, %v4233
    %v4236 = vunpack.c.l.s4 1983009808
    %v4237 = vunpack.c.0.s8 %v4236
    %v4238 = vlaneseq
    %v4239 = vshrl.u32 %v4238, 7
    %v4240 = vsub.s32 %v4237, %v4239
    %v4241 = vrot.slane %v4227, %v4240
    %v4242 = vcombine.low %v4143, %v4155
    %v4243 = vcombine.high %v4143, %v4155
    %v4245 = vunpack.c.l.s4 1983009808
    %v4246 = vunpack.c.0.s8 %v4245
    %v4247 = vlaneseq
    %v4248 = vshrl.u32 %v4247, 7
    %v4249 = vsub.s32 %v4246, %v4248
    %v4250 = vrot.slane %v4242, %v4249
    %v4252 = vunpack.c.l.s4 1983009808
    %v4253 = vunpack.c.0.s8 %v4252
    %v4254 = vlaneseq
    %v4255 = vshrl.u32 %v4254, 7
    %v4256 = vsub.s32 %v4253, %v4255
    %v4257 = vrot.slane %v4243, %v4256
    %v4258 = vcombine.low %v4149, %v4161
    %v4259 = vcombine.high %v4149, %v4161
    %v4261 = vunpack.c.l.s4 1983009808
    %v4262 = vunpack.c.0.s8 %v4261
    %v4263 = vlaneseq
    %v4264 = vshrl.u32 %v4263, 7
    %v4265 = vsub.s32 %v4262, %v4264
    %v4266 = vrot.slane %v4258, %v4265
    %v4268 = vunpack.c.l.s4 1983009808
    %v4269 = vunpack.c.0.s8 %v4268
    %v4270 = vlaneseq
    %v4271 = vshrl.u32 %v4270, 7
    %v4272 = vsub.s32 %v4269, %v4271
    %v4273 = vrot.slane %v4259, %v4272
    %v4274 = vcombine.low %v4218, %v4234
    %v4275 = vcombine.high %v4218, %v4234
    %v4277 = vunpack.c.l.s4 1934713408
    %v4278 = vunpack.c.0.s8 %v4277
    %v4279 = vlaneseq
    %v4280 = vshrl.u32 %v4279, 7
    %v4281 = vsub.s32 %v4278, %v4280
    %v4282 = vrot.slane %v4274, %v4281
    %v4284 = vunpack.c.l.s4 1934713408
    %v4285 = vunpack.c.0.s8 %v4284
    %v4286 = vlaneseq
    %v4287 = vshrl.u32 %v4286, 7
    %v4288 = vsub.s32 %v4285, %v4287
    %v4289 = vrot.slane %v4275, %v4288
    %v4290 = vcombine.low %v4225, %v4241
    %v4291 = vcombine.high %v4225, %v4241
    %v4293 = vunpack.c.l.s4 1934713408
    %v4294 = vunpack.c.0.s8 %v4293
    %v4295 = vlaneseq
    %v4296 = vshrl.u32 %v4295, 7
    %v4297 = vsub.s32 %v4294, %v4296
    %v4298 = vrot.slane %v4290, %v4297
    %v4300 = vunpack.c.l.s4 1934713408
    %v4301 = vunpack.c.0.s8 %v4300
    %v4302 = vlaneseq
    %v4303 = vshrl.u32 %v4302, 7
    %v4304 = vsub.s32 %v4301, %v4303
    %v4305 = vrot.slane %v4291, %v4304
    %v4306 = vcombine.low %v4250, %v4266
    %v4307 = vcombine.high %v4250, %v4266
    %v4309 = vunpack.c.l.s4 1934713408
    %v4310 = vunpack.c.0.s8 %v4309
    %v4311 = vlaneseq
    %v4312 = vshrl.u32 %v4311, 7
    %v4313 = vsub.s32 %v4310, %v4312
    %v4314 = vrot.slane %v4306, %v4313
    %v4316 = vunpack.c.l.s4 1934713408
    %v4317 = vunpack.c.0.s8 %v4316
    %v4318 = vlaneseq
    %v4319 = vshrl.u32 %v4318, 7
    %v4320 = vsub.s32 %v4317, %v4319
    %v4321 = vrot.slane %v4307, %v4320
    %v4322 = vcombine.low %v4257, %v4273
    %v4323 = vcombine.high %v4257, %v4273
    %v4325 = vunpack.c.l.s4 1934713408
    %v4326 = vunpack.c.0.s8 %v4325
    %v4327 = vlaneseq
    %v4328 = vshrl.u32 %v4327, 7
    %v4329 = vsub.s32 %v4326, %v4328
    %v4330 = vrot.slane %v4322, %v4329
    %v4332 = vunpack.c.l.s4 1934713408
    %v4333 = vunpack.c.0.s8 %v4332
    %v4334 = vlaneseq
    %v4335 = vshrl.u32 %v4334, 7
    %v4336 = vsub.s32 %v4333, %v4335
    %v4337 = vrot.slane %v4323, %v4336
    %v4338 = vcombine.low %v4282, %v4314
    %v4339 = vcombine.high %v4282, %v4314
    %v4340 = vcombine.low %v4289, %v4321
    %v4341 = vcombine.high %v4289, %v4321
    %v4342 = vcombine.low %v4298, %v4330
    %v4343 = vcombine.high %v4298, %v4330
    %v4344 = vcombine.low %v4305, %v4337
    %v4345 = vcombine.high %v4305, %v4337
    %v4346 = vcombine.low %v4071, %v4175
    %v4347 = vcombine.high %v4071, %v4175
    %v4349 = vunpack.c.l.s4 1983009808
    %v4350 = vunpack.c.0.s8 %v4349
    %v4351 = vlaneseq
    %v4352 = vshrl.u32 %v4351, 7
    %v4353 = vsub.s32 %v4350, %v4352
    %v4354 = vrot.slane %v4346, %v4353
    %v4356 = vunpack.c.l.s4 1983009808
    %v4357 = vunpack.c.0.s8 %v4356
    %v4358 = vlaneseq
    %v4359 = vshrl.u32 %v4358, 7
    %v4360 = vsub.s32 %v4357, %v4359
    %v4361 = vrot.slane %v4347, %v4360
    %v4362 = vcombine.low %v4169, %v4181
    %v4363 = vcombine.high %v4169, %v4181
    %v4365 = vunpack.c.l.s4 1983009808
    %v4366 = vunpack.c.0.s8 %v4365
    %v4367 = vlaneseq
    %v4368 = vshrl.u32 %v4367, 7
    %v4369 = vsub.s32 %v4366, %v4368
    %v4370 = vrot.slane %v4362, %v4369
    %v4372 = vunpack.c.l.s4 1983009808
    %v4373 = vunpack.c.0.s8 %v4372
    %v4374 = vlaneseq
    %v4375 = vshrl.u32 %v4374, 7
    %v4376 = vsub.s32 %v4373, %v4375
    %v4377 = vrot.slane %v4363, %v4376
    %v4378 = vcombine.low %v4187, %v4199
    %v4379 = vcombine.high %v4187, %v4199
    %v4381 = vunpack.c.l.s4 1983009808
    %v4382 = vunpack.c.0.s8 %v4381
    %v4383 = vlaneseq
    %v4384 = vshrl.u32 %v4383, 7
    %v4385 = vsub.s32 %v4382, %v4384
    %v4386 = vrot.slane %v4378, %v4385
    %v4388 = vunpack.c.l.s4 1983009808
    %v4389 = vunpack.c.0.s8 %v4388
    %v4390 = vlaneseq
    %v4391 = vshrl.u32 %v4390, 7
    %v4392 = vsub.s32 %v4389, %v4391
    %v4393 = vrot.slane %v4379, %v4392
    %v4394 = vcombine.low %v4193, %v4205
    %v4395 = vcombine.high %v4193, %v4205
    %v4397 = vunpack.c.l.s4 1983009808
    %v4398 = vunpack.c.0.s8 %v4397
    %v4399 = vlaneseq
    %v4400 = vshrl.u32 %v4399, 7
    %v4401 = vsub.s32 %v4398, %v4400
    %v4402 = vrot.slane %v4394, %v4401
    %v4404 = vunpack.c.l.s4 1983009808
    %v4405 = vunpack.c.0.s8 %v4404
    %v4406 = vlaneseq
    %v4407 = vshrl.u32 %v4406, 7
    %v4408 = vsub.s32 %v4405, %v4407
    %v4409 = vrot.slane %v4395, %v4408
    %v4410 = vcombine.low %v4354, %v4370
    %v4411 = vcombine.high %v4354, %v4370
    %v4413 = vunpack.c.l.s4 1934713408
    %v4414 = vunpack.c.0.s8 %v4413
    %v4415 = vlaneseq
    %v4416 = vshrl.u32 %v4415, 7
    %v4417 = vsub.s32 %v4414, %v4416
    %v4418 = vrot.slane %v4410, %v4417
    %v4420 = vunpack.c.l.s4 1934713408
    %v4421 = vunpack.c.0.s8 %v4420
    %v4422 = vlaneseq
    %v4423 = vshrl.u32 %v4422, 7
    %v4424 = vsub.s32 %v4421, %v4423
    %v4425 = vrot.slane %v4411, %v4424
    %v4426 = vcombine.low %v4361, %v4377
    %v4427 = vcombine.high %v4361, %v4377
    %v4429 = vunpack.c.l.s4 1934713408
    %v4430 = vunpack.c.0.s8 %v4429
    %v4431 = vlaneseq
    %v4432 = vshrl.u32 %v4431, 7
    %v4433 = vsub.s32 %v4430, %v4432
    %v4434 = vrot.slane %v4426, %v4433
    %v4436 = vunpack.c.l.s4 1934713408
    %v4437 = vunpack.c.0.s8 %v4436
    %v4438 = vlaneseq
    %v4439 = vshrl.u32 %v4438, 7
    %v4440 = vsub.s32 %v4437, %v4439
    %v4441 = vrot.slane %v4427, %v4440
    %v4442 = vcombine.low %v4386, %v4402
    %v4443 = vcombine.high %v4386, %v4402
    %v4445 = vunpack.c.l.s4 1934713408
    %v4446 = vunpack.c.0.s8 %v4445
    %v4447 = vlaneseq
    %v4448 = vshrl.u32 %v4447, 7
    %v4449 = vsub.s32 %v4446, %v4448
    %v4450 = vrot.slane %v4442, %v4449
    %v4452 = vunpack.c.l.s4 1934713408
    %v4453 = vunpack.c.0.s8 %v4452
    %v4454 = vlaneseq
    %v4455 = vshrl.u32 %v4454, 7
    %v4456 = vsub.s32 %v4453, %v4455
    %v4457 = vrot.slane %v4443, %v4456
    %v4458 = vcombine.low %v4393, %v4409
    %v4459 = vcombine.high %v4393, %v4409
    %v4461 = vunpack.c.l.s4 1934713408
    %v4462 = vunpack.c.0.s8 %v4461
    %v4463 = vlaneseq
    %v4464 = vshrl.u32 %v4463, 7
    %v4465 = vsub.s32 %v4462, %v4464
    %v4466 = vrot.slane %v4458, %v4465
    %v4468 = vunpack.c.l.s4 1934713408
    %v4469 = vunpack.c.0.s8 %v4468
    %v4470 = vlaneseq
    %v4471 = vshrl.u32 %v4470, 7
    %v4472 = vsub.s32 %v4469, %v4471
    %v4473 = vrot.slane %v4459, %v4472
    %v4474 = vcombine.low %v4418, %v4450
    %v4475 = vcombine.high %v4418, %v4450
    %v4476 = vcombine.low %v4425, %v4457
    %v4477 = vcombine.high %v4425, %v4457
    %v4478 = vcombine.low %v4434, %v4466
    %v4479 = vcombine.high %v4434, %v4466
    %v4480 = vcombine.low %v4441, %v4473
    %v4481 = vcombine.high %v4441, %v4473
    %v4482 = vcombine.low %v4072, %v4133
    %v4483 = vcombine.high %v4072, %v4133
    %v4485 = vunpack.c.l.s4 1983009808
    %v4486 = vunpack.c.0.s8 %v4485
    %v4487 = vlaneseq
    %v4488 = vshrl.u32 %v4487, 7
    %v4489 = vsub.s32 %v4486, %v4488
    %v4490 = vrot.slane %v4482, %v4489
    %v4492 = vunpack.c.l.s4 1983009808
    %v4493 = vunpack.c.0.s8 %v4492
    %v4494 = vlaneseq
    %v4495 = vshrl.u32 %v4494, 7
    %v4496 = vsub.s32 %v4493, %v4495
    %v4497 = vrot.slane %v4483, %v4496
    %v4498 = vcombine.low %v4127, %v4139
    %v4499 = vcombine.high %v4127, %v4139
    %v4501 = vunpack.c.l.s4 1983009808
    %v4502 = vunpack.c.0.s8 %v4501
    %v4503 = vlaneseq
    %v4504 = vshrl.u32 %v4503, 7
    %v4505 = vsub.s32 %v4502, %v4504
    %v4506 = vrot.slane %v4498, %v4505
    %v4508 = vunpack.c.l.s4 1983009808
    %v4509 = vunpack.c.0.s8 %v4508
    %v4510 = vlaneseq
    %v4511 = vshrl.u32 %v4510, 7
    %v4512 = vsub.s32 %v4509, %v4511
    %v4513 = vrot.slane %v4499, %v4512
    %v4514 = vcombine.low %v4145, %v4157
    %v4515 = vcombine.high %v4145, %v4157
    %v4517 = vunpack.c.l.s4 1983009808
    %v4518 = vunpack.c.0.s8 %v4517
    %v4519 = vlaneseq
    %v4520 = vshrl.u32 %v4519, 7
    %v4521 = vsub.s32 %v4518, %v4520
    %v4522 = vrot.slane %v4514, %v4521
    %v4524 = vunpack.c.l.s4 1983009808
    %v4525 = vunpack.c.0.s8 %v4524
    %v4526 = vlaneseq
    %v4527 = vshrl.u32 %v4526, 7
    %v4528 = vsub.s32 %v4525, %v4527
    %v4529 = vrot.slane %v4515, %v4528
    %v4530 = vcombine.low %v4151, %v4163
    %v4531 = vcombine.high %v4151, %v4163
    %v4533 = vunpack.c.l.s4 1983009808
    %v4534 = vunpack.c.0.s8 %v4533
    %v4535 = vlaneseq
    %v4536 = vshrl.u32 %v4535, 7
    %v4537 = vsub.s32 %v4534, %v4536
    %v4538 = vrot.slane %v4530, %v4537
    %v4540 = vunpack.c.l.s4 1983009808
    %v4541 = vunpack.c.0.s8 %v4540
    %v4542 = vlaneseq
    %v4543 = vshrl.u32 %v4542, 7
    %v4544 = vsub.s32 %v4541, %v4543
    %v4545 = vrot.slane %v4531, %v4544
    %v4546 = vcombine.low %v4490, %v4506
    %v4547 = vcombine.high %v4490, %v4506
    %v4549 = vunpack.c.l.s4 1934713408
    %v4550 = vunpack.c.0.s8 %v4549
    %v4551 = vlaneseq
    %v4552 = vshrl.u32 %v4551, 7
    %v4553 = vsub.s32 %v4550, %v4552
    %v4554 = vrot.slane %v4546, %v4553
    %v4556 = vunpack.c.l.s4 1934713408
    %v4557 = vunpack.c.0.s8 %v4556
    %v4558 = vlaneseq
    %v4559 = vshrl.u32 %v4558, 7
    %v4560 = vsub.s32 %v4557, %v4559
    %v4561 = vrot.slane %v4547, %v4560
    %v4562 = vcombine.low %v4497, %v4513
    %v4563 = vcombine.high %v4497, %v4513
    %v4565 = vunpack.c.l.s4 1934713408
    %v4566 = vunpack.c.0.s8 %v4565
    %v4567 = vlaneseq
    %v4568 = vshrl.u32 %v4567, 7
    %v4569 = vsub.s32 %v4566, %v4568
    %v4570 = vrot.slane %v4562, %v4569
    %v4572 = vunpack.c.l.s4 1934713408
    %v4573 = vunpack.c.0.s8 %v4572
    %v4574 = vlaneseq
    %v4575 = vshrl.u32 %v4574, 7
    %v4576 = vsub.s32 %v4573, %v4575
    %v4577 = vrot.slane %v4563, %v4576
    %v4578 = vcombine.low %v4522, %v4538
    %v4579 = vcombine.high %v4522, %v4538
    %v4581 = vunpack.c.l.s4 1934713408
    %v4582 = vunpack.c.0.s8 %v4581
    %v4583 = vlaneseq
    %v4584 = vshrl.u32 %v4583, 7
    %v4585 = vsub.s32 %v4582, %v4584
    %v4586 = vrot.slane %v4578, %v4585
    %v4588 = vunpack.c.l.s4 1934713408
    %v4589 = vunpack.c.0.s8 %v4588
    %v4590 = vlaneseq
    %v4591 = vshrl.u32 %v4590, 7
    %v4592 = vsub.s32 %v4589, %v4591
    %v4593 = vrot.slane %v4579, %v4592
    %v4594 = vcombine.low %v4529, %v4545
    %v4595 = vcombine.high %v4529, %v4545
    %v4597 = vunpack.c.l.s4 1934713408
    %v4598 = vunpack.c.0.s8 %v4597
    %v4599 = vlaneseq
    %v4600 = vshrl.u32 %v4599, 7
    %v4601 = vsub.s32 %v4598, %v4600
    %v4602 = vrot.slane %v4594, %v4601
    %v4604 = vunpack.c.l.s4 1934713408
    %v4605 = vunpack.c.0.s8 %v4604
    %v4606 = vlaneseq
    %v4607 = vshrl.u32 %v4606, 7
    %v4608 = vsub.s32 %v4605, %v4607
    %v4609 = vrot.slane %v4595, %v4608
    %v4610 = vcombine.low %v4554, %v4586
    %v4611 = vcombine.high %v4554, %v4586
    %v4612 = vcombine.low %v4561, %v4593
    %v4613 = vcombine.high %v4561, %v4593
    %v4614 = vcombine.low %v4570, %v4602
    %v4615 = vcombine.high %v4570, %v4602
    %v4616 = vcombine.low %v4577, %v4609
    %v4617 = vcombine.high %v4577, %v4609
    %v4618 = vcombine.low %v4073, %v4177
    %v4619 = vcombine.high %v4073, %v4177
    %v4621 = vunpack.c.l.s4 1983009808
    %v4622 = vunpack.c.0.s8 %v4621
    %v4623 = vlaneseq
    %v4624 = vshrl.u32 %v4623, 7
    %v4625 = vsub.s32 %v4622, %v4624
    %v4626 = vrot.slane %v4618, %v4625
    %v4628 = vunpack.c.l.s4 1983009808
    %v4629 = vunpack.c.0.s8 %v4628
    %v4630 = vlaneseq
    %v4631 = vshrl.u32 %v4630, 7
    %v4632 = vsub.s32 %v4629, %v4631
    %v4633 = vrot.slane %v4619, %v4632
    %v4634 = vcombine.low %v4171, %v4183
    %v4635 = vcombine.high %v4171, %v4183
    %v4637 = vunpack.c.l.s4 1983009808
    %v4638 = vunpack.c.0.s8 %v4637
    %v4639 = vlaneseq
    %v4640 = vshrl.u32 %v4639, 7
    %v4641 = vsub.s32 %v4638, %v4640
    %v4642 = vrot.slane %v4634, %v4641
    %v4644 = vunpack.c.l.s4 1983009808
    %v4645 = vunpack.c.0.s8 %v4644
    %v4646 = vlaneseq
    %v4647 = vshrl.u32 %v4646, 7
    %v4648 = vsub.s32 %v4645, %v4647
    %v4649 = vrot.slane %v4635, %v4648
    %v4650 = vcombine.low %v4189, %v4201
    %v4651 = vcombine.high %v4189, %v4201
    %v4653 = vunpack.c.l.s4 1983009808
    %v4654 = vunpack.c.0.s8 %v4653
    %v4655 = vlaneseq
    %v4656 = vshrl.u32 %v4655, 7
    %v4657 = vsub.s32 %v4654, %v4656
    %v4658 = vrot.slane %v4650, %v4657
    %v4660 = vunpack.c.l.s4 1983009808
    %v4661 = vunpack.c.0.s8 %v4660
    %v4662 = vlaneseq
    %v4663 = vshrl.u32 %v4662, 7
    %v4664 = vsub.s32 %v4661, %v4663
    %v4665 = vrot.slane %v4651, %v4664
    %v4666 = vcombine.low %v4195, %v4207
    %v4667 = vcombine.high %v4195, %v4207
    %v4669 = vunpack.c.l.s4 1983009808
    %v4670 = vunpack.c.0.s8 %v4669
    %v4671 = vlaneseq
    %v4672 = vshrl.u32 %v4671, 7
    %v4673 = vsub.s32 %v4670, %v4672
    %v4674 = vrot.slane %v4666, %v4673
    %v4676 = vunpack.c.l.s4 1983009808
    %v4677 = vunpack.c.0.s8 %v4676
    %v4678 = vlaneseq
    %v4679 = vshrl.u32 %v4678, 7
    %v4680 = vsub.s32 %v4677, %v4679
    %v4681 = vrot.slane %v4667, %v4680
    %v4682 = vcombine.low %v4626, %v4642
    %v4683 = vcombine.high %v4626, %v4642
    %v4685 = vunpack.c.l.s4 1934713408
    %v4686 = vunpack.c.0.s8 %v4685
    %v4687 = vlaneseq
    %v4688 = vshrl.u32 %v4687, 7
    %v4689 = vsub.s32 %v4686, %v4688
    %v4690 = vrot.slane %v4682, %v4689
    %v4692 = vunpack.c.l.s4 1934713408
    %v4693 = vunpack.c.0.s8 %v4692
    %v4694 = vlaneseq
    %v4695 = vshrl.u32 %v4694, 7
    %v4696 = vsub.s32 %v4693, %v4695
    %v4697 = vrot.slane %v4683, %v4696
    %v4698 = vcombine.low %v4633, %v4649
    %v4699 = vcombine.high %v4633, %v4649
    %v4701 = vunpack.c.l.s4 1934713408
    %v4702 = vunpack.c.0.s8 %v4701
    %v4703 = vlaneseq
    %v4704 = vshrl.u32 %v4703, 7
    %v4705 = vsub.s32 %v4702, %v4704
    %v4706 = vrot.slane %v4698, %v4705
    %v4708 = vunpack.c.l.s4 1934713408
    %v4709 = vunpack.c.0.s8 %v4708
    %v4710 = vlaneseq
    %v4711 = vshrl.u32 %v4710, 7
    %v4712 = vsub.s32 %v4709, %v4711
    %v4713 = vrot.slane %v4699, %v4712
    %v4714 = vcombine.low %v4658, %v4674
    %v4715 = vcombine.high %v4658, %v4674
    %v4717 = vunpack.c.l.s4 1934713408
    %v4718 = vunpack.c.0.s8 %v4717
    %v4719 = vlaneseq
    %v4720 = vshrl.u32 %v4719, 7
    %v4721 = vsub.s32 %v4718, %v4720
    %v4722 = vrot.slane %v4714, %v4721
    %v4724 = vunpack.c.l.s4 1934713408
    %v4725 = vunpack.c.0.s8 %v4724
    %v4726 = vlaneseq
    %v4727 = vshrl.u32 %v4726, 7
    %v4728 = vsub.s32 %v4725, %v4727
    %v4729 = vrot.slane %v4715, %v4728
    %v4730 = vcombine.low %v4665, %v4681
    %v4731 = vcombine.high %v4665, %v4681
    %v4733 = vunpack.c.l.s4 1934713408
    %v4734 = vunpack.c.0.s8 %v4733
    %v4735 = vlaneseq
    %v4736 = vshrl.u32 %v4735, 7
    %v4737 = vsub.s32 %v4734, %v4736
    %v4738 = vrot.slane %v4730, %v4737
    %v4740 = vunpack.c.l.s4 1934713408
    %v4741 = vunpack.c.0.s8 %v4740
    %v4742 = vlaneseq
    %v4743 = vshrl.u32 %v4742, 7
    %v4744 = vsub.s32 %v4741, %v4743
    %v4745 = vrot.slane %v4731, %v4744
    %v4746 = vcombine.low %v4690, %v4722
    %v4747 = vcombine.high %v4690, %v4722
    %v4748 = vcombine.low %v4697, %v4729
    %v4749 = vcombine.high %v4697, %v4729
    %v4750 = vcombine.low %v4706, %v4738
    %v4751 = vcombine.high %v4706, %v4738
    %v4752 = vcombine.low %v4713, %v4745
    %v4753 = vcombine.high %v4713, %v4745
    %4786 = vrot.lane.b32.xlu0 %v4338, 1
    %v4787 = vpop.permute.xlu0 %4786
    %4788 = vrot.lane.b32.xlu0 %v4474, 1
    %v4789 = vpop.permute.xlu0 %4788
    %4790 = vrot.lane.b32.xlu0 %v4339, 1
    %v4791 = vpop.permute.xlu0 %4790
    %4792 = vrot.lane.b32.xlu0 %v4475, 1
    %v4793 = vpop.permute.xlu0 %4792
    %4794 = vrot.lane.b32.xlu0 %v4340, 1
    %v4795 = vpop.permute.xlu0 %4794
    %4796 = vrot.lane.b32.xlu0 %v4476, 1
    %v4797 = vpop.permute.xlu0 %4796
    %4798 = vrot.lane.b32.xlu0 %v4341, 1
    %v4799 = vpop.permute.xlu0 %4798
    %4800 = vrot.lane.b32.xlu0 %v4477, 1
    %v4801 = vpop.permute.xlu0 %4800
    %4802 = vrot.lane.b32.xlu0 %v4342, 1
    %v4803 = vpop.permute.xlu0 %4802
    %4804 = vrot.lane.b32.xlu0 %v4478, 1
    %v4805 = vpop.permute.xlu0 %4804
    %4806 = vrot.lane.b32.xlu0 %v4343, 1
    %v4807 = vpop.permute.xlu0 %4806
    %4808 = vrot.lane.b32.xlu0 %v4479, 1
    %v4809 = vpop.permute.xlu0 %4808
    %4810 = vrot.lane.b32.xlu0 %v4344, 1
    %v4811 = vpop.permute.xlu0 %4810
    %4812 = vrot.lane.b32.xlu0 %v4480, 1
    %v4813 = vpop.permute.xlu0 %4812
    %4814 = vrot.lane.b32.xlu0 %v4345, 1
    %v4815 = vpop.permute.xlu0 %4814
    %4816 = vrot.lane.b32.xlu0 %v4481, 1
    %v4817 = vpop.permute.xlu0 %4816
    %4818 = vrot.lane.b32.xlu0 %v4610, 1
    %v4819 = vpop.permute.xlu0 %4818
    %4820 = vrot.lane.b32.xlu0 %v4746, 1
    %v4821 = vpop.permute.xlu0 %4820
    %4822 = vrot.lane.b32.xlu0 %v4611, 1
    %v4823 = vpop.permute.xlu0 %4822
    %4824 = vrot.lane.b32.xlu0 %v4747, 1
    %v4825 = vpop.permute.xlu0 %4824
    %4826 = vrot.lane.b32.xlu0 %v4612, 1
    %v4827 = vpop.permute.xlu0 %4826
    %4828 = vrot.lane.b32.xlu0 %v4748, 1
    %v4829 = vpop.permute.xlu0 %4828
    %4830 = vrot.lane.b32.xlu0 %v4613, 1
    %v4831 = vpop.permute.xlu0 %4830
    %4832 = vrot.lane.b32.xlu0 %v4749, 1
    %v4833 = vpop.permute.xlu0 %4832
    %4834 = vrot.lane.b32.xlu0 %v4614, 1
    %v4835 = vpop.permute.xlu0 %4834
    %4836 = vrot.lane.b32.xlu0 %v4750, 1
    %v4837 = vpop.permute.xlu0 %4836
    %4838 = vrot.lane.b32.xlu0 %v4615, 1
    %v4839 = vpop.permute.xlu0 %4838
    %4840 = vrot.lane.b32.xlu0 %v4751, 1
    %v4841 = vpop.permute.xlu0 %4840
    %4842 = vrot.lane.b32.xlu0 %v4616, 1
    %v4843 = vpop.permute.xlu0 %4842
    %4844 = vrot.lane.b32.xlu0 %v4752, 1
    %v4845 = vpop.permute.xlu0 %4844
    %4846 = vrot.lane.b32.xlu0 %v4617, 1
    %v4847 = vpop.permute.xlu0 %4846
    %4848 = vrot.lane.b32.xlu0 %v4753, 1
    %v4849 = vpop.permute.xlu0 %4848
    %4882 = vst.msk [vmem:[#allocation4 + $0x1] sm:$0xff] %vm147, %v4787
    %4883 = vst.msk [vmem:[#allocation4 + $0x9] sm:$0xff] %vm147, %v4789
    %4884 = vst.msk [vmem:[#allocation4 + $0x19] sm:$0xff] %vm147, %v4791
    %4885 = vst.msk [vmem:[#allocation4 + $0x21] sm:$0xff] %vm147, %v4793
    %4886 = vst.msk [vmem:[#allocation4 + $0x31] sm:$0xff] %vm147, %v4795
    %4887 = vst.msk [vmem:[#allocation4 + $0x39] sm:$0xff] %vm147, %v4797
    %4888 = vst.msk [vmem:[#allocation4 + $0x49] sm:$0xff] %vm147, %v4799
    %4889 = vst.msk [vmem:[#allocation4 + $0x51] sm:$0xff] %vm147, %v4801
    %4890 = vst.msk [vmem:[#allocation4 + $0x61] sm:$0xff] %vm147, %v4803
    %4891 = vst.msk [vmem:[#allocation4 + $0x69] sm:$0xff] %vm147, %v4805
    %4892 = vst.msk [vmem:[#allocation4 + $0x79] sm:$0xff] %vm147, %v4807
    %4893 = vst.msk [vmem:[#allocation4 + $0x81] sm:$0xff] %vm147, %v4809
    %4894 = vst.msk [vmem:[#allocation4 + $0x91] sm:$0xff] %vm147, %v4811
    %4895 = vst.msk [vmem:[#allocation4 + $0x99] sm:$0xff] %vm147, %v4813
    %4896 = vst.msk [vmem:[#allocation4 + $0xa9] sm:$0xff] %vm147, %v4815
    %4897 = vst.msk [vmem:[#allocation4 + $0xb1] sm:$0xff] %vm147, %v4817
    %4898 = vst.msk [vmem:[#allocation4 + $0xc1] sm:$0xff] %vm147, %v4819
    %4899 = vst.msk [vmem:[#allocation4 + $0xc9] sm:$0xff] %vm147, %v4821
    %4900 = vst.msk [vmem:[#allocation4 + $0xd9] sm:$0xff] %vm147, %v4823
    %4901 = vst.msk [vmem:[#allocation4 + $0xe1] sm:$0xff] %vm147, %v4825
    %4902 = vst.msk [vmem:[#allocation4 + $0xf1] sm:$0xff] %vm147, %v4827
    %4903 = vst.msk [vmem:[#allocation4 + $0xf9] sm:$0xff] %vm147, %v4829
    %4904 = vst.msk [vmem:[#allocation4 + $0x109] sm:$0xff] %vm147, %v4831
    %4905 = vst.msk [vmem:[#allocation4 + $0x111] sm:$0xff] %vm147, %v4833
    %4906 = vst.msk [vmem:[#allocation4 + $0x121] sm:$0xff] %vm147, %v4835
    %4907 = vst.msk [vmem:[#allocation4 + $0x129] sm:$0xff] %vm147, %v4837
    %4908 = vst.msk [vmem:[#allocation4 + $0x139] sm:$0xff] %vm147, %v4839
    %4909 = vst.msk [vmem:[#allocation4 + $0x141] sm:$0xff] %vm147, %v4841
    %4910 = vst.msk [vmem:[#allocation4 + $0x151] sm:$0xff] %vm147, %v4843
    %4911 = vst.msk [vmem:[#allocation4 + $0x159] sm:$0xff] %vm147, %v4845
    %4912 = vst.msk [vmem:[#allocation4 + $0x169] sm:$0xff] %vm147, %v4847
    %4913 = vst.msk [vmem:[#allocation4 + $0x171] sm:$0xff] %vm147, %v4849
    %v4914 = vld [vmem:[#allocation4] sm:$0xff]
    %v4915 = vld [vmem:[#allocation4 + $0x8] sm:$0xff]
    %v4916 = vld [vmem:[#allocation4 + $0x10] sm:$0x3]
    %v4917 = vld [vmem:[#allocation4 + $0x18] sm:$0xff]
    %v4918 = vld [vmem:[#allocation4 + $0x20] sm:$0xff]
    %v4919 = vld [vmem:[#allocation4 + $0x28] sm:$0x3]
    %v4920 = vld [vmem:[#allocation4 + $0x30] sm:$0xff]
    %v4921 = vld [vmem:[#allocation4 + $0x38] sm:$0xff]
    %v4922 = vld [vmem:[#allocation4 + $0x40] sm:$0x3]
    %v4923 = vld [vmem:[#allocation4 + $0x48] sm:$0xff]
    %v4924 = vld [vmem:[#allocation4 + $0x50] sm:$0xff]
    %v4925 = vld [vmem:[#allocation4 + $0x58] sm:$0x3]
    %v4926 = vld [vmem:[#allocation4 + $0x60] sm:$0xff]
    %v4927 = vld [vmem:[#allocation4 + $0x68] sm:$0xff]
    %v4928 = vld [vmem:[#allocation4 + $0x70] sm:$0x3]
    %v4929 = vld [vmem:[#allocation4 + $0x78] sm:$0xff]
    %v4930 = vld [vmem:[#allocation4 + $0x80] sm:$0xff]
    %v4931 = vld [vmem:[#allocation4 + $0x88] sm:$0x3]
    %v4932 = vld [vmem:[#allocation4 + $0x90] sm:$0xff]
    %v4933 = vld [vmem:[#allocation4 + $0x98] sm:$0xff]
    %v4934 = vld [vmem:[#allocation4 + $0xa0] sm:$0x3]
    %v4935 = vld [vmem:[#allocation4 + $0xa8] sm:$0xff]
    %v4936 = vld [vmem:[#allocation4 + $0xb0] sm:$0xff]
    %v4937 = vld [vmem:[#allocation4 + $0xb8] sm:$0x3]
    %v4938 = vld [vmem:[#allocation4 + $0xc0] sm:$0xff]
    %v4939 = vld [vmem:[#allocation4 + $0xc8] sm:$0xff]
    %v4940 = vld [vmem:[#allocation4 + $0xd0] sm:$0x3]
    %v4941 = vld [vmem:[#allocation4 + $0xd8] sm:$0xff]
    %v4942 = vld [vmem:[#allocation4 + $0xe0] sm:$0xff]
    %v4943 = vld [vmem:[#allocation4 + $0xe8] sm:$0x3]
    %v4944 = vld [vmem:[#allocation4 + $0xf0] sm:$0xff]
    %v4945 = vld [vmem:[#allocation4 + $0xf8] sm:$0xff]
    %v4946 = vld [vmem:[#allocation4 + $0x100] sm:$0x3]
    %v4947 = vld [vmem:[#allocation4 + $0x108] sm:$0xff]
    %v4948 = vld [vmem:[#allocation4 + $0x110] sm:$0xff]
    %v4949 = vld [vmem:[#allocation4 + $0x118] sm:$0x3]
    %v4950 = vld [vmem:[#allocation4 + $0x120] sm:$0xff]
    %v4951 = vld [vmem:[#allocation4 + $0x128] sm:$0xff]
    %v4952 = vld [vmem:[#allocation4 + $0x130] sm:$0x3]
    %v4953 = vld [vmem:[#allocation4 + $0x138] sm:$0xff]
    %v4954 = vld [vmem:[#allocation4 + $0x140] sm:$0xff]
    %v4955 = vld [vmem:[#allocation4 + $0x148] sm:$0x3]
    %v4956 = vld [vmem:[#allocation4 + $0x150] sm:$0xff]
    %v4957 = vld [vmem:[#allocation4 + $0x158] sm:$0xff]
    %v4958 = vld [vmem:[#allocation4 + $0x160] sm:$0x3]
    %v4959 = vld [vmem:[#allocation4 + $0x168] sm:$0xff]
    %v4960 = vld [vmem:[#allocation4 + $0x170] sm:$0xff]
    %v4961 = vld [vmem:[#allocation4 + $0x178] sm:$0x3]
    %4962 = vst.msk [vmem:[#allocation5] sm:$0xff] %vm188, %v4914
    %4963 = vst.msk [vmem:[#allocation5 + $0x8] sm:$0xff] %vm188, %v4915
    %4964 = vst.msk [vmem:[#allocation5 + $0x10] sm:$0xff] %vm188, %v4917
    %4965 = vst.msk [vmem:[#allocation5 + $0x18] sm:$0xff] %vm188, %v4918
    %4966 = vst.msk [vmem:[#allocation5 + $0x20] sm:$0xff] %vm188, %v4920
    %4967 = vst.msk [vmem:[#allocation5 + $0x28] sm:$0xff] %vm188, %v4921
    %4968 = vst.msk [vmem:[#allocation5 + $0x30] sm:$0xff] %vm188, %v4923
    %4969 = vst.msk [vmem:[#allocation5 + $0x38] sm:$0xff] %vm188, %v4924
    %4970 = vst.msk [vmem:[#allocation5 + $0x40] sm:$0xff] %vm188, %v4926
    %4971 = vst.msk [vmem:[#allocation5 + $0x48] sm:$0xff] %vm188, %v4927
    %4972 = vst.msk [vmem:[#allocation5 + $0x50] sm:$0xff] %vm188, %v4929
    %4973 = vst.msk [vmem:[#allocation5 + $0x58] sm:$0xff] %vm188, %v4930
    %4974 = vst.msk [vmem:[#allocation5 + $0x60] sm:$0xff] %vm188, %v4932
    %4975 = vst.msk [vmem:[#allocation5 + $0x68] sm:$0xff] %vm188, %v4933
    %4976 = vst.msk [vmem:[#allocation5 + $0x70] sm:$0xff] %vm188, %v4935
    %4977 = vst.msk [vmem:[#allocation5 + $0x78] sm:$0xff] %vm188, %v4936
    %4978 = vst.msk [vmem:[#allocation5 + $0x480] sm:$0xff] %vm188, %v4938
    %4979 = vst.msk [vmem:[#allocation5 + $0x488] sm:$0xff] %vm188, %v4939
    %4980 = vst.msk [vmem:[#allocation5 + $0x490] sm:$0xff] %vm188, %v4941
    %4981 = vst.msk [vmem:[#allocation5 + $0x498] sm:$0xff] %vm188, %v4942
    %4982 = vst.msk [vmem:[#allocation5 + $0x4a0] sm:$0xff] %vm188, %v4944
    %4983 = vst.msk [vmem:[#allocation5 + $0x4a8] sm:$0xff] %vm188, %v4945
    %4984 = vst.msk [vmem:[#allocation5 + $0x4b0] sm:$0xff] %vm188, %v4947
    %4985 = vst.msk [vmem:[#allocation5 + $0x4b8] sm:$0xff] %vm188, %v4948
    %4986 = vst.msk [vmem:[#allocation5 + $0x4c0] sm:$0xff] %vm188, %v4950
    %4987 = vst.msk [vmem:[#allocation5 + $0x4c8] sm:$0xff] %vm188, %v4951
    %4988 = vst.msk [vmem:[#allocation5 + $0x4d0] sm:$0xff] %vm188, %v4953
    %4989 = vst.msk [vmem:[#allocation5 + $0x4d8] sm:$0xff] %vm188, %v4954
    %4990 = vst.msk [vmem:[#allocation5 + $0x4e0] sm:$0xff] %vm188, %v4956
    %4991 = vst.msk [vmem:[#allocation5 + $0x4e8] sm:$0xff] %vm188, %v4957
    %4992 = vst.msk [vmem:[#allocation5 + $0x4f0] sm:$0xff] %vm188, %v4959
    %4993 = vst.msk [vmem:[#allocation5 + $0x4f8] sm:$0xff] %vm188, %v4960
    %5026 = vrot.lane.b32.xlu0 %v4914, 127
    %v5027 = vpop.permute.xlu0 %5026
    %5028 = vrot.lane.b32.xlu0 %v4915, 127
    %v5029 = vpop.permute.xlu0 %5028
    %5030 = vrot.lane.b32.xlu0 %v4917, 127
    %v5031 = vpop.permute.xlu0 %5030
    %5032 = vrot.lane.b32.xlu0 %v4918, 127
    %v5033 = vpop.permute.xlu0 %5032
    %5034 = vrot.lane.b32.xlu0 %v4920, 127
    %v5035 = vpop.permute.xlu0 %5034
    %5036 = vrot.lane.b32.xlu0 %v4921, 127
    %v5037 = vpop.permute.xlu0 %5036
    %5038 = vrot.lane.b32.xlu0 %v4923, 127
    %v5039 = vpop.permute.xlu0 %5038
    %5040 = vrot.lane.b32.xlu0 %v4924, 127
    %v5041 = vpop.permute.xlu0 %5040
    %5042 = vrot.lane.b32.xlu0 %v4926, 127
    %v5043 = vpop.permute.xlu0 %5042
    %5044 = vrot.lane.b32.xlu0 %v4927, 127
    %v5045 = vpop.permute.xlu0 %5044
    %5046 = vrot.lane.b32.xlu0 %v4929, 127
    %v5047 = vpop.permute.xlu0 %5046
    %5048 = vrot.lane.b32.xlu0 %v4930, 127
    %v5049 = vpop.permute.xlu0 %5048
    %5050 = vrot.lane.b32.xlu0 %v4932, 127
    %v5051 = vpop.permute.xlu0 %5050
    %5052 = vrot.lane.b32.xlu0 %v4933, 127
    %v5053 = vpop.permute.xlu0 %5052
    %5054 = vrot.lane.b32.xlu0 %v4935, 127
    %v5055 = vpop.permute.xlu0 %5054
    %5056 = vrot.lane.b32.xlu0 %v4936, 127
    %v5057 = vpop.permute.xlu0 %5056
    %5058 = vrot.lane.b32.xlu0 %v4938, 127
    %v5059 = vpop.permute.xlu0 %5058
    %5060 = vrot.lane.b32.xlu0 %v4939, 127
    %v5061 = vpop.permute.xlu0 %5060
    %5062 = vrot.lane.b32.xlu0 %v4941, 127
    %v5063 = vpop.permute.xlu0 %5062
    %5064 = vrot.lane.b32.xlu0 %v4942, 127
    %v5065 = vpop.permute.xlu0 %5064
    %5066 = vrot.lane.b32.xlu0 %v4944, 127
    %v5067 = vpop.permute.xlu0 %5066
    %5068 = vrot.lane.b32.xlu0 %v4945, 127
    %v5069 = vpop.permute.xlu0 %5068
    %5070 = vrot.lane.b32.xlu0 %v4947, 127
    %v5071 = vpop.permute.xlu0 %5070
    %5072 = vrot.lane.b32.xlu0 %v4948, 127
    %v5073 = vpop.permute.xlu0 %5072
    %5074 = vrot.lane.b32.xlu0 %v4950, 127
    %v5075 = vpop.permute.xlu0 %5074
    %5076 = vrot.lane.b32.xlu0 %v4951, 127
    %v5077 = vpop.permute.xlu0 %5076
    %5078 = vrot.lane.b32.xlu0 %v4953, 127
    %v5079 = vpop.permute.xlu0 %5078
    %5080 = vrot.lane.b32.xlu0 %v4954, 127
    %v5081 = vpop.permute.xlu0 %5080
    %5082 = vrot.lane.b32.xlu0 %v4956, 127
    %v5083 = vpop.permute.xlu0 %5082
    %5084 = vrot.lane.b32.xlu0 %v4957, 127
    %v5085 = vpop.permute.xlu0 %5084
    %5086 = vrot.lane.b32.xlu0 %v4959, 127
    %v5087 = vpop.permute.xlu0 %5086
    %5088 = vrot.lane.b32.xlu0 %v4960, 127
    %v5089 = vpop.permute.xlu0 %5088
    %s5122 = scalar_lea.vmem [#allocation5], 128
    %5123 = vst.msk [vmem:[%s5122] sm:$0xff] %vm188, %v5027
    %5124 = vst.msk [vmem:[%s5122 + $0x8] sm:$0xff] %vm188, %v5029
    %5125 = vst.msk [vmem:[%s5122 + $0x10] sm:$0xff] %vm188, %v5031
    %5126 = vst.msk [vmem:[%s5122 + $0x18] sm:$0xff] %vm188, %v5033
    %5127 = vst.msk [vmem:[%s5122 + $0x20] sm:$0xff] %vm188, %v5035
    %5128 = vst.msk [vmem:[%s5122 + $0x28] sm:$0xff] %vm188, %v5037
    %5129 = vst.msk [vmem:[%s5122 + $0x30] sm:$0xff] %vm188, %v5039
    %5130 = vst.msk [vmem:[%s5122 + $0x38] sm:$0xff] %vm188, %v5041
    %5131 = vst.msk [vmem:[%s5122 + $0x40] sm:$0xff] %vm188, %v5043
    %5132 = vst.msk [vmem:[%s5122 + $0x48] sm:$0xff] %vm188, %v5045
    %5133 = vst.msk [vmem:[%s5122 + $0x50] sm:$0xff] %vm188, %v5047
    %5134 = vst.msk [vmem:[%s5122 + $0x58] sm:$0xff] %vm188, %v5049
    %5135 = vst.msk [vmem:[%s5122 + $0x60] sm:$0xff] %vm188, %v5051
    %5136 = vst.msk [vmem:[%s5122 + $0x68] sm:$0xff] %vm188, %v5053
    %5137 = vst.msk [vmem:[%s5122 + $0x70] sm:$0xff] %vm188, %v5055
    %5138 = vst.msk [vmem:[%s5122 + $0x78] sm:$0xff] %vm188, %v5057
    %5139 = vst.msk [vmem:[%s5122 + $0x480] sm:$0xff] %vm188, %v5059
    %5140 = vst.msk [vmem:[%s5122 + $0x488] sm:$0xff] %vm188, %v5061
    %5141 = vst.msk [vmem:[%s5122 + $0x490] sm:$0xff] %vm188, %v5063
    %5142 = vst.msk [vmem:[%s5122 + $0x498] sm:$0xff] %vm188, %v5065
    %5143 = vst.msk [vmem:[%s5122 + $0x4a0] sm:$0xff] %vm188, %v5067
    %5144 = vst.msk [vmem:[%s5122 + $0x4a8] sm:$0xff] %vm188, %v5069
    %5145 = vst.msk [vmem:[%s5122 + $0x4b0] sm:$0xff] %vm188, %v5071
    %5146 = vst.msk [vmem:[%s5122 + $0x4b8] sm:$0xff] %vm188, %v5073
    %5147 = vst.msk [vmem:[%s5122 + $0x4c0] sm:$0xff] %vm188, %v5075
    %5148 = vst.msk [vmem:[%s5122 + $0x4c8] sm:$0xff] %vm188, %v5077
    %5149 = vst.msk [vmem:[%s5122 + $0x4d0] sm:$0xff] %vm188, %v5079
    %5150 = vst.msk [vmem:[%s5122 + $0x4d8] sm:$0xff] %vm188, %v5081
    %5151 = vst.msk [vmem:[%s5122 + $0x4e0] sm:$0xff] %vm188, %v5083
    %5152 = vst.msk [vmem:[%s5122 + $0x4e8] sm:$0xff] %vm188, %v5085
    %5153 = vst.msk [vmem:[%s5122 + $0x4f0] sm:$0xff] %vm188, %v5087
    %5154 = vst.msk [vmem:[%s5122 + $0x4f8] sm:$0xff] %vm188, %v5089
    %5155 = vrot.lane.b32.xlu0 %v4914, 126
    %v5156 = vpop.permute.xlu0 %5155
    %5157 = vrot.lane.b32.xlu0 %v4915, 126
    %v5158 = vpop.permute.xlu0 %5157
    %5159 = vrot.lane.b32.xlu0 %v4917, 126
    %v5160 = vpop.permute.xlu0 %5159
    %5161 = vrot.lane.b32.xlu0 %v4918, 126
    %v5162 = vpop.permute.xlu0 %5161
    %5163 = vrot.lane.b32.xlu0 %v4920, 126
    %v5164 = vpop.permute.xlu0 %5163
    %5165 = vrot.lane.b32.xlu0 %v4921, 126
    %v5166 = vpop.permute.xlu0 %5165
    %5167 = vrot.lane.b32.xlu0 %v4923, 126
    %v5168 = vpop.permute.xlu0 %5167
    %5169 = vrot.lane.b32.xlu0 %v4924, 126
    %v5170 = vpop.permute.xlu0 %5169
    %5171 = vrot.lane.b32.xlu0 %v4926, 126
    %v5172 = vpop.permute.xlu0 %5171
    %5173 = vrot.lane.b32.xlu0 %v4927, 126
    %v5174 = vpop.permute.xlu0 %5173
    %5175 = vrot.lane.b32.xlu0 %v4929, 126
    %v5176 = vpop.permute.xlu0 %5175
    %5177 = vrot.lane.b32.xlu0 %v4930, 126
    %v5178 = vpop.permute.xlu0 %5177
    %5179 = vrot.lane.b32.xlu0 %v4932, 126
    %v5180 = vpop.permute.xlu0 %5179
    %5181 = vrot.lane.b32.xlu0 %v4933, 126
    %v5182 = vpop.permute.xlu0 %5181
    %5183 = vrot.lane.b32.xlu0 %v4935, 126
    %v5184 = vpop.permute.xlu0 %5183
    %5185 = vrot.lane.b32.xlu0 %v4936, 126
    %v5186 = vpop.permute.xlu0 %5185
    %5187 = vrot.lane.b32.xlu0 %v4938, 126
    %v5188 = vpop.permute.xlu0 %5187
    %5189 = vrot.lane.b32.xlu0 %v4939, 126
    %v5190 = vpop.permute.xlu0 %5189
    %5191 = vrot.lane.b32.xlu0 %v4941, 126
    %v5192 = vpop.permute.xlu0 %5191
    %5193 = vrot.lane.b32.xlu0 %v4942, 126
    %v5194 = vpop.permute.xlu0 %5193
    %5195 = vrot.lane.b32.xlu0 %v4944, 126
    %v5196 = vpop.permute.xlu0 %5195
    %5197 = vrot.lane.b32.xlu0 %v4945, 126
    %v5198 = vpop.permute.xlu0 %5197
    %5199 = vrot.lane.b32.xlu0 %v4947, 126
    %v5200 = vpop.permute.xlu0 %5199
    %5201 = vrot.lane.b32.xlu0 %v4948, 126
    %v5202 = vpop.permute.xlu0 %5201
    %5203 = vrot.lane.b32.xlu0 %v4950, 126
    %v5204 = vpop.permute.xlu0 %5203
    %5205 = vrot.lane.b32.xlu0 %v4951, 126
    %v5206 = vpop.permute.xlu0 %5205
    %5207 = vrot.lane.b32.xlu0 %v4953, 126
    %v5208 = vpop.permute.xlu0 %5207
    %5209 = vrot.lane.b32.xlu0 %v4954, 126
    %v5210 = vpop.permute.xlu0 %5209
    %5211 = vrot.lane.b32.xlu0 %v4956, 126
    %v5212 = vpop.permute.xlu0 %5211
    %5213 = vrot.lane.b32.xlu0 %v4957, 126
    %v5214 = vpop.permute.xlu0 %5213
    %5215 = vrot.lane.b32.xlu0 %v4959, 126
    %v5216 = vpop.permute.xlu0 %5215
    %5217 = vrot.lane.b32.xlu0 %v4960, 126
    %v5218 = vpop.permute.xlu0 %5217
    %s5251 = scalar_lea.vmem [#allocation5], 256
    %5252 = vst.msk [vmem:[%s5251] sm:$0xff] %vm188, %v5156
    %5253 = vst.msk [vmem:[%s5251 + $0x8] sm:$0xff] %vm188, %v5158
    %5254 = vst.msk [vmem:[%s5251 + $0x10] sm:$0xff] %vm188, %v5160
    %5255 = vst.msk [vmem:[%s5251 + $0x18] sm:$0xff] %vm188, %v5162
    %5256 = vst.msk [vmem:[%s5251 + $0x20] sm:$0xff] %vm188, %v5164
    %5257 = vst.msk [vmem:[%s5251 + $0x28] sm:$0xff] %vm188, %v5166
    %5258 = vst.msk [vmem:[%s5251 + $0x30] sm:$0xff] %vm188, %v5168
    %5259 = vst.msk [vmem:[%s5251 + $0x38] sm:$0xff] %vm188, %v5170
    %5260 = vst.msk [vmem:[%s5251 + $0x40] sm:$0xff] %vm188, %v5172
    %5261 = vst.msk [vmem:[%s5251 + $0x48] sm:$0xff] %vm188, %v5174
    %5262 = vst.msk [vmem:[%s5251 + $0x50] sm:$0xff] %vm188, %v5176
    %5263 = vst.msk [vmem:[%s5251 + $0x58] sm:$0xff] %vm188, %v5178
    %5264 = vst.msk [vmem:[%s5251 + $0x60] sm:$0xff] %vm188, %v5180
    %5265 = vst.msk [vmem:[%s5251 + $0x68] sm:$0xff] %vm188, %v5182
    %5266 = vst.msk [vmem:[%s5251 + $0x70] sm:$0xff] %vm188, %v5184
    %5267 = vst.msk [vmem:[%s5251 + $0x78] sm:$0xff] %vm188, %v5186
    %5268 = vst.msk [vmem:[%s5251 + $0x480] sm:$0xff] %vm188, %v5188
    %5269 = vst.msk [vmem:[%s5251 + $0x488] sm:$0xff] %vm188, %v5190
    %5270 = vst.msk [vmem:[%s5251 + $0x490] sm:$0xff] %vm188, %v5192
    %5271 = vst.msk [vmem:[%s5251 + $0x498] sm:$0xff] %vm188, %v5194
    %5272 = vst.msk [vmem:[%s5251 + $0x4a0] sm:$0xff] %vm188, %v5196
    %5273 = vst.msk [vmem:[%s5251 + $0x4a8] sm:$0xff] %vm188, %v5198
    %5274 = vst.msk [vmem:[%s5251 + $0x4b0] sm:$0xff] %vm188, %v5200
    %5275 = vst.msk [vmem:[%s5251 + $0x4b8] sm:$0xff] %vm188, %v5202
    %5276 = vst.msk [vmem:[%s5251 + $0x4c0] sm:$0xff] %vm188, %v5204
    %5277 = vst.msk [vmem:[%s5251 + $0x4c8] sm:$0xff] %vm188, %v5206
    %5278 = vst.msk [vmem:[%s5251 + $0x4d0] sm:$0xff] %vm188, %v5208
    %5279 = vst.msk [vmem:[%s5251 + $0x4d8] sm:$0xff] %vm188, %v5210
    %5280 = vst.msk [vmem:[%s5251 + $0x4e0] sm:$0xff] %vm188, %v5212
    %5281 = vst.msk [vmem:[%s5251 + $0x4e8] sm:$0xff] %vm188, %v5214
    %5282 = vst.msk [vmem:[%s5251 + $0x4f0] sm:$0xff] %vm188, %v5216
    %5283 = vst.msk [vmem:[%s5251 + $0x4f8] sm:$0xff] %vm188, %v5218
    %s5284 = scalar_lea.vmem [#allocation5], 384
    %5285 = vst.msk [vmem:[%s5284 - $0x1] sm:$0xfe] %vm352, %v4914
    %5286 = vst.msk [vmem:[%s5284 + $0x7] sm:$0xff] %vm188, %v4915
    %5287 = vst.msk [vmem:[%s5284 + $0xf] sm:$0x1] %vm355, %v4916
    %5288 = vst.msk [vmem:[%s5284 + $0xf] sm:$0xfe] %vm352, %v4917
    %5289 = vst.msk [vmem:[%s5284 + $0x17] sm:$0xff] %vm188, %v4918
    %5290 = vst.msk [vmem:[%s5284 + $0x1f] sm:$0x1] %vm355, %v4919
    %5291 = vst.msk [vmem:[%s5284 + $0x1f] sm:$0xfe] %vm352, %v4920
    %5292 = vst.msk [vmem:[%s5284 + $0x27] sm:$0xff] %vm188, %v4921
    %5293 = vst.msk [vmem:[%s5284 + $0x2f] sm:$0x1] %vm355, %v4922
    %5294 = vst.msk [vmem:[%s5284 + $0x2f] sm:$0xfe] %vm352, %v4923
    %5295 = vst.msk [vmem:[%s5284 + $0x37] sm:$0xff] %vm188, %v4924
    %5296 = vst.msk [vmem:[%s5284 + $0x3f] sm:$0x1] %vm355, %v4925
    %5297 = vst.msk [vmem:[%s5284 + $0x3f] sm:$0xfe] %vm352, %v4926
    %5298 = vst.msk [vmem:[%s5284 + $0x47] sm:$0xff] %vm188, %v4927
    %5299 = vst.msk [vmem:[%s5284 + $0x4f] sm:$0x1] %vm355, %v4928
    %5300 = vst.msk [vmem:[%s5284 + $0x4f] sm:$0xfe] %vm352, %v4929
    %5301 = vst.msk [vmem:[%s5284 + $0x57] sm:$0xff] %vm188, %v4930
    %5302 = vst.msk [vmem:[%s5284 + $0x5f] sm:$0x1] %vm355, %v4931
    %5303 = vst.msk [vmem:[%s5284 + $0x5f] sm:$0xfe] %vm352, %v4932
    %5304 = vst.msk [vmem:[%s5284 + $0x67] sm:$0xff] %vm188, %v4933
    %5305 = vst.msk [vmem:[%s5284 + $0x6f] sm:$0x1] %vm355, %v4934
    %5306 = vst.msk [vmem:[%s5284 + $0x6f] sm:$0xfe] %vm352, %v4935
    %5307 = vst.msk [vmem:[%s5284 + $0x77] sm:$0xff] %vm188, %v4936
    %5308 = vst.msk [vmem:[%s5284 + $0x7f] sm:$0x1] %vm355, %v4937
    %5309 = vst.msk [vmem:[%s5284 + $0x47f] sm:$0xfe] %vm352, %v4938
    %5310 = vst.msk [vmem:[%s5284 + $0x487] sm:$0xff] %vm188, %v4939
    %5311 = vst.msk [vmem:[%s5284 + $0x48f] sm:$0x1] %vm355, %v4940
    %5312 = vst.msk [vmem:[%s5284 + $0x48f] sm:$0xfe] %vm352, %v4941
    %5313 = vst.msk [vmem:[%s5284 + $0x497] sm:$0xff] %vm188, %v4942
    %5314 = vst.msk [vmem:[%s5284 + $0x49f] sm:$0x1] %vm355, %v4943
    %5315 = vst.msk [vmem:[%s5284 + $0x49f] sm:$0xfe] %vm352, %v4944
    %5316 = vst.msk [vmem:[%s5284 + $0x4a7] sm:$0xff] %vm188, %v4945
    %5317 = vst.msk [vmem:[%s5284 + $0x4af] sm:$0x1] %vm355, %v4946
    %5318 = vst.msk [vmem:[%s5284 + $0x4af] sm:$0xfe] %vm352, %v4947
    %5319 = vst.msk [vmem:[%s5284 + $0x4b7] sm:$0xff] %vm188, %v4948
    %5320 = vst.msk [vmem:[%s5284 + $0x4bf] sm:$0x1] %vm355, %v4949
    %5321 = vst.msk [vmem:[%s5284 + $0x4bf] sm:$0xfe] %vm352, %v4950
    %5322 = vst.msk [vmem:[%s5284 + $0x4c7] sm:$0xff] %vm188, %v4951
    %5323 = vst.msk [vmem:[%s5284 + $0x4cf] sm:$0x1] %vm355, %v4952
    %5324 = vst.msk [vmem:[%s5284 + $0x4cf] sm:$0xfe] %vm352, %v4953
    %5325 = vst.msk [vmem:[%s5284 + $0x4d7] sm:$0xff] %vm188, %v4954
    %5326 = vst.msk [vmem:[%s5284 + $0x4df] sm:$0x1] %vm355, %v4955
    %5327 = vst.msk [vmem:[%s5284 + $0x4df] sm:$0xfe] %vm352, %v4956
    %5328 = vst.msk [vmem:[%s5284 + $0x4e7] sm:$0xff] %vm188, %v4957
    %5329 = vst.msk [vmem:[%s5284 + $0x4ef] sm:$0x1] %vm355, %v4958
    %5330 = vst.msk [vmem:[%s5284 + $0x4ef] sm:$0xfe] %vm352, %v4959
    %5331 = vst.msk [vmem:[%s5284 + $0x4f7] sm:$0xff] %vm188, %v4960
    %5332 = vst.msk [vmem:[%s5284 + $0x4ff] sm:$0x1] %vm355, %v4961
    %5349 = vrot.lane.b32.xlu0 %v4916, 127
    %v5350 = vpop.permute.xlu0 %5349
    %5351 = vrot.lane.b32.xlu0 %v4919, 127
    %v5352 = vpop.permute.xlu0 %5351
    %5353 = vrot.lane.b32.xlu0 %v4922, 127
    %v5354 = vpop.permute.xlu0 %5353
    %5355 = vrot.lane.b32.xlu0 %v4925, 127
    %v5356 = vpop.permute.xlu0 %5355
    %5357 = vrot.lane.b32.xlu0 %v4928, 127
    %v5358 = vpop.permute.xlu0 %5357
    %5359 = vrot.lane.b32.xlu0 %v4931, 127
    %v5360 = vpop.permute.xlu0 %5359
    %5361 = vrot.lane.b32.xlu0 %v4934, 127
    %v5362 = vpop.permute.xlu0 %5361
    %5363 = vrot.lane.b32.xlu0 %v4937, 127
    %v5364 = vpop.permute.xlu0 %5363
    %5365 = vrot.lane.b32.xlu0 %v4940, 127
    %v5366 = vpop.permute.xlu0 %5365
    %5367 = vrot.lane.b32.xlu0 %v4943, 127
    %v5368 = vpop.permute.xlu0 %5367
    %5369 = vrot.lane.b32.xlu0 %v4946, 127
    %v5370 = vpop.permute.xlu0 %5369
    %5371 = vrot.lane.b32.xlu0 %v4949, 127
    %v5372 = vpop.permute.xlu0 %5371
    %5373 = vrot.lane.b32.xlu0 %v4952, 127
    %v5374 = vpop.permute.xlu0 %5373
    %5375 = vrot.lane.b32.xlu0 %v4955, 127
    %v5376 = vpop.permute.xlu0 %5375
    %5377 = vrot.lane.b32.xlu0 %v4958, 127
    %v5378 = vpop.permute.xlu0 %5377
    %5379 = vrot.lane.b32.xlu0 %v4961, 127
    %v5380 = vpop.permute.xlu0 %5379
    %s5397 = scalar_lea.vmem [#allocation5], 512
    %5398 = vst.msk [vmem:[%s5397 - $0x1] sm:$0xfe] %vm352, %v5027
    %5399 = vst.msk [vmem:[%s5397 + $0x7] sm:$0xff] %vm188, %v5029
    %5400 = vst.msk [vmem:[%s5397 + $0xf] sm:$0x1] %vm355, %v5350
    %5401 = vst.msk [vmem:[%s5397 + $0xf] sm:$0xfe] %vm352, %v5031
    %5402 = vst.msk [vmem:[%s5397 + $0x17] sm:$0xff] %vm188, %v5033
    %5403 = vst.msk [vmem:[%s5397 + $0x1f] sm:$0x1] %vm355, %v5352
    %5404 = vst.msk [vmem:[%s5397 + $0x1f] sm:$0xfe] %vm352, %v5035
    %5405 = vst.msk [vmem:[%s5397 + $0x27] sm:$0xff] %vm188, %v5037
    %5406 = vst.msk [vmem:[%s5397 + $0x2f] sm:$0x1] %vm355, %v5354
    %5407 = vst.msk [vmem:[%s5397 + $0x2f] sm:$0xfe] %vm352, %v5039
    %5408 = vst.msk [vmem:[%s5397 + $0x37] sm:$0xff] %vm188, %v5041
    %5409 = vst.msk [vmem:[%s5397 + $0x3f] sm:$0x1] %vm355, %v5356
    %5410 = vst.msk [vmem:[%s5397 + $0x3f] sm:$0xfe] %vm352, %v5043
    %5411 = vst.msk [vmem:[%s5397 + $0x47] sm:$0xff] %vm188, %v5045
    %5412 = vst.msk [vmem:[%s5397 + $0x4f] sm:$0x1] %vm355, %v5358
    %5413 = vst.msk [vmem:[%s5397 + $0x4f] sm:$0xfe] %vm352, %v5047
    %5414 = vst.msk [vmem:[%s5397 + $0x57] sm:$0xff] %vm188, %v5049
    %5415 = vst.msk [vmem:[%s5397 + $0x5f] sm:$0x1] %vm355, %v5360
    %5416 = vst.msk [vmem:[%s5397 + $0x5f] sm:$0xfe] %vm352, %v5051
    %5417 = vst.msk [vmem:[%s5397 + $0x67] sm:$0xff] %vm188, %v5053
    %5418 = vst.msk [vmem:[%s5397 + $0x6f] sm:$0x1] %vm355, %v5362
    %5419 = vst.msk [vmem:[%s5397 + $0x6f] sm:$0xfe] %vm352, %v5055
    %5420 = vst.msk [vmem:[%s5397 + $0x77] sm:$0xff] %vm188, %v5057
    %5421 = vst.msk [vmem:[%s5397 + $0x7f] sm:$0x1] %vm355, %v5364
    %5422 = vst.msk [vmem:[%s5397 + $0x47f] sm:$0xfe] %vm352, %v5059
    %5423 = vst.msk [vmem:[%s5397 + $0x487] sm:$0xff] %vm188, %v5061
    %5424 = vst.msk [vmem:[%s5397 + $0x48f] sm:$0x1] %vm355, %v5366
    %5425 = vst.msk [vmem:[%s5397 + $0x48f] sm:$0xfe] %vm352, %v5063
    %5426 = vst.msk [vmem:[%s5397 + $0x497] sm:$0xff] %vm188, %v5065
    %5427 = vst.msk [vmem:[%s5397 + $0x49f] sm:$0x1] %vm355, %v5368
    %5428 = vst.msk [vmem:[%s5397 + $0x49f] sm:$0xfe] %vm352, %v5067
    %5429 = vst.msk [vmem:[%s5397 + $0x4a7] sm:$0xff] %vm188, %v5069
    %5430 = vst.msk [vmem:[%s5397 + $0x4af] sm:$0x1] %vm355, %v5370
    %5431 = vst.msk [vmem:[%s5397 + $0x4af] sm:$0xfe] %vm352, %v5071
    %5432 = vst.msk [vmem:[%s5397 + $0x4b7] sm:$0xff] %vm188, %v5073
    %5433 = vst.msk [vmem:[%s5397 + $0x4bf] sm:$0x1] %vm355, %v5372
    %5434 = vst.msk [vmem:[%s5397 + $0x4bf] sm:$0xfe] %vm352, %v5075
    %5435 = vst.msk [vmem:[%s5397 + $0x4c7] sm:$0xff] %vm188, %v5077
    %5436 = vst.msk [vmem:[%s5397 + $0x4cf] sm:$0x1] %vm355, %v5374
    %5437 = vst.msk [vmem:[%s5397 + $0x4cf] sm:$0xfe] %vm352, %v5079
    %5438 = vst.msk [vmem:[%s5397 + $0x4d7] sm:$0xff] %vm188, %v5081
    %5439 = vst.msk [vmem:[%s5397 + $0x4df] sm:$0x1] %vm355, %v5376
    %5440 = vst.msk [vmem:[%s5397 + $0x4df] sm:$0xfe] %vm352, %v5083
    %5441 = vst.msk [vmem:[%s5397 + $0x4e7] sm:$0xff] %vm188, %v5085
    %5442 = vst.msk [vmem:[%s5397 + $0x4ef] sm:$0x1] %vm355, %v5378
    %5443 = vst.msk [vmem:[%s5397 + $0x4ef] sm:$0xfe] %vm352, %v5087
    %5444 = vst.msk [vmem:[%s5397 + $0x4f7] sm:$0xff] %vm188, %v5089
    %5445 = vst.msk [vmem:[%s5397 + $0x4ff] sm:$0x1] %vm355, %v5380
    %5446 = vrot.lane.b32.xlu0 %v4916, 126
    %v5447 = vpop.permute.xlu0 %5446
    %5448 = vrot.lane.b32.xlu0 %v4919, 126
    %v5449 = vpop.permute.xlu0 %5448
    %5450 = vrot.lane.b32.xlu0 %v4922, 126
    %v5451 = vpop.permute.xlu0 %5450
    %5452 = vrot.lane.b32.xlu0 %v4925, 126
    %v5453 = vpop.permute.xlu0 %5452
    %5454 = vrot.lane.b32.xlu0 %v4928, 126
    %v5455 = vpop.permute.xlu0 %5454
    %5456 = vrot.lane.b32.xlu0 %v4931, 126
    %v5457 = vpop.permute.xlu0 %5456
    %5458 = vrot.lane.b32.xlu0 %v4934, 126
    %v5459 = vpop.permute.xlu0 %5458
    %5460 = vrot.lane.b32.xlu0 %v4937, 126
    %v5461 = vpop.permute.xlu0 %5460
    %5462 = vrot.lane.b32.xlu0 %v4940, 126
    %v5463 = vpop.permute.xlu0 %5462
    %5464 = vrot.lane.b32.xlu0 %v4943, 126
    %v5465 = vpop.permute.xlu0 %5464
    %5466 = vrot.lane.b32.xlu0 %v4946, 126
    %v5467 = vpop.permute.xlu0 %5466
    %5468 = vrot.lane.b32.xlu0 %v4949, 126
    %v5469 = vpop.permute.xlu0 %5468
    %5470 = vrot.lane.b32.xlu0 %v4952, 126
    %v5471 = vpop.permute.xlu0 %5470
    %5472 = vrot.lane.b32.xlu0 %v4955, 126
    %v5473 = vpop.permute.xlu0 %5472
    %5474 = vrot.lane.b32.xlu0 %v4958, 126
    %v5475 = vpop.permute.xlu0 %5474
    %5476 = vrot.lane.b32.xlu0 %v4961, 126
    %v5477 = vpop.permute.xlu0 %5476
    %s5494 = scalar_lea.vmem [#allocation5], 640
    %5495 = vst.msk [vmem:[%s5494 - $0x1] sm:$0xfe] %vm352, %v5156
    %5496 = vst.msk [vmem:[%s5494 + $0x7] sm:$0xff] %vm188, %v5158
    %5497 = vst.msk [vmem:[%s5494 + $0xf] sm:$0x1] %vm355, %v5447
    %5498 = vst.msk [vmem:[%s5494 + $0xf] sm:$0xfe] %vm352, %v5160
    %5499 = vst.msk [vmem:[%s5494 + $0x17] sm:$0xff] %vm188, %v5162
    %5500 = vst.msk [vmem:[%s5494 + $0x1f] sm:$0x1] %vm355, %v5449
    %5501 = vst.msk [vmem:[%s5494 + $0x1f] sm:$0xfe] %vm352, %v5164
    %5502 = vst.msk [vmem:[%s5494 + $0x27] sm:$0xff] %vm188, %v5166
    %5503 = vst.msk [vmem:[%s5494 + $0x2f] sm:$0x1] %vm355, %v5451
    %5504 = vst.msk [vmem:[%s5494 + $0x2f] sm:$0xfe] %vm352, %v5168
    %5505 = vst.msk [vmem:[%s5494 + $0x37] sm:$0xff] %vm188, %v5170
    %5506 = vst.msk [vmem:[%s5494 + $0x3f] sm:$0x1] %vm355, %v5453
    %5507 = vst.msk [vmem:[%s5494 + $0x3f] sm:$0xfe] %vm352, %v5172
    %5508 = vst.msk [vmem:[%s5494 + $0x47] sm:$0xff] %vm188, %v5174
    %5509 = vst.msk [vmem:[%s5494 + $0x4f] sm:$0x1] %vm355, %v5455
    %5510 = vst.msk [vmem:[%s5494 + $0x4f] sm:$0xfe] %vm352, %v5176
    %5511 = vst.msk [vmem:[%s5494 + $0x57] sm:$0xff] %vm188, %v5178
    %5512 = vst.msk [vmem:[%s5494 + $0x5f] sm:$0x1] %vm355, %v5457
    %5513 = vst.msk [vmem:[%s5494 + $0x5f] sm:$0xfe] %vm352, %v5180
    %5514 = vst.msk [vmem:[%s5494 + $0x67] sm:$0xff] %vm188, %v5182
    %5515 = vst.msk [vmem:[%s5494 + $0x6f] sm:$0x1] %vm355, %v5459
    %5516 = vst.msk [vmem:[%s5494 + $0x6f] sm:$0xfe] %vm352, %v5184
    %5517 = vst.msk [vmem:[%s5494 + $0x77] sm:$0xff] %vm188, %v5186
    %5518 = vst.msk [vmem:[%s5494 + $0x7f] sm:$0x1] %vm355, %v5461
    %5519 = vst.msk [vmem:[%s5494 + $0x47f] sm:$0xfe] %vm352, %v5188
    %5520 = vst.msk [vmem:[%s5494 + $0x487] sm:$0xff] %vm188, %v5190
    %5521 = vst.msk [vmem:[%s5494 + $0x48f] sm:$0x1] %vm355, %v5463
    %5522 = vst.msk [vmem:[%s5494 + $0x48f] sm:$0xfe] %vm352, %v5192
    %5523 = vst.msk [vmem:[%s5494 + $0x497] sm:$0xff] %vm188, %v5194
    %5524 = vst.msk [vmem:[%s5494 + $0x49f] sm:$0x1] %vm355, %v5465
    %5525 = vst.msk [vmem:[%s5494 + $0x49f] sm:$0xfe] %vm352, %v5196
    %5526 = vst.msk [vmem:[%s5494 + $0x4a7] sm:$0xff] %vm188, %v5198
    %5527 = vst.msk [vmem:[%s5494 + $0x4af] sm:$0x1] %vm355, %v5467
    %5528 = vst.msk [vmem:[%s5494 + $0x4af] sm:$0xfe] %vm352, %v5200
    %5529 = vst.msk [vmem:[%s5494 + $0x4b7] sm:$0xff] %vm188, %v5202
    %5530 = vst.msk [vmem:[%s5494 + $0x4bf] sm:$0x1] %vm355, %v5469
    %5531 = vst.msk [vmem:[%s5494 + $0x4bf] sm:$0xfe] %vm352, %v5204
    %5532 = vst.msk [vmem:[%s5494 + $0x4c7] sm:$0xff] %vm188, %v5206
    %5533 = vst.msk [vmem:[%s5494 + $0x4cf] sm:$0x1] %vm355, %v5471
    %5534 = vst.msk [vmem:[%s5494 + $0x4cf] sm:$0xfe] %vm352, %v5208
    %5535 = vst.msk [vmem:[%s5494 + $0x4d7] sm:$0xff] %vm188, %v5210
    %5536 = vst.msk [vmem:[%s5494 + $0x4df] sm:$0x1] %vm355, %v5473
    %5537 = vst.msk [vmem:[%s5494 + $0x4df] sm:$0xfe] %vm352, %v5212
    %5538 = vst.msk [vmem:[%s5494 + $0x4e7] sm:$0xff] %vm188, %v5214
    %5539 = vst.msk [vmem:[%s5494 + $0x4ef] sm:$0x1] %vm355, %v5475
    %5540 = vst.msk [vmem:[%s5494 + $0x4ef] sm:$0xfe] %vm352, %v5216
    %5541 = vst.msk [vmem:[%s5494 + $0x4f7] sm:$0xff] %vm188, %v5218
    %5542 = vst.msk [vmem:[%s5494 + $0x4ff] sm:$0x1] %vm355, %v5477
    %s5543 = scalar_lea.vmem [#allocation5], 768
    %5544 = vst.msk [vmem:[%s5543 - $0x2] sm:$0xfc] %vm485, %v4914
    %5545 = vst.msk [vmem:[%s5543 + $0x6] sm:$0xff] %vm188, %v4915
    %5546 = vst.msk [vmem:[%s5543 + $0xe] sm:$0x3] %vm488, %v4916
    %5547 = vst.msk [vmem:[%s5543 + $0xe] sm:$0xfc] %vm485, %v4917
    %5548 = vst.msk [vmem:[%s5543 + $0x16] sm:$0xff] %vm188, %v4918
    %5549 = vst.msk [vmem:[%s5543 + $0x1e] sm:$0x3] %vm488, %v4919
    %5550 = vst.msk [vmem:[%s5543 + $0x1e] sm:$0xfc] %vm485, %v4920
    %5551 = vst.msk [vmem:[%s5543 + $0x26] sm:$0xff] %vm188, %v4921
    %5552 = vst.msk [vmem:[%s5543 + $0x2e] sm:$0x3] %vm488, %v4922
    %5553 = vst.msk [vmem:[%s5543 + $0x2e] sm:$0xfc] %vm485, %v4923
    %5554 = vst.msk [vmem:[%s5543 + $0x36] sm:$0xff] %vm188, %v4924
    %5555 = vst.msk [vmem:[%s5543 + $0x3e] sm:$0x3] %vm488, %v4925
    %5556 = vst.msk [vmem:[%s5543 + $0x3e] sm:$0xfc] %vm485, %v4926
    %5557 = vst.msk [vmem:[%s5543 + $0x46] sm:$0xff] %vm188, %v4927
    %5558 = vst.msk [vmem:[%s5543 + $0x4e] sm:$0x3] %vm488, %v4928
    %5559 = vst.msk [vmem:[%s5543 + $0x4e] sm:$0xfc] %vm485, %v4929
    %5560 = vst.msk [vmem:[%s5543 + $0x56] sm:$0xff] %vm188, %v4930
    %5561 = vst.msk [vmem:[%s5543 + $0x5e] sm:$0x3] %vm488, %v4931
    %5562 = vst.msk [vmem:[%s5543 + $0x5e] sm:$0xfc] %vm485, %v4932
    %5563 = vst.msk [vmem:[%s5543 + $0x66] sm:$0xff] %vm188, %v4933
    %5564 = vst.msk [vmem:[%s5543 + $0x6e] sm:$0x3] %vm488, %v4934
    %5565 = vst.msk [vmem:[%s5543 + $0x6e] sm:$0xfc] %vm485, %v4935
    %5566 = vst.msk [vmem:[%s5543 + $0x76] sm:$0xff] %vm188, %v4936
    %5567 = vst.msk [vmem:[%s5543 + $0x7e] sm:$0x3] %vm488, %v4937
    %5568 = vst.msk [vmem:[%s5543 + $0x47e] sm:$0xfc] %vm485, %v4938
    %5569 = vst.msk [vmem:[%s5543 + $0x486] sm:$0xff] %vm188, %v4939
    %5570 = vst.msk [vmem:[%s5543 + $0x48e] sm:$0x3] %vm488, %v4940
    %5571 = vst.msk [vmem:[%s5543 + $0x48e] sm:$0xfc] %vm485, %v4941
    %5572 = vst.msk [vmem:[%s5543 + $0x496] sm:$0xff] %vm188, %v4942
    %5573 = vst.msk [vmem:[%s5543 + $0x49e] sm:$0x3] %vm488, %v4943
    %5574 = vst.msk [vmem:[%s5543 + $0x49e] sm:$0xfc] %vm485, %v4944
    %5575 = vst.msk [vmem:[%s5543 + $0x4a6] sm:$0xff] %vm188, %v4945
    %5576 = vst.msk [vmem:[%s5543 + $0x4ae] sm:$0x3] %vm488, %v4946
    %5577 = vst.msk [vmem:[%s5543 + $0x4ae] sm:$0xfc] %vm485, %v4947
    %5578 = vst.msk [vmem:[%s5543 + $0x4b6] sm:$0xff] %vm188, %v4948
    %5579 = vst.msk [vmem:[%s5543 + $0x4be] sm:$0x3] %vm488, %v4949
    %5580 = vst.msk [vmem:[%s5543 + $0x4be] sm:$0xfc] %vm485, %v4950
    %5581 = vst.msk [vmem:[%s5543 + $0x4c6] sm:$0xff] %vm188, %v4951
    %5582 = vst.msk [vmem:[%s5543 + $0x4ce] sm:$0x3] %vm488, %v4952
    %5583 = vst.msk [vmem:[%s5543 + $0x4ce] sm:$0xfc] %vm485, %v4953
    %5584 = vst.msk [vmem:[%s5543 + $0x4d6] sm:$0xff] %vm188, %v4954
    %5585 = vst.msk [vmem:[%s5543 + $0x4de] sm:$0x3] %vm488, %v4955
    %5586 = vst.msk [vmem:[%s5543 + $0x4de] sm:$0xfc] %vm485, %v4956
    %5587 = vst.msk [vmem:[%s5543 + $0x4e6] sm:$0xff] %vm188, %v4957
    %5588 = vst.msk [vmem:[%s5543 + $0x4ee] sm:$0x3] %vm488, %v4958
    %5589 = vst.msk [vmem:[%s5543 + $0x4ee] sm:$0xfc] %vm485, %v4959
    %5590 = vst.msk [vmem:[%s5543 + $0x4f6] sm:$0xff] %vm188, %v4960
    %5591 = vst.msk [vmem:[%s5543 + $0x4fe] sm:$0x3] %vm488, %v4961
    %s5592 = scalar_lea.vmem [#allocation5], 896
    %5593 = vst.msk [vmem:[%s5592 - $0x2] sm:$0xfc] %vm485, %v5027
    %5594 = vst.msk [vmem:[%s5592 + $0x6] sm:$0xff] %vm188, %v5029
    %5595 = vst.msk [vmem:[%s5592 + $0xe] sm:$0x3] %vm488, %v5350
    %5596 = vst.msk [vmem:[%s5592 + $0xe] sm:$0xfc] %vm485, %v5031
    %5597 = vst.msk [vmem:[%s5592 + $0x16] sm:$0xff] %vm188, %v5033
    %5598 = vst.msk [vmem:[%s5592 + $0x1e] sm:$0x3] %vm488, %v5352
    %5599 = vst.msk [vmem:[%s5592 + $0x1e] sm:$0xfc] %vm485, %v5035
    %5600 = vst.msk [vmem:[%s5592 + $0x26] sm:$0xff] %vm188, %v5037
    %5601 = vst.msk [vmem:[%s5592 + $0x2e] sm:$0x3] %vm488, %v5354
    %5602 = vst.msk [vmem:[%s5592 + $0x2e] sm:$0xfc] %vm485, %v5039
    %5603 = vst.msk [vmem:[%s5592 + $0x36] sm:$0xff] %vm188, %v5041
    %5604 = vst.msk [vmem:[%s5592 + $0x3e] sm:$0x3] %vm488, %v5356
    %5605 = vst.msk [vmem:[%s5592 + $0x3e] sm:$0xfc] %vm485, %v5043
    %5606 = vst.msk [vmem:[%s5592 + $0x46] sm:$0xff] %vm188, %v5045
    %5607 = vst.msk [vmem:[%s5592 + $0x4e] sm:$0x3] %vm488, %v5358
    %5608 = vst.msk [vmem:[%s5592 + $0x4e] sm:$0xfc] %vm485, %v5047
    %5609 = vst.msk [vmem:[%s5592 + $0x56] sm:$0xff] %vm188, %v5049
    %5610 = vst.msk [vmem:[%s5592 + $0x5e] sm:$0x3] %vm488, %v5360
    %5611 = vst.msk [vmem:[%s5592 + $0x5e] sm:$0xfc] %vm485, %v5051
    %5612 = vst.msk [vmem:[%s5592 + $0x66] sm:$0xff] %vm188, %v5053
    %5613 = vst.msk [vmem:[%s5592 + $0x6e] sm:$0x3] %vm488, %v5362
    %5614 = vst.msk [vmem:[%s5592 + $0x6e] sm:$0xfc] %vm485, %v5055
    %5615 = vst.msk [vmem:[%s5592 + $0x76] sm:$0xff] %vm188, %v5057
    %5616 = vst.msk [vmem:[%s5592 + $0x7e] sm:$0x3] %vm488, %v5364
    %5617 = vst.msk [vmem:[%s5592 + $0x47e] sm:$0xfc] %vm485, %v5059
    %5618 = vst.msk [vmem:[%s5592 + $0x486] sm:$0xff] %vm188, %v5061
    %5619 = vst.msk [vmem:[%s5592 + $0x48e] sm:$0x3] %vm488, %v5366
    %5620 = vst.msk [vmem:[%s5592 + $0x48e] sm:$0xfc] %vm485, %v5063
    %5621 = vst.msk [vmem:[%s5592 + $0x496] sm:$0xff] %vm188, %v5065
    %5622 = vst.msk [vmem:[%s5592 + $0x49e] sm:$0x3] %vm488, %v5368
    %5623 = vst.msk [vmem:[%s5592 + $0x49e] sm:$0xfc] %vm485, %v5067
    %5624 = vst.msk [vmem:[%s5592 + $0x4a6] sm:$0xff] %vm188, %v5069
    %5625 = vst.msk [vmem:[%s5592 + $0x4ae] sm:$0x3] %vm488, %v5370
    %5626 = vst.msk [vmem:[%s5592 + $0x4ae] sm:$0xfc] %vm485, %v5071
    %5627 = vst.msk [vmem:[%s5592 + $0x4b6] sm:$0xff] %vm188, %v5073
    %5628 = vst.msk [vmem:[%s5592 + $0x4be] sm:$0x3] %vm488, %v5372
    %5629 = vst.msk [vmem:[%s5592 + $0x4be] sm:$0xfc] %vm485, %v5075
    %5630 = vst.msk [vmem:[%s5592 + $0x4c6] sm:$0xff] %vm188, %v5077
    %5631 = vst.msk [vmem:[%s5592 + $0x4ce] sm:$0x3] %vm488, %v5374
    %5632 = vst.msk [vmem:[%s5592 + $0x4ce] sm:$0xfc] %vm485, %v5079
    %5633 = vst.msk [vmem:[%s5592 + $0x4d6] sm:$0xff] %vm188, %v5081
    %5634 = vst.msk [vmem:[%s5592 + $0x4de] sm:$0x3] %vm488, %v5376
    %5635 = vst.msk [vmem:[%s5592 + $0x4de] sm:$0xfc] %vm485, %v5083
    %5636 = vst.msk [vmem:[%s5592 + $0x4e6] sm:$0xff] %vm188, %v5085
    %5637 = vst.msk [vmem:[%s5592 + $0x4ee] sm:$0x3] %vm488, %v5378
    %5638 = vst.msk [vmem:[%s5592 + $0x4ee] sm:$0xfc] %vm485, %v5087
    %5639 = vst.msk [vmem:[%s5592 + $0x4f6] sm:$0xff] %vm188, %v5089
    %5640 = vst.msk [vmem:[%s5592 + $0x4fe] sm:$0x3] %vm488, %v5380
    %s5641 = scalar_lea.vmem [#allocation5], 1024
    %5642 = vst.msk [vmem:[%s5641 - $0x2] sm:$0xfc] %vm485, %v5156
    %5643 = vst.msk [vmem:[%s5641 + $0x6] sm:$0xff] %vm188, %v5158
    %5644 = vst.msk [vmem:[%s5641 + $0xe] sm:$0x3] %vm488, %v5447
    %5645 = vst.msk [vmem:[%s5641 + $0xe] sm:$0xfc] %vm485, %v5160
    %5646 = vst.msk [vmem:[%s5641 + $0x16] sm:$0xff] %vm188, %v5162
    %5647 = vst.msk [vmem:[%s5641 + $0x1e] sm:$0x3] %vm488, %v5449
    %5648 = vst.msk [vmem:[%s5641 + $0x1e] sm:$0xfc] %vm485, %v5164
    %5649 = vst.msk [vmem:[%s5641 + $0x26] sm:$0xff] %vm188, %v5166
    %5650 = vst.msk [vmem:[%s5641 + $0x2e] sm:$0x3] %vm488, %v5451
    %5651 = vst.msk [vmem:[%s5641 + $0x2e] sm:$0xfc] %vm485, %v5168
    %5652 = vst.msk [vmem:[%s5641 + $0x36] sm:$0xff] %vm188, %v5170
    %5653 = vst.msk [vmem:[%s5641 + $0x3e] sm:$0x3] %vm488, %v5453
    %5654 = vst.msk [vmem:[%s5641 + $0x3e] sm:$0xfc] %vm485, %v5172
    %5655 = vst.msk [vmem:[%s5641 + $0x46] sm:$0xff] %vm188, %v5174
    %5656 = vst.msk [vmem:[%s5641 + $0x4e] sm:$0x3] %vm488, %v5455
    %5657 = vst.msk [vmem:[%s5641 + $0x4e] sm:$0xfc] %vm485, %v5176
    %5658 = vst.msk [vmem:[%s5641 + $0x56] sm:$0xff] %vm188, %v5178
    %5659 = vst.msk [vmem:[%s5641 + $0x5e] sm:$0x3] %vm488, %v5457
    %5660 = vst.msk [vmem:[%s5641 + $0x5e] sm:$0xfc] %vm485, %v5180
    %5661 = vst.msk [vmem:[%s5641 + $0x66] sm:$0xff] %vm188, %v5182
    %5662 = vst.msk [vmem:[%s5641 + $0x6e] sm:$0x3] %vm488, %v5459
    %5663 = vst.msk [vmem:[%s5641 + $0x6e] sm:$0xfc] %vm485, %v5184
    %5664 = vst.msk [vmem:[%s5641 + $0x76] sm:$0xff] %vm188, %v5186
    %5665 = vst.msk [vmem:[%s5641 + $0x7e] sm:$0x3] %vm488, %v5461
    %5666 = vst.msk [vmem:[%s5641 + $0x47e] sm:$0xfc] %vm485, %v5188
    %5667 = vst.msk [vmem:[%s5641 + $0x486] sm:$0xff] %vm188, %v5190
    %5668 = vst.msk [vmem:[%s5641 + $0x48e] sm:$0x3] %vm488, %v5463
    %5669 = vst.msk [vmem:[%s5641 + $0x48e] sm:$0xfc] %vm485, %v5192
    %5670 = vst.msk [vmem:[%s5641 + $0x496] sm:$0xff] %vm188, %v5194
    %5671 = vst.msk [vmem:[%s5641 + $0x49e] sm:$0x3] %vm488, %v5465
    %5672 = vst.msk [vmem:[%s5641 + $0x49e] sm:$0xfc] %vm485, %v5196
    %5673 = vst.msk [vmem:[%s5641 + $0x4a6] sm:$0xff] %vm188, %v5198
    %5674 = vst.msk [vmem:[%s5641 + $0x4ae] sm:$0x3] %vm488, %v5467
    %5675 = vst.msk [vmem:[%s5641 + $0x4ae] sm:$0xfc] %vm485, %v5200
    %5676 = vst.msk [vmem:[%s5641 + $0x4b6] sm:$0xff] %vm188, %v5202
    %5677 = vst.msk [vmem:[%s5641 + $0x4be] sm:$0x3] %vm488, %v5469
    %5678 = vst.msk [vmem:[%s5641 + $0x4be] sm:$0xfc] %vm485, %v5204
    %5679 = vst.msk [vmem:[%s5641 + $0x4c6] sm:$0xff] %vm188, %v5206
    %5680 = vst.msk [vmem:[%s5641 + $0x4ce] sm:$0x3] %vm488, %v5471
    %5681 = vst.msk [vmem:[%s5641 + $0x4ce] sm:$0xfc] %vm485, %v5208
    %5682 = vst.msk [vmem:[%s5641 + $0x4d6] sm:$0xff] %vm188, %v5210
    %5683 = vst.msk [vmem:[%s5641 + $0x4de] sm:$0x3] %vm488, %v5473
    %5684 = vst.msk [vmem:[%s5641 + $0x4de] sm:$0xfc] %vm485, %v5212
    %5685 = vst.msk [vmem:[%s5641 + $0x4e6] sm:$0xff] %vm188, %v5214
    %5686 = vst.msk [vmem:[%s5641 + $0x4ee] sm:$0x3] %vm488, %v5475
    %5687 = vst.msk [vmem:[%s5641 + $0x4ee] sm:$0xfc] %vm485, %v5216
    %5688 = vst.msk [vmem:[%s5641 + $0x4f6] sm:$0xff] %vm188, %v5218
    %5689 = vst.msk [vmem:[%s5641 + $0x4fe] sm:$0x3] %vm488, %v5477
    %v5690 = vld [vmem:[#allocation5] sm:$0xff]
    %v5691 = vld [vmem:[#allocation5 + $0x8] sm:$0xff]
    %v5692 = vld [vmem:[#allocation5 + $0x10] sm:$0xff]
    %v5693 = vld [vmem:[#allocation5 + $0x18] sm:$0xff]
    %v5694 = vld [vmem:[#allocation5 + $0x20] sm:$0xff]
    %v5695 = vld [vmem:[#allocation5 + $0x28] sm:$0xff]
    %v5696 = vld [vmem:[#allocation5 + $0x30] sm:$0xff]
    %v5697 = vld [vmem:[#allocation5 + $0x38] sm:$0xff]
    %v5698 = vld [vmem:[#allocation5 + $0x40] sm:$0xff]
    %v5699 = vld [vmem:[#allocation5 + $0x48] sm:$0xff]
    %v5700 = vld [vmem:[#allocation5 + $0x50] sm:$0xff]
    %v5701 = vld [vmem:[#allocation5 + $0x58] sm:$0xff]
    %v5702 = vld [vmem:[#allocation5 + $0x60] sm:$0xff]
    %v5703 = vld [vmem:[#allocation5 + $0x68] sm:$0xff]
    %v5704 = vld [vmem:[#allocation5 + $0x70] sm:$0xff]
    %v5705 = vld [vmem:[#allocation5 + $0x78] sm:$0xff]
    %v5706 = vld [vmem:[#allocation5 + $0x80] sm:$0xff]
    %v5707 = vld [vmem:[#allocation5 + $0x88] sm:$0xff]
    %v5708 = vld [vmem:[#allocation5 + $0x90] sm:$0xff]
    %v5709 = vld [vmem:[#allocation5 + $0x98] sm:$0xff]
    %v5710 = vld [vmem:[#allocation5 + $0xa0] sm:$0xff]
    %v5711 = vld [vmem:[#allocation5 + $0xa8] sm:$0xff]
    %v5712 = vld [vmem:[#allocation5 + $0xb0] sm:$0xff]
    %v5713 = vld [vmem:[#allocation5 + $0xb8] sm:$0xff]
    %v5714 = vld [vmem:[#allocation5 + $0xc0] sm:$0xff]
    %v5715 = vld [vmem:[#allocation5 + $0xc8] sm:$0xff]
    %v5716 = vld [vmem:[#allocation5 + $0xd0] sm:$0xff]
    %v5717 = vld [vmem:[#allocation5 + $0xd8] sm:$0xff]
    %v5718 = vld [vmem:[#allocation5 + $0xe0] sm:$0xff]
    %v5719 = vld [vmem:[#allocation5 + $0xe8] sm:$0xff]
    %v5720 = vld [vmem:[#allocation5 + $0xf0] sm:$0xff]
    %v5721 = vld [vmem:[#allocation5 + $0xf8] sm:$0xff]
    %v5722 = vld [vmem:[#allocation5 + $0x100] sm:$0xff]
    %v5723 = vld [vmem:[#allocation5 + $0x108] sm:$0xff]
    %v5724 = vld [vmem:[#allocation5 + $0x110] sm:$0xff]
    %v5725 = vld [vmem:[#allocation5 + $0x118] sm:$0xff]
    %v5726 = vld [vmem:[#allocation5 + $0x120] sm:$0xff]
    %v5727 = vld [vmem:[#allocation5 + $0x128] sm:$0xff]
    %v5728 = vld [vmem:[#allocation5 + $0x130] sm:$0xff]
    %v5729 = vld [vmem:[#allocation5 + $0x138] sm:$0xff]
    %v5730 = vld [vmem:[#allocation5 + $0x140] sm:$0xff]
    %v5731 = vld [vmem:[#allocation5 + $0x148] sm:$0xff]
    %v5732 = vld [vmem:[#allocation5 + $0x150] sm:$0xff]
    %v5733 = vld [vmem:[#allocation5 + $0x158] sm:$0xff]
    %v5734 = vld [vmem:[#allocation5 + $0x160] sm:$0xff]
    %v5735 = vld [vmem:[#allocation5 + $0x168] sm:$0xff]
    %v5736 = vld [vmem:[#allocation5 + $0x170] sm:$0xff]
    %v5737 = vld [vmem:[#allocation5 + $0x178] sm:$0xff]
    %v5738 = vld [vmem:[#allocation5 + $0x180] sm:$0xff]
    %v5739 = vld [vmem:[#allocation5 + $0x188] sm:$0xff]
    %v5740 = vld [vmem:[#allocation5 + $0x190] sm:$0xff]
    %v5741 = vld [vmem:[#allocation5 + $0x198] sm:$0xff]
    %v5742 = vld [vmem:[#allocation5 + $0x1a0] sm:$0xff]
    %v5743 = vld [vmem:[#allocation5 + $0x1a8] sm:$0xff]
    %v5744 = vld [vmem:[#allocation5 + $0x1b0] sm:$0xff]
    %v5745 = vld [vmem:[#allocation5 + $0x1b8] sm:$0xff]
    %v5746 = vld [vmem:[#allocation5 + $0x1c0] sm:$0xff]
    %v5747 = vld [vmem:[#allocation5 + $0x1c8] sm:$0xff]
    %v5748 = vld [vmem:[#allocation5 + $0x1d0] sm:$0xff]
    %v5749 = vld [vmem:[#allocation5 + $0x1d8] sm:$0xff]
    %v5750 = vld [vmem:[#allocation5 + $0x1e0] sm:$0xff]
    %v5751 = vld [vmem:[#allocation5 + $0x1e8] sm:$0xff]
    %v5752 = vld [vmem:[#allocation5 + $0x1f0] sm:$0xff]
    %v5753 = vld [vmem:[#allocation5 + $0x1f8] sm:$0xff]
    %v5754 = vld [vmem:[#allocation5 + $0x200] sm:$0xff]
    %v5755 = vld [vmem:[#allocation5 + $0x208] sm:$0xff]
    %v5756 = vld [vmem:[#allocation5 + $0x210] sm:$0xff]
    %v5757 = vld [vmem:[#allocation5 + $0x218] sm:$0xff]
    %v5758 = vld [vmem:[#allocation5 + $0x220] sm:$0xff]
    %v5759 = vld [vmem:[#allocation5 + $0x228] sm:$0xff]
    %v5760 = vld [vmem:[#allocation5 + $0x230] sm:$0xff]
    %v5761 = vld [vmem:[#allocation5 + $0x238] sm:$0xff]
    %v5762 = vld [vmem:[#allocation5 + $0x240] sm:$0xff]
    %v5763 = vld [vmem:[#allocation5 + $0x248] sm:$0xff]
    %v5764 = vld [vmem:[#allocation5 + $0x250] sm:$0xff]
    %v5765 = vld [vmem:[#allocation5 + $0x258] sm:$0xff]
    %v5766 = vld [vmem:[#allocation5 + $0x260] sm:$0xff]
    %v5767 = vld [vmem:[#allocation5 + $0x268] sm:$0xff]
    %v5768 = vld [vmem:[#allocation5 + $0x270] sm:$0xff]
    %v5769 = vld [vmem:[#allocation5 + $0x278] sm:$0xff]
    %v5770 = vld [vmem:[#allocation5 + $0x280] sm:$0xff]
    %v5771 = vld [vmem:[#allocation5 + $0x288] sm:$0xff]
    %v5772 = vld [vmem:[#allocation5 + $0x290] sm:$0xff]
    %v5773 = vld [vmem:[#allocation5 + $0x298] sm:$0xff]
    %v5774 = vld [vmem:[#allocation5 + $0x2a0] sm:$0xff]
    %v5775 = vld [vmem:[#allocation5 + $0x2a8] sm:$0xff]
    %v5776 = vld [vmem:[#allocation5 + $0x2b0] sm:$0xff]
    %v5777 = vld [vmem:[#allocation5 + $0x2b8] sm:$0xff]
    %v5778 = vld [vmem:[#allocation5 + $0x2c0] sm:$0xff]
    %v5779 = vld [vmem:[#allocation5 + $0x2c8] sm:$0xff]
    %v5780 = vld [vmem:[#allocation5 + $0x2d0] sm:$0xff]
    %v5781 = vld [vmem:[#allocation5 + $0x2d8] sm:$0xff]
    %v5782 = vld [vmem:[#allocation5 + $0x2e0] sm:$0xff]
    %v5783 = vld [vmem:[#allocation5 + $0x2e8] sm:$0xff]
    %v5784 = vld [vmem:[#allocation5 + $0x2f0] sm:$0xff]
    %v5785 = vld [vmem:[#allocation5 + $0x2f8] sm:$0xff]
    %v5786 = vld [vmem:[#allocation5 + $0x300] sm:$0xff]
    %v5787 = vld [vmem:[#allocation5 + $0x308] sm:$0xff]
    %v5788 = vld [vmem:[#allocation5 + $0x310] sm:$0xff]
    %v5789 = vld [vmem:[#allocation5 + $0x318] sm:$0xff]
    %v5790 = vld [vmem:[#allocation5 + $0x320] sm:$0xff]
    %v5791 = vld [vmem:[#allocation5 + $0x328] sm:$0xff]
    %v5792 = vld [vmem:[#allocation5 + $0x330] sm:$0xff]
    %v5793 = vld [vmem:[#allocation5 + $0x338] sm:$0xff]
    %v5794 = vld [vmem:[#allocation5 + $0x340] sm:$0xff]
    %v5795 = vld [vmem:[#allocation5 + $0x348] sm:$0xff]
    %v5796 = vld [vmem:[#allocation5 + $0x350] sm:$0xff]
    %v5797 = vld [vmem:[#allocation5 + $0x358] sm:$0xff]
    %v5798 = vld [vmem:[#allocation5 + $0x360] sm:$0xff]
    %v5799 = vld [vmem:[#allocation5 + $0x368] sm:$0xff]
    %v5800 = vld [vmem:[#allocation5 + $0x370] sm:$0xff]
    %v5801 = vld [vmem:[#allocation5 + $0x378] sm:$0xff]
    %v5802 = vld [vmem:[#allocation5 + $0x380] sm:$0xff]
    %v5803 = vld [vmem:[#allocation5 + $0x388] sm:$0xff]
    %v5804 = vld [vmem:[#allocation5 + $0x390] sm:$0xff]
    %v5805 = vld [vmem:[#allocation5 + $0x398] sm:$0xff]
    %v5806 = vld [vmem:[#allocation5 + $0x3a0] sm:$0xff]
    %v5807 = vld [vmem:[#allocation5 + $0x3a8] sm:$0xff]
    %v5808 = vld [vmem:[#allocation5 + $0x3b0] sm:$0xff]
    %v5809 = vld [vmem:[#allocation5 + $0x3b8] sm:$0xff]
    %v5810 = vld [vmem:[#allocation5 + $0x3c0] sm:$0xff]
    %v5811 = vld [vmem:[#allocation5 + $0x3c8] sm:$0xff]
    %v5812 = vld [vmem:[#allocation5 + $0x3d0] sm:$0xff]
    %v5813 = vld [vmem:[#allocation5 + $0x3d8] sm:$0xff]
    %v5814 = vld [vmem:[#allocation5 + $0x3e0] sm:$0xff]
    %v5815 = vld [vmem:[#allocation5 + $0x3e8] sm:$0xff]
    %v5816 = vld [vmem:[#allocation5 + $0x3f0] sm:$0xff]
    %v5817 = vld [vmem:[#allocation5 + $0x3f8] sm:$0xff]
    %v5818 = vld [vmem:[#allocation5 + $0x400] sm:$0xff]
    %v5819 = vld [vmem:[#allocation5 + $0x408] sm:$0xff]
    %v5820 = vld [vmem:[#allocation5 + $0x410] sm:$0xff]
    %v5821 = vld [vmem:[#allocation5 + $0x418] sm:$0xff]
    %v5822 = vld [vmem:[#allocation5 + $0x420] sm:$0xff]
    %v5823 = vld [vmem:[#allocation5 + $0x428] sm:$0xff]
    %v5824 = vld [vmem:[#allocation5 + $0x430] sm:$0xff]
    %v5825 = vld [vmem:[#allocation5 + $0x438] sm:$0xff]
    %v5826 = vld [vmem:[#allocation5 + $0x440] sm:$0xff]
    %v5827 = vld [vmem:[#allocation5 + $0x448] sm:$0xff]
    %v5828 = vld [vmem:[#allocation5 + $0x450] sm:$0xff]
    %v5829 = vld [vmem:[#allocation5 + $0x458] sm:$0xff]
    %v5830 = vld [vmem:[#allocation5 + $0x460] sm:$0xff]
    %v5831 = vld [vmem:[#allocation5 + $0x468] sm:$0xff]
    %v5832 = vld [vmem:[#allocation5 + $0x470] sm:$0xff]
    %v5833 = vld [vmem:[#allocation5 + $0x478] sm:$0xff]
    %v5834 = vld [vmem:[#allocation5 + $0x480] sm:$0xff]
    %v5835 = vld [vmem:[#allocation5 + $0x488] sm:$0xff]
    %v5836 = vld [vmem:[#allocation5 + $0x490] sm:$0xff]
    %v5837 = vld [vmem:[#allocation5 + $0x498] sm:$0xff]
    %v5838 = vld [vmem:[#allocation5 + $0x4a0] sm:$0xff]
    %v5839 = vld [vmem:[#allocation5 + $0x4a8] sm:$0xff]
    %v5840 = vld [vmem:[#allocation5 + $0x4b0] sm:$0xff]
    %v5841 = vld [vmem:[#allocation5 + $0x4b8] sm:$0xff]
    %v5842 = vld [vmem:[#allocation5 + $0x4c0] sm:$0xff]
    %v5843 = vld [vmem:[#allocation5 + $0x4c8] sm:$0xff]
    %v5844 = vld [vmem:[#allocation5 + $0x4d0] sm:$0xff]
    %v5845 = vld [vmem:[#allocation5 + $0x4d8] sm:$0xff]
    %v5846 = vld [vmem:[#allocation5 + $0x4e0] sm:$0xff]
    %v5847 = vld [vmem:[#allocation5 + $0x4e8] sm:$0xff]
    %v5848 = vld [vmem:[#allocation5 + $0x4f0] sm:$0xff]
    %v5849 = vld [vmem:[#allocation5 + $0x4f8] sm:$0xff]
    %v5850 = vld [vmem:[#allocation5 + $0x500] sm:$0xff]
    %v5851 = vld [vmem:[#allocation5 + $0x508] sm:$0xff]
    %v5852 = vld [vmem:[#allocation5 + $0x510] sm:$0xff]
    %v5853 = vld [vmem:[#allocation5 + $0x518] sm:$0xff]
    %v5854 = vld [vmem:[#allocation5 + $0x520] sm:$0xff]
    %v5855 = vld [vmem:[#allocation5 + $0x528] sm:$0xff]
    %v5856 = vld [vmem:[#allocation5 + $0x530] sm:$0xff]
    %v5857 = vld [vmem:[#allocation5 + $0x538] sm:$0xff]
    %v5858 = vld [vmem:[#allocation5 + $0x540] sm:$0xff]
    %v5859 = vld [vmem:[#allocation5 + $0x548] sm:$0xff]
    %v5860 = vld [vmem:[#allocation5 + $0x550] sm:$0xff]
    %v5861 = vld [vmem:[#allocation5 + $0x558] sm:$0xff]
    %v5862 = vld [vmem:[#allocation5 + $0x560] sm:$0xff]
    %v5863 = vld [vmem:[#allocation5 + $0x568] sm:$0xff]
    %v5864 = vld [vmem:[#allocation5 + $0x570] sm:$0xff]
    %v5865 = vld [vmem:[#allocation5 + $0x578] sm:$0xff]
    %v5866 = vld [vmem:[#allocation5 + $0x580] sm:$0xff]
    %v5867 = vld [vmem:[#allocation5 + $0x588] sm:$0xff]
    %v5868 = vld [vmem:[#allocation5 + $0x590] sm:$0xff]
    %v5869 = vld [vmem:[#allocation5 + $0x598] sm:$0xff]
    %v5870 = vld [vmem:[#allocation5 + $0x5a0] sm:$0xff]
    %v5871 = vld [vmem:[#allocation5 + $0x5a8] sm:$0xff]
    %v5872 = vld [vmem:[#allocation5 + $0x5b0] sm:$0xff]
    %v5873 = vld [vmem:[#allocation5 + $0x5b8] sm:$0xff]
    %v5874 = vld [vmem:[#allocation5 + $0x5c0] sm:$0xff]
    %v5875 = vld [vmem:[#allocation5 + $0x5c8] sm:$0xff]
    %v5876 = vld [vmem:[#allocation5 + $0x5d0] sm:$0xff]
    %v5877 = vld [vmem:[#allocation5 + $0x5d8] sm:$0xff]
    %v5878 = vld [vmem:[#allocation5 + $0x5e0] sm:$0xff]
    %v5879 = vld [vmem:[#allocation5 + $0x5e8] sm:$0xff]
    %v5880 = vld [vmem:[#allocation5 + $0x5f0] sm:$0xff]
    %v5881 = vld [vmem:[#allocation5 + $0x5f8] sm:$0xff]
    %v5882 = vld [vmem:[#allocation5 + $0x600] sm:$0xff]
    %v5883 = vld [vmem:[#allocation5 + $0x608] sm:$0xff]
    %v5884 = vld [vmem:[#allocation5 + $0x610] sm:$0xff]
    %v5885 = vld [vmem:[#allocation5 + $0x618] sm:$0xff]
    %v5886 = vld [vmem:[#allocation5 + $0x620] sm:$0xff]
    %v5887 = vld [vmem:[#allocation5 + $0x628] sm:$0xff]
    %v5888 = vld [vmem:[#allocation5 + $0x630] sm:$0xff]
    %v5889 = vld [vmem:[#allocation5 + $0x638] sm:$0xff]
    %v5890 = vld [vmem:[#allocation5 + $0x640] sm:$0xff]
    %v5891 = vld [vmem:[#allocation5 + $0x648] sm:$0xff]
    %v5892 = vld [vmem:[#allocation5 + $0x650] sm:$0xff]
    %v5893 = vld [vmem:[#allocation5 + $0x658] sm:$0xff]
    %v5894 = vld [vmem:[#allocation5 + $0x660] sm:$0xff]
    %v5895 = vld [vmem:[#allocation5 + $0x668] sm:$0xff]
    %v5896 = vld [vmem:[#allocation5 + $0x670] sm:$0xff]
    %v5897 = vld [vmem:[#allocation5 + $0x678] sm:$0xff]
    %v5898 = vld [vmem:[#allocation5 + $0x680] sm:$0xff]
    %v5899 = vld [vmem:[#allocation5 + $0x688] sm:$0xff]
    %v5900 = vld [vmem:[#allocation5 + $0x690] sm:$0xff]
    %v5901 = vld [vmem:[#allocation5 + $0x698] sm:$0xff]
    %v5902 = vld [vmem:[#allocation5 + $0x6a0] sm:$0xff]
    %v5903 = vld [vmem:[#allocation5 + $0x6a8] sm:$0xff]
    %v5904 = vld [vmem:[#allocation5 + $0x6b0] sm:$0xff]
    %v5905 = vld [vmem:[#allocation5 + $0x6b8] sm:$0xff]
    %v5906 = vld [vmem:[#allocation5 + $0x6c0] sm:$0xff]
    %v5907 = vld [vmem:[#allocation5 + $0x6c8] sm:$0xff]
    %v5908 = vld [vmem:[#allocation5 + $0x6d0] sm:$0xff]
    %v5909 = vld [vmem:[#allocation5 + $0x6d8] sm:$0xff]
    %v5910 = vld [vmem:[#allocation5 + $0x6e0] sm:$0xff]
    %v5911 = vld [vmem:[#allocation5 + $0x6e8] sm:$0xff]
    %v5912 = vld [vmem:[#allocation5 + $0x6f0] sm:$0xff]
    %v5913 = vld [vmem:[#allocation5 + $0x6f8] sm:$0xff]
    %v5914 = vld [vmem:[#allocation5 + $0x700] sm:$0xff]
    %v5915 = vld [vmem:[#allocation5 + $0x708] sm:$0xff]
    %v5916 = vld [vmem:[#allocation5 + $0x710] sm:$0xff]
    %v5917 = vld [vmem:[#allocation5 + $0x718] sm:$0xff]
    %v5918 = vld [vmem:[#allocation5 + $0x720] sm:$0xff]
    %v5919 = vld [vmem:[#allocation5 + $0x728] sm:$0xff]
    %v5920 = vld [vmem:[#allocation5 + $0x730] sm:$0xff]
    %v5921 = vld [vmem:[#allocation5 + $0x738] sm:$0xff]
    %v5922 = vld [vmem:[#allocation5 + $0x740] sm:$0xff]
    %v5923 = vld [vmem:[#allocation5 + $0x748] sm:$0xff]
    %v5924 = vld [vmem:[#allocation5 + $0x750] sm:$0xff]
    %v5925 = vld [vmem:[#allocation5 + $0x758] sm:$0xff]
    %v5926 = vld [vmem:[#allocation5 + $0x760] sm:$0xff]
    %v5927 = vld [vmem:[#allocation5 + $0x768] sm:$0xff]
    %v5928 = vld [vmem:[#allocation5 + $0x770] sm:$0xff]
    %v5929 = vld [vmem:[#allocation5 + $0x778] sm:$0xff]
    %v5930 = vld [vmem:[#allocation5 + $0x780] sm:$0xff]
    %v5931 = vld [vmem:[#allocation5 + $0x788] sm:$0xff]
    %v5932 = vld [vmem:[#allocation5 + $0x790] sm:$0xff]
    %v5933 = vld [vmem:[#allocation5 + $0x798] sm:$0xff]
    %v5934 = vld [vmem:[#allocation5 + $0x7a0] sm:$0xff]
    %v5935 = vld [vmem:[#allocation5 + $0x7a8] sm:$0xff]
    %v5936 = vld [vmem:[#allocation5 + $0x7b0] sm:$0xff]
    %v5937 = vld [vmem:[#allocation5 + $0x7b8] sm:$0xff]
    %v5938 = vld [vmem:[#allocation5 + $0x7c0] sm:$0xff]
    %v5939 = vld [vmem:[#allocation5 + $0x7c8] sm:$0xff]
    %v5940 = vld [vmem:[#allocation5 + $0x7d0] sm:$0xff]
    %v5941 = vld [vmem:[#allocation5 + $0x7d8] sm:$0xff]
    %v5942 = vld [vmem:[#allocation5 + $0x7e0] sm:$0xff]
    %v5943 = vld [vmem:[#allocation5 + $0x7e8] sm:$0xff]
    %v5944 = vld [vmem:[#allocation5 + $0x7f0] sm:$0xff]
    %v5945 = vld [vmem:[#allocation5 + $0x7f8] sm:$0xff]
    %v5946 = vld [vmem:[#allocation5 + $0x800] sm:$0xff]
    %v5947 = vld [vmem:[#allocation5 + $0x808] sm:$0xff]
    %v5948 = vld [vmem:[#allocation5 + $0x810] sm:$0xff]
    %v5949 = vld [vmem:[#allocation5 + $0x818] sm:$0xff]
    %v5950 = vld [vmem:[#allocation5 + $0x820] sm:$0xff]
    %v5951 = vld [vmem:[#allocation5 + $0x828] sm:$0xff]
    %v5952 = vld [vmem:[#allocation5 + $0x830] sm:$0xff]
    %v5953 = vld [vmem:[#allocation5 + $0x838] sm:$0xff]
    %v5954 = vld [vmem:[#allocation5 + $0x840] sm:$0xff]
    %v5955 = vld [vmem:[#allocation5 + $0x848] sm:$0xff]
    %v5956 = vld [vmem:[#allocation5 + $0x850] sm:$0xff]
    %v5957 = vld [vmem:[#allocation5 + $0x858] sm:$0xff]
    %v5958 = vld [vmem:[#allocation5 + $0x860] sm:$0xff]
    %v5959 = vld [vmem:[#allocation5 + $0x868] sm:$0xff]
    %v5960 = vld [vmem:[#allocation5 + $0x870] sm:$0xff]
    %v5961 = vld [vmem:[#allocation5 + $0x878] sm:$0xff]
    %v5962 = vld [vmem:[#allocation5 + $0x880] sm:$0xff]
    %v5963 = vld [vmem:[#allocation5 + $0x888] sm:$0xff]
    %v5964 = vld [vmem:[#allocation5 + $0x890] sm:$0xff]
    %v5965 = vld [vmem:[#allocation5 + $0x898] sm:$0xff]
    %v5966 = vld [vmem:[#allocation5 + $0x8a0] sm:$0xff]
    %v5967 = vld [vmem:[#allocation5 + $0x8a8] sm:$0xff]
    %v5968 = vld [vmem:[#allocation5 + $0x8b0] sm:$0xff]
    %v5969 = vld [vmem:[#allocation5 + $0x8b8] sm:$0xff]
    %v5970 = vld [vmem:[#allocation5 + $0x8c0] sm:$0xff]
    %v5971 = vld [vmem:[#allocation5 + $0x8c8] sm:$0xff]
    %v5972 = vld [vmem:[#allocation5 + $0x8d0] sm:$0xff]
    %v5973 = vld [vmem:[#allocation5 + $0x8d8] sm:$0xff]
    %v5974 = vld [vmem:[#allocation5 + $0x8e0] sm:$0xff]
    %v5975 = vld [vmem:[#allocation5 + $0x8e8] sm:$0xff]
    %v5976 = vld [vmem:[#allocation5 + $0x8f0] sm:$0xff]
    %v5977 = vld [vmem:[#allocation5 + $0x8f8] sm:$0xff]
    %v5978 = vcombine.low %v5690, %v5694
    %v5979 = vcombine.high %v5690, %v5694
    %v5981 = vunpack.c.l.s4 1983009808
    %v5982 = vunpack.c.0.s8 %v5981
    %v5983 = vlaneseq
    %v5984 = vshrl.u32 %v5983, 7
    %v5985 = vsub.s32 %v5982, %v5984
    %v5986 = vrot.slane %v5978, %v5985
    %v5988 = vunpack.c.l.s4 1983009808
    %v5989 = vunpack.c.0.s8 %v5988
    %v5990 = vlaneseq
    %v5991 = vshrl.u32 %v5990, 7
    %v5992 = vsub.s32 %v5989, %v5991
    %v5993 = vrot.slane %v5979, %v5992
    %v5994 = vcombine.low %v5692, %v5696
    %v5995 = vcombine.high %v5692, %v5696
    %v5997 = vunpack.c.l.s4 1983009808
    %v5998 = vunpack.c.0.s8 %v5997
    %v5999 = vlaneseq
    %v6000 = vshrl.u32 %v5999, 7
    %v6001 = vsub.s32 %v5998, %v6000
    %v6002 = vrot.slane %v5994, %v6001
    %v6004 = vunpack.c.l.s4 1983009808
    %v6005 = vunpack.c.0.s8 %v6004
    %v6006 = vlaneseq
    %v6007 = vshrl.u32 %v6006, 7
    %v6008 = vsub.s32 %v6005, %v6007
    %v6009 = vrot.slane %v5995, %v6008
    %v6010 = vcombine.low %v5698, %v5702
    %v6011 = vcombine.high %v5698, %v5702
    %v6013 = vunpack.c.l.s4 1983009808
    %v6014 = vunpack.c.0.s8 %v6013
    %v6015 = vlaneseq
    %v6016 = vshrl.u32 %v6015, 7
    %v6017 = vsub.s32 %v6014, %v6016
    %v6018 = vrot.slane %v6010, %v6017
    %v6020 = vunpack.c.l.s4 1983009808
    %v6021 = vunpack.c.0.s8 %v6020
    %v6022 = vlaneseq
    %v6023 = vshrl.u32 %v6022, 7
    %v6024 = vsub.s32 %v6021, %v6023
    %v6025 = vrot.slane %v6011, %v6024
    %v6026 = vcombine.low %v5700, %v5704
    %v6027 = vcombine.high %v5700, %v5704
    %v6029 = vunpack.c.l.s4 1983009808
    %v6030 = vunpack.c.0.s8 %v6029
    %v6031 = vlaneseq
    %v6032 = vshrl.u32 %v6031, 7
    %v6033 = vsub.s32 %v6030, %v6032
    %v6034 = vrot.slane %v6026, %v6033
    %v6036 = vunpack.c.l.s4 1983009808
    %v6037 = vunpack.c.0.s8 %v6036
    %v6038 = vlaneseq
    %v6039 = vshrl.u32 %v6038, 7
    %v6040 = vsub.s32 %v6037, %v6039
    %v6041 = vrot.slane %v6027, %v6040
    %v6042 = vcombine.low %v5986, %v6002
    %v6043 = vcombine.high %v5986, %v6002
    %v6045 = vunpack.c.l.s4 1934713408
    %v6046 = vunpack.c.0.s8 %v6045
    %v6047 = vlaneseq
    %v6048 = vshrl.u32 %v6047, 7
    %v6049 = vsub.s32 %v6046, %v6048
    %v6050 = vrot.slane %v6042, %v6049
    %v6052 = vunpack.c.l.s4 1934713408
    %v6053 = vunpack.c.0.s8 %v6052
    %v6054 = vlaneseq
    %v6055 = vshrl.u32 %v6054, 7
    %v6056 = vsub.s32 %v6053, %v6055
    %v6057 = vrot.slane %v6043, %v6056
    %v6058 = vcombine.low %v5993, %v6009
    %v6059 = vcombine.high %v5993, %v6009
    %v6061 = vunpack.c.l.s4 1934713408
    %v6062 = vunpack.c.0.s8 %v6061
    %v6063 = vlaneseq
    %v6064 = vshrl.u32 %v6063, 7
    %v6065 = vsub.s32 %v6062, %v6064
    %v6066 = vrot.slane %v6058, %v6065
    %v6068 = vunpack.c.l.s4 1934713408
    %v6069 = vunpack.c.0.s8 %v6068
    %v6070 = vlaneseq
    %v6071 = vshrl.u32 %v6070, 7
    %v6072 = vsub.s32 %v6069, %v6071
    %v6073 = vrot.slane %v6059, %v6072
    %v6074 = vcombine.low %v6018, %v6034
    %v6075 = vcombine.high %v6018, %v6034
    %v6077 = vunpack.c.l.s4 1934713408
    %v6078 = vunpack.c.0.s8 %v6077
    %v6079 = vlaneseq
    %v6080 = vshrl.u32 %v6079, 7
    %v6081 = vsub.s32 %v6078, %v6080
    %v6082 = vrot.slane %v6074, %v6081
    %v6084 = vunpack.c.l.s4 1934713408
    %v6085 = vunpack.c.0.s8 %v6084
    %v6086 = vlaneseq
    %v6087 = vshrl.u32 %v6086, 7
    %v6088 = vsub.s32 %v6085, %v6087
    %v6089 = vrot.slane %v6075, %v6088
    %v6090 = vcombine.low %v6025, %v6041
    %v6091 = vcombine.high %v6025, %v6041
    %v6093 = vunpack.c.l.s4 1934713408
    %v6094 = vunpack.c.0.s8 %v6093
    %v6095 = vlaneseq
    %v6096 = vshrl.u32 %v6095, 7
    %v6097 = vsub.s32 %v6094, %v6096
    %v6098 = vrot.slane %v6090, %v6097
    %v6100 = vunpack.c.l.s4 1934713408
    %v6101 = vunpack.c.0.s8 %v6100
    %v6102 = vlaneseq
    %v6103 = vshrl.u32 %v6102, 7
    %v6104 = vsub.s32 %v6101, %v6103
    %v6105 = vrot.slane %v6091, %v6104
    %v6106 = vcombine.low %v6050, %v6082
    %v6107 = vcombine.high %v6050, %v6082
    %v6108 = vcombine.low %v6057, %v6089
    %v6109 = vcombine.high %v6057, %v6089
    %v6110 = vcombine.low %v6066, %v6098
    %v6111 = vcombine.high %v6066, %v6098
    %v6112 = vcombine.low %v6073, %v6105
    %v6113 = vcombine.high %v6073, %v6105
    %v6114 = vcombine.low %v5706, %v5710
    %v6115 = vcombine.high %v5706, %v5710
    %v6117 = vunpack.c.l.s4 1983009808
    %v6118 = vunpack.c.0.s8 %v6117
    %v6119 = vlaneseq
    %v6120 = vshrl.u32 %v6119, 7
    %v6121 = vsub.s32 %v6118, %v6120
    %v6122 = vrot.slane %v6114, %v6121
    %v6124 = vunpack.c.l.s4 1983009808
    %v6125 = vunpack.c.0.s8 %v6124
    %v6126 = vlaneseq
    %v6127 = vshrl.u32 %v6126, 7
    %v6128 = vsub.s32 %v6125, %v6127
    %v6129 = vrot.slane %v6115, %v6128
    %v6130 = vcombine.low %v5708, %v5712
    %v6131 = vcombine.high %v5708, %v5712
    %v6133 = vunpack.c.l.s4 1983009808
    %v6134 = vunpack.c.0.s8 %v6133
    %v6135 = vlaneseq
    %v6136 = vshrl.u32 %v6135, 7
    %v6137 = vsub.s32 %v6134, %v6136
    %v6138 = vrot.slane %v6130, %v6137
    %v6140 = vunpack.c.l.s4 1983009808
    %v6141 = vunpack.c.0.s8 %v6140
    %v6142 = vlaneseq
    %v6143 = vshrl.u32 %v6142, 7
    %v6144 = vsub.s32 %v6141, %v6143
    %v6145 = vrot.slane %v6131, %v6144
    %v6146 = vcombine.low %v5714, %v5718
    %v6147 = vcombine.high %v5714, %v5718
    %v6149 = vunpack.c.l.s4 1983009808
    %v6150 = vunpack.c.0.s8 %v6149
    %v6151 = vlaneseq
    %v6152 = vshrl.u32 %v6151, 7
    %v6153 = vsub.s32 %v6150, %v6152
    %v6154 = vrot.slane %v6146, %v6153
    %v6156 = vunpack.c.l.s4 1983009808
    %v6157 = vunpack.c.0.s8 %v6156
    %v6158 = vlaneseq
    %v6159 = vshrl.u32 %v6158, 7
    %v6160 = vsub.s32 %v6157, %v6159
    %v6161 = vrot.slane %v6147, %v6160
    %v6162 = vcombine.low %v5716, %v5720
    %v6163 = vcombine.high %v5716, %v5720
    %v6165 = vunpack.c.l.s4 1983009808
    %v6166 = vunpack.c.0.s8 %v6165
    %v6167 = vlaneseq
    %v6168 = vshrl.u32 %v6167, 7
    %v6169 = vsub.s32 %v6166, %v6168
    %v6170 = vrot.slane %v6162, %v6169
    %v6172 = vunpack.c.l.s4 1983009808
    %v6173 = vunpack.c.0.s8 %v6172
    %v6174 = vlaneseq
    %v6175 = vshrl.u32 %v6174, 7
    %v6176 = vsub.s32 %v6173, %v6175
    %v6177 = vrot.slane %v6163, %v6176
    %v6178 = vcombine.low %v6122, %v6138
    %v6179 = vcombine.high %v6122, %v6138
    %v6181 = vunpack.c.l.s4 1934713408
    %v6182 = vunpack.c.0.s8 %v6181
    %v6183 = vlaneseq
    %v6184 = vshrl.u32 %v6183, 7
    %v6185 = vsub.s32 %v6182, %v6184
    %v6186 = vrot.slane %v6178, %v6185
    %v6188 = vunpack.c.l.s4 1934713408
    %v6189 = vunpack.c.0.s8 %v6188
    %v6190 = vlaneseq
    %v6191 = vshrl.u32 %v6190, 7
    %v6192 = vsub.s32 %v6189, %v6191
    %v6193 = vrot.slane %v6179, %v6192
    %v6194 = vcombine.low %v6129, %v6145
    %v6195 = vcombine.high %v6129, %v6145
    %v6197 = vunpack.c.l.s4 1934713408
    %v6198 = vunpack.c.0.s8 %v6197
    %v6199 = vlaneseq
    %v6200 = vshrl.u32 %v6199, 7
    %v6201 = vsub.s32 %v6198, %v6200
    %v6202 = vrot.slane %v6194, %v6201
    %v6204 = vunpack.c.l.s4 1934713408
    %v6205 = vunpack.c.0.s8 %v6204
    %v6206 = vlaneseq
    %v6207 = vshrl.u32 %v6206, 7
    %v6208 = vsub.s32 %v6205, %v6207
    %v6209 = vrot.slane %v6195, %v6208
    %v6210 = vcombine.low %v6154, %v6170
    %v6211 = vcombine.high %v6154, %v6170
    %v6213 = vunpack.c.l.s4 1934713408
    %v6214 = vunpack.c.0.s8 %v6213
    %v6215 = vlaneseq
    %v6216 = vshrl.u32 %v6215, 7
    %v6217 = vsub.s32 %v6214, %v6216
    %v6218 = vrot.slane %v6210, %v6217
    %v6220 = vunpack.c.l.s4 1934713408
    %v6221 = vunpack.c.0.s8 %v6220
    %v6222 = vlaneseq
    %v6223 = vshrl.u32 %v6222, 7
    %v6224 = vsub.s32 %v6221, %v6223
    %v6225 = vrot.slane %v6211, %v6224
    %v6226 = vcombine.low %v6161, %v6177
    %v6227 = vcombine.high %v6161, %v6177
    %v6229 = vunpack.c.l.s4 1934713408
    %v6230 = vunpack.c.0.s8 %v6229
    %v6231 = vlaneseq
    %v6232 = vshrl.u32 %v6231, 7
    %v6233 = vsub.s32 %v6230, %v6232
    %v6234 = vrot.slane %v6226, %v6233
    %v6236 = vunpack.c.l.s4 1934713408
    %v6237 = vunpack.c.0.s8 %v6236
    %v6238 = vlaneseq
    %v6239 = vshrl.u32 %v6238, 7
    %v6240 = vsub.s32 %v6237, %v6239
    %v6241 = vrot.slane %v6227, %v6240
    %v6242 = vcombine.low %v6186, %v6218
    %v6243 = vcombine.high %v6186, %v6218
    %v6244 = vcombine.low %v6193, %v6225
    %v6245 = vcombine.high %v6193, %v6225
    %v6246 = vcombine.low %v6202, %v6234
    %v6247 = vcombine.high %v6202, %v6234
    %v6248 = vcombine.low %v6209, %v6241
    %v6249 = vcombine.high %v6209, %v6241
    %v6250 = vcombine.low %v5722, %v5726
    %v6251 = vcombine.high %v5722, %v5726
    %v6253 = vunpack.c.l.s4 1983009808
    %v6254 = vunpack.c.0.s8 %v6253
    %v6255 = vlaneseq
    %v6256 = vshrl.u32 %v6255, 7
    %v6257 = vsub.s32 %v6254, %v6256
    %v6258 = vrot.slane %v6250, %v6257
    %v6260 = vunpack.c.l.s4 1983009808
    %v6261 = vunpack.c.0.s8 %v6260
    %v6262 = vlaneseq
    %v6263 = vshrl.u32 %v6262, 7
    %v6264 = vsub.s32 %v6261, %v6263
    %v6265 = vrot.slane %v6251, %v6264
    %v6266 = vcombine.low %v5724, %v5728
    %v6267 = vcombine.high %v5724, %v5728
    %v6269 = vunpack.c.l.s4 1983009808
    %v6270 = vunpack.c.0.s8 %v6269
    %v6271 = vlaneseq
    %v6272 = vshrl.u32 %v6271, 7
    %v6273 = vsub.s32 %v6270, %v6272
    %v6274 = vrot.slane %v6266, %v6273
    %v6276 = vunpack.c.l.s4 1983009808
    %v6277 = vunpack.c.0.s8 %v6276
    %v6278 = vlaneseq
    %v6279 = vshrl.u32 %v6278, 7
    %v6280 = vsub.s32 %v6277, %v6279
    %v6281 = vrot.slane %v6267, %v6280
    %v6282 = vcombine.low %v5730, %v5734
    %v6283 = vcombine.high %v5730, %v5734
    %v6285 = vunpack.c.l.s4 1983009808
    %v6286 = vunpack.c.0.s8 %v6285
    %v6287 = vlaneseq
    %v6288 = vshrl.u32 %v6287, 7
    %v6289 = vsub.s32 %v6286, %v6288
    %v6290 = vrot.slane %v6282, %v6289
    %v6292 = vunpack.c.l.s4 1983009808
    %v6293 = vunpack.c.0.s8 %v6292
    %v6294 = vlaneseq
    %v6295 = vshrl.u32 %v6294, 7
    %v6296 = vsub.s32 %v6293, %v6295
    %v6297 = vrot.slane %v6283, %v6296
    %v6298 = vcombine.low %v5732, %v5736
    %v6299 = vcombine.high %v5732, %v5736
    %v6301 = vunpack.c.l.s4 1983009808
    %v6302 = vunpack.c.0.s8 %v6301
    %v6303 = vlaneseq
    %v6304 = vshrl.u32 %v6303, 7
    %v6305 = vsub.s32 %v6302, %v6304
    %v6306 = vrot.slane %v6298, %v6305
    %v6308 = vunpack.c.l.s4 1983009808
    %v6309 = vunpack.c.0.s8 %v6308
    %v6310 = vlaneseq
    %v6311 = vshrl.u32 %v6310, 7
    %v6312 = vsub.s32 %v6309, %v6311
    %v6313 = vrot.slane %v6299, %v6312
    %v6314 = vcombine.low %v6258, %v6274
    %v6315 = vcombine.high %v6258, %v6274
    %v6317 = vunpack.c.l.s4 1934713408
    %v6318 = vunpack.c.0.s8 %v6317
    %v6319 = vlaneseq
    %v6320 = vshrl.u32 %v6319, 7
    %v6321 = vsub.s32 %v6318, %v6320
    %v6322 = vrot.slane %v6314, %v6321
    %v6324 = vunpack.c.l.s4 1934713408
    %v6325 = vunpack.c.0.s8 %v6324
    %v6326 = vlaneseq
    %v6327 = vshrl.u32 %v6326, 7
    %v6328 = vsub.s32 %v6325, %v6327
    %v6329 = vrot.slane %v6315, %v6328
    %v6330 = vcombine.low %v6265, %v6281
    %v6331 = vcombine.high %v6265, %v6281
    %v6333 = vunpack.c.l.s4 1934713408
    %v6334 = vunpack.c.0.s8 %v6333
    %v6335 = vlaneseq
    %v6336 = vshrl.u32 %v6335, 7
    %v6337 = vsub.s32 %v6334, %v6336
    %v6338 = vrot.slane %v6330, %v6337
    %v6340 = vunpack.c.l.s4 1934713408
    %v6341 = vunpack.c.0.s8 %v6340
    %v6342 = vlaneseq
    %v6343 = vshrl.u32 %v6342, 7
    %v6344 = vsub.s32 %v6341, %v6343
    %v6345 = vrot.slane %v6331, %v6344
    %v6346 = vcombine.low %v6290, %v6306
    %v6347 = vcombine.high %v6290, %v6306
    %v6349 = vunpack.c.l.s4 1934713408
    %v6350 = vunpack.c.0.s8 %v6349
    %v6351 = vlaneseq
    %v6352 = vshrl.u32 %v6351, 7
    %v6353 = vsub.s32 %v6350, %v6352
    %v6354 = vrot.slane %v6346, %v6353
    %v6356 = vunpack.c.l.s4 1934713408
    %v6357 = vunpack.c.0.s8 %v6356
    %v6358 = vlaneseq
    %v6359 = vshrl.u32 %v6358, 7
    %v6360 = vsub.s32 %v6357, %v6359
    %v6361 = vrot.slane %v6347, %v6360
    %v6362 = vcombine.low %v6297, %v6313
    %v6363 = vcombine.high %v6297, %v6313
    %v6365 = vunpack.c.l.s4 1934713408
    %v6366 = vunpack.c.0.s8 %v6365
    %v6367 = vlaneseq
    %v6368 = vshrl.u32 %v6367, 7
    %v6369 = vsub.s32 %v6366, %v6368
    %v6370 = vrot.slane %v6362, %v6369
    %v6372 = vunpack.c.l.s4 1934713408
    %v6373 = vunpack.c.0.s8 %v6372
    %v6374 = vlaneseq
    %v6375 = vshrl.u32 %v6374, 7
    %v6376 = vsub.s32 %v6373, %v6375
    %v6377 = vrot.slane %v6363, %v6376
    %v6378 = vcombine.low %v6322, %v6354
    %v6379 = vcombine.high %v6322, %v6354
    %v6380 = vcombine.low %v6329, %v6361
    %v6381 = vcombine.high %v6329, %v6361
    %v6382 = vcombine.low %v6338, %v6370
    %v6383 = vcombine.high %v6338, %v6370
    %v6384 = vcombine.low %v6345, %v6377
    %v6385 = vcombine.high %v6345, %v6377
    %v6386 = vcombine.low %v5738, %v5742
    %v6387 = vcombine.high %v5738, %v5742
    %v6389 = vunpack.c.l.s4 1983009808
    %v6390 = vunpack.c.0.s8 %v6389
    %v6391 = vlaneseq
    %v6392 = vshrl.u32 %v6391, 7
    %v6393 = vsub.s32 %v6390, %v6392
    %v6394 = vrot.slane %v6386, %v6393
    %v6396 = vunpack.c.l.s4 1983009808
    %v6397 = vunpack.c.0.s8 %v6396
    %v6398 = vlaneseq
    %v6399 = vshrl.u32 %v6398, 7
    %v6400 = vsub.s32 %v6397, %v6399
    %v6401 = vrot.slane %v6387, %v6400
    %v6402 = vcombine.low %v5740, %v5744
    %v6403 = vcombine.high %v5740, %v5744
    %v6405 = vunpack.c.l.s4 1983009808
    %v6406 = vunpack.c.0.s8 %v6405
    %v6407 = vlaneseq
    %v6408 = vshrl.u32 %v6407, 7
    %v6409 = vsub.s32 %v6406, %v6408
    %v6410 = vrot.slane %v6402, %v6409
    %v6412 = vunpack.c.l.s4 1983009808
    %v6413 = vunpack.c.0.s8 %v6412
    %v6414 = vlaneseq
    %v6415 = vshrl.u32 %v6414, 7
    %v6416 = vsub.s32 %v6413, %v6415
    %v6417 = vrot.slane %v6403, %v6416
    %v6418 = vcombine.low %v5746, %v5750
    %v6419 = vcombine.high %v5746, %v5750
    %v6421 = vunpack.c.l.s4 1983009808
    %v6422 = vunpack.c.0.s8 %v6421
    %v6423 = vlaneseq
    %v6424 = vshrl.u32 %v6423, 7
    %v6425 = vsub.s32 %v6422, %v6424
    %v6426 = vrot.slane %v6418, %v6425
    %v6428 = vunpack.c.l.s4 1983009808
    %v6429 = vunpack.c.0.s8 %v6428
    %v6430 = vlaneseq
    %v6431 = vshrl.u32 %v6430, 7
    %v6432 = vsub.s32 %v6429, %v6431
    %v6433 = vrot.slane %v6419, %v6432
    %v6434 = vcombine.low %v5748, %v5752
    %v6435 = vcombine.high %v5748, %v5752
    %v6437 = vunpack.c.l.s4 1983009808
    %v6438 = vunpack.c.0.s8 %v6437
    %v6439 = vlaneseq
    %v6440 = vshrl.u32 %v6439, 7
    %v6441 = vsub.s32 %v6438, %v6440
    %v6442 = vrot.slane %v6434, %v6441
    %v6444 = vunpack.c.l.s4 1983009808
    %v6445 = vunpack.c.0.s8 %v6444
    %v6446 = vlaneseq
    %v6447 = vshrl.u32 %v6446, 7
    %v6448 = vsub.s32 %v6445, %v6447
    %v6449 = vrot.slane %v6435, %v6448
    %v6450 = vcombine.low %v6394, %v6410
    %v6451 = vcombine.high %v6394, %v6410
    %v6453 = vunpack.c.l.s4 1934713408
    %v6454 = vunpack.c.0.s8 %v6453
    %v6455 = vlaneseq
    %v6456 = vshrl.u32 %v6455, 7
    %v6457 = vsub.s32 %v6454, %v6456
    %v6458 = vrot.slane %v6450, %v6457
    %v6460 = vunpack.c.l.s4 1934713408
    %v6461 = vunpack.c.0.s8 %v6460
    %v6462 = vlaneseq
    %v6463 = vshrl.u32 %v6462, 7
    %v6464 = vsub.s32 %v6461, %v6463
    %v6465 = vrot.slane %v6451, %v6464
    %v6466 = vcombine.low %v6401, %v6417
    %v6467 = vcombine.high %v6401, %v6417
    %v6469 = vunpack.c.l.s4 1934713408
    %v6470 = vunpack.c.0.s8 %v6469
    %v6471 = vlaneseq
    %v6472 = vshrl.u32 %v6471, 7
    %v6473 = vsub.s32 %v6470, %v6472
    %v6474 = vrot.slane %v6466, %v6473
    %v6476 = vunpack.c.l.s4 1934713408
    %v6477 = vunpack.c.0.s8 %v6476
    %v6478 = vlaneseq
    %v6479 = vshrl.u32 %v6478, 7
    %v6480 = vsub.s32 %v6477, %v6479
    %v6481 = vrot.slane %v6467, %v6480
    %v6482 = vcombine.low %v6426, %v6442
    %v6483 = vcombine.high %v6426, %v6442
    %v6485 = vunpack.c.l.s4 1934713408
    %v6486 = vunpack.c.0.s8 %v6485
    %v6487 = vlaneseq
    %v6488 = vshrl.u32 %v6487, 7
    %v6489 = vsub.s32 %v6486, %v6488
    %v6490 = vrot.slane %v6482, %v6489
    %v6492 = vunpack.c.l.s4 1934713408
    %v6493 = vunpack.c.0.s8 %v6492
    %v6494 = vlaneseq
    %v6495 = vshrl.u32 %v6494, 7
    %v6496 = vsub.s32 %v6493, %v6495
    %v6497 = vrot.slane %v6483, %v6496
    %v6498 = vcombine.low %v6433, %v6449
    %v6499 = vcombine.high %v6433, %v6449
    %v6501 = vunpack.c.l.s4 1934713408
    %v6502 = vunpack.c.0.s8 %v6501
    %v6503 = vlaneseq
    %v6504 = vshrl.u32 %v6503, 7
    %v6505 = vsub.s32 %v6502, %v6504
    %v6506 = vrot.slane %v6498, %v6505
    %v6508 = vunpack.c.l.s4 1934713408
    %v6509 = vunpack.c.0.s8 %v6508
    %v6510 = vlaneseq
    %v6511 = vshrl.u32 %v6510, 7
    %v6512 = vsub.s32 %v6509, %v6511
    %v6513 = vrot.slane %v6499, %v6512
    %v6514 = vcombine.low %v6458, %v6490
    %v6515 = vcombine.high %v6458, %v6490
    %v6516 = vcombine.low %v6465, %v6497
    %v6517 = vcombine.high %v6465, %v6497
    %v6518 = vcombine.low %v6474, %v6506
    %v6519 = vcombine.high %v6474, %v6506
    %v6520 = vcombine.low %v6481, %v6513
    %v6521 = vcombine.high %v6481, %v6513
    %v6522 = vcombine.low %v5754, %v5758
    %v6523 = vcombine.high %v5754, %v5758
    %v6525 = vunpack.c.l.s4 1983009808
    %v6526 = vunpack.c.0.s8 %v6525
    %v6527 = vlaneseq
    %v6528 = vshrl.u32 %v6527, 7
    %v6529 = vsub.s32 %v6526, %v6528
    %v6530 = vrot.slane %v6522, %v6529
    %v6532 = vunpack.c.l.s4 1983009808
    %v6533 = vunpack.c.0.s8 %v6532
    %v6534 = vlaneseq
    %v6535 = vshrl.u32 %v6534, 7
    %v6536 = vsub.s32 %v6533, %v6535
    %v6537 = vrot.slane %v6523, %v6536
    %v6538 = vcombine.low %v5756, %v5760
    %v6539 = vcombine.high %v5756, %v5760
    %v6541 = vunpack.c.l.s4 1983009808
    %v6542 = vunpack.c.0.s8 %v6541
    %v6543 = vlaneseq
    %v6544 = vshrl.u32 %v6543, 7
    %v6545 = vsub.s32 %v6542, %v6544
    %v6546 = vrot.slane %v6538, %v6545
    %v6548 = vunpack.c.l.s4 1983009808
    %v6549 = vunpack.c.0.s8 %v6548
    %v6550 = vlaneseq
    %v6551 = vshrl.u32 %v6550, 7
    %v6552 = vsub.s32 %v6549, %v6551
    %v6553 = vrot.slane %v6539, %v6552
    %v6554 = vcombine.low %v5762, %v5766
    %v6555 = vcombine.high %v5762, %v5766
    %v6557 = vunpack.c.l.s4 1983009808
    %v6558 = vunpack.c.0.s8 %v6557
    %v6559 = vlaneseq
    %v6560 = vshrl.u32 %v6559, 7
    %v6561 = vsub.s32 %v6558, %v6560
    %v6562 = vrot.slane %v6554, %v6561
    %v6564 = vunpack.c.l.s4 1983009808
    %v6565 = vunpack.c.0.s8 %v6564
    %v6566 = vlaneseq
    %v6567 = vshrl.u32 %v6566, 7
    %v6568 = vsub.s32 %v6565, %v6567
    %v6569 = vrot.slane %v6555, %v6568
    %v6570 = vcombine.low %v5764, %v5768
    %v6571 = vcombine.high %v5764, %v5768
    %v6573 = vunpack.c.l.s4 1983009808
    %v6574 = vunpack.c.0.s8 %v6573
    %v6575 = vlaneseq
    %v6576 = vshrl.u32 %v6575, 7
    %v6577 = vsub.s32 %v6574, %v6576
    %v6578 = vrot.slane %v6570, %v6577
    %v6580 = vunpack.c.l.s4 1983009808
    %v6581 = vunpack.c.0.s8 %v6580
    %v6582 = vlaneseq
    %v6583 = vshrl.u32 %v6582, 7
    %v6584 = vsub.s32 %v6581, %v6583
    %v6585 = vrot.slane %v6571, %v6584
    %v6586 = vcombine.low %v6530, %v6546
    %v6587 = vcombine.high %v6530, %v6546
    %v6589 = vunpack.c.l.s4 1934713408
    %v6590 = vunpack.c.0.s8 %v6589
    %v6591 = vlaneseq
    %v6592 = vshrl.u32 %v6591, 7
    %v6593 = vsub.s32 %v6590, %v6592
    %v6594 = vrot.slane %v6586, %v6593
    %v6596 = vunpack.c.l.s4 1934713408
    %v6597 = vunpack.c.0.s8 %v6596
    %v6598 = vlaneseq
    %v6599 = vshrl.u32 %v6598, 7
    %v6600 = vsub.s32 %v6597, %v6599
    %v6601 = vrot.slane %v6587, %v6600
    %v6602 = vcombine.low %v6537, %v6553
    %v6603 = vcombine.high %v6537, %v6553
    %v6605 = vunpack.c.l.s4 1934713408
    %v6606 = vunpack.c.0.s8 %v6605
    %v6607 = vlaneseq
    %v6608 = vshrl.u32 %v6607, 7
    %v6609 = vsub.s32 %v6606, %v6608
    %v6610 = vrot.slane %v6602, %v6609
    %v6612 = vunpack.c.l.s4 1934713408
    %v6613 = vunpack.c.0.s8 %v6612
    %v6614 = vlaneseq
    %v6615 = vshrl.u32 %v6614, 7
    %v6616 = vsub.s32 %v6613, %v6615
    %v6617 = vrot.slane %v6603, %v6616
    %v6618 = vcombine.low %v6562, %v6578
    %v6619 = vcombine.high %v6562, %v6578
    %v6621 = vunpack.c.l.s4 1934713408
    %v6622 = vunpack.c.0.s8 %v6621
    %v6623 = vlaneseq
    %v6624 = vshrl.u32 %v6623, 7
    %v6625 = vsub.s32 %v6622, %v6624
    %v6626 = vrot.slane %v6618, %v6625
    %v6628 = vunpack.c.l.s4 1934713408
    %v6629 = vunpack.c.0.s8 %v6628
    %v6630 = vlaneseq
    %v6631 = vshrl.u32 %v6630, 7
    %v6632 = vsub.s32 %v6629, %v6631
    %v6633 = vrot.slane %v6619, %v6632
    %v6634 = vcombine.low %v6569, %v6585
    %v6635 = vcombine.high %v6569, %v6585
    %v6637 = vunpack.c.l.s4 1934713408
    %v6638 = vunpack.c.0.s8 %v6637
    %v6639 = vlaneseq
    %v6640 = vshrl.u32 %v6639, 7
    %v6641 = vsub.s32 %v6638, %v6640
    %v6642 = vrot.slane %v6634, %v6641
    %v6644 = vunpack.c.l.s4 1934713408
    %v6645 = vunpack.c.0.s8 %v6644
    %v6646 = vlaneseq
    %v6647 = vshrl.u32 %v6646, 7
    %v6648 = vsub.s32 %v6645, %v6647
    %v6649 = vrot.slane %v6635, %v6648
    %v6650 = vcombine.low %v6594, %v6626
    %v6651 = vcombine.high %v6594, %v6626
    %v6652 = vcombine.low %v6601, %v6633
    %v6653 = vcombine.high %v6601, %v6633
    %v6654 = vcombine.low %v6610, %v6642
    %v6655 = vcombine.high %v6610, %v6642
    %v6656 = vcombine.low %v6617, %v6649
    %v6657 = vcombine.high %v6617, %v6649
    %v6658 = vcombine.low %v5770, %v5774
    %v6659 = vcombine.high %v5770, %v5774
    %v6661 = vunpack.c.l.s4 1983009808
    %v6662 = vunpack.c.0.s8 %v6661
    %v6663 = vlaneseq
    %v6664 = vshrl.u32 %v6663, 7
    %v6665 = vsub.s32 %v6662, %v6664
    %v6666 = vrot.slane %v6658, %v6665
    %v6668 = vunpack.c.l.s4 1983009808
    %v6669 = vunpack.c.0.s8 %v6668
    %v6670 = vlaneseq
    %v6671 = vshrl.u32 %v6670, 7
    %v6672 = vsub.s32 %v6669, %v6671
    %v6673 = vrot.slane %v6659, %v6672
    %v6674 = vcombine.low %v5772, %v5776
    %v6675 = vcombine.high %v5772, %v5776
    %v6677 = vunpack.c.l.s4 1983009808
    %v6678 = vunpack.c.0.s8 %v6677
    %v6679 = vlaneseq
    %v6680 = vshrl.u32 %v6679, 7
    %v6681 = vsub.s32 %v6678, %v6680
    %v6682 = vrot.slane %v6674, %v6681
    %v6684 = vunpack.c.l.s4 1983009808
    %v6685 = vunpack.c.0.s8 %v6684
    %v6686 = vlaneseq
    %v6687 = vshrl.u32 %v6686, 7
    %v6688 = vsub.s32 %v6685, %v6687
    %v6689 = vrot.slane %v6675, %v6688
    %v6690 = vcombine.low %v5778, %v5782
    %v6691 = vcombine.high %v5778, %v5782
    %v6693 = vunpack.c.l.s4 1983009808
    %v6694 = vunpack.c.0.s8 %v6693
    %v6695 = vlaneseq
    %v6696 = vshrl.u32 %v6695, 7
    %v6697 = vsub.s32 %v6694, %v6696
    %v6698 = vrot.slane %v6690, %v6697
    %v6700 = vunpack.c.l.s4 1983009808
    %v6701 = vunpack.c.0.s8 %v6700
    %v6702 = vlaneseq
    %v6703 = vshrl.u32 %v6702, 7
    %v6704 = vsub.s32 %v6701, %v6703
    %v6705 = vrot.slane %v6691, %v6704
    %v6706 = vcombine.low %v5780, %v5784
    %v6707 = vcombine.high %v5780, %v5784
    %v6709 = vunpack.c.l.s4 1983009808
    %v6710 = vunpack.c.0.s8 %v6709
    %v6711 = vlaneseq
    %v6712 = vshrl.u32 %v6711, 7
    %v6713 = vsub.s32 %v6710, %v6712
    %v6714 = vrot.slane %v6706, %v6713
    %v6716 = vunpack.c.l.s4 1983009808
    %v6717 = vunpack.c.0.s8 %v6716
    %v6718 = vlaneseq
    %v6719 = vshrl.u32 %v6718, 7
    %v6720 = vsub.s32 %v6717, %v6719
    %v6721 = vrot.slane %v6707, %v6720
    %v6722 = vcombine.low %v6666, %v6682
    %v6723 = vcombine.high %v6666, %v6682
    %v6725 = vunpack.c.l.s4 1934713408
    %v6726 = vunpack.c.0.s8 %v6725
    %v6727 = vlaneseq
    %v6728 = vshrl.u32 %v6727, 7
    %v6729 = vsub.s32 %v6726, %v6728
    %v6730 = vrot.slane %v6722, %v6729
    %v6732 = vunpack.c.l.s4 1934713408
    %v6733 = vunpack.c.0.s8 %v6732
    %v6734 = vlaneseq
    %v6735 = vshrl.u32 %v6734, 7
    %v6736 = vsub.s32 %v6733, %v6735
    %v6737 = vrot.slane %v6723, %v6736
    %v6738 = vcombine.low %v6673, %v6689
    %v6739 = vcombine.high %v6673, %v6689
    %v6741 = vunpack.c.l.s4 1934713408
    %v6742 = vunpack.c.0.s8 %v6741
    %v6743 = vlaneseq
    %v6744 = vshrl.u32 %v6743, 7
    %v6745 = vsub.s32 %v6742, %v6744
    %v6746 = vrot.slane %v6738, %v6745
    %v6748 = vunpack.c.l.s4 1934713408
    %v6749 = vunpack.c.0.s8 %v6748
    %v6750 = vlaneseq
    %v6751 = vshrl.u32 %v6750, 7
    %v6752 = vsub.s32 %v6749, %v6751
    %v6753 = vrot.slane %v6739, %v6752
    %v6754 = vcombine.low %v6698, %v6714
    %v6755 = vcombine.high %v6698, %v6714
    %v6757 = vunpack.c.l.s4 1934713408
    %v6758 = vunpack.c.0.s8 %v6757
    %v6759 = vlaneseq
    %v6760 = vshrl.u32 %v6759, 7
    %v6761 = vsub.s32 %v6758, %v6760
    %v6762 = vrot.slane %v6754, %v6761
    %v6764 = vunpack.c.l.s4 1934713408
    %v6765 = vunpack.c.0.s8 %v6764
    %v6766 = vlaneseq
    %v6767 = vshrl.u32 %v6766, 7
    %v6768 = vsub.s32 %v6765, %v6767
    %v6769 = vrot.slane %v6755, %v6768
    %v6770 = vcombine.low %v6705, %v6721
    %v6771 = vcombine.high %v6705, %v6721
    %v6773 = vunpack.c.l.s4 1934713408
    %v6774 = vunpack.c.0.s8 %v6773
    %v6775 = vlaneseq
    %v6776 = vshrl.u32 %v6775, 7
    %v6777 = vsub.s32 %v6774, %v6776
    %v6778 = vrot.slane %v6770, %v6777
    %v6780 = vunpack.c.l.s4 1934713408
    %v6781 = vunpack.c.0.s8 %v6780
    %v6782 = vlaneseq
    %v6783 = vshrl.u32 %v6782, 7
    %v6784 = vsub.s32 %v6781, %v6783
    %v6785 = vrot.slane %v6771, %v6784
    %v6786 = vcombine.low %v6730, %v6762
    %v6787 = vcombine.high %v6730, %v6762
    %v6788 = vcombine.low %v6737, %v6769
    %v6789 = vcombine.high %v6737, %v6769
    %v6790 = vcombine.low %v6746, %v6778
    %v6791 = vcombine.high %v6746, %v6778
    %v6792 = vcombine.low %v6753, %v6785
    %v6793 = vcombine.high %v6753, %v6785
    %v6794 = vcombine.low %v5786, %v5790
    %v6795 = vcombine.high %v5786, %v5790
    %v6797 = vunpack.c.l.s4 1983009808
    %v6798 = vunpack.c.0.s8 %v6797
    %v6799 = vlaneseq
    %v6800 = vshrl.u32 %v6799, 7
    %v6801 = vsub.s32 %v6798, %v6800
    %v6802 = vrot.slane %v6794, %v6801
    %v6804 = vunpack.c.l.s4 1983009808
    %v6805 = vunpack.c.0.s8 %v6804
    %v6806 = vlaneseq
    %v6807 = vshrl.u32 %v6806, 7
    %v6808 = vsub.s32 %v6805, %v6807
    %v6809 = vrot.slane %v6795, %v6808
    %v6810 = vcombine.low %v5788, %v5792
    %v6811 = vcombine.high %v5788, %v5792
    %v6813 = vunpack.c.l.s4 1983009808
    %v6814 = vunpack.c.0.s8 %v6813
    %v6815 = vlaneseq
    %v6816 = vshrl.u32 %v6815, 7
    %v6817 = vsub.s32 %v6814, %v6816
    %v6818 = vrot.slane %v6810, %v6817
    %v6820 = vunpack.c.l.s4 1983009808
    %v6821 = vunpack.c.0.s8 %v6820
    %v6822 = vlaneseq
    %v6823 = vshrl.u32 %v6822, 7
    %v6824 = vsub.s32 %v6821, %v6823
    %v6825 = vrot.slane %v6811, %v6824
    %v6826 = vcombine.low %v5794, %v5798
    %v6827 = vcombine.high %v5794, %v5798
    %v6829 = vunpack.c.l.s4 1983009808
    %v6830 = vunpack.c.0.s8 %v6829
    %v6831 = vlaneseq
    %v6832 = vshrl.u32 %v6831, 7
    %v6833 = vsub.s32 %v6830, %v6832
    %v6834 = vrot.slane %v6826, %v6833
    %v6836 = vunpack.c.l.s4 1983009808
    %v6837 = vunpack.c.0.s8 %v6836
    %v6838 = vlaneseq
    %v6839 = vshrl.u32 %v6838, 7
    %v6840 = vsub.s32 %v6837, %v6839
    %v6841 = vrot.slane %v6827, %v6840
    %v6842 = vcombine.low %v5796, %v5800
    %v6843 = vcombine.high %v5796, %v5800
    %v6845 = vunpack.c.l.s4 1983009808
    %v6846 = vunpack.c.0.s8 %v6845
    %v6847 = vlaneseq
    %v6848 = vshrl.u32 %v6847, 7
    %v6849 = vsub.s32 %v6846, %v6848
    %v6850 = vrot.slane %v6842, %v6849
    %v6852 = vunpack.c.l.s4 1983009808
    %v6853 = vunpack.c.0.s8 %v6852
    %v6854 = vlaneseq
    %v6855 = vshrl.u32 %v6854, 7
    %v6856 = vsub.s32 %v6853, %v6855
    %v6857 = vrot.slane %v6843, %v6856
    %v6858 = vcombine.low %v6802, %v6818
    %v6859 = vcombine.high %v6802, %v6818
    %v6861 = vunpack.c.l.s4 1934713408
    %v6862 = vunpack.c.0.s8 %v6861
    %v6863 = vlaneseq
    %v6864 = vshrl.u32 %v6863, 7
    %v6865 = vsub.s32 %v6862, %v6864
    %v6866 = vrot.slane %v6858, %v6865
    %v6868 = vunpack.c.l.s4 1934713408
    %v6869 = vunpack.c.0.s8 %v6868
    %v6870 = vlaneseq
    %v6871 = vshrl.u32 %v6870, 7
    %v6872 = vsub.s32 %v6869, %v6871
    %v6873 = vrot.slane %v6859, %v6872
    %v6874 = vcombine.low %v6809, %v6825
    %v6875 = vcombine.high %v6809, %v6825
    %v6877 = vunpack.c.l.s4 1934713408
    %v6878 = vunpack.c.0.s8 %v6877
    %v6879 = vlaneseq
    %v6880 = vshrl.u32 %v6879, 7
    %v6881 = vsub.s32 %v6878, %v6880
    %v6882 = vrot.slane %v6874, %v6881
    %v6884 = vunpack.c.l.s4 1934713408
    %v6885 = vunpack.c.0.s8 %v6884
    %v6886 = vlaneseq
    %v6887 = vshrl.u32 %v6886, 7
    %v6888 = vsub.s32 %v6885, %v6887
    %v6889 = vrot.slane %v6875, %v6888
    %v6890 = vcombine.low %v6834, %v6850
    %v6891 = vcombine.high %v6834, %v6850
    %v6893 = vunpack.c.l.s4 1934713408
    %v6894 = vunpack.c.0.s8 %v6893
    %v6895 = vlaneseq
    %v6896 = vshrl.u32 %v6895, 7
    %v6897 = vsub.s32 %v6894, %v6896
    %v6898 = vrot.slane %v6890, %v6897
    %v6900 = vunpack.c.l.s4 1934713408
    %v6901 = vunpack.c.0.s8 %v6900
    %v6902 = vlaneseq
    %v6903 = vshrl.u32 %v6902, 7
    %v6904 = vsub.s32 %v6901, %v6903
    %v6905 = vrot.slane %v6891, %v6904
    %v6906 = vcombine.low %v6841, %v6857
    %v6907 = vcombine.high %v6841, %v6857
    %v6909 = vunpack.c.l.s4 1934713408
    %v6910 = vunpack.c.0.s8 %v6909
    %v6911 = vlaneseq
    %v6912 = vshrl.u32 %v6911, 7
    %v6913 = vsub.s32 %v6910, %v6912
    %v6914 = vrot.slane %v6906, %v6913
    %v6916 = vunpack.c.l.s4 1934713408
    %v6917 = vunpack.c.0.s8 %v6916
    %v6918 = vlaneseq
    %v6919 = vshrl.u32 %v6918, 7
    %v6920 = vsub.s32 %v6917, %v6919
    %v6921 = vrot.slane %v6907, %v6920
    %v6922 = vcombine.low %v6866, %v6898
    %v6923 = vcombine.high %v6866, %v6898
    %v6924 = vcombine.low %v6873, %v6905
    %v6925 = vcombine.high %v6873, %v6905
    %v6926 = vcombine.low %v6882, %v6914
    %v6927 = vcombine.high %v6882, %v6914
    %v6928 = vcombine.low %v6889, %v6921
    %v6929 = vcombine.high %v6889, %v6921
    %v6930 = vcombine.low %v5802, %v5806
    %v6931 = vcombine.high %v5802, %v5806
    %v6933 = vunpack.c.l.s4 1983009808
    %v6934 = vunpack.c.0.s8 %v6933
    %v6935 = vlaneseq
    %v6936 = vshrl.u32 %v6935, 7
    %v6937 = vsub.s32 %v6934, %v6936
    %v6938 = vrot.slane %v6930, %v6937
    %v6940 = vunpack.c.l.s4 1983009808
    %v6941 = vunpack.c.0.s8 %v6940
    %v6942 = vlaneseq
    %v6943 = vshrl.u32 %v6942, 7
    %v6944 = vsub.s32 %v6941, %v6943
    %v6945 = vrot.slane %v6931, %v6944
    %v6946 = vcombine.low %v5804, %v5808
    %v6947 = vcombine.high %v5804, %v5808
    %v6949 = vunpack.c.l.s4 1983009808
    %v6950 = vunpack.c.0.s8 %v6949
    %v6951 = vlaneseq
    %v6952 = vshrl.u32 %v6951, 7
    %v6953 = vsub.s32 %v6950, %v6952
    %v6954 = vrot.slane %v6946, %v6953
    %v6956 = vunpack.c.l.s4 1983009808
    %v6957 = vunpack.c.0.s8 %v6956
    %v6958 = vlaneseq
    %v6959 = vshrl.u32 %v6958, 7
    %v6960 = vsub.s32 %v6957, %v6959
    %v6961 = vrot.slane %v6947, %v6960
    %v6962 = vcombine.low %v5810, %v5814
    %v6963 = vcombine.high %v5810, %v5814
    %v6965 = vunpack.c.l.s4 1983009808
    %v6966 = vunpack.c.0.s8 %v6965
    %v6967 = vlaneseq
    %v6968 = vshrl.u32 %v6967, 7
    %v6969 = vsub.s32 %v6966, %v6968
    %v6970 = vrot.slane %v6962, %v6969
    %v6972 = vunpack.c.l.s4 1983009808
    %v6973 = vunpack.c.0.s8 %v6972
    %v6974 = vlaneseq
    %v6975 = vshrl.u32 %v6974, 7
    %v6976 = vsub.s32 %v6973, %v6975
    %v6977 = vrot.slane %v6963, %v6976
    %v6978 = vcombine.low %v5812, %v5816
    %v6979 = vcombine.high %v5812, %v5816
    %v6981 = vunpack.c.l.s4 1983009808
    %v6982 = vunpack.c.0.s8 %v6981
    %v6983 = vlaneseq
    %v6984 = vshrl.u32 %v6983, 7
    %v6985 = vsub.s32 %v6982, %v6984
    %v6986 = vrot.slane %v6978, %v6985
    %v6988 = vunpack.c.l.s4 1983009808
    %v6989 = vunpack.c.0.s8 %v6988
    %v6990 = vlaneseq
    %v6991 = vshrl.u32 %v6990, 7
    %v6992 = vsub.s32 %v6989, %v6991
    %v6993 = vrot.slane %v6979, %v6992
    %v6994 = vcombine.low %v6938, %v6954
    %v6995 = vcombine.high %v6938, %v6954
    %v6997 = vunpack.c.l.s4 1934713408
    %v6998 = vunpack.c.0.s8 %v6997
    %v6999 = vlaneseq
    %v7000 = vshrl.u32 %v6999, 7
    %v7001 = vsub.s32 %v6998, %v7000
    %v7002 = vrot.slane %v6994, %v7001
    %v7004 = vunpack.c.l.s4 1934713408
    %v7005 = vunpack.c.0.s8 %v7004
    %v7006 = vlaneseq
    %v7007 = vshrl.u32 %v7006, 7
    %v7008 = vsub.s32 %v7005, %v7007
    %v7009 = vrot.slane %v6995, %v7008
    %v7010 = vcombine.low %v6945, %v6961
    %v7011 = vcombine.high %v6945, %v6961
    %v7013 = vunpack.c.l.s4 1934713408
    %v7014 = vunpack.c.0.s8 %v7013
    %v7015 = vlaneseq
    %v7016 = vshrl.u32 %v7015, 7
    %v7017 = vsub.s32 %v7014, %v7016
    %v7018 = vrot.slane %v7010, %v7017
    %v7020 = vunpack.c.l.s4 1934713408
    %v7021 = vunpack.c.0.s8 %v7020
    %v7022 = vlaneseq
    %v7023 = vshrl.u32 %v7022, 7
    %v7024 = vsub.s32 %v7021, %v7023
    %v7025 = vrot.slane %v7011, %v7024
    %v7026 = vcombine.low %v6970, %v6986
    %v7027 = vcombine.high %v6970, %v6986
    %v7029 = vunpack.c.l.s4 1934713408
    %v7030 = vunpack.c.0.s8 %v7029
    %v7031 = vlaneseq
    %v7032 = vshrl.u32 %v7031, 7
    %v7033 = vsub.s32 %v7030, %v7032
    %v7034 = vrot.slane %v7026, %v7033
    %v7036 = vunpack.c.l.s4 1934713408
    %v7037 = vunpack.c.0.s8 %v7036
    %v7038 = vlaneseq
    %v7039 = vshrl.u32 %v7038, 7
    %v7040 = vsub.s32 %v7037, %v7039
    %v7041 = vrot.slane %v7027, %v7040
    %v7042 = vcombine.low %v6977, %v6993
    %v7043 = vcombine.high %v6977, %v6993
    %v7045 = vunpack.c.l.s4 1934713408
    %v7046 = vunpack.c.0.s8 %v7045
    %v7047 = vlaneseq
    %v7048 = vshrl.u32 %v7047, 7
    %v7049 = vsub.s32 %v7046, %v7048
    %v7050 = vrot.slane %v7042, %v7049
    %v7052 = vunpack.c.l.s4 1934713408
    %v7053 = vunpack.c.0.s8 %v7052
    %v7054 = vlaneseq
    %v7055 = vshrl.u32 %v7054, 7
    %v7056 = vsub.s32 %v7053, %v7055
    %v7057 = vrot.slane %v7043, %v7056
    %v7058 = vcombine.low %v7002, %v7034
    %v7059 = vcombine.high %v7002, %v7034
    %v7060 = vcombine.low %v7009, %v7041
    %v7061 = vcombine.high %v7009, %v7041
    %v7062 = vcombine.low %v7018, %v7050
    %v7063 = vcombine.high %v7018, %v7050
    %v7064 = vcombine.low %v7025, %v7057
    %v7065 = vcombine.high %v7025, %v7057
    %v7066 = vcombine.low %v5818, %v5822
    %v7067 = vcombine.high %v5818, %v5822
    %v7069 = vunpack.c.l.s4 1983009808
    %v7070 = vunpack.c.0.s8 %v7069
    %v7071 = vlaneseq
    %v7072 = vshrl.u32 %v7071, 7
    %v7073 = vsub.s32 %v7070, %v7072
    %v7074 = vrot.slane %v7066, %v7073
    %v7076 = vunpack.c.l.s4 1983009808
    %v7077 = vunpack.c.0.s8 %v7076
    %v7078 = vlaneseq
    %v7079 = vshrl.u32 %v7078, 7
    %v7080 = vsub.s32 %v7077, %v7079
    %v7081 = vrot.slane %v7067, %v7080
    %v7082 = vcombine.low %v5820, %v5824
    %v7083 = vcombine.high %v5820, %v5824
    %v7085 = vunpack.c.l.s4 1983009808
    %v7086 = vunpack.c.0.s8 %v7085
    %v7087 = vlaneseq
    %v7088 = vshrl.u32 %v7087, 7
    %v7089 = vsub.s32 %v7086, %v7088
    %v7090 = vrot.slane %v7082, %v7089
    %v7092 = vunpack.c.l.s4 1983009808
    %v7093 = vunpack.c.0.s8 %v7092
    %v7094 = vlaneseq
    %v7095 = vshrl.u32 %v7094, 7
    %v7096 = vsub.s32 %v7093, %v7095
    %v7097 = vrot.slane %v7083, %v7096
    %v7098 = vcombine.low %v5826, %v5830
    %v7099 = vcombine.high %v5826, %v5830
    %v7101 = vunpack.c.l.s4 1983009808
    %v7102 = vunpack.c.0.s8 %v7101
    %v7103 = vlaneseq
    %v7104 = vshrl.u32 %v7103, 7
    %v7105 = vsub.s32 %v7102, %v7104
    %v7106 = vrot.slane %v7098, %v7105
    %v7108 = vunpack.c.l.s4 1983009808
    %v7109 = vunpack.c.0.s8 %v7108
    %v7110 = vlaneseq
    %v7111 = vshrl.u32 %v7110, 7
    %v7112 = vsub.s32 %v7109, %v7111
    %v7113 = vrot.slane %v7099, %v7112
    %v7114 = vcombine.low %v5828, %v5832
    %v7115 = vcombine.high %v5828, %v5832
    %v7117 = vunpack.c.l.s4 1983009808
    %v7118 = vunpack.c.0.s8 %v7117
    %v7119 = vlaneseq
    %v7120 = vshrl.u32 %v7119, 7
    %v7121 = vsub.s32 %v7118, %v7120
    %v7122 = vrot.slane %v7114, %v7121
    %v7124 = vunpack.c.l.s4 1983009808
    %v7125 = vunpack.c.0.s8 %v7124
    %v7126 = vlaneseq
    %v7127 = vshrl.u32 %v7126, 7
    %v7128 = vsub.s32 %v7125, %v7127
    %v7129 = vrot.slane %v7115, %v7128
    %v7130 = vcombine.low %v7074, %v7090
    %v7131 = vcombine.high %v7074, %v7090
    %v7133 = vunpack.c.l.s4 1934713408
    %v7134 = vunpack.c.0.s8 %v7133
    %v7135 = vlaneseq
    %v7136 = vshrl.u32 %v7135, 7
    %v7137 = vsub.s32 %v7134, %v7136
    %v7138 = vrot.slane %v7130, %v7137
    %v7140 = vunpack.c.l.s4 1934713408
    %v7141 = vunpack.c.0.s8 %v7140
    %v7142 = vlaneseq
    %v7143 = vshrl.u32 %v7142, 7
    %v7144 = vsub.s32 %v7141, %v7143
    %v7145 = vrot.slane %v7131, %v7144
    %v7146 = vcombine.low %v7081, %v7097
    %v7147 = vcombine.high %v7081, %v7097
    %v7149 = vunpack.c.l.s4 1934713408
    %v7150 = vunpack.c.0.s8 %v7149
    %v7151 = vlaneseq
    %v7152 = vshrl.u32 %v7151, 7
    %v7153 = vsub.s32 %v7150, %v7152
    %v7154 = vrot.slane %v7146, %v7153
    %v7156 = vunpack.c.l.s4 1934713408
    %v7157 = vunpack.c.0.s8 %v7156
    %v7158 = vlaneseq
    %v7159 = vshrl.u32 %v7158, 7
    %v7160 = vsub.s32 %v7157, %v7159
    %v7161 = vrot.slane %v7147, %v7160
    %v7162 = vcombine.low %v7106, %v7122
    %v7163 = vcombine.high %v7106, %v7122
    %v7165 = vunpack.c.l.s4 1934713408
    %v7166 = vunpack.c.0.s8 %v7165
    %v7167 = vlaneseq
    %v7168 = vshrl.u32 %v7167, 7
    %v7169 = vsub.s32 %v7166, %v7168
    %v7170 = vrot.slane %v7162, %v7169
    %v7172 = vunpack.c.l.s4 1934713408
    %v7173 = vunpack.c.0.s8 %v7172
    %v7174 = vlaneseq
    %v7175 = vshrl.u32 %v7174, 7
    %v7176 = vsub.s32 %v7173, %v7175
    %v7177 = vrot.slane %v7163, %v7176
    %v7178 = vcombine.low %v7113, %v7129
    %v7179 = vcombine.high %v7113, %v7129
    %v7181 = vunpack.c.l.s4 1934713408
    %v7182 = vunpack.c.0.s8 %v7181
    %v7183 = vlaneseq
    %v7184 = vshrl.u32 %v7183, 7
    %v7185 = vsub.s32 %v7182, %v7184
    %v7186 = vrot.slane %v7178, %v7185
    %v7188 = vunpack.c.l.s4 1934713408
    %v7189 = vunpack.c.0.s8 %v7188
    %v7190 = vlaneseq
    %v7191 = vshrl.u32 %v7190, 7
    %v7192 = vsub.s32 %v7189, %v7191
    %v7193 = vrot.slane %v7179, %v7192
    %v7194 = vcombine.low %v7138, %v7170
    %v7195 = vcombine.high %v7138, %v7170
    %v7196 = vcombine.low %v7145, %v7177
    %v7197 = vcombine.high %v7145, %v7177
    %v7198 = vcombine.low %v7154, %v7186
    %v7199 = vcombine.high %v7154, %v7186
    %v7200 = vcombine.low %v7161, %v7193
    %v7201 = vcombine.high %v7161, %v7193
    %v7202 = vcombine.low %v5691, %v5695
    %v7203 = vcombine.high %v5691, %v5695
    %v7205 = vunpack.c.l.s4 1983009808
    %v7206 = vunpack.c.0.s8 %v7205
    %v7207 = vlaneseq
    %v7208 = vshrl.u32 %v7207, 7
    %v7209 = vsub.s32 %v7206, %v7208
    %v7210 = vrot.slane %v7202, %v7209
    %v7212 = vunpack.c.l.s4 1983009808
    %v7213 = vunpack.c.0.s8 %v7212
    %v7214 = vlaneseq
    %v7215 = vshrl.u32 %v7214, 7
    %v7216 = vsub.s32 %v7213, %v7215
    %v7217 = vrot.slane %v7203, %v7216
    %v7218 = vcombine.low %v5693, %v5697
    %v7219 = vcombine.high %v5693, %v5697
    %v7221 = vunpack.c.l.s4 1983009808
    %v7222 = vunpack.c.0.s8 %v7221
    %v7223 = vlaneseq
    %v7224 = vshrl.u32 %v7223, 7
    %v7225 = vsub.s32 %v7222, %v7224
    %v7226 = vrot.slane %v7218, %v7225
    %v7228 = vunpack.c.l.s4 1983009808
    %v7229 = vunpack.c.0.s8 %v7228
    %v7230 = vlaneseq
    %v7231 = vshrl.u32 %v7230, 7
    %v7232 = vsub.s32 %v7229, %v7231
    %v7233 = vrot.slane %v7219, %v7232
    %v7234 = vcombine.low %v5699, %v5703
    %v7235 = vcombine.high %v5699, %v5703
    %v7237 = vunpack.c.l.s4 1983009808
    %v7238 = vunpack.c.0.s8 %v7237
    %v7239 = vlaneseq
    %v7240 = vshrl.u32 %v7239, 7
    %v7241 = vsub.s32 %v7238, %v7240
    %v7242 = vrot.slane %v7234, %v7241
    %v7244 = vunpack.c.l.s4 1983009808
    %v7245 = vunpack.c.0.s8 %v7244
    %v7246 = vlaneseq
    %v7247 = vshrl.u32 %v7246, 7
    %v7248 = vsub.s32 %v7245, %v7247
    %v7249 = vrot.slane %v7235, %v7248
    %v7250 = vcombine.low %v5701, %v5705
    %v7251 = vcombine.high %v5701, %v5705
    %v7253 = vunpack.c.l.s4 1983009808
    %v7254 = vunpack.c.0.s8 %v7253
    %v7255 = vlaneseq
    %v7256 = vshrl.u32 %v7255, 7
    %v7257 = vsub.s32 %v7254, %v7256
    %v7258 = vrot.slane %v7250, %v7257
    %v7260 = vunpack.c.l.s4 1983009808
    %v7261 = vunpack.c.0.s8 %v7260
    %v7262 = vlaneseq
    %v7263 = vshrl.u32 %v7262, 7
    %v7264 = vsub.s32 %v7261, %v7263
    %v7265 = vrot.slane %v7251, %v7264
    %v7266 = vcombine.low %v7210, %v7226
    %v7267 = vcombine.high %v7210, %v7226
    %v7269 = vunpack.c.l.s4 1934713408
    %v7270 = vunpack.c.0.s8 %v7269
    %v7271 = vlaneseq
    %v7272 = vshrl.u32 %v7271, 7
    %v7273 = vsub.s32 %v7270, %v7272
    %v7274 = vrot.slane %v7266, %v7273
    %v7276 = vunpack.c.l.s4 1934713408
    %v7277 = vunpack.c.0.s8 %v7276
    %v7278 = vlaneseq
    %v7279 = vshrl.u32 %v7278, 7
    %v7280 = vsub.s32 %v7277, %v7279
    %v7281 = vrot.slane %v7267, %v7280
    %v7282 = vcombine.low %v7217, %v7233
    %v7283 = vcombine.high %v7217, %v7233
    %v7285 = vunpack.c.l.s4 1934713408
    %v7286 = vunpack.c.0.s8 %v7285
    %v7287 = vlaneseq
    %v7288 = vshrl.u32 %v7287, 7
    %v7289 = vsub.s32 %v7286, %v7288
    %v7290 = vrot.slane %v7282, %v7289
    %v7292 = vunpack.c.l.s4 1934713408
    %v7293 = vunpack.c.0.s8 %v7292
    %v7294 = vlaneseq
    %v7295 = vshrl.u32 %v7294, 7
    %v7296 = vsub.s32 %v7293, %v7295
    %v7297 = vrot.slane %v7283, %v7296
    %v7298 = vcombine.low %v7242, %v7258
    %v7299 = vcombine.high %v7242, %v7258
    %v7301 = vunpack.c.l.s4 1934713408
    %v7302 = vunpack.c.0.s8 %v7301
    %v7303 = vlaneseq
    %v7304 = vshrl.u32 %v7303, 7
    %v7305 = vsub.s32 %v7302, %v7304
    %v7306 = vrot.slane %v7298, %v7305
    %v7308 = vunpack.c.l.s4 1934713408
    %v7309 = vunpack.c.0.s8 %v7308
    %v7310 = vlaneseq
    %v7311 = vshrl.u32 %v7310, 7
    %v7312 = vsub.s32 %v7309, %v7311
    %v7313 = vrot.slane %v7299, %v7312
    %v7314 = vcombine.low %v7249, %v7265
    %v7315 = vcombine.high %v7249, %v7265
    %v7317 = vunpack.c.l.s4 1934713408
    %v7318 = vunpack.c.0.s8 %v7317
    %v7319 = vlaneseq
    %v7320 = vshrl.u32 %v7319, 7
    %v7321 = vsub.s32 %v7318, %v7320
    %v7322 = vrot.slane %v7314, %v7321
    %v7324 = vunpack.c.l.s4 1934713408
    %v7325 = vunpack.c.0.s8 %v7324
    %v7326 = vlaneseq
    %v7327 = vshrl.u32 %v7326, 7
    %v7328 = vsub.s32 %v7325, %v7327
    %v7329 = vrot.slane %v7315, %v7328
    %v7330 = vcombine.low %v7274, %v7306
    %v7331 = vcombine.high %v7274, %v7306
    %v7332 = vcombine.low %v7281, %v7313
    %v7333 = vcombine.high %v7281, %v7313
    %v7334 = vcombine.low %v7290, %v7322
    %v7335 = vcombine.high %v7290, %v7322
    %v7336 = vcombine.low %v7297, %v7329
    %v7337 = vcombine.high %v7297, %v7329
    %v7338 = vcombine.low %v5707, %v5711
    %v7339 = vcombine.high %v5707, %v5711
    %v7341 = vunpack.c.l.s4 1983009808
    %v7342 = vunpack.c.0.s8 %v7341
    %v7343 = vlaneseq
    %v7344 = vshrl.u32 %v7343, 7
    %v7345 = vsub.s32 %v7342, %v7344
    %v7346 = vrot.slane %v7338, %v7345
    %v7348 = vunpack.c.l.s4 1983009808
    %v7349 = vunpack.c.0.s8 %v7348
    %v7350 = vlaneseq
    %v7351 = vshrl.u32 %v7350, 7
    %v7352 = vsub.s32 %v7349, %v7351
    %v7353 = vrot.slane %v7339, %v7352
    %v7354 = vcombine.low %v5709, %v5713
    %v7355 = vcombine.high %v5709, %v5713
    %v7357 = vunpack.c.l.s4 1983009808
    %v7358 = vunpack.c.0.s8 %v7357
    %v7359 = vlaneseq
    %v7360 = vshrl.u32 %v7359, 7
    %v7361 = vsub.s32 %v7358, %v7360
    %v7362 = vrot.slane %v7354, %v7361
    %v7364 = vunpack.c.l.s4 1983009808
    %v7365 = vunpack.c.0.s8 %v7364
    %v7366 = vlaneseq
    %v7367 = vshrl.u32 %v7366, 7
    %v7368 = vsub.s32 %v7365, %v7367
    %v7369 = vrot.slane %v7355, %v7368
    %v7370 = vcombine.low %v5715, %v5719
    %v7371 = vcombine.high %v5715, %v5719
    %v7373 = vunpack.c.l.s4 1983009808
    %v7374 = vunpack.c.0.s8 %v7373
    %v7375 = vlaneseq
    %v7376 = vshrl.u32 %v7375, 7
    %v7377 = vsub.s32 %v7374, %v7376
    %v7378 = vrot.slane %v7370, %v7377
    %v7380 = vunpack.c.l.s4 1983009808
    %v7381 = vunpack.c.0.s8 %v7380
    %v7382 = vlaneseq
    %v7383 = vshrl.u32 %v7382, 7
    %v7384 = vsub.s32 %v7381, %v7383
    %v7385 = vrot.slane %v7371, %v7384
    %v7386 = vcombine.low %v5717, %v5721
    %v7387 = vcombine.high %v5717, %v5721
    %v7389 = vunpack.c.l.s4 1983009808
    %v7390 = vunpack.c.0.s8 %v7389
    %v7391 = vlaneseq
    %v7392 = vshrl.u32 %v7391, 7
    %v7393 = vsub.s32 %v7390, %v7392
    %v7394 = vrot.slane %v7386, %v7393
    %v7396 = vunpack.c.l.s4 1983009808
    %v7397 = vunpack.c.0.s8 %v7396
    %v7398 = vlaneseq
    %v7399 = vshrl.u32 %v7398, 7
    %v7400 = vsub.s32 %v7397, %v7399
    %v7401 = vrot.slane %v7387, %v7400
    %v7402 = vcombine.low %v7346, %v7362
    %v7403 = vcombine.high %v7346, %v7362
    %v7405 = vunpack.c.l.s4 1934713408
    %v7406 = vunpack.c.0.s8 %v7405
    %v7407 = vlaneseq
    %v7408 = vshrl.u32 %v7407, 7
    %v7409 = vsub.s32 %v7406, %v7408
    %v7410 = vrot.slane %v7402, %v7409
    %v7412 = vunpack.c.l.s4 1934713408
    %v7413 = vunpack.c.0.s8 %v7412
    %v7414 = vlaneseq
    %v7415 = vshrl.u32 %v7414, 7
    %v7416 = vsub.s32 %v7413, %v7415
    %v7417 = vrot.slane %v7403, %v7416
    %v7418 = vcombine.low %v7353, %v7369
    %v7419 = vcombine.high %v7353, %v7369
    %v7421 = vunpack.c.l.s4 1934713408
    %v7422 = vunpack.c.0.s8 %v7421
    %v7423 = vlaneseq
    %v7424 = vshrl.u32 %v7423, 7
    %v7425 = vsub.s32 %v7422, %v7424
    %v7426 = vrot.slane %v7418, %v7425
    %v7428 = vunpack.c.l.s4 1934713408
    %v7429 = vunpack.c.0.s8 %v7428
    %v7430 = vlaneseq
    %v7431 = vshrl.u32 %v7430, 7
    %v7432 = vsub.s32 %v7429, %v7431
    %v7433 = vrot.slane %v7419, %v7432
    %v7434 = vcombine.low %v7378, %v7394
    %v7435 = vcombine.high %v7378, %v7394
    %v7437 = vunpack.c.l.s4 1934713408
    %v7438 = vunpack.c.0.s8 %v7437
    %v7439 = vlaneseq
    %v7440 = vshrl.u32 %v7439, 7
    %v7441 = vsub.s32 %v7438, %v7440
    %v7442 = vrot.slane %v7434, %v7441
    %v7444 = vunpack.c.l.s4 1934713408
    %v7445 = vunpack.c.0.s8 %v7444
    %v7446 = vlaneseq
    %v7447 = vshrl.u32 %v7446, 7
    %v7448 = vsub.s32 %v7445, %v7447
    %v7449 = vrot.slane %v7435, %v7448
    %v7450 = vcombine.low %v7385, %v7401
    %v7451 = vcombine.high %v7385, %v7401
    %v7453 = vunpack.c.l.s4 1934713408
    %v7454 = vunpack.c.0.s8 %v7453
    %v7455 = vlaneseq
    %v7456 = vshrl.u32 %v7455, 7
    %v7457 = vsub.s32 %v7454, %v7456
    %v7458 = vrot.slane %v7450, %v7457
    %v7460 = vunpack.c.l.s4 1934713408
    %v7461 = vunpack.c.0.s8 %v7460
    %v7462 = vlaneseq
    %v7463 = vshrl.u32 %v7462, 7
    %v7464 = vsub.s32 %v7461, %v7463
    %v7465 = vrot.slane %v7451, %v7464
    %v7466 = vcombine.low %v7410, %v7442
    %v7467 = vcombine.high %v7410, %v7442
    %v7468 = vcombine.low %v7417, %v7449
    %v7469 = vcombine.high %v7417, %v7449
    %v7470 = vcombine.low %v7426, %v7458
    %v7471 = vcombine.high %v7426, %v7458
    %v7472 = vcombine.low %v7433, %v7465
    %v7473 = vcombine.high %v7433, %v7465
    %v7474 = vcombine.low %v5723, %v5727
    %v7475 = vcombine.high %v5723, %v5727
    %v7477 = vunpack.c.l.s4 1983009808
    %v7478 = vunpack.c.0.s8 %v7477
    %v7479 = vlaneseq
    %v7480 = vshrl.u32 %v7479, 7
    %v7481 = vsub.s32 %v7478, %v7480
    %v7482 = vrot.slane %v7474, %v7481
    %v7484 = vunpack.c.l.s4 1983009808
    %v7485 = vunpack.c.0.s8 %v7484
    %v7486 = vlaneseq
    %v7487 = vshrl.u32 %v7486, 7
    %v7488 = vsub.s32 %v7485, %v7487
    %v7489 = vrot.slane %v7475, %v7488
    %v7490 = vcombine.low %v5725, %v5729
    %v7491 = vcombine.high %v5725, %v5729
    %v7493 = vunpack.c.l.s4 1983009808
    %v7494 = vunpack.c.0.s8 %v7493
    %v7495 = vlaneseq
    %v7496 = vshrl.u32 %v7495, 7
    %v7497 = vsub.s32 %v7494, %v7496
    %v7498 = vrot.slane %v7490, %v7497
    %v7500 = vunpack.c.l.s4 1983009808
    %v7501 = vunpack.c.0.s8 %v7500
    %v7502 = vlaneseq
    %v7503 = vshrl.u32 %v7502, 7
    %v7504 = vsub.s32 %v7501, %v7503
    %v7505 = vrot.slane %v7491, %v7504
    %v7506 = vcombine.low %v5731, %v5735
    %v7507 = vcombine.high %v5731, %v5735
    %v7509 = vunpack.c.l.s4 1983009808
    %v7510 = vunpack.c.0.s8 %v7509
    %v7511 = vlaneseq
    %v7512 = vshrl.u32 %v7511, 7
    %v7513 = vsub.s32 %v7510, %v7512
    %v7514 = vrot.slane %v7506, %v7513
    %v7516 = vunpack.c.l.s4 1983009808
    %v7517 = vunpack.c.0.s8 %v7516
    %v7518 = vlaneseq
    %v7519 = vshrl.u32 %v7518, 7
    %v7520 = vsub.s32 %v7517, %v7519
    %v7521 = vrot.slane %v7507, %v7520
    %v7522 = vcombine.low %v5733, %v5737
    %v7523 = vcombine.high %v5733, %v5737
    %v7525 = vunpack.c.l.s4 1983009808
    %v7526 = vunpack.c.0.s8 %v7525
    %v7527 = vlaneseq
    %v7528 = vshrl.u32 %v7527, 7
    %v7529 = vsub.s32 %v7526, %v7528
    %v7530 = vrot.slane %v7522, %v7529
    %v7532 = vunpack.c.l.s4 1983009808
    %v7533 = vunpack.c.0.s8 %v7532
    %v7534 = vlaneseq
    %v7535 = vshrl.u32 %v7534, 7
    %v7536 = vsub.s32 %v7533, %v7535
    %v7537 = vrot.slane %v7523, %v7536
    %v7538 = vcombine.low %v7482, %v7498
    %v7539 = vcombine.high %v7482, %v7498
    %v7541 = vunpack.c.l.s4 1934713408
    %v7542 = vunpack.c.0.s8 %v7541
    %v7543 = vlaneseq
    %v7544 = vshrl.u32 %v7543, 7
    %v7545 = vsub.s32 %v7542, %v7544
    %v7546 = vrot.slane %v7538, %v7545
    %v7548 = vunpack.c.l.s4 1934713408
    %v7549 = vunpack.c.0.s8 %v7548
    %v7550 = vlaneseq
    %v7551 = vshrl.u32 %v7550, 7
    %v7552 = vsub.s32 %v7549, %v7551
    %v7553 = vrot.slane %v7539, %v7552
    %v7554 = vcombine.low %v7489, %v7505
    %v7555 = vcombine.high %v7489, %v7505
    %v7557 = vunpack.c.l.s4 1934713408
    %v7558 = vunpack.c.0.s8 %v7557
    %v7559 = vlaneseq
    %v7560 = vshrl.u32 %v7559, 7
    %v7561 = vsub.s32 %v7558, %v7560
    %v7562 = vrot.slane %v7554, %v7561
    %v7564 = vunpack.c.l.s4 1934713408
    %v7565 = vunpack.c.0.s8 %v7564
    %v7566 = vlaneseq
    %v7567 = vshrl.u32 %v7566, 7
    %v7568 = vsub.s32 %v7565, %v7567
    %v7569 = vrot.slane %v7555, %v7568
    %v7570 = vcombine.low %v7514, %v7530
    %v7571 = vcombine.high %v7514, %v7530
    %v7573 = vunpack.c.l.s4 1934713408
    %v7574 = vunpack.c.0.s8 %v7573
    %v7575 = vlaneseq
    %v7576 = vshrl.u32 %v7575, 7
    %v7577 = vsub.s32 %v7574, %v7576
    %v7578 = vrot.slane %v7570, %v7577
    %v7580 = vunpack.c.l.s4 1934713408
    %v7581 = vunpack.c.0.s8 %v7580
    %v7582 = vlaneseq
    %v7583 = vshrl.u32 %v7582, 7
    %v7584 = vsub.s32 %v7581, %v7583
    %v7585 = vrot.slane %v7571, %v7584
    %v7586 = vcombine.low %v7521, %v7537
    %v7587 = vcombine.high %v7521, %v7537
    %v7589 = vunpack.c.l.s4 1934713408
    %v7590 = vunpack.c.0.s8 %v7589
    %v7591 = vlaneseq
    %v7592 = vshrl.u32 %v7591, 7
    %v7593 = vsub.s32 %v7590, %v7592
    %v7594 = vrot.slane %v7586, %v7593
    %v7596 = vunpack.c.l.s4 1934713408
    %v7597 = vunpack.c.0.s8 %v7596
    %v7598 = vlaneseq
    %v7599 = vshrl.u32 %v7598, 7
    %v7600 = vsub.s32 %v7597, %v7599
    %v7601 = vrot.slane %v7587, %v7600
    %v7602 = vcombine.low %v7546, %v7578
    %v7603 = vcombine.high %v7546, %v7578
    %v7604 = vcombine.low %v7553, %v7585
    %v7605 = vcombine.high %v7553, %v7585
    %v7606 = vcombine.low %v7562, %v7594
    %v7607 = vcombine.high %v7562, %v7594
    %v7608 = vcombine.low %v7569, %v7601
    %v7609 = vcombine.high %v7569, %v7601
    %v7610 = vcombine.low %v5739, %v5743
    %v7611 = vcombine.high %v5739, %v5743
    %v7613 = vunpack.c.l.s4 1983009808
    %v7614 = vunpack.c.0.s8 %v7613
    %v7615 = vlaneseq
    %v7616 = vshrl.u32 %v7615, 7
    %v7617 = vsub.s32 %v7614, %v7616
    %v7618 = vrot.slane %v7610, %v7617
    %v7620 = vunpack.c.l.s4 1983009808
    %v7621 = vunpack.c.0.s8 %v7620
    %v7622 = vlaneseq
    %v7623 = vshrl.u32 %v7622, 7
    %v7624 = vsub.s32 %v7621, %v7623
    %v7625 = vrot.slane %v7611, %v7624
    %v7626 = vcombine.low %v5741, %v5745
    %v7627 = vcombine.high %v5741, %v5745
    %v7629 = vunpack.c.l.s4 1983009808
    %v7630 = vunpack.c.0.s8 %v7629
    %v7631 = vlaneseq
    %v7632 = vshrl.u32 %v7631, 7
    %v7633 = vsub.s32 %v7630, %v7632
    %v7634 = vrot.slane %v7626, %v7633
    %v7636 = vunpack.c.l.s4 1983009808
    %v7637 = vunpack.c.0.s8 %v7636
    %v7638 = vlaneseq
    %v7639 = vshrl.u32 %v7638, 7
    %v7640 = vsub.s32 %v7637, %v7639
    %v7641 = vrot.slane %v7627, %v7640
    %v7642 = vcombine.low %v5747, %v5751
    %v7643 = vcombine.high %v5747, %v5751
    %v7645 = vunpack.c.l.s4 1983009808
    %v7646 = vunpack.c.0.s8 %v7645
    %v7647 = vlaneseq
    %v7648 = vshrl.u32 %v7647, 7
    %v7649 = vsub.s32 %v7646, %v7648
    %v7650 = vrot.slane %v7642, %v7649
    %v7652 = vunpack.c.l.s4 1983009808
    %v7653 = vunpack.c.0.s8 %v7652
    %v7654 = vlaneseq
    %v7655 = vshrl.u32 %v7654, 7
    %v7656 = vsub.s32 %v7653, %v7655
    %v7657 = vrot.slane %v7643, %v7656
    %v7658 = vcombine.low %v5749, %v5753
    %v7659 = vcombine.high %v5749, %v5753
    %v7661 = vunpack.c.l.s4 1983009808
    %v7662 = vunpack.c.0.s8 %v7661
    %v7663 = vlaneseq
    %v7664 = vshrl.u32 %v7663, 7
    %v7665 = vsub.s32 %v7662, %v7664
    %v7666 = vrot.slane %v7658, %v7665
    %v7668 = vunpack.c.l.s4 1983009808
    %v7669 = vunpack.c.0.s8 %v7668
    %v7670 = vlaneseq
    %v7671 = vshrl.u32 %v7670, 7
    %v7672 = vsub.s32 %v7669, %v7671
    %v7673 = vrot.slane %v7659, %v7672
    %v7674 = vcombine.low %v7618, %v7634
    %v7675 = vcombine.high %v7618, %v7634
    %v7677 = vunpack.c.l.s4 1934713408
    %v7678 = vunpack.c.0.s8 %v7677
    %v7679 = vlaneseq
    %v7680 = vshrl.u32 %v7679, 7
    %v7681 = vsub.s32 %v7678, %v7680
    %v7682 = vrot.slane %v7674, %v7681
    %v7684 = vunpack.c.l.s4 1934713408
    %v7685 = vunpack.c.0.s8 %v7684
    %v7686 = vlaneseq
    %v7687 = vshrl.u32 %v7686, 7
    %v7688 = vsub.s32 %v7685, %v7687
    %v7689 = vrot.slane %v7675, %v7688
    %v7690 = vcombine.low %v7625, %v7641
    %v7691 = vcombine.high %v7625, %v7641
    %v7693 = vunpack.c.l.s4 1934713408
    %v7694 = vunpack.c.0.s8 %v7693
    %v7695 = vlaneseq
    %v7696 = vshrl.u32 %v7695, 7
    %v7697 = vsub.s32 %v7694, %v7696
    %v7698 = vrot.slane %v7690, %v7697
    %v7700 = vunpack.c.l.s4 1934713408
    %v7701 = vunpack.c.0.s8 %v7700
    %v7702 = vlaneseq
    %v7703 = vshrl.u32 %v7702, 7
    %v7704 = vsub.s32 %v7701, %v7703
    %v7705 = vrot.slane %v7691, %v7704
    %v7706 = vcombine.low %v7650, %v7666
    %v7707 = vcombine.high %v7650, %v7666
    %v7709 = vunpack.c.l.s4 1934713408
    %v7710 = vunpack.c.0.s8 %v7709
    %v7711 = vlaneseq
    %v7712 = vshrl.u32 %v7711, 7
    %v7713 = vsub.s32 %v7710, %v7712
    %v7714 = vrot.slane %v7706, %v7713
    %v7716 = vunpack.c.l.s4 1934713408
    %v7717 = vunpack.c.0.s8 %v7716
    %v7718 = vlaneseq
    %v7719 = vshrl.u32 %v7718, 7
    %v7720 = vsub.s32 %v7717, %v7719
    %v7721 = vrot.slane %v7707, %v7720
    %v7722 = vcombine.low %v7657, %v7673
    %v7723 = vcombine.high %v7657, %v7673
    %v7725 = vunpack.c.l.s4 1934713408
    %v7726 = vunpack.c.0.s8 %v7725
    %v7727 = vlaneseq
    %v7728 = vshrl.u32 %v7727, 7
    %v7729 = vsub.s32 %v7726, %v7728
    %v7730 = vrot.slane %v7722, %v7729
    %v7732 = vunpack.c.l.s4 1934713408
    %v7733 = vunpack.c.0.s8 %v7732
    %v7734 = vlaneseq
    %v7735 = vshrl.u32 %v7734, 7
    %v7736 = vsub.s32 %v7733, %v7735
    %v7737 = vrot.slane %v7723, %v7736
    %v7738 = vcombine.low %v7682, %v7714
    %v7739 = vcombine.high %v7682, %v7714
    %v7740 = vcombine.low %v7689, %v7721
    %v7741 = vcombine.high %v7689, %v7721
    %v7742 = vcombine.low %v7698, %v7730
    %v7743 = vcombine.high %v7698, %v7730
    %v7744 = vcombine.low %v7705, %v7737
    %v7745 = vcombine.high %v7705, %v7737
    %v7746 = vcombine.low %v5755, %v5759
    %v7747 = vcombine.high %v5755, %v5759
    %v7749 = vunpack.c.l.s4 1983009808
    %v7750 = vunpack.c.0.s8 %v7749
    %v7751 = vlaneseq
    %v7752 = vshrl.u32 %v7751, 7
    %v7753 = vsub.s32 %v7750, %v7752
    %v7754 = vrot.slane %v7746, %v7753
    %v7756 = vunpack.c.l.s4 1983009808
    %v7757 = vunpack.c.0.s8 %v7756
    %v7758 = vlaneseq
    %v7759 = vshrl.u32 %v7758, 7
    %v7760 = vsub.s32 %v7757, %v7759
    %v7761 = vrot.slane %v7747, %v7760
    %v7762 = vcombine.low %v5757, %v5761
    %v7763 = vcombine.high %v5757, %v5761
    %v7765 = vunpack.c.l.s4 1983009808
    %v7766 = vunpack.c.0.s8 %v7765
    %v7767 = vlaneseq
    %v7768 = vshrl.u32 %v7767, 7
    %v7769 = vsub.s32 %v7766, %v7768
    %v7770 = vrot.slane %v7762, %v7769
    %v7772 = vunpack.c.l.s4 1983009808
    %v7773 = vunpack.c.0.s8 %v7772
    %v7774 = vlaneseq
    %v7775 = vshrl.u32 %v7774, 7
    %v7776 = vsub.s32 %v7773, %v7775
    %v7777 = vrot.slane %v7763, %v7776
    %v7778 = vcombine.low %v5763, %v5767
    %v7779 = vcombine.high %v5763, %v5767
    %v7781 = vunpack.c.l.s4 1983009808
    %v7782 = vunpack.c.0.s8 %v7781
    %v7783 = vlaneseq
    %v7784 = vshrl.u32 %v7783, 7
    %v7785 = vsub.s32 %v7782, %v7784
    %v7786 = vrot.slane %v7778, %v7785
    %v7788 = vunpack.c.l.s4 1983009808
    %v7789 = vunpack.c.0.s8 %v7788
    %v7790 = vlaneseq
    %v7791 = vshrl.u32 %v7790, 7
    %v7792 = vsub.s32 %v7789, %v7791
    %v7793 = vrot.slane %v7779, %v7792
    %v7794 = vcombine.low %v5765, %v5769
    %v7795 = vcombine.high %v5765, %v5769
    %v7797 = vunpack.c.l.s4 1983009808
    %v7798 = vunpack.c.0.s8 %v7797
    %v7799 = vlaneseq
    %v7800 = vshrl.u32 %v7799, 7
    %v7801 = vsub.s32 %v7798, %v7800
    %v7802 = vrot.slane %v7794, %v7801
    %v7804 = vunpack.c.l.s4 1983009808
    %v7805 = vunpack.c.0.s8 %v7804
    %v7806 = vlaneseq
    %v7807 = vshrl.u32 %v7806, 7
    %v7808 = vsub.s32 %v7805, %v7807
    %v7809 = vrot.slane %v7795, %v7808
    %v7810 = vcombine.low %v7754, %v7770
    %v7811 = vcombine.high %v7754, %v7770
    %v7813 = vunpack.c.l.s4 1934713408
    %v7814 = vunpack.c.0.s8 %v7813
    %v7815 = vlaneseq
    %v7816 = vshrl.u32 %v7815, 7
    %v7817 = vsub.s32 %v7814, %v7816
    %v7818 = vrot.slane %v7810, %v7817
    %v7820 = vunpack.c.l.s4 1934713408
    %v7821 = vunpack.c.0.s8 %v7820
    %v7822 = vlaneseq
    %v7823 = vshrl.u32 %v7822, 7
    %v7824 = vsub.s32 %v7821, %v7823
    %v7825 = vrot.slane %v7811, %v7824
    %v7826 = vcombine.low %v7761, %v7777
    %v7827 = vcombine.high %v7761, %v7777
    %v7829 = vunpack.c.l.s4 1934713408
    %v7830 = vunpack.c.0.s8 %v7829
    %v7831 = vlaneseq
    %v7832 = vshrl.u32 %v7831, 7
    %v7833 = vsub.s32 %v7830, %v7832
    %v7834 = vrot.slane %v7826, %v7833
    %v7836 = vunpack.c.l.s4 1934713408
    %v7837 = vunpack.c.0.s8 %v7836
    %v7838 = vlaneseq
    %v7839 = vshrl.u32 %v7838, 7
    %v7840 = vsub.s32 %v7837, %v7839
    %v7841 = vrot.slane %v7827, %v7840
    %v7842 = vcombine.low %v7786, %v7802
    %v7843 = vcombine.high %v7786, %v7802
    %v7845 = vunpack.c.l.s4 1934713408
    %v7846 = vunpack.c.0.s8 %v7845
    %v7847 = vlaneseq
    %v7848 = vshrl.u32 %v7847, 7
    %v7849 = vsub.s32 %v7846, %v7848
    %v7850 = vrot.slane %v7842, %v7849
    %v7852 = vunpack.c.l.s4 1934713408
    %v7853 = vunpack.c.0.s8 %v7852
    %v7854 = vlaneseq
    %v7855 = vshrl.u32 %v7854, 7
    %v7856 = vsub.s32 %v7853, %v7855
    %v7857 = vrot.slane %v7843, %v7856
    %v7858 = vcombine.low %v7793, %v7809
    %v7859 = vcombine.high %v7793, %v7809
    %v7861 = vunpack.c.l.s4 1934713408
    %v7862 = vunpack.c.0.s8 %v7861
    %v7863 = vlaneseq
    %v7864 = vshrl.u32 %v7863, 7
    %v7865 = vsub.s32 %v7862, %v7864
    %v7866 = vrot.slane %v7858, %v7865
    %v7868 = vunpack.c.l.s4 1934713408
    %v7869 = vunpack.c.0.s8 %v7868
    %v7870 = vlaneseq
    %v7871 = vshrl.u32 %v7870, 7
    %v7872 = vsub.s32 %v7869, %v7871
    %v7873 = vrot.slane %v7859, %v7872
    %v7874 = vcombine.low %v7818, %v7850
    %v7875 = vcombine.high %v7818, %v7850
    %v7876 = vcombine.low %v7825, %v7857
    %v7877 = vcombine.high %v7825, %v7857
    %v7878 = vcombine.low %v7834, %v7866
    %v7879 = vcombine.high %v7834, %v7866
    %v7880 = vcombine.low %v7841, %v7873
    %v7881 = vcombine.high %v7841, %v7873
    %v7882 = vcombine.low %v5771, %v5775
    %v7883 = vcombine.high %v5771, %v5775
    %v7885 = vunpack.c.l.s4 1983009808
    %v7886 = vunpack.c.0.s8 %v7885
    %v7887 = vlaneseq
    %v7888 = vshrl.u32 %v7887, 7
    %v7889 = vsub.s32 %v7886, %v7888
    %v7890 = vrot.slane %v7882, %v7889
    %v7892 = vunpack.c.l.s4 1983009808
    %v7893 = vunpack.c.0.s8 %v7892
    %v7894 = vlaneseq
    %v7895 = vshrl.u32 %v7894, 7
    %v7896 = vsub.s32 %v7893, %v7895
    %v7897 = vrot.slane %v7883, %v7896
    %v7898 = vcombine.low %v5773, %v5777
    %v7899 = vcombine.high %v5773, %v5777
    %v7901 = vunpack.c.l.s4 1983009808
    %v7902 = vunpack.c.0.s8 %v7901
    %v7903 = vlaneseq
    %v7904 = vshrl.u32 %v7903, 7
    %v7905 = vsub.s32 %v7902, %v7904
    %v7906 = vrot.slane %v7898, %v7905
    %v7908 = vunpack.c.l.s4 1983009808
    %v7909 = vunpack.c.0.s8 %v7908
    %v7910 = vlaneseq
    %v7911 = vshrl.u32 %v7910, 7
    %v7912 = vsub.s32 %v7909, %v7911
    %v7913 = vrot.slane %v7899, %v7912
    %v7914 = vcombine.low %v5779, %v5783
    %v7915 = vcombine.high %v5779, %v5783
    %v7917 = vunpack.c.l.s4 1983009808
    %v7918 = vunpack.c.0.s8 %v7917
    %v7919 = vlaneseq
    %v7920 = vshrl.u32 %v7919, 7
    %v7921 = vsub.s32 %v7918, %v7920
    %v7922 = vrot.slane %v7914, %v7921
    %v7924 = vunpack.c.l.s4 1983009808
    %v7925 = vunpack.c.0.s8 %v7924
    %v7926 = vlaneseq
    %v7927 = vshrl.u32 %v7926, 7
    %v7928 = vsub.s32 %v7925, %v7927
    %v7929 = vrot.slane %v7915, %v7928
    %v7930 = vcombine.low %v5781, %v5785
    %v7931 = vcombine.high %v5781, %v5785
    %v7933 = vunpack.c.l.s4 1983009808
    %v7934 = vunpack.c.0.s8 %v7933
    %v7935 = vlaneseq
    %v7936 = vshrl.u32 %v7935, 7
    %v7937 = vsub.s32 %v7934, %v7936
    %v7938 = vrot.slane %v7930, %v7937
    %v7940 = vunpack.c.l.s4 1983009808
    %v7941 = vunpack.c.0.s8 %v7940
    %v7942 = vlaneseq
    %v7943 = vshrl.u32 %v7942, 7
    %v7944 = vsub.s32 %v7941, %v7943
    %v7945 = vrot.slane %v7931, %v7944
    %v7946 = vcombine.low %v7890, %v7906
    %v7947 = vcombine.high %v7890, %v7906
    %v7949 = vunpack.c.l.s4 1934713408
    %v7950 = vunpack.c.0.s8 %v7949
    %v7951 = vlaneseq
    %v7952 = vshrl.u32 %v7951, 7
    %v7953 = vsub.s32 %v7950, %v7952
    %v7954 = vrot.slane %v7946, %v7953
    %v7956 = vunpack.c.l.s4 1934713408
    %v7957 = vunpack.c.0.s8 %v7956
    %v7958 = vlaneseq
    %v7959 = vshrl.u32 %v7958, 7
    %v7960 = vsub.s32 %v7957, %v7959
    %v7961 = vrot.slane %v7947, %v7960
    %v7962 = vcombine.low %v7897, %v7913
    %v7963 = vcombine.high %v7897, %v7913
    %v7965 = vunpack.c.l.s4 1934713408
    %v7966 = vunpack.c.0.s8 %v7965
    %v7967 = vlaneseq
    %v7968 = vshrl.u32 %v7967, 7
    %v7969 = vsub.s32 %v7966, %v7968
    %v7970 = vrot.slane %v7962, %v7969
    %v7972 = vunpack.c.l.s4 1934713408
    %v7973 = vunpack.c.0.s8 %v7972
    %v7974 = vlaneseq
    %v7975 = vshrl.u32 %v7974, 7
    %v7976 = vsub.s32 %v7973, %v7975
    %v7977 = vrot.slane %v7963, %v7976
    %v7978 = vcombine.low %v7922, %v7938
    %v7979 = vcombine.high %v7922, %v7938
    %v7981 = vunpack.c.l.s4 1934713408
    %v7982 = vunpack.c.0.s8 %v7981
    %v7983 = vlaneseq
    %v7984 = vshrl.u32 %v7983, 7
    %v7985 = vsub.s32 %v7982, %v7984
    %v7986 = vrot.slane %v7978, %v7985
    %v7988 = vunpack.c.l.s4 1934713408
    %v7989 = vunpack.c.0.s8 %v7988
    %v7990 = vlaneseq
    %v7991 = vshrl.u32 %v7990, 7
    %v7992 = vsub.s32 %v7989, %v7991
    %v7993 = vrot.slane %v7979, %v7992
    %v7994 = vcombine.low %v7929, %v7945
    %v7995 = vcombine.high %v7929, %v7945
    %v7997 = vunpack.c.l.s4 1934713408
    %v7998 = vunpack.c.0.s8 %v7997
    %v7999 = vlaneseq
    %v8000 = vshrl.u32 %v7999, 7
    %v8001 = vsub.s32 %v7998, %v8000
    %v8002 = vrot.slane %v7994, %v8001
    %v8004 = vunpack.c.l.s4 1934713408
    %v8005 = vunpack.c.0.s8 %v8004
    %v8006 = vlaneseq
    %v8007 = vshrl.u32 %v8006, 7
    %v8008 = vsub.s32 %v8005, %v8007
    %v8009 = vrot.slane %v7995, %v8008
    %v8010 = vcombine.low %v7954, %v7986
    %v8011 = vcombine.high %v7954, %v7986
    %v8012 = vcombine.low %v7961, %v7993
    %v8013 = vcombine.high %v7961, %v7993
    %v8014 = vcombine.low %v7970, %v8002
    %v8015 = vcombine.high %v7970, %v8002
    %v8016 = vcombine.low %v7977, %v8009
    %v8017 = vcombine.high %v7977, %v8009
    %v8018 = vcombine.low %v5787, %v5791
    %v8019 = vcombine.high %v5787, %v5791
    %v8021 = vunpack.c.l.s4 1983009808
    %v8022 = vunpack.c.0.s8 %v8021
    %v8023 = vlaneseq
    %v8024 = vshrl.u32 %v8023, 7
    %v8025 = vsub.s32 %v8022, %v8024
    %v8026 = vrot.slane %v8018, %v8025
    %v8028 = vunpack.c.l.s4 1983009808
    %v8029 = vunpack.c.0.s8 %v8028
    %v8030 = vlaneseq
    %v8031 = vshrl.u32 %v8030, 7
    %v8032 = vsub.s32 %v8029, %v8031
    %v8033 = vrot.slane %v8019, %v8032
    %v8034 = vcombine.low %v5789, %v5793
    %v8035 = vcombine.high %v5789, %v5793
    %v8037 = vunpack.c.l.s4 1983009808
    %v8038 = vunpack.c.0.s8 %v8037
    %v8039 = vlaneseq
    %v8040 = vshrl.u32 %v8039, 7
    %v8041 = vsub.s32 %v8038, %v8040
    %v8042 = vrot.slane %v8034, %v8041
    %v8044 = vunpack.c.l.s4 1983009808
    %v8045 = vunpack.c.0.s8 %v8044
    %v8046 = vlaneseq
    %v8047 = vshrl.u32 %v8046, 7
    %v8048 = vsub.s32 %v8045, %v8047
    %v8049 = vrot.slane %v8035, %v8048
    %v8050 = vcombine.low %v5795, %v5799
    %v8051 = vcombine.high %v5795, %v5799
    %v8053 = vunpack.c.l.s4 1983009808
    %v8054 = vunpack.c.0.s8 %v8053
    %v8055 = vlaneseq
    %v8056 = vshrl.u32 %v8055, 7
    %v8057 = vsub.s32 %v8054, %v8056
    %v8058 = vrot.slane %v8050, %v8057
    %v8060 = vunpack.c.l.s4 1983009808
    %v8061 = vunpack.c.0.s8 %v8060
    %v8062 = vlaneseq
    %v8063 = vshrl.u32 %v8062, 7
    %v8064 = vsub.s32 %v8061, %v8063
    %v8065 = vrot.slane %v8051, %v8064
    %v8066 = vcombine.low %v5797, %v5801
    %v8067 = vcombine.high %v5797, %v5801
    %v8069 = vunpack.c.l.s4 1983009808
    %v8070 = vunpack.c.0.s8 %v8069
    %v8071 = vlaneseq
    %v8072 = vshrl.u32 %v8071, 7
    %v8073 = vsub.s32 %v8070, %v8072
    %v8074 = vrot.slane %v8066, %v8073
    %v8076 = vunpack.c.l.s4 1983009808
    %v8077 = vunpack.c.0.s8 %v8076
    %v8078 = vlaneseq
    %v8079 = vshrl.u32 %v8078, 7
    %v8080 = vsub.s32 %v8077, %v8079
    %v8081 = vrot.slane %v8067, %v8080
    %v8082 = vcombine.low %v8026, %v8042
    %v8083 = vcombine.high %v8026, %v8042
    %v8085 = vunpack.c.l.s4 1934713408
    %v8086 = vunpack.c.0.s8 %v8085
    %v8087 = vlaneseq
    %v8088 = vshrl.u32 %v8087, 7
    %v8089 = vsub.s32 %v8086, %v8088
    %v8090 = vrot.slane %v8082, %v8089
    %v8092 = vunpack.c.l.s4 1934713408
    %v8093 = vunpack.c.0.s8 %v8092
    %v8094 = vlaneseq
    %v8095 = vshrl.u32 %v8094, 7
    %v8096 = vsub.s32 %v8093, %v8095
    %v8097 = vrot.slane %v8083, %v8096
    %v8098 = vcombine.low %v8033, %v8049
    %v8099 = vcombine.high %v8033, %v8049
    %v8101 = vunpack.c.l.s4 1934713408
    %v8102 = vunpack.c.0.s8 %v8101
    %v8103 = vlaneseq
    %v8104 = vshrl.u32 %v8103, 7
    %v8105 = vsub.s32 %v8102, %v8104
    %v8106 = vrot.slane %v8098, %v8105
    %v8108 = vunpack.c.l.s4 1934713408
    %v8109 = vunpack.c.0.s8 %v8108
    %v8110 = vlaneseq
    %v8111 = vshrl.u32 %v8110, 7
    %v8112 = vsub.s32 %v8109, %v8111
    %v8113 = vrot.slane %v8099, %v8112
    %v8114 = vcombine.low %v8058, %v8074
    %v8115 = vcombine.high %v8058, %v8074
    %v8117 = vunpack.c.l.s4 1934713408
    %v8118 = vunpack.c.0.s8 %v8117
    %v8119 = vlaneseq
    %v8120 = vshrl.u32 %v8119, 7
    %v8121 = vsub.s32 %v8118, %v8120
    %v8122 = vrot.slane %v8114, %v8121
    %v8124 = vunpack.c.l.s4 1934713408
    %v8125 = vunpack.c.0.s8 %v8124
    %v8126 = vlaneseq
    %v8127 = vshrl.u32 %v8126, 7
    %v8128 = vsub.s32 %v8125, %v8127
    %v8129 = vrot.slane %v8115, %v8128
    %v8130 = vcombine.low %v8065, %v8081
    %v8131 = vcombine.high %v8065, %v8081
    %v8133 = vunpack.c.l.s4 1934713408
    %v8134 = vunpack.c.0.s8 %v8133
    %v8135 = vlaneseq
    %v8136 = vshrl.u32 %v8135, 7
    %v8137 = vsub.s32 %v8134, %v8136
    %v8138 = vrot.slane %v8130, %v8137
    %v8140 = vunpack.c.l.s4 1934713408
    %v8141 = vunpack.c.0.s8 %v8140
    %v8142 = vlaneseq
    %v8143 = vshrl.u32 %v8142, 7
    %v8144 = vsub.s32 %v8141, %v8143
    %v8145 = vrot.slane %v8131, %v8144
    %v8146 = vcombine.low %v8090, %v8122
    %v8147 = vcombine.high %v8090, %v8122
    %v8148 = vcombine.low %v8097, %v8129
    %v8149 = vcombine.high %v8097, %v8129
    %v8150 = vcombine.low %v8106, %v8138
    %v8151 = vcombine.high %v8106, %v8138
    %v8152 = vcombine.low %v8113, %v8145
    %v8153 = vcombine.high %v8113, %v8145
    %v8154 = vcombine.low %v5803, %v5807
    %v8155 = vcombine.high %v5803, %v5807
    %v8157 = vunpack.c.l.s4 1983009808
    %v8158 = vunpack.c.0.s8 %v8157
    %v8159 = vlaneseq
    %v8160 = vshrl.u32 %v8159, 7
    %v8161 = vsub.s32 %v8158, %v8160
    %v8162 = vrot.slane %v8154, %v8161
    %v8164 = vunpack.c.l.s4 1983009808
    %v8165 = vunpack.c.0.s8 %v8164
    %v8166 = vlaneseq
    %v8167 = vshrl.u32 %v8166, 7
    %v8168 = vsub.s32 %v8165, %v8167
    %v8169 = vrot.slane %v8155, %v8168
    %v8170 = vcombine.low %v5805, %v5809
    %v8171 = vcombine.high %v5805, %v5809
    %v8173 = vunpack.c.l.s4 1983009808
    %v8174 = vunpack.c.0.s8 %v8173
    %v8175 = vlaneseq
    %v8176 = vshrl.u32 %v8175, 7
    %v8177 = vsub.s32 %v8174, %v8176
    %v8178 = vrot.slane %v8170, %v8177
    %v8180 = vunpack.c.l.s4 1983009808
    %v8181 = vunpack.c.0.s8 %v8180
    %v8182 = vlaneseq
    %v8183 = vshrl.u32 %v8182, 7
    %v8184 = vsub.s32 %v8181, %v8183
    %v8185 = vrot.slane %v8171, %v8184
    %v8186 = vcombine.low %v5811, %v5815
    %v8187 = vcombine.high %v5811, %v5815
    %v8189 = vunpack.c.l.s4 1983009808
    %v8190 = vunpack.c.0.s8 %v8189
    %v8191 = vlaneseq
    %v8192 = vshrl.u32 %v8191, 7
    %v8193 = vsub.s32 %v8190, %v8192
    %v8194 = vrot.slane %v8186, %v8193
    %v8196 = vunpack.c.l.s4 1983009808
    %v8197 = vunpack.c.0.s8 %v8196
    %v8198 = vlaneseq
    %v8199 = vshrl.u32 %v8198, 7
    %v8200 = vsub.s32 %v8197, %v8199
    %v8201 = vrot.slane %v8187, %v8200
    %v8202 = vcombine.low %v5813, %v5817
    %v8203 = vcombine.high %v5813, %v5817
    %v8205 = vunpack.c.l.s4 1983009808
    %v8206 = vunpack.c.0.s8 %v8205
    %v8207 = vlaneseq
    %v8208 = vshrl.u32 %v8207, 7
    %v8209 = vsub.s32 %v8206, %v8208
    %v8210 = vrot.slane %v8202, %v8209
    %v8212 = vunpack.c.l.s4 1983009808
    %v8213 = vunpack.c.0.s8 %v8212
    %v8214 = vlaneseq
    %v8215 = vshrl.u32 %v8214, 7
    %v8216 = vsub.s32 %v8213, %v8215
    %v8217 = vrot.slane %v8203, %v8216
    %v8218 = vcombine.low %v8162, %v8178
    %v8219 = vcombine.high %v8162, %v8178
    %v8221 = vunpack.c.l.s4 1934713408
    %v8222 = vunpack.c.0.s8 %v8221
    %v8223 = vlaneseq
    %v8224 = vshrl.u32 %v8223, 7
    %v8225 = vsub.s32 %v8222, %v8224
    %v8226 = vrot.slane %v8218, %v8225
    %v8228 = vunpack.c.l.s4 1934713408
    %v8229 = vunpack.c.0.s8 %v8228
    %v8230 = vlaneseq
    %v8231 = vshrl.u32 %v8230, 7
    %v8232 = vsub.s32 %v8229, %v8231
    %v8233 = vrot.slane %v8219, %v8232
    %v8234 = vcombine.low %v8169, %v8185
    %v8235 = vcombine.high %v8169, %v8185
    %v8237 = vunpack.c.l.s4 1934713408
    %v8238 = vunpack.c.0.s8 %v8237
    %v8239 = vlaneseq
    %v8240 = vshrl.u32 %v8239, 7
    %v8241 = vsub.s32 %v8238, %v8240
    %v8242 = vrot.slane %v8234, %v8241
    %v8244 = vunpack.c.l.s4 1934713408
    %v8245 = vunpack.c.0.s8 %v8244
    %v8246 = vlaneseq
    %v8247 = vshrl.u32 %v8246, 7
    %v8248 = vsub.s32 %v8245, %v8247
    %v8249 = vrot.slane %v8235, %v8248
    %v8250 = vcombine.low %v8194, %v8210
    %v8251 = vcombine.high %v8194, %v8210
    %v8253 = vunpack.c.l.s4 1934713408
    %v8254 = vunpack.c.0.s8 %v8253
    %v8255 = vlaneseq
    %v8256 = vshrl.u32 %v8255, 7
    %v8257 = vsub.s32 %v8254, %v8256
    %v8258 = vrot.slane %v8250, %v8257
    %v8260 = vunpack.c.l.s4 1934713408
    %v8261 = vunpack.c.0.s8 %v8260
    %v8262 = vlaneseq
    %v8263 = vshrl.u32 %v8262, 7
    %v8264 = vsub.s32 %v8261, %v8263
    %v8265 = vrot.slane %v8251, %v8264
    %v8266 = vcombine.low %v8201, %v8217
    %v8267 = vcombine.high %v8201, %v8217
    %v8269 = vunpack.c.l.s4 1934713408
    %v8270 = vunpack.c.0.s8 %v8269
    %v8271 = vlaneseq
    %v8272 = vshrl.u32 %v8271, 7
    %v8273 = vsub.s32 %v8270, %v8272
    %v8274 = vrot.slane %v8266, %v8273
    %v8276 = vunpack.c.l.s4 1934713408
    %v8277 = vunpack.c.0.s8 %v8276
    %v8278 = vlaneseq
    %v8279 = vshrl.u32 %v8278, 7
    %v8280 = vsub.s32 %v8277, %v8279
    %v8281 = vrot.slane %v8267, %v8280
    %v8282 = vcombine.low %v8226, %v8258
    %v8283 = vcombine.high %v8226, %v8258
    %v8284 = vcombine.low %v8233, %v8265
    %v8285 = vcombine.high %v8233, %v8265
    %v8286 = vcombine.low %v8242, %v8274
    %v8287 = vcombine.high %v8242, %v8274
    %v8288 = vcombine.low %v8249, %v8281
    %v8289 = vcombine.high %v8249, %v8281
    %v8290 = vcombine.low %v5819, %v5823
    %v8291 = vcombine.high %v5819, %v5823
    %v8293 = vunpack.c.l.s4 1983009808
    %v8294 = vunpack.c.0.s8 %v8293
    %v8295 = vlaneseq
    %v8296 = vshrl.u32 %v8295, 7
    %v8297 = vsub.s32 %v8294, %v8296
    %v8298 = vrot.slane %v8290, %v8297
    %v8300 = vunpack.c.l.s4 1983009808
    %v8301 = vunpack.c.0.s8 %v8300
    %v8302 = vlaneseq
    %v8303 = vshrl.u32 %v8302, 7
    %v8304 = vsub.s32 %v8301, %v8303
    %v8305 = vrot.slane %v8291, %v8304
    %v8306 = vcombine.low %v5821, %v5825
    %v8307 = vcombine.high %v5821, %v5825
    %v8309 = vunpack.c.l.s4 1983009808
    %v8310 = vunpack.c.0.s8 %v8309
    %v8311 = vlaneseq
    %v8312 = vshrl.u32 %v8311, 7
    %v8313 = vsub.s32 %v8310, %v8312
    %v8314 = vrot.slane %v8306, %v8313
    %v8316 = vunpack.c.l.s4 1983009808
    %v8317 = vunpack.c.0.s8 %v8316
    %v8318 = vlaneseq
    %v8319 = vshrl.u32 %v8318, 7
    %v8320 = vsub.s32 %v8317, %v8319
    %v8321 = vrot.slane %v8307, %v8320
    %v8322 = vcombine.low %v5827, %v5831
    %v8323 = vcombine.high %v5827, %v5831
    %v8325 = vunpack.c.l.s4 1983009808
    %v8326 = vunpack.c.0.s8 %v8325
    %v8327 = vlaneseq
    %v8328 = vshrl.u32 %v8327, 7
    %v8329 = vsub.s32 %v8326, %v8328
    %v8330 = vrot.slane %v8322, %v8329
    %v8332 = vunpack.c.l.s4 1983009808
    %v8333 = vunpack.c.0.s8 %v8332
    %v8334 = vlaneseq
    %v8335 = vshrl.u32 %v8334, 7
    %v8336 = vsub.s32 %v8333, %v8335
    %v8337 = vrot.slane %v8323, %v8336
    %v8338 = vcombine.low %v5829, %v5833
    %v8339 = vcombine.high %v5829, %v5833
    %v8341 = vunpack.c.l.s4 1983009808
    %v8342 = vunpack.c.0.s8 %v8341
    %v8343 = vlaneseq
    %v8344 = vshrl.u32 %v8343, 7
    %v8345 = vsub.s32 %v8342, %v8344
    %v8346 = vrot.slane %v8338, %v8345
    %v8348 = vunpack.c.l.s4 1983009808
    %v8349 = vunpack.c.0.s8 %v8348
    %v8350 = vlaneseq
    %v8351 = vshrl.u32 %v8350, 7
    %v8352 = vsub.s32 %v8349, %v8351
    %v8353 = vrot.slane %v8339, %v8352
    %v8354 = vcombine.low %v8298, %v8314
    %v8355 = vcombine.high %v8298, %v8314
    %v8357 = vunpack.c.l.s4 1934713408
    %v8358 = vunpack.c.0.s8 %v8357
    %v8359 = vlaneseq
    %v8360 = vshrl.u32 %v8359, 7
    %v8361 = vsub.s32 %v8358, %v8360
    %v8362 = vrot.slane %v8354, %v8361
    %v8364 = vunpack.c.l.s4 1934713408
    %v8365 = vunpack.c.0.s8 %v8364
    %v8366 = vlaneseq
    %v8367 = vshrl.u32 %v8366, 7
    %v8368 = vsub.s32 %v8365, %v8367
    %v8369 = vrot.slane %v8355, %v8368
    %v8370 = vcombine.low %v8305, %v8321
    %v8371 = vcombine.high %v8305, %v8321
    %v8373 = vunpack.c.l.s4 1934713408
    %v8374 = vunpack.c.0.s8 %v8373
    %v8375 = vlaneseq
    %v8376 = vshrl.u32 %v8375, 7
    %v8377 = vsub.s32 %v8374, %v8376
    %v8378 = vrot.slane %v8370, %v8377
    %v8380 = vunpack.c.l.s4 1934713408
    %v8381 = vunpack.c.0.s8 %v8380
    %v8382 = vlaneseq
    %v8383 = vshrl.u32 %v8382, 7
    %v8384 = vsub.s32 %v8381, %v8383
    %v8385 = vrot.slane %v8371, %v8384
    %v8386 = vcombine.low %v8330, %v8346
    %v8387 = vcombine.high %v8330, %v8346
    %v8389 = vunpack.c.l.s4 1934713408
    %v8390 = vunpack.c.0.s8 %v8389
    %v8391 = vlaneseq
    %v8392 = vshrl.u32 %v8391, 7
    %v8393 = vsub.s32 %v8390, %v8392
    %v8394 = vrot.slane %v8386, %v8393
    %v8396 = vunpack.c.l.s4 1934713408
    %v8397 = vunpack.c.0.s8 %v8396
    %v8398 = vlaneseq
    %v8399 = vshrl.u32 %v8398, 7
    %v8400 = vsub.s32 %v8397, %v8399
    %v8401 = vrot.slane %v8387, %v8400
    %v8402 = vcombine.low %v8337, %v8353
    %v8403 = vcombine.high %v8337, %v8353
    %v8405 = vunpack.c.l.s4 1934713408
    %v8406 = vunpack.c.0.s8 %v8405
    %v8407 = vlaneseq
    %v8408 = vshrl.u32 %v8407, 7
    %v8409 = vsub.s32 %v8406, %v8408
    %v8410 = vrot.slane %v8402, %v8409
    %v8412 = vunpack.c.l.s4 1934713408
    %v8413 = vunpack.c.0.s8 %v8412
    %v8414 = vlaneseq
    %v8415 = vshrl.u32 %v8414, 7
    %v8416 = vsub.s32 %v8413, %v8415
    %v8417 = vrot.slane %v8403, %v8416
    %v8418 = vcombine.low %v8362, %v8394
    %v8419 = vcombine.high %v8362, %v8394
    %v8420 = vcombine.low %v8369, %v8401
    %v8421 = vcombine.high %v8369, %v8401
    %v8422 = vcombine.low %v8378, %v8410
    %v8423 = vcombine.high %v8378, %v8410
    %v8424 = vcombine.low %v8385, %v8417
    %v8425 = vcombine.high %v8385, %v8417
    %v8426 = vcombine.low %v5834, %v5838
    %v8427 = vcombine.high %v5834, %v5838
    %v8429 = vunpack.c.l.s4 1983009808
    %v8430 = vunpack.c.0.s8 %v8429
    %v8431 = vlaneseq
    %v8432 = vshrl.u32 %v8431, 7
    %v8433 = vsub.s32 %v8430, %v8432
    %v8434 = vrot.slane %v8426, %v8433
    %v8436 = vunpack.c.l.s4 1983009808
    %v8437 = vunpack.c.0.s8 %v8436
    %v8438 = vlaneseq
    %v8439 = vshrl.u32 %v8438, 7
    %v8440 = vsub.s32 %v8437, %v8439
    %v8441 = vrot.slane %v8427, %v8440
    %v8442 = vcombine.low %v5836, %v5840
    %v8443 = vcombine.high %v5836, %v5840
    %v8445 = vunpack.c.l.s4 1983009808
    %v8446 = vunpack.c.0.s8 %v8445
    %v8447 = vlaneseq
    %v8448 = vshrl.u32 %v8447, 7
    %v8449 = vsub.s32 %v8446, %v8448
    %v8450 = vrot.slane %v8442, %v8449
    %v8452 = vunpack.c.l.s4 1983009808
    %v8453 = vunpack.c.0.s8 %v8452
    %v8454 = vlaneseq
    %v8455 = vshrl.u32 %v8454, 7
    %v8456 = vsub.s32 %v8453, %v8455
    %v8457 = vrot.slane %v8443, %v8456
    %v8458 = vcombine.low %v5842, %v5846
    %v8459 = vcombine.high %v5842, %v5846
    %v8461 = vunpack.c.l.s4 1983009808
    %v8462 = vunpack.c.0.s8 %v8461
    %v8463 = vlaneseq
    %v8464 = vshrl.u32 %v8463, 7
    %v8465 = vsub.s32 %v8462, %v8464
    %v8466 = vrot.slane %v8458, %v8465
    %v8468 = vunpack.c.l.s4 1983009808
    %v8469 = vunpack.c.0.s8 %v8468
    %v8470 = vlaneseq
    %v8471 = vshrl.u32 %v8470, 7
    %v8472 = vsub.s32 %v8469, %v8471
    %v8473 = vrot.slane %v8459, %v8472
    %v8474 = vcombine.low %v5844, %v5848
    %v8475 = vcombine.high %v5844, %v5848
    %v8477 = vunpack.c.l.s4 1983009808
    %v8478 = vunpack.c.0.s8 %v8477
    %v8479 = vlaneseq
    %v8480 = vshrl.u32 %v8479, 7
    %v8481 = vsub.s32 %v8478, %v8480
    %v8482 = vrot.slane %v8474, %v8481
    %v8484 = vunpack.c.l.s4 1983009808
    %v8485 = vunpack.c.0.s8 %v8484
    %v8486 = vlaneseq
    %v8487 = vshrl.u32 %v8486, 7
    %v8488 = vsub.s32 %v8485, %v8487
    %v8489 = vrot.slane %v8475, %v8488
    %v8490 = vcombine.low %v8434, %v8450
    %v8491 = vcombine.high %v8434, %v8450
    %v8493 = vunpack.c.l.s4 1934713408
    %v8494 = vunpack.c.0.s8 %v8493
    %v8495 = vlaneseq
    %v8496 = vshrl.u32 %v8495, 7
    %v8497 = vsub.s32 %v8494, %v8496
    %v8498 = vrot.slane %v8490, %v8497
    %v8500 = vunpack.c.l.s4 1934713408
    %v8501 = vunpack.c.0.s8 %v8500
    %v8502 = vlaneseq
    %v8503 = vshrl.u32 %v8502, 7
    %v8504 = vsub.s32 %v8501, %v8503
    %v8505 = vrot.slane %v8491, %v8504
    %v8506 = vcombine.low %v8441, %v8457
    %v8507 = vcombine.high %v8441, %v8457
    %v8509 = vunpack.c.l.s4 1934713408
    %v8510 = vunpack.c.0.s8 %v8509
    %v8511 = vlaneseq
    %v8512 = vshrl.u32 %v8511, 7
    %v8513 = vsub.s32 %v8510, %v8512
    %v8514 = vrot.slane %v8506, %v8513
    %v8516 = vunpack.c.l.s4 1934713408
    %v8517 = vunpack.c.0.s8 %v8516
    %v8518 = vlaneseq
    %v8519 = vshrl.u32 %v8518, 7
    %v8520 = vsub.s32 %v8517, %v8519
    %v8521 = vrot.slane %v8507, %v8520
    %v8522 = vcombine.low %v8466, %v8482
    %v8523 = vcombine.high %v8466, %v8482
    %v8525 = vunpack.c.l.s4 1934713408
    %v8526 = vunpack.c.0.s8 %v8525
    %v8527 = vlaneseq
    %v8528 = vshrl.u32 %v8527, 7
    %v8529 = vsub.s32 %v8526, %v8528
    %v8530 = vrot.slane %v8522, %v8529
    %v8532 = vunpack.c.l.s4 1934713408
    %v8533 = vunpack.c.0.s8 %v8532
    %v8534 = vlaneseq
    %v8535 = vshrl.u32 %v8534, 7
    %v8536 = vsub.s32 %v8533, %v8535
    %v8537 = vrot.slane %v8523, %v8536
    %v8538 = vcombine.low %v8473, %v8489
    %v8539 = vcombine.high %v8473, %v8489
    %v8541 = vunpack.c.l.s4 1934713408
    %v8542 = vunpack.c.0.s8 %v8541
    %v8543 = vlaneseq
    %v8544 = vshrl.u32 %v8543, 7
    %v8545 = vsub.s32 %v8542, %v8544
    %v8546 = vrot.slane %v8538, %v8545
    %v8548 = vunpack.c.l.s4 1934713408
    %v8549 = vunpack.c.0.s8 %v8548
    %v8550 = vlaneseq
    %v8551 = vshrl.u32 %v8550, 7
    %v8552 = vsub.s32 %v8549, %v8551
    %v8553 = vrot.slane %v8539, %v8552
    %v8554 = vcombine.low %v8498, %v8530
    %v8555 = vcombine.high %v8498, %v8530
    %v8556 = vcombine.low %v8505, %v8537
    %v8557 = vcombine.high %v8505, %v8537
    %v8558 = vcombine.low %v8514, %v8546
    %v8559 = vcombine.high %v8514, %v8546
    %v8560 = vcombine.low %v8521, %v8553
    %v8561 = vcombine.high %v8521, %v8553
    %v8562 = vcombine.low %v5850, %v5854
    %v8563 = vcombine.high %v5850, %v5854
    %v8565 = vunpack.c.l.s4 1983009808
    %v8566 = vunpack.c.0.s8 %v8565
    %v8567 = vlaneseq
    %v8568 = vshrl.u32 %v8567, 7
    %v8569 = vsub.s32 %v8566, %v8568
    %v8570 = vrot.slane %v8562, %v8569
    %v8572 = vunpack.c.l.s4 1983009808
    %v8573 = vunpack.c.0.s8 %v8572
    %v8574 = vlaneseq
    %v8575 = vshrl.u32 %v8574, 7
    %v8576 = vsub.s32 %v8573, %v8575
    %v8577 = vrot.slane %v8563, %v8576
    %v8578 = vcombine.low %v5852, %v5856
    %v8579 = vcombine.high %v5852, %v5856
    %v8581 = vunpack.c.l.s4 1983009808
    %v8582 = vunpack.c.0.s8 %v8581
    %v8583 = vlaneseq
    %v8584 = vshrl.u32 %v8583, 7
    %v8585 = vsub.s32 %v8582, %v8584
    %v8586 = vrot.slane %v8578, %v8585
    %v8588 = vunpack.c.l.s4 1983009808
    %v8589 = vunpack.c.0.s8 %v8588
    %v8590 = vlaneseq
    %v8591 = vshrl.u32 %v8590, 7
    %v8592 = vsub.s32 %v8589, %v8591
    %v8593 = vrot.slane %v8579, %v8592
    %v8594 = vcombine.low %v5858, %v5862
    %v8595 = vcombine.high %v5858, %v5862
    %v8597 = vunpack.c.l.s4 1983009808
    %v8598 = vunpack.c.0.s8 %v8597
    %v8599 = vlaneseq
    %v8600 = vshrl.u32 %v8599, 7
    %v8601 = vsub.s32 %v8598, %v8600
    %v8602 = vrot.slane %v8594, %v8601
    %v8604 = vunpack.c.l.s4 1983009808
    %v8605 = vunpack.c.0.s8 %v8604
    %v8606 = vlaneseq
    %v8607 = vshrl.u32 %v8606, 7
    %v8608 = vsub.s32 %v8605, %v8607
    %v8609 = vrot.slane %v8595, %v8608
    %v8610 = vcombine.low %v5860, %v5864
    %v8611 = vcombine.high %v5860, %v5864
    %v8613 = vunpack.c.l.s4 1983009808
    %v8614 = vunpack.c.0.s8 %v8613
    %v8615 = vlaneseq
    %v8616 = vshrl.u32 %v8615, 7
    %v8617 = vsub.s32 %v8614, %v8616
    %v8618 = vrot.slane %v8610, %v8617
    %v8620 = vunpack.c.l.s4 1983009808
    %v8621 = vunpack.c.0.s8 %v8620
    %v8622 = vlaneseq
    %v8623 = vshrl.u32 %v8622, 7
    %v8624 = vsub.s32 %v8621, %v8623
    %v8625 = vrot.slane %v8611, %v8624
    %v8626 = vcombine.low %v8570, %v8586
    %v8627 = vcombine.high %v8570, %v8586
    %v8629 = vunpack.c.l.s4 1934713408
    %v8630 = vunpack.c.0.s8 %v8629
    %v8631 = vlaneseq
    %v8632 = vshrl.u32 %v8631, 7
    %v8633 = vsub.s32 %v8630, %v8632
    %v8634 = vrot.slane %v8626, %v8633
    %v8636 = vunpack.c.l.s4 1934713408
    %v8637 = vunpack.c.0.s8 %v8636
    %v8638 = vlaneseq
    %v8639 = vshrl.u32 %v8638, 7
    %v8640 = vsub.s32 %v8637, %v8639
    %v8641 = vrot.slane %v8627, %v8640
    %v8642 = vcombine.low %v8577, %v8593
    %v8643 = vcombine.high %v8577, %v8593
    %v8645 = vunpack.c.l.s4 1934713408
    %v8646 = vunpack.c.0.s8 %v8645
    %v8647 = vlaneseq
    %v8648 = vshrl.u32 %v8647, 7
    %v8649 = vsub.s32 %v8646, %v8648
    %v8650 = vrot.slane %v8642, %v8649
    %v8652 = vunpack.c.l.s4 1934713408
    %v8653 = vunpack.c.0.s8 %v8652
    %v8654 = vlaneseq
    %v8655 = vshrl.u32 %v8654, 7
    %v8656 = vsub.s32 %v8653, %v8655
    %v8657 = vrot.slane %v8643, %v8656
    %v8658 = vcombine.low %v8602, %v8618
    %v8659 = vcombine.high %v8602, %v8618
    %v8661 = vunpack.c.l.s4 1934713408
    %v8662 = vunpack.c.0.s8 %v8661
    %v8663 = vlaneseq
    %v8664 = vshrl.u32 %v8663, 7
    %v8665 = vsub.s32 %v8662, %v8664
    %v8666 = vrot.slane %v8658, %v8665
    %v8668 = vunpack.c.l.s4 1934713408
    %v8669 = vunpack.c.0.s8 %v8668
    %v8670 = vlaneseq
    %v8671 = vshrl.u32 %v8670, 7
    %v8672 = vsub.s32 %v8669, %v8671
    %v8673 = vrot.slane %v8659, %v8672
    %v8674 = vcombine.low %v8609, %v8625
    %v8675 = vcombine.high %v8609, %v8625
    %v8677 = vunpack.c.l.s4 1934713408
    %v8678 = vunpack.c.0.s8 %v8677
    %v8679 = vlaneseq
    %v8680 = vshrl.u32 %v8679, 7
    %v8681 = vsub.s32 %v8678, %v8680
    %v8682 = vrot.slane %v8674, %v8681
    %v8684 = vunpack.c.l.s4 1934713408
    %v8685 = vunpack.c.0.s8 %v8684
    %v8686 = vlaneseq
    %v8687 = vshrl.u32 %v8686, 7
    %v8688 = vsub.s32 %v8685, %v8687
    %v8689 = vrot.slane %v8675, %v8688
    %v8690 = vcombine.low %v8634, %v8666
    %v8691 = vcombine.high %v8634, %v8666
    %v8692 = vcombine.low %v8641, %v8673
    %v8693 = vcombine.high %v8641, %v8673
    %v8694 = vcombine.low %v8650, %v8682
    %v8695 = vcombine.high %v8650, %v8682
    %v8696 = vcombine.low %v8657, %v8689
    %v8697 = vcombine.high %v8657, %v8689
    %v8698 = vcombine.low %v5866, %v5870
    %v8699 = vcombine.high %v5866, %v5870
    %v8701 = vunpack.c.l.s4 1983009808
    %v8702 = vunpack.c.0.s8 %v8701
    %v8703 = vlaneseq
    %v8704 = vshrl.u32 %v8703, 7
    %v8705 = vsub.s32 %v8702, %v8704
    %v8706 = vrot.slane %v8698, %v8705
    %v8708 = vunpack.c.l.s4 1983009808
    %v8709 = vunpack.c.0.s8 %v8708
    %v8710 = vlaneseq
    %v8711 = vshrl.u32 %v8710, 7
    %v8712 = vsub.s32 %v8709, %v8711
    %v8713 = vrot.slane %v8699, %v8712
    %v8714 = vcombine.low %v5868, %v5872
    %v8715 = vcombine.high %v5868, %v5872
    %v8717 = vunpack.c.l.s4 1983009808
    %v8718 = vunpack.c.0.s8 %v8717
    %v8719 = vlaneseq
    %v8720 = vshrl.u32 %v8719, 7
    %v8721 = vsub.s32 %v8718, %v8720
    %v8722 = vrot.slane %v8714, %v8721
    %v8724 = vunpack.c.l.s4 1983009808
    %v8725 = vunpack.c.0.s8 %v8724
    %v8726 = vlaneseq
    %v8727 = vshrl.u32 %v8726, 7
    %v8728 = vsub.s32 %v8725, %v8727
    %v8729 = vrot.slane %v8715, %v8728
    %v8730 = vcombine.low %v5874, %v5878
    %v8731 = vcombine.high %v5874, %v5878
    %v8733 = vunpack.c.l.s4 1983009808
    %v8734 = vunpack.c.0.s8 %v8733
    %v8735 = vlaneseq
    %v8736 = vshrl.u32 %v8735, 7
    %v8737 = vsub.s32 %v8734, %v8736
    %v8738 = vrot.slane %v8730, %v8737
    %v8740 = vunpack.c.l.s4 1983009808
    %v8741 = vunpack.c.0.s8 %v8740
    %v8742 = vlaneseq
    %v8743 = vshrl.u32 %v8742, 7
    %v8744 = vsub.s32 %v8741, %v8743
    %v8745 = vrot.slane %v8731, %v8744
    %v8746 = vcombine.low %v5876, %v5880
    %v8747 = vcombine.high %v5876, %v5880
    %v8749 = vunpack.c.l.s4 1983009808
    %v8750 = vunpack.c.0.s8 %v8749
    %v8751 = vlaneseq
    %v8752 = vshrl.u32 %v8751, 7
    %v8753 = vsub.s32 %v8750, %v8752
    %v8754 = vrot.slane %v8746, %v8753
    %v8756 = vunpack.c.l.s4 1983009808
    %v8757 = vunpack.c.0.s8 %v8756
    %v8758 = vlaneseq
    %v8759 = vshrl.u32 %v8758, 7
    %v8760 = vsub.s32 %v8757, %v8759
    %v8761 = vrot.slane %v8747, %v8760
    %v8762 = vcombine.low %v8706, %v8722
    %v8763 = vcombine.high %v8706, %v8722
    %v8765 = vunpack.c.l.s4 1934713408
    %v8766 = vunpack.c.0.s8 %v8765
    %v8767 = vlaneseq
    %v8768 = vshrl.u32 %v8767, 7
    %v8769 = vsub.s32 %v8766, %v8768
    %v8770 = vrot.slane %v8762, %v8769
    %v8772 = vunpack.c.l.s4 1934713408
    %v8773 = vunpack.c.0.s8 %v8772
    %v8774 = vlaneseq
    %v8775 = vshrl.u32 %v8774, 7
    %v8776 = vsub.s32 %v8773, %v8775
    %v8777 = vrot.slane %v8763, %v8776
    %v8778 = vcombine.low %v8713, %v8729
    %v8779 = vcombine.high %v8713, %v8729
    %v8781 = vunpack.c.l.s4 1934713408
    %v8782 = vunpack.c.0.s8 %v8781
    %v8783 = vlaneseq
    %v8784 = vshrl.u32 %v8783, 7
    %v8785 = vsub.s32 %v8782, %v8784
    %v8786 = vrot.slane %v8778, %v8785
    %v8788 = vunpack.c.l.s4 1934713408
    %v8789 = vunpack.c.0.s8 %v8788
    %v8790 = vlaneseq
    %v8791 = vshrl.u32 %v8790, 7
    %v8792 = vsub.s32 %v8789, %v8791
    %v8793 = vrot.slane %v8779, %v8792
    %v8794 = vcombine.low %v8738, %v8754
    %v8795 = vcombine.high %v8738, %v8754
    %v8797 = vunpack.c.l.s4 1934713408
    %v8798 = vunpack.c.0.s8 %v8797
    %v8799 = vlaneseq
    %v8800 = vshrl.u32 %v8799, 7
    %v8801 = vsub.s32 %v8798, %v8800
    %v8802 = vrot.slane %v8794, %v8801
    %v8804 = vunpack.c.l.s4 1934713408
    %v8805 = vunpack.c.0.s8 %v8804
    %v8806 = vlaneseq
    %v8807 = vshrl.u32 %v8806, 7
    %v8808 = vsub.s32 %v8805, %v8807
    %v8809 = vrot.slane %v8795, %v8808
    %v8810 = vcombine.low %v8745, %v8761
    %v8811 = vcombine.high %v8745, %v8761
    %v8813 = vunpack.c.l.s4 1934713408
    %v8814 = vunpack.c.0.s8 %v8813
    %v8815 = vlaneseq
    %v8816 = vshrl.u32 %v8815, 7
    %v8817 = vsub.s32 %v8814, %v8816
    %v8818 = vrot.slane %v8810, %v8817
    %v8820 = vunpack.c.l.s4 1934713408
    %v8821 = vunpack.c.0.s8 %v8820
    %v8822 = vlaneseq
    %v8823 = vshrl.u32 %v8822, 7
    %v8824 = vsub.s32 %v8821, %v8823
    %v8825 = vrot.slane %v8811, %v8824
    %v8826 = vcombine.low %v8770, %v8802
    %v8827 = vcombine.high %v8770, %v8802
    %v8828 = vcombine.low %v8777, %v8809
    %v8829 = vcombine.high %v8777, %v8809
    %v8830 = vcombine.low %v8786, %v8818
    %v8831 = vcombine.high %v8786, %v8818
    %v8832 = vcombine.low %v8793, %v8825
    %v8833 = vcombine.high %v8793, %v8825
    %v8834 = vcombine.low %v5882, %v5886
    %v8835 = vcombine.high %v5882, %v5886
    %v8837 = vunpack.c.l.s4 1983009808
    %v8838 = vunpack.c.0.s8 %v8837
    %v8839 = vlaneseq
    %v8840 = vshrl.u32 %v8839, 7
    %v8841 = vsub.s32 %v8838, %v8840
    %v8842 = vrot.slane %v8834, %v8841
    %v8844 = vunpack.c.l.s4 1983009808
    %v8845 = vunpack.c.0.s8 %v8844
    %v8846 = vlaneseq
    %v8847 = vshrl.u32 %v8846, 7
    %v8848 = vsub.s32 %v8845, %v8847
    %v8849 = vrot.slane %v8835, %v8848
    %v8850 = vcombine.low %v5884, %v5888
    %v8851 = vcombine.high %v5884, %v5888
    %v8853 = vunpack.c.l.s4 1983009808
    %v8854 = vunpack.c.0.s8 %v8853
    %v8855 = vlaneseq
    %v8856 = vshrl.u32 %v8855, 7
    %v8857 = vsub.s32 %v8854, %v8856
    %v8858 = vrot.slane %v8850, %v8857
    %v8860 = vunpack.c.l.s4 1983009808
    %v8861 = vunpack.c.0.s8 %v8860
    %v8862 = vlaneseq
    %v8863 = vshrl.u32 %v8862, 7
    %v8864 = vsub.s32 %v8861, %v8863
    %v8865 = vrot.slane %v8851, %v8864
    %v8866 = vcombine.low %v5890, %v5894
    %v8867 = vcombine.high %v5890, %v5894
    %v8869 = vunpack.c.l.s4 1983009808
    %v8870 = vunpack.c.0.s8 %v8869
    %v8871 = vlaneseq
    %v8872 = vshrl.u32 %v8871, 7
    %v8873 = vsub.s32 %v8870, %v8872
    %v8874 = vrot.slane %v8866, %v8873
    %v8876 = vunpack.c.l.s4 1983009808
    %v8877 = vunpack.c.0.s8 %v8876
    %v8878 = vlaneseq
    %v8879 = vshrl.u32 %v8878, 7
    %v8880 = vsub.s32 %v8877, %v8879
    %v8881 = vrot.slane %v8867, %v8880
    %v8882 = vcombine.low %v5892, %v5896
    %v8883 = vcombine.high %v5892, %v5896
    %v8885 = vunpack.c.l.s4 1983009808
    %v8886 = vunpack.c.0.s8 %v8885
    %v8887 = vlaneseq
    %v8888 = vshrl.u32 %v8887, 7
    %v8889 = vsub.s32 %v8886, %v8888
    %v8890 = vrot.slane %v8882, %v8889
    %v8892 = vunpack.c.l.s4 1983009808
    %v8893 = vunpack.c.0.s8 %v8892
    %v8894 = vlaneseq
    %v8895 = vshrl.u32 %v8894, 7
    %v8896 = vsub.s32 %v8893, %v8895
    %v8897 = vrot.slane %v8883, %v8896
    %v8898 = vcombine.low %v8842, %v8858
    %v8899 = vcombine.high %v8842, %v8858
    %v8901 = vunpack.c.l.s4 1934713408
    %v8902 = vunpack.c.0.s8 %v8901
    %v8903 = vlaneseq
    %v8904 = vshrl.u32 %v8903, 7
    %v8905 = vsub.s32 %v8902, %v8904
    %v8906 = vrot.slane %v8898, %v8905
    %v8908 = vunpack.c.l.s4 1934713408
    %v8909 = vunpack.c.0.s8 %v8908
    %v8910 = vlaneseq
    %v8911 = vshrl.u32 %v8910, 7
    %v8912 = vsub.s32 %v8909, %v8911
    %v8913 = vrot.slane %v8899, %v8912
    %v8914 = vcombine.low %v8849, %v8865
    %v8915 = vcombine.high %v8849, %v8865
    %v8917 = vunpack.c.l.s4 1934713408
    %v8918 = vunpack.c.0.s8 %v8917
    %v8919 = vlaneseq
    %v8920 = vshrl.u32 %v8919, 7
    %v8921 = vsub.s32 %v8918, %v8920
    %v8922 = vrot.slane %v8914, %v8921
    %v8924 = vunpack.c.l.s4 1934713408
    %v8925 = vunpack.c.0.s8 %v8924
    %v8926 = vlaneseq
    %v8927 = vshrl.u32 %v8926, 7
    %v8928 = vsub.s32 %v8925, %v8927
    %v8929 = vrot.slane %v8915, %v8928
    %v8930 = vcombine.low %v8874, %v8890
    %v8931 = vcombine.high %v8874, %v8890
    %v8933 = vunpack.c.l.s4 1934713408
    %v8934 = vunpack.c.0.s8 %v8933
    %v8935 = vlaneseq
    %v8936 = vshrl.u32 %v8935, 7
    %v8937 = vsub.s32 %v8934, %v8936
    %v8938 = vrot.slane %v8930, %v8937
    %v8940 = vunpack.c.l.s4 1934713408
    %v8941 = vunpack.c.0.s8 %v8940
    %v8942 = vlaneseq
    %v8943 = vshrl.u32 %v8942, 7
    %v8944 = vsub.s32 %v8941, %v8943
    %v8945 = vrot.slane %v8931, %v8944
    %v8946 = vcombine.low %v8881, %v8897
    %v8947 = vcombine.high %v8881, %v8897
    %v8949 = vunpack.c.l.s4 1934713408
    %v8950 = vunpack.c.0.s8 %v8949
    %v8951 = vlaneseq
    %v8952 = vshrl.u32 %v8951, 7
    %v8953 = vsub.s32 %v8950, %v8952
    %v8954 = vrot.slane %v8946, %v8953
    %v8956 = vunpack.c.l.s4 1934713408
    %v8957 = vunpack.c.0.s8 %v8956
    %v8958 = vlaneseq
    %v8959 = vshrl.u32 %v8958, 7
    %v8960 = vsub.s32 %v8957, %v8959
    %v8961 = vrot.slane %v8947, %v8960
    %v8962 = vcombine.low %v8906, %v8938
    %v8963 = vcombine.high %v8906, %v8938
    %v8964 = vcombine.low %v8913, %v8945
    %v8965 = vcombine.high %v8913, %v8945
    %v8966 = vcombine.low %v8922, %v8954
    %v8967 = vcombine.high %v8922, %v8954
    %v8968 = vcombine.low %v8929, %v8961
    %v8969 = vcombine.high %v8929, %v8961
    %v8970 = vcombine.low %v5898, %v5902
    %v8971 = vcombine.high %v5898, %v5902
    %v8973 = vunpack.c.l.s4 1983009808
    %v8974 = vunpack.c.0.s8 %v8973
    %v8975 = vlaneseq
    %v8976 = vshrl.u32 %v8975, 7
    %v8977 = vsub.s32 %v8974, %v8976
    %v8978 = vrot.slane %v8970, %v8977
    %v8980 = vunpack.c.l.s4 1983009808
    %v8981 = vunpack.c.0.s8 %v8980
    %v8982 = vlaneseq
    %v8983 = vshrl.u32 %v8982, 7
    %v8984 = vsub.s32 %v8981, %v8983
    %v8985 = vrot.slane %v8971, %v8984
    %v8986 = vcombine.low %v5900, %v5904
    %v8987 = vcombine.high %v5900, %v5904
    %v8989 = vunpack.c.l.s4 1983009808
    %v8990 = vunpack.c.0.s8 %v8989
    %v8991 = vlaneseq
    %v8992 = vshrl.u32 %v8991, 7
    %v8993 = vsub.s32 %v8990, %v8992
    %v8994 = vrot.slane %v8986, %v8993
    %v8996 = vunpack.c.l.s4 1983009808
    %v8997 = vunpack.c.0.s8 %v8996
    %v8998 = vlaneseq
    %v8999 = vshrl.u32 %v8998, 7
    %v9000 = vsub.s32 %v8997, %v8999
    %v9001 = vrot.slane %v8987, %v9000
    %v9002 = vcombine.low %v5906, %v5910
    %v9003 = vcombine.high %v5906, %v5910
    %v9005 = vunpack.c.l.s4 1983009808
    %v9006 = vunpack.c.0.s8 %v9005
    %v9007 = vlaneseq
    %v9008 = vshrl.u32 %v9007, 7
    %v9009 = vsub.s32 %v9006, %v9008
    %v9010 = vrot.slane %v9002, %v9009
    %v9012 = vunpack.c.l.s4 1983009808
    %v9013 = vunpack.c.0.s8 %v9012
    %v9014 = vlaneseq
    %v9015 = vshrl.u32 %v9014, 7
    %v9016 = vsub.s32 %v9013, %v9015
    %v9017 = vrot.slane %v9003, %v9016
    %v9018 = vcombine.low %v5908, %v5912
    %v9019 = vcombine.high %v5908, %v5912
    %v9021 = vunpack.c.l.s4 1983009808
    %v9022 = vunpack.c.0.s8 %v9021
    %v9023 = vlaneseq
    %v9024 = vshrl.u32 %v9023, 7
    %v9025 = vsub.s32 %v9022, %v9024
    %v9026 = vrot.slane %v9018, %v9025
    %v9028 = vunpack.c.l.s4 1983009808
    %v9029 = vunpack.c.0.s8 %v9028
    %v9030 = vlaneseq
    %v9031 = vshrl.u32 %v9030, 7
    %v9032 = vsub.s32 %v9029, %v9031
    %v9033 = vrot.slane %v9019, %v9032
    %v9034 = vcombine.low %v8978, %v8994
    %v9035 = vcombine.high %v8978, %v8994
    %v9037 = vunpack.c.l.s4 1934713408
    %v9038 = vunpack.c.0.s8 %v9037
    %v9039 = vlaneseq
    %v9040 = vshrl.u32 %v9039, 7
    %v9041 = vsub.s32 %v9038, %v9040
    %v9042 = vrot.slane %v9034, %v9041
    %v9044 = vunpack.c.l.s4 1934713408
    %v9045 = vunpack.c.0.s8 %v9044
    %v9046 = vlaneseq
    %v9047 = vshrl.u32 %v9046, 7
    %v9048 = vsub.s32 %v9045, %v9047
    %v9049 = vrot.slane %v9035, %v9048
    %v9050 = vcombine.low %v8985, %v9001
    %v9051 = vcombine.high %v8985, %v9001
    %v9053 = vunpack.c.l.s4 1934713408
    %v9054 = vunpack.c.0.s8 %v9053
    %v9055 = vlaneseq
    %v9056 = vshrl.u32 %v9055, 7
    %v9057 = vsub.s32 %v9054, %v9056
    %v9058 = vrot.slane %v9050, %v9057
    %v9060 = vunpack.c.l.s4 1934713408
    %v9061 = vunpack.c.0.s8 %v9060
    %v9062 = vlaneseq
    %v9063 = vshrl.u32 %v9062, 7
    %v9064 = vsub.s32 %v9061, %v9063
    %v9065 = vrot.slane %v9051, %v9064
    %v9066 = vcombine.low %v9010, %v9026
    %v9067 = vcombine.high %v9010, %v9026
    %v9069 = vunpack.c.l.s4 1934713408
    %v9070 = vunpack.c.0.s8 %v9069
    %v9071 = vlaneseq
    %v9072 = vshrl.u32 %v9071, 7
    %v9073 = vsub.s32 %v9070, %v9072
    %v9074 = vrot.slane %v9066, %v9073
    %v9076 = vunpack.c.l.s4 1934713408
    %v9077 = vunpack.c.0.s8 %v9076
    %v9078 = vlaneseq
    %v9079 = vshrl.u32 %v9078, 7
    %v9080 = vsub.s32 %v9077, %v9079
    %v9081 = vrot.slane %v9067, %v9080
    %v9082 = vcombine.low %v9017, %v9033
    %v9083 = vcombine.high %v9017, %v9033
    %v9085 = vunpack.c.l.s4 1934713408
    %v9086 = vunpack.c.0.s8 %v9085
    %v9087 = vlaneseq
    %v9088 = vshrl.u32 %v9087, 7
    %v9089 = vsub.s32 %v9086, %v9088
    %v9090 = vrot.slane %v9082, %v9089
    %v9092 = vunpack.c.l.s4 1934713408
    %v9093 = vunpack.c.0.s8 %v9092
    %v9094 = vlaneseq
    %v9095 = vshrl.u32 %v9094, 7
    %v9096 = vsub.s32 %v9093, %v9095
    %v9097 = vrot.slane %v9083, %v9096
    %v9098 = vcombine.low %v9042, %v9074
    %v9099 = vcombine.high %v9042, %v9074
    %v9100 = vcombine.low %v9049, %v9081
    %v9101 = vcombine.high %v9049, %v9081
    %v9102 = vcombine.low %v9058, %v9090
    %v9103 = vcombine.high %v9058, %v9090
    %v9104 = vcombine.low %v9065, %v9097
    %v9105 = vcombine.high %v9065, %v9097
    %v9106 = vcombine.low %v5914, %v5918
    %v9107 = vcombine.high %v5914, %v5918
    %v9109 = vunpack.c.l.s4 1983009808
    %v9110 = vunpack.c.0.s8 %v9109
    %v9111 = vlaneseq
    %v9112 = vshrl.u32 %v9111, 7
    %v9113 = vsub.s32 %v9110, %v9112
    %v9114 = vrot.slane %v9106, %v9113
    %v9116 = vunpack.c.l.s4 1983009808
    %v9117 = vunpack.c.0.s8 %v9116
    %v9118 = vlaneseq
    %v9119 = vshrl.u32 %v9118, 7
    %v9120 = vsub.s32 %v9117, %v9119
    %v9121 = vrot.slane %v9107, %v9120
    %v9122 = vcombine.low %v5916, %v5920
    %v9123 = vcombine.high %v5916, %v5920
    %v9125 = vunpack.c.l.s4 1983009808
    %v9126 = vunpack.c.0.s8 %v9125
    %v9127 = vlaneseq
    %v9128 = vshrl.u32 %v9127, 7
    %v9129 = vsub.s32 %v9126, %v9128
    %v9130 = vrot.slane %v9122, %v9129
    %v9132 = vunpack.c.l.s4 1983009808
    %v9133 = vunpack.c.0.s8 %v9132
    %v9134 = vlaneseq
    %v9135 = vshrl.u32 %v9134, 7
    %v9136 = vsub.s32 %v9133, %v9135
    %v9137 = vrot.slane %v9123, %v9136
    %v9138 = vcombine.low %v5922, %v5926
    %v9139 = vcombine.high %v5922, %v5926
    %v9141 = vunpack.c.l.s4 1983009808
    %v9142 = vunpack.c.0.s8 %v9141
    %v9143 = vlaneseq
    %v9144 = vshrl.u32 %v9143, 7
    %v9145 = vsub.s32 %v9142, %v9144
    %v9146 = vrot.slane %v9138, %v9145
    %v9148 = vunpack.c.l.s4 1983009808
    %v9149 = vunpack.c.0.s8 %v9148
    %v9150 = vlaneseq
    %v9151 = vshrl.u32 %v9150, 7
    %v9152 = vsub.s32 %v9149, %v9151
    %v9153 = vrot.slane %v9139, %v9152
    %v9154 = vcombine.low %v5924, %v5928
    %v9155 = vcombine.high %v5924, %v5928
    %v9157 = vunpack.c.l.s4 1983009808
    %v9158 = vunpack.c.0.s8 %v9157
    %v9159 = vlaneseq
    %v9160 = vshrl.u32 %v9159, 7
    %v9161 = vsub.s32 %v9158, %v9160
    %v9162 = vrot.slane %v9154, %v9161
    %v9164 = vunpack.c.l.s4 1983009808
    %v9165 = vunpack.c.0.s8 %v9164
    %v9166 = vlaneseq
    %v9167 = vshrl.u32 %v9166, 7
    %v9168 = vsub.s32 %v9165, %v9167
    %v9169 = vrot.slane %v9155, %v9168
    %v9170 = vcombine.low %v9114, %v9130
    %v9171 = vcombine.high %v9114, %v9130
    %v9173 = vunpack.c.l.s4 1934713408
    %v9174 = vunpack.c.0.s8 %v9173
    %v9175 = vlaneseq
    %v9176 = vshrl.u32 %v9175, 7
    %v9177 = vsub.s32 %v9174, %v9176
    %v9178 = vrot.slane %v9170, %v9177
    %v9180 = vunpack.c.l.s4 1934713408
    %v9181 = vunpack.c.0.s8 %v9180
    %v9182 = vlaneseq
    %v9183 = vshrl.u32 %v9182, 7
    %v9184 = vsub.s32 %v9181, %v9183
    %v9185 = vrot.slane %v9171, %v9184
    %v9186 = vcombine.low %v9121, %v9137
    %v9187 = vcombine.high %v9121, %v9137
    %v9189 = vunpack.c.l.s4 1934713408
    %v9190 = vunpack.c.0.s8 %v9189
    %v9191 = vlaneseq
    %v9192 = vshrl.u32 %v9191, 7
    %v9193 = vsub.s32 %v9190, %v9192
    %v9194 = vrot.slane %v9186, %v9193
    %v9196 = vunpack.c.l.s4 1934713408
    %v9197 = vunpack.c.0.s8 %v9196
    %v9198 = vlaneseq
    %v9199 = vshrl.u32 %v9198, 7
    %v9200 = vsub.s32 %v9197, %v9199
    %v9201 = vrot.slane %v9187, %v9200
    %v9202 = vcombine.low %v9146, %v9162
    %v9203 = vcombine.high %v9146, %v9162
    %v9205 = vunpack.c.l.s4 1934713408
    %v9206 = vunpack.c.0.s8 %v9205
    %v9207 = vlaneseq
    %v9208 = vshrl.u32 %v9207, 7
    %v9209 = vsub.s32 %v9206, %v9208
    %v9210 = vrot.slane %v9202, %v9209
    %v9212 = vunpack.c.l.s4 1934713408
    %v9213 = vunpack.c.0.s8 %v9212
    %v9214 = vlaneseq
    %v9215 = vshrl.u32 %v9214, 7
    %v9216 = vsub.s32 %v9213, %v9215
    %v9217 = vrot.slane %v9203, %v9216
    %v9218 = vcombine.low %v9153, %v9169
    %v9219 = vcombine.high %v9153, %v9169
    %v9221 = vunpack.c.l.s4 1934713408
    %v9222 = vunpack.c.0.s8 %v9221
    %v9223 = vlaneseq
    %v9224 = vshrl.u32 %v9223, 7
    %v9225 = vsub.s32 %v9222, %v9224
    %v9226 = vrot.slane %v9218, %v9225
    %v9228 = vunpack.c.l.s4 1934713408
    %v9229 = vunpack.c.0.s8 %v9228
    %v9230 = vlaneseq
    %v9231 = vshrl.u32 %v9230, 7
    %v9232 = vsub.s32 %v9229, %v9231
    %v9233 = vrot.slane %v9219, %v9232
    %v9234 = vcombine.low %v9178, %v9210
    %v9235 = vcombine.high %v9178, %v9210
    %v9236 = vcombine.low %v9185, %v9217
    %v9237 = vcombine.high %v9185, %v9217
    %v9238 = vcombine.low %v9194, %v9226
    %v9239 = vcombine.high %v9194, %v9226
    %v9240 = vcombine.low %v9201, %v9233
    %v9241 = vcombine.high %v9201, %v9233
    %v9242 = vcombine.low %v5930, %v5934
    %v9243 = vcombine.high %v5930, %v5934
    %v9245 = vunpack.c.l.s4 1983009808
    %v9246 = vunpack.c.0.s8 %v9245
    %v9247 = vlaneseq
    %v9248 = vshrl.u32 %v9247, 7
    %v9249 = vsub.s32 %v9246, %v9248
    %v9250 = vrot.slane %v9242, %v9249
    %v9252 = vunpack.c.l.s4 1983009808
    %v9253 = vunpack.c.0.s8 %v9252
    %v9254 = vlaneseq
    %v9255 = vshrl.u32 %v9254, 7
    %v9256 = vsub.s32 %v9253, %v9255
    %v9257 = vrot.slane %v9243, %v9256
    %v9258 = vcombine.low %v5932, %v5936
    %v9259 = vcombine.high %v5932, %v5936
    %v9261 = vunpack.c.l.s4 1983009808
    %v9262 = vunpack.c.0.s8 %v9261
    %v9263 = vlaneseq
    %v9264 = vshrl.u32 %v9263, 7
    %v9265 = vsub.s32 %v9262, %v9264
    %v9266 = vrot.slane %v9258, %v9265
    %v9268 = vunpack.c.l.s4 1983009808
    %v9269 = vunpack.c.0.s8 %v9268
    %v9270 = vlaneseq
    %v9271 = vshrl.u32 %v9270, 7
    %v9272 = vsub.s32 %v9269, %v9271
    %v9273 = vrot.slane %v9259, %v9272
    %v9274 = vcombine.low %v5938, %v5942
    %v9275 = vcombine.high %v5938, %v5942
    %v9277 = vunpack.c.l.s4 1983009808
    %v9278 = vunpack.c.0.s8 %v9277
    %v9279 = vlaneseq
    %v9280 = vshrl.u32 %v9279, 7
    %v9281 = vsub.s32 %v9278, %v9280
    %v9282 = vrot.slane %v9274, %v9281
    %v9284 = vunpack.c.l.s4 1983009808
    %v9285 = vunpack.c.0.s8 %v9284
    %v9286 = vlaneseq
    %v9287 = vshrl.u32 %v9286, 7
    %v9288 = vsub.s32 %v9285, %v9287
    %v9289 = vrot.slane %v9275, %v9288
    %v9290 = vcombine.low %v5940, %v5944
    %v9291 = vcombine.high %v5940, %v5944
    %v9293 = vunpack.c.l.s4 1983009808
    %v9294 = vunpack.c.0.s8 %v9293
    %v9295 = vlaneseq
    %v9296 = vshrl.u32 %v9295, 7
    %v9297 = vsub.s32 %v9294, %v9296
    %v9298 = vrot.slane %v9290, %v9297
    %v9300 = vunpack.c.l.s4 1983009808
    %v9301 = vunpack.c.0.s8 %v9300
    %v9302 = vlaneseq
    %v9303 = vshrl.u32 %v9302, 7
    %v9304 = vsub.s32 %v9301, %v9303
    %v9305 = vrot.slane %v9291, %v9304
    %v9306 = vcombine.low %v9250, %v9266
    %v9307 = vcombine.high %v9250, %v9266
    %v9309 = vunpack.c.l.s4 1934713408
    %v9310 = vunpack.c.0.s8 %v9309
    %v9311 = vlaneseq
    %v9312 = vshrl.u32 %v9311, 7
    %v9313 = vsub.s32 %v9310, %v9312
    %v9314 = vrot.slane %v9306, %v9313
    %v9316 = vunpack.c.l.s4 1934713408
    %v9317 = vunpack.c.0.s8 %v9316
    %v9318 = vlaneseq
    %v9319 = vshrl.u32 %v9318, 7
    %v9320 = vsub.s32 %v9317, %v9319
    %v9321 = vrot.slane %v9307, %v9320
    %v9322 = vcombine.low %v9257, %v9273
    %v9323 = vcombine.high %v9257, %v9273
    %v9325 = vunpack.c.l.s4 1934713408
    %v9326 = vunpack.c.0.s8 %v9325
    %v9327 = vlaneseq
    %v9328 = vshrl.u32 %v9327, 7
    %v9329 = vsub.s32 %v9326, %v9328
    %v9330 = vrot.slane %v9322, %v9329
    %v9332 = vunpack.c.l.s4 1934713408
    %v9333 = vunpack.c.0.s8 %v9332
    %v9334 = vlaneseq
    %v9335 = vshrl.u32 %v9334, 7
    %v9336 = vsub.s32 %v9333, %v9335
    %v9337 = vrot.slane %v9323, %v9336
    %v9338 = vcombine.low %v9282, %v9298
    %v9339 = vcombine.high %v9282, %v9298
    %v9341 = vunpack.c.l.s4 1934713408
    %v9342 = vunpack.c.0.s8 %v9341
    %v9343 = vlaneseq
    %v9344 = vshrl.u32 %v9343, 7
    %v9345 = vsub.s32 %v9342, %v9344
    %v9346 = vrot.slane %v9338, %v9345
    %v9348 = vunpack.c.l.s4 1934713408
    %v9349 = vunpack.c.0.s8 %v9348
    %v9350 = vlaneseq
    %v9351 = vshrl.u32 %v9350, 7
    %v9352 = vsub.s32 %v9349, %v9351
    %v9353 = vrot.slane %v9339, %v9352
    %v9354 = vcombine.low %v9289, %v9305
    %v9355 = vcombine.high %v9289, %v9305
    %v9357 = vunpack.c.l.s4 1934713408
    %v9358 = vunpack.c.0.s8 %v9357
    %v9359 = vlaneseq
    %v9360 = vshrl.u32 %v9359, 7
    %v9361 = vsub.s32 %v9358, %v9360
    %v9362 = vrot.slane %v9354, %v9361
    %v9364 = vunpack.c.l.s4 1934713408
    %v9365 = vunpack.c.0.s8 %v9364
    %v9366 = vlaneseq
    %v9367 = vshrl.u32 %v9366, 7
    %v9368 = vsub.s32 %v9365, %v9367
    %v9369 = vrot.slane %v9355, %v9368
    %v9370 = vcombine.low %v9314, %v9346
    %v9371 = vcombine.high %v9314, %v9346
    %v9372 = vcombine.low %v9321, %v9353
    %v9373 = vcombine.high %v9321, %v9353
    %v9374 = vcombine.low %v9330, %v9362
    %v9375 = vcombine.high %v9330, %v9362
    %v9376 = vcombine.low %v9337, %v9369
    %v9377 = vcombine.high %v9337, %v9369
    %v9378 = vcombine.low %v5946, %v5950
    %v9379 = vcombine.high %v5946, %v5950
    %v9381 = vunpack.c.l.s4 1983009808
    %v9382 = vunpack.c.0.s8 %v9381
    %v9383 = vlaneseq
    %v9384 = vshrl.u32 %v9383, 7
    %v9385 = vsub.s32 %v9382, %v9384
    %v9386 = vrot.slane %v9378, %v9385
    %v9388 = vunpack.c.l.s4 1983009808
    %v9389 = vunpack.c.0.s8 %v9388
    %v9390 = vlaneseq
    %v9391 = vshrl.u32 %v9390, 7
    %v9392 = vsub.s32 %v9389, %v9391
    %v9393 = vrot.slane %v9379, %v9392
    %v9394 = vcombine.low %v5948, %v5952
    %v9395 = vcombine.high %v5948, %v5952
    %v9397 = vunpack.c.l.s4 1983009808
    %v9398 = vunpack.c.0.s8 %v9397
    %v9399 = vlaneseq
    %v9400 = vshrl.u32 %v9399, 7
    %v9401 = vsub.s32 %v9398, %v9400
    %v9402 = vrot.slane %v9394, %v9401
    %v9404 = vunpack.c.l.s4 1983009808
    %v9405 = vunpack.c.0.s8 %v9404
    %v9406 = vlaneseq
    %v9407 = vshrl.u32 %v9406, 7
    %v9408 = vsub.s32 %v9405, %v9407
    %v9409 = vrot.slane %v9395, %v9408
    %v9410 = vcombine.low %v5954, %v5958
    %v9411 = vcombine.high %v5954, %v5958
    %v9413 = vunpack.c.l.s4 1983009808
    %v9414 = vunpack.c.0.s8 %v9413
    %v9415 = vlaneseq
    %v9416 = vshrl.u32 %v9415, 7
    %v9417 = vsub.s32 %v9414, %v9416
    %v9418 = vrot.slane %v9410, %v9417
    %v9420 = vunpack.c.l.s4 1983009808
    %v9421 = vunpack.c.0.s8 %v9420
    %v9422 = vlaneseq
    %v9423 = vshrl.u32 %v9422, 7
    %v9424 = vsub.s32 %v9421, %v9423
    %v9425 = vrot.slane %v9411, %v9424
    %v9426 = vcombine.low %v5956, %v5960
    %v9427 = vcombine.high %v5956, %v5960
    %v9429 = vunpack.c.l.s4 1983009808
    %v9430 = vunpack.c.0.s8 %v9429
    %v9431 = vlaneseq
    %v9432 = vshrl.u32 %v9431, 7
    %v9433 = vsub.s32 %v9430, %v9432
    %v9434 = vrot.slane %v9426, %v9433
    %v9436 = vunpack.c.l.s4 1983009808
    %v9437 = vunpack.c.0.s8 %v9436
    %v9438 = vlaneseq
    %v9439 = vshrl.u32 %v9438, 7
    %v9440 = vsub.s32 %v9437, %v9439
    %v9441 = vrot.slane %v9427, %v9440
    %v9442 = vcombine.low %v9386, %v9402
    %v9443 = vcombine.high %v9386, %v9402
    %v9445 = vunpack.c.l.s4 1934713408
    %v9446 = vunpack.c.0.s8 %v9445
    %v9447 = vlaneseq
    %v9448 = vshrl.u32 %v9447, 7
    %v9449 = vsub.s32 %v9446, %v9448
    %v9450 = vrot.slane %v9442, %v9449
    %v9452 = vunpack.c.l.s4 1934713408
    %v9453 = vunpack.c.0.s8 %v9452
    %v9454 = vlaneseq
    %v9455 = vshrl.u32 %v9454, 7
    %v9456 = vsub.s32 %v9453, %v9455
    %v9457 = vrot.slane %v9443, %v9456
    %v9458 = vcombine.low %v9393, %v9409
    %v9459 = vcombine.high %v9393, %v9409
    %v9461 = vunpack.c.l.s4 1934713408
    %v9462 = vunpack.c.0.s8 %v9461
    %v9463 = vlaneseq
    %v9464 = vshrl.u32 %v9463, 7
    %v9465 = vsub.s32 %v9462, %v9464
    %v9466 = vrot.slane %v9458, %v9465
    %v9468 = vunpack.c.l.s4 1934713408
    %v9469 = vunpack.c.0.s8 %v9468
    %v9470 = vlaneseq
    %v9471 = vshrl.u32 %v9470, 7
    %v9472 = vsub.s32 %v9469, %v9471
    %v9473 = vrot.slane %v9459, %v9472
    %v9474 = vcombine.low %v9418, %v9434
    %v9475 = vcombine.high %v9418, %v9434
    %v9477 = vunpack.c.l.s4 1934713408
    %v9478 = vunpack.c.0.s8 %v9477
    %v9479 = vlaneseq
    %v9480 = vshrl.u32 %v9479, 7
    %v9481 = vsub.s32 %v9478, %v9480
    %v9482 = vrot.slane %v9474, %v9481
    %v9484 = vunpack.c.l.s4 1934713408
    %v9485 = vunpack.c.0.s8 %v9484
    %v9486 = vlaneseq
    %v9487 = vshrl.u32 %v9486, 7
    %v9488 = vsub.s32 %v9485, %v9487
    %v9489 = vrot.slane %v9475, %v9488
    %v9490 = vcombine.low %v9425, %v9441
    %v9491 = vcombine.high %v9425, %v9441
    %v9493 = vunpack.c.l.s4 1934713408
    %v9494 = vunpack.c.0.s8 %v9493
    %v9495 = vlaneseq
    %v9496 = vshrl.u32 %v9495, 7
    %v9497 = vsub.s32 %v9494, %v9496
    %v9498 = vrot.slane %v9490, %v9497
    %v9500 = vunpack.c.l.s4 1934713408
    %v9501 = vunpack.c.0.s8 %v9500
    %v9502 = vlaneseq
    %v9503 = vshrl.u32 %v9502, 7
    %v9504 = vsub.s32 %v9501, %v9503
    %v9505 = vrot.slane %v9491, %v9504
    %v9506 = vcombine.low %v9450, %v9482
    %v9507 = vcombine.high %v9450, %v9482
    %v9508 = vcombine.low %v9457, %v9489
    %v9509 = vcombine.high %v9457, %v9489
    %v9510 = vcombine.low %v9466, %v9498
    %v9511 = vcombine.high %v9466, %v9498
    %v9512 = vcombine.low %v9473, %v9505
    %v9513 = vcombine.high %v9473, %v9505
    %v9514 = vcombine.low %v5962, %v5966
    %v9515 = vcombine.high %v5962, %v5966
    %v9517 = vunpack.c.l.s4 1983009808
    %v9518 = vunpack.c.0.s8 %v9517
    %v9519 = vlaneseq
    %v9520 = vshrl.u32 %v9519, 7
    %v9521 = vsub.s32 %v9518, %v9520
    %v9522 = vrot.slane %v9514, %v9521
    %v9524 = vunpack.c.l.s4 1983009808
    %v9525 = vunpack.c.0.s8 %v9524
    %v9526 = vlaneseq
    %v9527 = vshrl.u32 %v9526, 7
    %v9528 = vsub.s32 %v9525, %v9527
    %v9529 = vrot.slane %v9515, %v9528
    %v9530 = vcombine.low %v5964, %v5968
    %v9531 = vcombine.high %v5964, %v5968
    %v9533 = vunpack.c.l.s4 1983009808
    %v9534 = vunpack.c.0.s8 %v9533
    %v9535 = vlaneseq
    %v9536 = vshrl.u32 %v9535, 7
    %v9537 = vsub.s32 %v9534, %v9536
    %v9538 = vrot.slane %v9530, %v9537
    %v9540 = vunpack.c.l.s4 1983009808
    %v9541 = vunpack.c.0.s8 %v9540
    %v9542 = vlaneseq
    %v9543 = vshrl.u32 %v9542, 7
    %v9544 = vsub.s32 %v9541, %v9543
    %v9545 = vrot.slane %v9531, %v9544
    %v9546 = vcombine.low %v5970, %v5974
    %v9547 = vcombine.high %v5970, %v5974
    %v9549 = vunpack.c.l.s4 1983009808
    %v9550 = vunpack.c.0.s8 %v9549
    %v9551 = vlaneseq
    %v9552 = vshrl.u32 %v9551, 7
    %v9553 = vsub.s32 %v9550, %v9552
    %v9554 = vrot.slane %v9546, %v9553
    %v9556 = vunpack.c.l.s4 1983009808
    %v9557 = vunpack.c.0.s8 %v9556
    %v9558 = vlaneseq
    %v9559 = vshrl.u32 %v9558, 7
    %v9560 = vsub.s32 %v9557, %v9559
    %v9561 = vrot.slane %v9547, %v9560
    %v9562 = vcombine.low %v5972, %v5976
    %v9563 = vcombine.high %v5972, %v5976
    %v9565 = vunpack.c.l.s4 1983009808
    %v9566 = vunpack.c.0.s8 %v9565
    %v9567 = vlaneseq
    %v9568 = vshrl.u32 %v9567, 7
    %v9569 = vsub.s32 %v9566, %v9568
    %v9570 = vrot.slane %v9562, %v9569
    %v9572 = vunpack.c.l.s4 1983009808
    %v9573 = vunpack.c.0.s8 %v9572
    %v9574 = vlaneseq
    %v9575 = vshrl.u32 %v9574, 7
    %v9576 = vsub.s32 %v9573, %v9575
    %v9577 = vrot.slane %v9563, %v9576
    %v9578 = vcombine.low %v9522, %v9538
    %v9579 = vcombine.high %v9522, %v9538
    %v9581 = vunpack.c.l.s4 1934713408
    %v9582 = vunpack.c.0.s8 %v9581
    %v9583 = vlaneseq
    %v9584 = vshrl.u32 %v9583, 7
    %v9585 = vsub.s32 %v9582, %v9584
    %v9586 = vrot.slane %v9578, %v9585
    %v9588 = vunpack.c.l.s4 1934713408
    %v9589 = vunpack.c.0.s8 %v9588
    %v9590 = vlaneseq
    %v9591 = vshrl.u32 %v9590, 7
    %v9592 = vsub.s32 %v9589, %v9591
    %v9593 = vrot.slane %v9579, %v9592
    %v9594 = vcombine.low %v9529, %v9545
    %v9595 = vcombine.high %v9529, %v9545
    %v9597 = vunpack.c.l.s4 1934713408
    %v9598 = vunpack.c.0.s8 %v9597
    %v9599 = vlaneseq
    %v9600 = vshrl.u32 %v9599, 7
    %v9601 = vsub.s32 %v9598, %v9600
    %v9602 = vrot.slane %v9594, %v9601
    %v9604 = vunpack.c.l.s4 1934713408
    %v9605 = vunpack.c.0.s8 %v9604
    %v9606 = vlaneseq
    %v9607 = vshrl.u32 %v9606, 7
    %v9608 = vsub.s32 %v9605, %v9607
    %v9609 = vrot.slane %v9595, %v9608
    %v9610 = vcombine.low %v9554, %v9570
    %v9611 = vcombine.high %v9554, %v9570
    %v9613 = vunpack.c.l.s4 1934713408
    %v9614 = vunpack.c.0.s8 %v9613
    %v9615 = vlaneseq
    %v9616 = vshrl.u32 %v9615, 7
    %v9617 = vsub.s32 %v9614, %v9616
    %v9618 = vrot.slane %v9610, %v9617
    %v9620 = vunpack.c.l.s4 1934713408
    %v9621 = vunpack.c.0.s8 %v9620
    %v9622 = vlaneseq
    %v9623 = vshrl.u32 %v9622, 7
    %v9624 = vsub.s32 %v9621, %v9623
    %v9625 = vrot.slane %v9611, %v9624
    %v9626 = vcombine.low %v9561, %v9577
    %v9627 = vcombine.high %v9561, %v9577
    %v9629 = vunpack.c.l.s4 1934713408
    %v9630 = vunpack.c.0.s8 %v9629
    %v9631 = vlaneseq
    %v9632 = vshrl.u32 %v9631, 7
    %v9633 = vsub.s32 %v9630, %v9632
    %v9634 = vrot.slane %v9626, %v9633
    %v9636 = vunpack.c.l.s4 1934713408
    %v9637 = vunpack.c.0.s8 %v9636
    %v9638 = vlaneseq
    %v9639 = vshrl.u32 %v9638, 7
    %v9640 = vsub.s32 %v9637, %v9639
    %v9641 = vrot.slane %v9627, %v9640
    %v9642 = vcombine.low %v9586, %v9618
    %v9643 = vcombine.high %v9586, %v9618
    %v9644 = vcombine.low %v9593, %v9625
    %v9645 = vcombine.high %v9593, %v9625
    %v9646 = vcombine.low %v9602, %v9634
    %v9647 = vcombine.high %v9602, %v9634
    %v9648 = vcombine.low %v9609, %v9641
    %v9649 = vcombine.high %v9609, %v9641
    %v9650 = vcombine.low %v5835, %v5839
    %v9651 = vcombine.high %v5835, %v5839
    %v9653 = vunpack.c.l.s4 1983009808
    %v9654 = vunpack.c.0.s8 %v9653
    %v9655 = vlaneseq
    %v9656 = vshrl.u32 %v9655, 7
    %v9657 = vsub.s32 %v9654, %v9656
    %v9658 = vrot.slane %v9650, %v9657
    %v9660 = vunpack.c.l.s4 1983009808
    %v9661 = vunpack.c.0.s8 %v9660
    %v9662 = vlaneseq
    %v9663 = vshrl.u32 %v9662, 7
    %v9664 = vsub.s32 %v9661, %v9663
    %v9665 = vrot.slane %v9651, %v9664
    %v9666 = vcombine.low %v5837, %v5841
    %v9667 = vcombine.high %v5837, %v5841
    %v9669 = vunpack.c.l.s4 1983009808
    %v9670 = vunpack.c.0.s8 %v9669
    %v9671 = vlaneseq
    %v9672 = vshrl.u32 %v9671, 7
    %v9673 = vsub.s32 %v9670, %v9672
    %v9674 = vrot.slane %v9666, %v9673
    %v9676 = vunpack.c.l.s4 1983009808
    %v9677 = vunpack.c.0.s8 %v9676
    %v9678 = vlaneseq
    %v9679 = vshrl.u32 %v9678, 7
    %v9680 = vsub.s32 %v9677, %v9679
    %v9681 = vrot.slane %v9667, %v9680
    %v9682 = vcombine.low %v5843, %v5847
    %v9683 = vcombine.high %v5843, %v5847
    %v9685 = vunpack.c.l.s4 1983009808
    %v9686 = vunpack.c.0.s8 %v9685
    %v9687 = vlaneseq
    %v9688 = vshrl.u32 %v9687, 7
    %v9689 = vsub.s32 %v9686, %v9688
    %v9690 = vrot.slane %v9682, %v9689
    %v9692 = vunpack.c.l.s4 1983009808
    %v9693 = vunpack.c.0.s8 %v9692
    %v9694 = vlaneseq
    %v9695 = vshrl.u32 %v9694, 7
    %v9696 = vsub.s32 %v9693, %v9695
    %v9697 = vrot.slane %v9683, %v9696
    %v9698 = vcombine.low %v5845, %v5849
    %v9699 = vcombine.high %v5845, %v5849
    %v9701 = vunpack.c.l.s4 1983009808
    %v9702 = vunpack.c.0.s8 %v9701
    %v9703 = vlaneseq
    %v9704 = vshrl.u32 %v9703, 7
    %v9705 = vsub.s32 %v9702, %v9704
    %v9706 = vrot.slane %v9698, %v9705
    %v9708 = vunpack.c.l.s4 1983009808
    %v9709 = vunpack.c.0.s8 %v9708
    %v9710 = vlaneseq
    %v9711 = vshrl.u32 %v9710, 7
    %v9712 = vsub.s32 %v9709, %v9711
    %v9713 = vrot.slane %v9699, %v9712
    %v9714 = vcombine.low %v9658, %v9674
    %v9715 = vcombine.high %v9658, %v9674
    %v9717 = vunpack.c.l.s4 1934713408
    %v9718 = vunpack.c.0.s8 %v9717
    %v9719 = vlaneseq
    %v9720 = vshrl.u32 %v9719, 7
    %v9721 = vsub.s32 %v9718, %v9720
    %v9722 = vrot.slane %v9714, %v9721
    %v9724 = vunpack.c.l.s4 1934713408
    %v9725 = vunpack.c.0.s8 %v9724
    %v9726 = vlaneseq
    %v9727 = vshrl.u32 %v9726, 7
    %v9728 = vsub.s32 %v9725, %v9727
    %v9729 = vrot.slane %v9715, %v9728
    %v9730 = vcombine.low %v9665, %v9681
    %v9731 = vcombine.high %v9665, %v9681
    %v9733 = vunpack.c.l.s4 1934713408
    %v9734 = vunpack.c.0.s8 %v9733
    %v9735 = vlaneseq
    %v9736 = vshrl.u32 %v9735, 7
    %v9737 = vsub.s32 %v9734, %v9736
    %v9738 = vrot.slane %v9730, %v9737
    %v9740 = vunpack.c.l.s4 1934713408
    %v9741 = vunpack.c.0.s8 %v9740
    %v9742 = vlaneseq
    %v9743 = vshrl.u32 %v9742, 7
    %v9744 = vsub.s32 %v9741, %v9743
    %v9745 = vrot.slane %v9731, %v9744
    %v9746 = vcombine.low %v9690, %v9706
    %v9747 = vcombine.high %v9690, %v9706
    %v9749 = vunpack.c.l.s4 1934713408
    %v9750 = vunpack.c.0.s8 %v9749
    %v9751 = vlaneseq
    %v9752 = vshrl.u32 %v9751, 7
    %v9753 = vsub.s32 %v9750, %v9752
    %v9754 = vrot.slane %v9746, %v9753
    %v9756 = vunpack.c.l.s4 1934713408
    %v9757 = vunpack.c.0.s8 %v9756
    %v9758 = vlaneseq
    %v9759 = vshrl.u32 %v9758, 7
    %v9760 = vsub.s32 %v9757, %v9759
    %v9761 = vrot.slane %v9747, %v9760
    %v9762 = vcombine.low %v9697, %v9713
    %v9763 = vcombine.high %v9697, %v9713
    %v9765 = vunpack.c.l.s4 1934713408
    %v9766 = vunpack.c.0.s8 %v9765
    %v9767 = vlaneseq
    %v9768 = vshrl.u32 %v9767, 7
    %v9769 = vsub.s32 %v9766, %v9768
    %v9770 = vrot.slane %v9762, %v9769
    %v9772 = vunpack.c.l.s4 1934713408
    %v9773 = vunpack.c.0.s8 %v9772
    %v9774 = vlaneseq
    %v9775 = vshrl.u32 %v9774, 7
    %v9776 = vsub.s32 %v9773, %v9775
    %v9777 = vrot.slane %v9763, %v9776
    %v9778 = vcombine.low %v9722, %v9754
    %v9779 = vcombine.high %v9722, %v9754
    %v9780 = vcombine.low %v9729, %v9761
    %v9781 = vcombine.high %v9729, %v9761
    %v9782 = vcombine.low %v9738, %v9770
    %v9783 = vcombine.high %v9738, %v9770
    %v9784 = vcombine.low %v9745, %v9777
    %v9785 = vcombine.high %v9745, %v9777
    %v9786 = vcombine.low %v5851, %v5855
    %v9787 = vcombine.high %v5851, %v5855
    %v9789 = vunpack.c.l.s4 1983009808
    %v9790 = vunpack.c.0.s8 %v9789
    %v9791 = vlaneseq
    %v9792 = vshrl.u32 %v9791, 7
    %v9793 = vsub.s32 %v9790, %v9792
    %v9794 = vrot.slane %v9786, %v9793
    %v9796 = vunpack.c.l.s4 1983009808
    %v9797 = vunpack.c.0.s8 %v9796
    %v9798 = vlaneseq
    %v9799 = vshrl.u32 %v9798, 7
    %v9800 = vsub.s32 %v9797, %v9799
    %v9801 = vrot.slane %v9787, %v9800
    %v9802 = vcombine.low %v5853, %v5857
    %v9803 = vcombine.high %v5853, %v5857
    %v9805 = vunpack.c.l.s4 1983009808
    %v9806 = vunpack.c.0.s8 %v9805
    %v9807 = vlaneseq
    %v9808 = vshrl.u32 %v9807, 7
    %v9809 = vsub.s32 %v9806, %v9808
    %v9810 = vrot.slane %v9802, %v9809
    %v9812 = vunpack.c.l.s4 1983009808
    %v9813 = vunpack.c.0.s8 %v9812
    %v9814 = vlaneseq
    %v9815 = vshrl.u32 %v9814, 7
    %v9816 = vsub.s32 %v9813, %v9815
    %v9817 = vrot.slane %v9803, %v9816
    %v9818 = vcombine.low %v5859, %v5863
    %v9819 = vcombine.high %v5859, %v5863
    %v9821 = vunpack.c.l.s4 1983009808
    %v9822 = vunpack.c.0.s8 %v9821
    %v9823 = vlaneseq
    %v9824 = vshrl.u32 %v9823, 7
    %v9825 = vsub.s32 %v9822, %v9824
    %v9826 = vrot.slane %v9818, %v9825
    %v9828 = vunpack.c.l.s4 1983009808
    %v9829 = vunpack.c.0.s8 %v9828
    %v9830 = vlaneseq
    %v9831 = vshrl.u32 %v9830, 7
    %v9832 = vsub.s32 %v9829, %v9831
    %v9833 = vrot.slane %v9819, %v9832
    %v9834 = vcombine.low %v5861, %v5865
    %v9835 = vcombine.high %v5861, %v5865
    %v9837 = vunpack.c.l.s4 1983009808
    %v9838 = vunpack.c.0.s8 %v9837
    %v9839 = vlaneseq
    %v9840 = vshrl.u32 %v9839, 7
    %v9841 = vsub.s32 %v9838, %v9840
    %v9842 = vrot.slane %v9834, %v9841
    %v9844 = vunpack.c.l.s4 1983009808
    %v9845 = vunpack.c.0.s8 %v9844
    %v9846 = vlaneseq
    %v9847 = vshrl.u32 %v9846, 7
    %v9848 = vsub.s32 %v9845, %v9847
    %v9849 = vrot.slane %v9835, %v9848
    %v9850 = vcombine.low %v9794, %v9810
    %v9851 = vcombine.high %v9794, %v9810
    %v9853 = vunpack.c.l.s4 1934713408
    %v9854 = vunpack.c.0.s8 %v9853
    %v9855 = vlaneseq
    %v9856 = vshrl.u32 %v9855, 7
    %v9857 = vsub.s32 %v9854, %v9856
    %v9858 = vrot.slane %v9850, %v9857
    %v9860 = vunpack.c.l.s4 1934713408
    %v9861 = vunpack.c.0.s8 %v9860
    %v9862 = vlaneseq
    %v9863 = vshrl.u32 %v9862, 7
    %v9864 = vsub.s32 %v9861, %v9863
    %v9865 = vrot.slane %v9851, %v9864
    %v9866 = vcombine.low %v9801, %v9817
    %v9867 = vcombine.high %v9801, %v9817
    %v9869 = vunpack.c.l.s4 1934713408
    %v9870 = vunpack.c.0.s8 %v9869
    %v9871 = vlaneseq
    %v9872 = vshrl.u32 %v9871, 7
    %v9873 = vsub.s32 %v9870, %v9872
    %v9874 = vrot.slane %v9866, %v9873
    %v9876 = vunpack.c.l.s4 1934713408
    %v9877 = vunpack.c.0.s8 %v9876
    %v9878 = vlaneseq
    %v9879 = vshrl.u32 %v9878, 7
    %v9880 = vsub.s32 %v9877, %v9879
    %v9881 = vrot.slane %v9867, %v9880
    %v9882 = vcombine.low %v9826, %v9842
    %v9883 = vcombine.high %v9826, %v9842
    %v9885 = vunpack.c.l.s4 1934713408
    %v9886 = vunpack.c.0.s8 %v9885
    %v9887 = vlaneseq
    %v9888 = vshrl.u32 %v9887, 7
    %v9889 = vsub.s32 %v9886, %v9888
    %v9890 = vrot.slane %v9882, %v9889
    %v9892 = vunpack.c.l.s4 1934713408
    %v9893 = vunpack.c.0.s8 %v9892
    %v9894 = vlaneseq
    %v9895 = vshrl.u32 %v9894, 7
    %v9896 = vsub.s32 %v9893, %v9895
    %v9897 = vrot.slane %v9883, %v9896
    %v9898 = vcombine.low %v9833, %v9849
    %v9899 = vcombine.high %v9833, %v9849
    %v9901 = vunpack.c.l.s4 1934713408
    %v9902 = vunpack.c.0.s8 %v9901
    %v9903 = vlaneseq
    %v9904 = vshrl.u32 %v9903, 7
    %v9905 = vsub.s32 %v9902, %v9904
    %v9906 = vrot.slane %v9898, %v9905
    %v9908 = vunpack.c.l.s4 1934713408
    %v9909 = vunpack.c.0.s8 %v9908
    %v9910 = vlaneseq
    %v9911 = vshrl.u32 %v9910, 7
    %v9912 = vsub.s32 %v9909, %v9911
    %v9913 = vrot.slane %v9899, %v9912
    %v9914 = vcombine.low %v9858, %v9890
    %v9915 = vcombine.high %v9858, %v9890
    %v9916 = vcombine.low %v9865, %v9897
    %v9917 = vcombine.high %v9865, %v9897
    %v9918 = vcombine.low %v9874, %v9906
    %v9919 = vcombine.high %v9874, %v9906
    %v9920 = vcombine.low %v9881, %v9913
    %v9921 = vcombine.high %v9881, %v9913
    %v9922 = vcombine.low %v5867, %v5871
    %v9923 = vcombine.high %v5867, %v5871
    %v9925 = vunpack.c.l.s4 1983009808
    %v9926 = vunpack.c.0.s8 %v9925
    %v9927 = vlaneseq
    %v9928 = vshrl.u32 %v9927, 7
    %v9929 = vsub.s32 %v9926, %v9928
    %v9930 = vrot.slane %v9922, %v9929
    %v9932 = vunpack.c.l.s4 1983009808
    %v9933 = vunpack.c.0.s8 %v9932
    %v9934 = vlaneseq
    %v9935 = vshrl.u32 %v9934, 7
    %v9936 = vsub.s32 %v9933, %v9935
    %v9937 = vrot.slane %v9923, %v9936
    %v9938 = vcombine.low %v5869, %v5873
    %v9939 = vcombine.high %v5869, %v5873
    %v9941 = vunpack.c.l.s4 1983009808
    %v9942 = vunpack.c.0.s8 %v9941
    %v9943 = vlaneseq
    %v9944 = vshrl.u32 %v9943, 7
    %v9945 = vsub.s32 %v9942, %v9944
    %v9946 = vrot.slane %v9938, %v9945
    %v9948 = vunpack.c.l.s4 1983009808
    %v9949 = vunpack.c.0.s8 %v9948
    %v9950 = vlaneseq
    %v9951 = vshrl.u32 %v9950, 7
    %v9952 = vsub.s32 %v9949, %v9951
    %v9953 = vrot.slane %v9939, %v9952
    %v9954 = vcombine.low %v5875, %v5879
    %v9955 = vcombine.high %v5875, %v5879
    %v9957 = vunpack.c.l.s4 1983009808
    %v9958 = vunpack.c.0.s8 %v9957
    %v9959 = vlaneseq
    %v9960 = vshrl.u32 %v9959, 7
    %v9961 = vsub.s32 %v9958, %v9960
    %v9962 = vrot.slane %v9954, %v9961
    %v9964 = vunpack.c.l.s4 1983009808
    %v9965 = vunpack.c.0.s8 %v9964
    %v9966 = vlaneseq
    %v9967 = vshrl.u32 %v9966, 7
    %v9968 = vsub.s32 %v9965, %v9967
    %v9969 = vrot.slane %v9955, %v9968
    %v9970 = vcombine.low %v5877, %v5881
    %v9971 = vcombine.high %v5877, %v5881
    %v9973 = vunpack.c.l.s4 1983009808
    %v9974 = vunpack.c.0.s8 %v9973
    %v9975 = vlaneseq
    %v9976 = vshrl.u32 %v9975, 7
    %v9977 = vsub.s32 %v9974, %v9976
    %v9978 = vrot.slane %v9970, %v9977
    %v9980 = vunpack.c.l.s4 1983009808
    %v9981 = vunpack.c.0.s8 %v9980
    %v9982 = vlaneseq
    %v9983 = vshrl.u32 %v9982, 7
    %v9984 = vsub.s32 %v9981, %v9983
    %v9985 = vrot.slane %v9971, %v9984
    %v9986 = vcombine.low %v9930, %v9946
    %v9987 = vcombine.high %v9930, %v9946
    %v9989 = vunpack.c.l.s4 1934713408
    %v9990 = vunpack.c.0.s8 %v9989
    %v9991 = vlaneseq
    %v9992 = vshrl.u32 %v9991, 7
    %v9993 = vsub.s32 %v9990, %v9992
    %v9994 = vrot.slane %v9986, %v9993
    %v9996 = vunpack.c.l.s4 1934713408
    %v9997 = vunpack.c.0.s8 %v9996
    %v9998 = vlaneseq
    %v9999 = vshrl.u32 %v9998, 7
    %v10000 = vsub.s32 %v9997, %v9999
    %v10001 = vrot.slane %v9987, %v10000
    %v10002 = vcombine.low %v9937, %v9953
    %v10003 = vcombine.high %v9937, %v9953
    %v10005 = vunpack.c.l.s4 1934713408
    %v10006 = vunpack.c.0.s8 %v10005
    %v10007 = vlaneseq
    %v10008 = vshrl.u32 %v10007, 7
    %v10009 = vsub.s32 %v10006, %v10008
    %v10010 = vrot.slane %v10002, %v10009
    %v10012 = vunpack.c.l.s4 1934713408
    %v10013 = vunpack.c.0.s8 %v10012
    %v10014 = vlaneseq
    %v10015 = vshrl.u32 %v10014, 7
    %v10016 = vsub.s32 %v10013, %v10015
    %v10017 = vrot.slane %v10003, %v10016
    %v10018 = vcombine.low %v9962, %v9978
    %v10019 = vcombine.high %v9962, %v9978
    %v10021 = vunpack.c.l.s4 1934713408
    %v10022 = vunpack.c.0.s8 %v10021
    %v10023 = vlaneseq
    %v10024 = vshrl.u32 %v10023, 7
    %v10025 = vsub.s32 %v10022, %v10024
    %v10026 = vrot.slane %v10018, %v10025
    %v10028 = vunpack.c.l.s4 1934713408
    %v10029 = vunpack.c.0.s8 %v10028
    %v10030 = vlaneseq
    %v10031 = vshrl.u32 %v10030, 7
    %v10032 = vsub.s32 %v10029, %v10031
    %v10033 = vrot.slane %v10019, %v10032
    %v10034 = vcombine.low %v9969, %v9985
    %v10035 = vcombine.high %v9969, %v9985
    %v10037 = vunpack.c.l.s4 1934713408
    %v10038 = vunpack.c.0.s8 %v10037
    %v10039 = vlaneseq
    %v10040 = vshrl.u32 %v10039, 7
    %v10041 = vsub.s32 %v10038, %v10040
    %v10042 = vrot.slane %v10034, %v10041
    %v10044 = vunpack.c.l.s4 1934713408
    %v10045 = vunpack.c.0.s8 %v10044
    %v10046 = vlaneseq
    %v10047 = vshrl.u32 %v10046, 7
    %v10048 = vsub.s32 %v10045, %v10047
    %v10049 = vrot.slane %v10035, %v10048
    %v10050 = vcombine.low %v9994, %v10026
    %v10051 = vcombine.high %v9994, %v10026
    %v10052 = vcombine.low %v10001, %v10033
    %v10053 = vcombine.high %v10001, %v10033
    %v10054 = vcombine.low %v10010, %v10042
    %v10055 = vcombine.high %v10010, %v10042
    %v10056 = vcombine.low %v10017, %v10049
    %v10057 = vcombine.high %v10017, %v10049
    %v10058 = vcombine.low %v5883, %v5887
    %v10059 = vcombine.high %v5883, %v5887
    %v10061 = vunpack.c.l.s4 1983009808
    %v10062 = vunpack.c.0.s8 %v10061
    %v10063 = vlaneseq
    %v10064 = vshrl.u32 %v10063, 7
    %v10065 = vsub.s32 %v10062, %v10064
    %v10066 = vrot.slane %v10058, %v10065
    %v10068 = vunpack.c.l.s4 1983009808
    %v10069 = vunpack.c.0.s8 %v10068
    %v10070 = vlaneseq
    %v10071 = vshrl.u32 %v10070, 7
    %v10072 = vsub.s32 %v10069, %v10071
    %v10073 = vrot.slane %v10059, %v10072
    %v10074 = vcombine.low %v5885, %v5889
    %v10075 = vcombine.high %v5885, %v5889
    %v10077 = vunpack.c.l.s4 1983009808
    %v10078 = vunpack.c.0.s8 %v10077
    %v10079 = vlaneseq
    %v10080 = vshrl.u32 %v10079, 7
    %v10081 = vsub.s32 %v10078, %v10080
    %v10082 = vrot.slane %v10074, %v10081
    %v10084 = vunpack.c.l.s4 1983009808
    %v10085 = vunpack.c.0.s8 %v10084
    %v10086 = vlaneseq
    %v10087 = vshrl.u32 %v10086, 7
    %v10088 = vsub.s32 %v10085, %v10087
    %v10089 = vrot.slane %v10075, %v10088
    %v10090 = vcombine.low %v5891, %v5895
    %v10091 = vcombine.high %v5891, %v5895
    %v10093 = vunpack.c.l.s4 1983009808
    %v10094 = vunpack.c.0.s8 %v10093
    %v10095 = vlaneseq
    %v10096 = vshrl.u32 %v10095, 7
    %v10097 = vsub.s32 %v10094, %v10096
    %v10098 = vrot.slane %v10090, %v10097
    %v10100 = vunpack.c.l.s4 1983009808
    %v10101 = vunpack.c.0.s8 %v10100
    %v10102 = vlaneseq
    %v10103 = vshrl.u32 %v10102, 7
    %v10104 = vsub.s32 %v10101, %v10103
    %v10105 = vrot.slane %v10091, %v10104
    %v10106 = vcombine.low %v5893, %v5897
    %v10107 = vcombine.high %v5893, %v5897
    %v10109 = vunpack.c.l.s4 1983009808
    %v10110 = vunpack.c.0.s8 %v10109
    %v10111 = vlaneseq
    %v10112 = vshrl.u32 %v10111, 7
    %v10113 = vsub.s32 %v10110, %v10112
    %v10114 = vrot.slane %v10106, %v10113
    %v10116 = vunpack.c.l.s4 1983009808
    %v10117 = vunpack.c.0.s8 %v10116
    %v10118 = vlaneseq
    %v10119 = vshrl.u32 %v10118, 7
    %v10120 = vsub.s32 %v10117, %v10119
    %v10121 = vrot.slane %v10107, %v10120
    %v10122 = vcombine.low %v10066, %v10082
    %v10123 = vcombine.high %v10066, %v10082
    %v10125 = vunpack.c.l.s4 1934713408
    %v10126 = vunpack.c.0.s8 %v10125
    %v10127 = vlaneseq
    %v10128 = vshrl.u32 %v10127, 7
    %v10129 = vsub.s32 %v10126, %v10128
    %v10130 = vrot.slane %v10122, %v10129
    %v10132 = vunpack.c.l.s4 1934713408
    %v10133 = vunpack.c.0.s8 %v10132
    %v10134 = vlaneseq
    %v10135 = vshrl.u32 %v10134, 7
    %v10136 = vsub.s32 %v10133, %v10135
    %v10137 = vrot.slane %v10123, %v10136
    %v10138 = vcombine.low %v10073, %v10089
    %v10139 = vcombine.high %v10073, %v10089
    %v10141 = vunpack.c.l.s4 1934713408
    %v10142 = vunpack.c.0.s8 %v10141
    %v10143 = vlaneseq
    %v10144 = vshrl.u32 %v10143, 7
    %v10145 = vsub.s32 %v10142, %v10144
    %v10146 = vrot.slane %v10138, %v10145
    %v10148 = vunpack.c.l.s4 1934713408
    %v10149 = vunpack.c.0.s8 %v10148
    %v10150 = vlaneseq
    %v10151 = vshrl.u32 %v10150, 7
    %v10152 = vsub.s32 %v10149, %v10151
    %v10153 = vrot.slane %v10139, %v10152
    %v10154 = vcombine.low %v10098, %v10114
    %v10155 = vcombine.high %v10098, %v10114
    %v10157 = vunpack.c.l.s4 1934713408
    %v10158 = vunpack.c.0.s8 %v10157
    %v10159 = vlaneseq
    %v10160 = vshrl.u32 %v10159, 7
    %v10161 = vsub.s32 %v10158, %v10160
    %v10162 = vrot.slane %v10154, %v10161
    %v10164 = vunpack.c.l.s4 1934713408
    %v10165 = vunpack.c.0.s8 %v10164
    %v10166 = vlaneseq
    %v10167 = vshrl.u32 %v10166, 7
    %v10168 = vsub.s32 %v10165, %v10167
    %v10169 = vrot.slane %v10155, %v10168
    %v10170 = vcombine.low %v10105, %v10121
    %v10171 = vcombine.high %v10105, %v10121
    %v10173 = vunpack.c.l.s4 1934713408
    %v10174 = vunpack.c.0.s8 %v10173
    %v10175 = vlaneseq
    %v10176 = vshrl.u32 %v10175, 7
    %v10177 = vsub.s32 %v10174, %v10176
    %v10178 = vrot.slane %v10170, %v10177
    %v10180 = vunpack.c.l.s4 1934713408
    %v10181 = vunpack.c.0.s8 %v10180
    %v10182 = vlaneseq
    %v10183 = vshrl.u32 %v10182, 7
    %v10184 = vsub.s32 %v10181, %v10183
    %v10185 = vrot.slane %v10171, %v10184
    %v10186 = vcombine.low %v10130, %v10162
    %v10187 = vcombine.high %v10130, %v10162
    %v10188 = vcombine.low %v10137, %v10169
    %v10189 = vcombine.high %v10137, %v10169
    %v10190 = vcombine.low %v10146, %v10178
    %v10191 = vcombine.high %v10146, %v10178
    %v10192 = vcombine.low %v10153, %v10185
    %v10193 = vcombine.high %v10153, %v10185
    %v10194 = vcombine.low %v5899, %v5903
    %v10195 = vcombine.high %v5899, %v5903
    %v10197 = vunpack.c.l.s4 1983009808
    %v10198 = vunpack.c.0.s8 %v10197
    %v10199 = vlaneseq
    %v10200 = vshrl.u32 %v10199, 7
    %v10201 = vsub.s32 %v10198, %v10200
    %v10202 = vrot.slane %v10194, %v10201
    %v10204 = vunpack.c.l.s4 1983009808
    %v10205 = vunpack.c.0.s8 %v10204
    %v10206 = vlaneseq
    %v10207 = vshrl.u32 %v10206, 7
    %v10208 = vsub.s32 %v10205, %v10207
    %v10209 = vrot.slane %v10195, %v10208
    %v10210 = vcombine.low %v5901, %v5905
    %v10211 = vcombine.high %v5901, %v5905
    %v10213 = vunpack.c.l.s4 1983009808
    %v10214 = vunpack.c.0.s8 %v10213
    %v10215 = vlaneseq
    %v10216 = vshrl.u32 %v10215, 7
    %v10217 = vsub.s32 %v10214, %v10216
    %v10218 = vrot.slane %v10210, %v10217
    %v10220 = vunpack.c.l.s4 1983009808
    %v10221 = vunpack.c.0.s8 %v10220
    %v10222 = vlaneseq
    %v10223 = vshrl.u32 %v10222, 7
    %v10224 = vsub.s32 %v10221, %v10223
    %v10225 = vrot.slane %v10211, %v10224
    %v10226 = vcombine.low %v5907, %v5911
    %v10227 = vcombine.high %v5907, %v5911
    %v10229 = vunpack.c.l.s4 1983009808
    %v10230 = vunpack.c.0.s8 %v10229
    %v10231 = vlaneseq
    %v10232 = vshrl.u32 %v10231, 7
    %v10233 = vsub.s32 %v10230, %v10232
    %v10234 = vrot.slane %v10226, %v10233
    %v10236 = vunpack.c.l.s4 1983009808
    %v10237 = vunpack.c.0.s8 %v10236
    %v10238 = vlaneseq
    %v10239 = vshrl.u32 %v10238, 7
    %v10240 = vsub.s32 %v10237, %v10239
    %v10241 = vrot.slane %v10227, %v10240
    %v10242 = vcombine.low %v5909, %v5913
    %v10243 = vcombine.high %v5909, %v5913
    %v10245 = vunpack.c.l.s4 1983009808
    %v10246 = vunpack.c.0.s8 %v10245
    %v10247 = vlaneseq
    %v10248 = vshrl.u32 %v10247, 7
    %v10249 = vsub.s32 %v10246, %v10248
    %v10250 = vrot.slane %v10242, %v10249
    %v10252 = vunpack.c.l.s4 1983009808
    %v10253 = vunpack.c.0.s8 %v10252
    %v10254 = vlaneseq
    %v10255 = vshrl.u32 %v10254, 7
    %v10256 = vsub.s32 %v10253, %v10255
    %v10257 = vrot.slane %v10243, %v10256
    %v10258 = vcombine.low %v10202, %v10218
    %v10259 = vcombine.high %v10202, %v10218
    %v10261 = vunpack.c.l.s4 1934713408
    %v10262 = vunpack.c.0.s8 %v10261
    %v10263 = vlaneseq
    %v10264 = vshrl.u32 %v10263, 7
    %v10265 = vsub.s32 %v10262, %v10264
    %v10266 = vrot.slane %v10258, %v10265
    %v10268 = vunpack.c.l.s4 1934713408
    %v10269 = vunpack.c.0.s8 %v10268
    %v10270 = vlaneseq
    %v10271 = vshrl.u32 %v10270, 7
    %v10272 = vsub.s32 %v10269, %v10271
    %v10273 = vrot.slane %v10259, %v10272
    %v10274 = vcombine.low %v10209, %v10225
    %v10275 = vcombine.high %v10209, %v10225
    %v10277 = vunpack.c.l.s4 1934713408
    %v10278 = vunpack.c.0.s8 %v10277
    %v10279 = vlaneseq
    %v10280 = vshrl.u32 %v10279, 7
    %v10281 = vsub.s32 %v10278, %v10280
    %v10282 = vrot.slane %v10274, %v10281
    %v10284 = vunpack.c.l.s4 1934713408
    %v10285 = vunpack.c.0.s8 %v10284
    %v10286 = vlaneseq
    %v10287 = vshrl.u32 %v10286, 7
    %v10288 = vsub.s32 %v10285, %v10287
    %v10289 = vrot.slane %v10275, %v10288
    %v10290 = vcombine.low %v10234, %v10250
    %v10291 = vcombine.high %v10234, %v10250
    %v10293 = vunpack.c.l.s4 1934713408
    %v10294 = vunpack.c.0.s8 %v10293
    %v10295 = vlaneseq
    %v10296 = vshrl.u32 %v10295, 7
    %v10297 = vsub.s32 %v10294, %v10296
    %v10298 = vrot.slane %v10290, %v10297
    %v10300 = vunpack.c.l.s4 1934713408
    %v10301 = vunpack.c.0.s8 %v10300
    %v10302 = vlaneseq
    %v10303 = vshrl.u32 %v10302, 7
    %v10304 = vsub.s32 %v10301, %v10303
    %v10305 = vrot.slane %v10291, %v10304
    %v10306 = vcombine.low %v10241, %v10257
    %v10307 = vcombine.high %v10241, %v10257
    %v10309 = vunpack.c.l.s4 1934713408
    %v10310 = vunpack.c.0.s8 %v10309
    %v10311 = vlaneseq
    %v10312 = vshrl.u32 %v10311, 7
    %v10313 = vsub.s32 %v10310, %v10312
    %v10314 = vrot.slane %v10306, %v10313
    %v10316 = vunpack.c.l.s4 1934713408
    %v10317 = vunpack.c.0.s8 %v10316
    %v10318 = vlaneseq
    %v10319 = vshrl.u32 %v10318, 7
    %v10320 = vsub.s32 %v10317, %v10319
    %v10321 = vrot.slane %v10307, %v10320
    %v10322 = vcombine.low %v10266, %v10298
    %v10323 = vcombine.high %v10266, %v10298
    %v10324 = vcombine.low %v10273, %v10305
    %v10325 = vcombine.high %v10273, %v10305
    %v10326 = vcombine.low %v10282, %v10314
    %v10327 = vcombine.high %v10282, %v10314
    %v10328 = vcombine.low %v10289, %v10321
    %v10329 = vcombine.high %v10289, %v10321
    %v10330 = vcombine.low %v5915, %v5919
    %v10331 = vcombine.high %v5915, %v5919
    %v10333 = vunpack.c.l.s4 1983009808
    %v10334 = vunpack.c.0.s8 %v10333
    %v10335 = vlaneseq
    %v10336 = vshrl.u32 %v10335, 7
    %v10337 = vsub.s32 %v10334, %v10336
    %v10338 = vrot.slane %v10330, %v10337
    %v10340 = vunpack.c.l.s4 1983009808
    %v10341 = vunpack.c.0.s8 %v10340
    %v10342 = vlaneseq
    %v10343 = vshrl.u32 %v10342, 7
    %v10344 = vsub.s32 %v10341, %v10343
    %v10345 = vrot.slane %v10331, %v10344
    %v10346 = vcombine.low %v5917, %v5921
    %v10347 = vcombine.high %v5917, %v5921
    %v10349 = vunpack.c.l.s4 1983009808
    %v10350 = vunpack.c.0.s8 %v10349
    %v10351 = vlaneseq
    %v10352 = vshrl.u32 %v10351, 7
    %v10353 = vsub.s32 %v10350, %v10352
    %v10354 = vrot.slane %v10346, %v10353
    %v10356 = vunpack.c.l.s4 1983009808
    %v10357 = vunpack.c.0.s8 %v10356
    %v10358 = vlaneseq
    %v10359 = vshrl.u32 %v10358, 7
    %v10360 = vsub.s32 %v10357, %v10359
    %v10361 = vrot.slane %v10347, %v10360
    %v10362 = vcombine.low %v5923, %v5927
    %v10363 = vcombine.high %v5923, %v5927
    %v10365 = vunpack.c.l.s4 1983009808
    %v10366 = vunpack.c.0.s8 %v10365
    %v10367 = vlaneseq
    %v10368 = vshrl.u32 %v10367, 7
    %v10369 = vsub.s32 %v10366, %v10368
    %v10370 = vrot.slane %v10362, %v10369
    %v10372 = vunpack.c.l.s4 1983009808
    %v10373 = vunpack.c.0.s8 %v10372
    %v10374 = vlaneseq
    %v10375 = vshrl.u32 %v10374, 7
    %v10376 = vsub.s32 %v10373, %v10375
    %v10377 = vrot.slane %v10363, %v10376
    %v10378 = vcombine.low %v5925, %v5929
    %v10379 = vcombine.high %v5925, %v5929
    %v10381 = vunpack.c.l.s4 1983009808
    %v10382 = vunpack.c.0.s8 %v10381
    %v10383 = vlaneseq
    %v10384 = vshrl.u32 %v10383, 7
    %v10385 = vsub.s32 %v10382, %v10384
    %v10386 = vrot.slane %v10378, %v10385
    %v10388 = vunpack.c.l.s4 1983009808
    %v10389 = vunpack.c.0.s8 %v10388
    %v10390 = vlaneseq
    %v10391 = vshrl.u32 %v10390, 7
    %v10392 = vsub.s32 %v10389, %v10391
    %v10393 = vrot.slane %v10379, %v10392
    %v10394 = vcombine.low %v10338, %v10354
    %v10395 = vcombine.high %v10338, %v10354
    %v10397 = vunpack.c.l.s4 1934713408
    %v10398 = vunpack.c.0.s8 %v10397
    %v10399 = vlaneseq
    %v10400 = vshrl.u32 %v10399, 7
    %v10401 = vsub.s32 %v10398, %v10400
    %v10402 = vrot.slane %v10394, %v10401
    %v10404 = vunpack.c.l.s4 1934713408
    %v10405 = vunpack.c.0.s8 %v10404
    %v10406 = vlaneseq
    %v10407 = vshrl.u32 %v10406, 7
    %v10408 = vsub.s32 %v10405, %v10407
    %v10409 = vrot.slane %v10395, %v10408
    %v10410 = vcombine.low %v10345, %v10361
    %v10411 = vcombine.high %v10345, %v10361
    %v10413 = vunpack.c.l.s4 1934713408
    %v10414 = vunpack.c.0.s8 %v10413
    %v10415 = vlaneseq
    %v10416 = vshrl.u32 %v10415, 7
    %v10417 = vsub.s32 %v10414, %v10416
    %v10418 = vrot.slane %v10410, %v10417
    %v10420 = vunpack.c.l.s4 1934713408
    %v10421 = vunpack.c.0.s8 %v10420
    %v10422 = vlaneseq
    %v10423 = vshrl.u32 %v10422, 7
    %v10424 = vsub.s32 %v10421, %v10423
    %v10425 = vrot.slane %v10411, %v10424
    %v10426 = vcombine.low %v10370, %v10386
    %v10427 = vcombine.high %v10370, %v10386
    %v10429 = vunpack.c.l.s4 1934713408
    %v10430 = vunpack.c.0.s8 %v10429
    %v10431 = vlaneseq
    %v10432 = vshrl.u32 %v10431, 7
    %v10433 = vsub.s32 %v10430, %v10432
    %v10434 = vrot.slane %v10426, %v10433
    %v10436 = vunpack.c.l.s4 1934713408
    %v10437 = vunpack.c.0.s8 %v10436
    %v10438 = vlaneseq
    %v10439 = vshrl.u32 %v10438, 7
    %v10440 = vsub.s32 %v10437, %v10439
    %v10441 = vrot.slane %v10427, %v10440
    %v10442 = vcombine.low %v10377, %v10393
    %v10443 = vcombine.high %v10377, %v10393
    %v10445 = vunpack.c.l.s4 1934713408
    %v10446 = vunpack.c.0.s8 %v10445
    %v10447 = vlaneseq
    %v10448 = vshrl.u32 %v10447, 7
    %v10449 = vsub.s32 %v10446, %v10448
    %v10450 = vrot.slane %v10442, %v10449
    %v10452 = vunpack.c.l.s4 1934713408
    %v10453 = vunpack.c.0.s8 %v10452
    %v10454 = vlaneseq
    %v10455 = vshrl.u32 %v10454, 7
    %v10456 = vsub.s32 %v10453, %v10455
    %v10457 = vrot.slane %v10443, %v10456
    %v10458 = vcombine.low %v10402, %v10434
    %v10459 = vcombine.high %v10402, %v10434
    %v10460 = vcombine.low %v10409, %v10441
    %v10461 = vcombine.high %v10409, %v10441
    %v10462 = vcombine.low %v10418, %v10450
    %v10463 = vcombine.high %v10418, %v10450
    %v10464 = vcombine.low %v10425, %v10457
    %v10465 = vcombine.high %v10425, %v10457
    %v10466 = vcombine.low %v5931, %v5935
    %v10467 = vcombine.high %v5931, %v5935
    %v10469 = vunpack.c.l.s4 1983009808
    %v10470 = vunpack.c.0.s8 %v10469
    %v10471 = vlaneseq
    %v10472 = vshrl.u32 %v10471, 7
    %v10473 = vsub.s32 %v10470, %v10472
    %v10474 = vrot.slane %v10466, %v10473
    %v10476 = vunpack.c.l.s4 1983009808
    %v10477 = vunpack.c.0.s8 %v10476
    %v10478 = vlaneseq
    %v10479 = vshrl.u32 %v10478, 7
    %v10480 = vsub.s32 %v10477, %v10479
    %v10481 = vrot.slane %v10467, %v10480
    %v10482 = vcombine.low %v5933, %v5937
    %v10483 = vcombine.high %v5933, %v5937
    %v10485 = vunpack.c.l.s4 1983009808
    %v10486 = vunpack.c.0.s8 %v10485
    %v10487 = vlaneseq
    %v10488 = vshrl.u32 %v10487, 7
    %v10489 = vsub.s32 %v10486, %v10488
    %v10490 = vrot.slane %v10482, %v10489
    %v10492 = vunpack.c.l.s4 1983009808
    %v10493 = vunpack.c.0.s8 %v10492
    %v10494 = vlaneseq
    %v10495 = vshrl.u32 %v10494, 7
    %v10496 = vsub.s32 %v10493, %v10495
    %v10497 = vrot.slane %v10483, %v10496
    %v10498 = vcombine.low %v5939, %v5943
    %v10499 = vcombine.high %v5939, %v5943
    %v10501 = vunpack.c.l.s4 1983009808
    %v10502 = vunpack.c.0.s8 %v10501
    %v10503 = vlaneseq
    %v10504 = vshrl.u32 %v10503, 7
    %v10505 = vsub.s32 %v10502, %v10504
    %v10506 = vrot.slane %v10498, %v10505
    %v10508 = vunpack.c.l.s4 1983009808
    %v10509 = vunpack.c.0.s8 %v10508
    %v10510 = vlaneseq
    %v10511 = vshrl.u32 %v10510, 7
    %v10512 = vsub.s32 %v10509, %v10511
    %v10513 = vrot.slane %v10499, %v10512
    %v10514 = vcombine.low %v5941, %v5945
    %v10515 = vcombine.high %v5941, %v5945
    %v10517 = vunpack.c.l.s4 1983009808
    %v10518 = vunpack.c.0.s8 %v10517
    %v10519 = vlaneseq
    %v10520 = vshrl.u32 %v10519, 7
    %v10521 = vsub.s32 %v10518, %v10520
    %v10522 = vrot.slane %v10514, %v10521
    %v10524 = vunpack.c.l.s4 1983009808
    %v10525 = vunpack.c.0.s8 %v10524
    %v10526 = vlaneseq
    %v10527 = vshrl.u32 %v10526, 7
    %v10528 = vsub.s32 %v10525, %v10527
    %v10529 = vrot.slane %v10515, %v10528
    %v10530 = vcombine.low %v10474, %v10490
    %v10531 = vcombine.high %v10474, %v10490
    %v10533 = vunpack.c.l.s4 1934713408
    %v10534 = vunpack.c.0.s8 %v10533
    %v10535 = vlaneseq
    %v10536 = vshrl.u32 %v10535, 7
    %v10537 = vsub.s32 %v10534, %v10536
    %v10538 = vrot.slane %v10530, %v10537
    %v10540 = vunpack.c.l.s4 1934713408
    %v10541 = vunpack.c.0.s8 %v10540
    %v10542 = vlaneseq
    %v10543 = vshrl.u32 %v10542, 7
    %v10544 = vsub.s32 %v10541, %v10543
    %v10545 = vrot.slane %v10531, %v10544
    %v10546 = vcombine.low %v10481, %v10497
    %v10547 = vcombine.high %v10481, %v10497
    %v10549 = vunpack.c.l.s4 1934713408
    %v10550 = vunpack.c.0.s8 %v10549
    %v10551 = vlaneseq
    %v10552 = vshrl.u32 %v10551, 7
    %v10553 = vsub.s32 %v10550, %v10552
    %v10554 = vrot.slane %v10546, %v10553
    %v10556 = vunpack.c.l.s4 1934713408
    %v10557 = vunpack.c.0.s8 %v10556
    %v10558 = vlaneseq
    %v10559 = vshrl.u32 %v10558, 7
    %v10560 = vsub.s32 %v10557, %v10559
    %v10561 = vrot.slane %v10547, %v10560
    %v10562 = vcombine.low %v10506, %v10522
    %v10563 = vcombine.high %v10506, %v10522
    %v10565 = vunpack.c.l.s4 1934713408
    %v10566 = vunpack.c.0.s8 %v10565
    %v10567 = vlaneseq
    %v10568 = vshrl.u32 %v10567, 7
    %v10569 = vsub.s32 %v10566, %v10568
    %v10570 = vrot.slane %v10562, %v10569
    %v10572 = vunpack.c.l.s4 1934713408
    %v10573 = vunpack.c.0.s8 %v10572
    %v10574 = vlaneseq
    %v10575 = vshrl.u32 %v10574, 7
    %v10576 = vsub.s32 %v10573, %v10575
    %v10577 = vrot.slane %v10563, %v10576
    %v10578 = vcombine.low %v10513, %v10529
    %v10579 = vcombine.high %v10513, %v10529
    %v10581 = vunpack.c.l.s4 1934713408
    %v10582 = vunpack.c.0.s8 %v10581
    %v10583 = vlaneseq
    %v10584 = vshrl.u32 %v10583, 7
    %v10585 = vsub.s32 %v10582, %v10584
    %v10586 = vrot.slane %v10578, %v10585
    %v10588 = vunpack.c.l.s4 1934713408
    %v10589 = vunpack.c.0.s8 %v10588
    %v10590 = vlaneseq
    %v10591 = vshrl.u32 %v10590, 7
    %v10592 = vsub.s32 %v10589, %v10591
    %v10593 = vrot.slane %v10579, %v10592
    %v10594 = vcombine.low %v10538, %v10570
    %v10595 = vcombine.high %v10538, %v10570
    %v10596 = vcombine.low %v10545, %v10577
    %v10597 = vcombine.high %v10545, %v10577
    %v10598 = vcombine.low %v10554, %v10586
    %v10599 = vcombine.high %v10554, %v10586
    %v10600 = vcombine.low %v10561, %v10593
    %v10601 = vcombine.high %v10561, %v10593
    %v10602 = vcombine.low %v5947, %v5951
    %v10603 = vcombine.high %v5947, %v5951
    %v10605 = vunpack.c.l.s4 1983009808
    %v10606 = vunpack.c.0.s8 %v10605
    %v10607 = vlaneseq
    %v10608 = vshrl.u32 %v10607, 7
    %v10609 = vsub.s32 %v10606, %v10608
    %v10610 = vrot.slane %v10602, %v10609
    %v10612 = vunpack.c.l.s4 1983009808
    %v10613 = vunpack.c.0.s8 %v10612
    %v10614 = vlaneseq
    %v10615 = vshrl.u32 %v10614, 7
    %v10616 = vsub.s32 %v10613, %v10615
    %v10617 = vrot.slane %v10603, %v10616
    %v10618 = vcombine.low %v5949, %v5953
    %v10619 = vcombine.high %v5949, %v5953
    %v10621 = vunpack.c.l.s4 1983009808
    %v10622 = vunpack.c.0.s8 %v10621
    %v10623 = vlaneseq
    %v10624 = vshrl.u32 %v10623, 7
    %v10625 = vsub.s32 %v10622, %v10624
    %v10626 = vrot.slane %v10618, %v10625
    %v10628 = vunpack.c.l.s4 1983009808
    %v10629 = vunpack.c.0.s8 %v10628
    %v10630 = vlaneseq
    %v10631 = vshrl.u32 %v10630, 7
    %v10632 = vsub.s32 %v10629, %v10631
    %v10633 = vrot.slane %v10619, %v10632
    %v10634 = vcombine.low %v5955, %v5959
    %v10635 = vcombine.high %v5955, %v5959
    %v10637 = vunpack.c.l.s4 1983009808
    %v10638 = vunpack.c.0.s8 %v10637
    %v10639 = vlaneseq
    %v10640 = vshrl.u32 %v10639, 7
    %v10641 = vsub.s32 %v10638, %v10640
    %v10642 = vrot.slane %v10634, %v10641
    %v10644 = vunpack.c.l.s4 1983009808
    %v10645 = vunpack.c.0.s8 %v10644
    %v10646 = vlaneseq
    %v10647 = vshrl.u32 %v10646, 7
    %v10648 = vsub.s32 %v10645, %v10647
    %v10649 = vrot.slane %v10635, %v10648
    %v10650 = vcombine.low %v5957, %v5961
    %v10651 = vcombine.high %v5957, %v5961
    %v10653 = vunpack.c.l.s4 1983009808
    %v10654 = vunpack.c.0.s8 %v10653
    %v10655 = vlaneseq
    %v10656 = vshrl.u32 %v10655, 7
    %v10657 = vsub.s32 %v10654, %v10656
    %v10658 = vrot.slane %v10650, %v10657
    %v10660 = vunpack.c.l.s4 1983009808
    %v10661 = vunpack.c.0.s8 %v10660
    %v10662 = vlaneseq
    %v10663 = vshrl.u32 %v10662, 7
    %v10664 = vsub.s32 %v10661, %v10663
    %v10665 = vrot.slane %v10651, %v10664
    %v10666 = vcombine.low %v10610, %v10626
    %v10667 = vcombine.high %v10610, %v10626
    %v10669 = vunpack.c.l.s4 1934713408
    %v10670 = vunpack.c.0.s8 %v10669
    %v10671 = vlaneseq
    %v10672 = vshrl.u32 %v10671, 7
    %v10673 = vsub.s32 %v10670, %v10672
    %v10674 = vrot.slane %v10666, %v10673
    %v10676 = vunpack.c.l.s4 1934713408
    %v10677 = vunpack.c.0.s8 %v10676
    %v10678 = vlaneseq
    %v10679 = vshrl.u32 %v10678, 7
    %v10680 = vsub.s32 %v10677, %v10679
    %v10681 = vrot.slane %v10667, %v10680
    %v10682 = vcombine.low %v10617, %v10633
    %v10683 = vcombine.high %v10617, %v10633
    %v10685 = vunpack.c.l.s4 1934713408
    %v10686 = vunpack.c.0.s8 %v10685
    %v10687 = vlaneseq
    %v10688 = vshrl.u32 %v10687, 7
    %v10689 = vsub.s32 %v10686, %v10688
    %v10690 = vrot.slane %v10682, %v10689
    %v10692 = vunpack.c.l.s4 1934713408
    %v10693 = vunpack.c.0.s8 %v10692
    %v10694 = vlaneseq
    %v10695 = vshrl.u32 %v10694, 7
    %v10696 = vsub.s32 %v10693, %v10695
    %v10697 = vrot.slane %v10683, %v10696
    %v10698 = vcombine.low %v10642, %v10658
    %v10699 = vcombine.high %v10642, %v10658
    %v10701 = vunpack.c.l.s4 1934713408
    %v10702 = vunpack.c.0.s8 %v10701
    %v10703 = vlaneseq
    %v10704 = vshrl.u32 %v10703, 7
    %v10705 = vsub.s32 %v10702, %v10704
    %v10706 = vrot.slane %v10698, %v10705
    %v10708 = vunpack.c.l.s4 1934713408
    %v10709 = vunpack.c.0.s8 %v10708
    %v10710 = vlaneseq
    %v10711 = vshrl.u32 %v10710, 7
    %v10712 = vsub.s32 %v10709, %v10711
    %v10713 = vrot.slane %v10699, %v10712
    %v10714 = vcombine.low %v10649, %v10665
    %v10715 = vcombine.high %v10649, %v10665
    %v10717 = vunpack.c.l.s4 1934713408
    %v10718 = vunpack.c.0.s8 %v10717
    %v10719 = vlaneseq
    %v10720 = vshrl.u32 %v10719, 7
    %v10721 = vsub.s32 %v10718, %v10720
    %v10722 = vrot.slane %v10714, %v10721
    %v10724 = vunpack.c.l.s4 1934713408
    %v10725 = vunpack.c.0.s8 %v10724
    %v10726 = vlaneseq
    %v10727 = vshrl.u32 %v10726, 7
    %v10728 = vsub.s32 %v10725, %v10727
    %v10729 = vrot.slane %v10715, %v10728
    %v10730 = vcombine.low %v10674, %v10706
    %v10731 = vcombine.high %v10674, %v10706
    %v10732 = vcombine.low %v10681, %v10713
    %v10733 = vcombine.high %v10681, %v10713
    %v10734 = vcombine.low %v10690, %v10722
    %v10735 = vcombine.high %v10690, %v10722
    %v10736 = vcombine.low %v10697, %v10729
    %v10737 = vcombine.high %v10697, %v10729
    %v10738 = vcombine.low %v5963, %v5967
    %v10739 = vcombine.high %v5963, %v5967
    %v10741 = vunpack.c.l.s4 1983009808
    %v10742 = vunpack.c.0.s8 %v10741
    %v10743 = vlaneseq
    %v10744 = vshrl.u32 %v10743, 7
    %v10745 = vsub.s32 %v10742, %v10744
    %v10746 = vrot.slane %v10738, %v10745
    %v10748 = vunpack.c.l.s4 1983009808
    %v10749 = vunpack.c.0.s8 %v10748
    %v10750 = vlaneseq
    %v10751 = vshrl.u32 %v10750, 7
    %v10752 = vsub.s32 %v10749, %v10751
    %v10753 = vrot.slane %v10739, %v10752
    %v10754 = vcombine.low %v5965, %v5969
    %v10755 = vcombine.high %v5965, %v5969
    %v10757 = vunpack.c.l.s4 1983009808
    %v10758 = vunpack.c.0.s8 %v10757
    %v10759 = vlaneseq
    %v10760 = vshrl.u32 %v10759, 7
    %v10761 = vsub.s32 %v10758, %v10760
    %v10762 = vrot.slane %v10754, %v10761
    %v10764 = vunpack.c.l.s4 1983009808
    %v10765 = vunpack.c.0.s8 %v10764
    %v10766 = vlaneseq
    %v10767 = vshrl.u32 %v10766, 7
    %v10768 = vsub.s32 %v10765, %v10767
    %v10769 = vrot.slane %v10755, %v10768
    %v10770 = vcombine.low %v5971, %v5975
    %v10771 = vcombine.high %v5971, %v5975
    %v10773 = vunpack.c.l.s4 1983009808
    %v10774 = vunpack.c.0.s8 %v10773
    %v10775 = vlaneseq
    %v10776 = vshrl.u32 %v10775, 7
    %v10777 = vsub.s32 %v10774, %v10776
    %v10778 = vrot.slane %v10770, %v10777
    %v10780 = vunpack.c.l.s4 1983009808
    %v10781 = vunpack.c.0.s8 %v10780
    %v10782 = vlaneseq
    %v10783 = vshrl.u32 %v10782, 7
    %v10784 = vsub.s32 %v10781, %v10783
    %v10785 = vrot.slane %v10771, %v10784
    %v10786 = vcombine.low %v5973, %v5977
    %v10787 = vcombine.high %v5973, %v5977
    %v10789 = vunpack.c.l.s4 1983009808
    %v10790 = vunpack.c.0.s8 %v10789
    %v10791 = vlaneseq
    %v10792 = vshrl.u32 %v10791, 7
    %v10793 = vsub.s32 %v10790, %v10792
    %v10794 = vrot.slane %v10786, %v10793
    %v10796 = vunpack.c.l.s4 1983009808
    %v10797 = vunpack.c.0.s8 %v10796
    %v10798 = vlaneseq
    %v10799 = vshrl.u32 %v10798, 7
    %v10800 = vsub.s32 %v10797, %v10799
    %v10801 = vrot.slane %v10787, %v10800
    %v10802 = vcombine.low %v10746, %v10762
    %v10803 = vcombine.high %v10746, %v10762
    %v10805 = vunpack.c.l.s4 1934713408
    %v10806 = vunpack.c.0.s8 %v10805
    %v10807 = vlaneseq
    %v10808 = vshrl.u32 %v10807, 7
    %v10809 = vsub.s32 %v10806, %v10808
    %v10810 = vrot.slane %v10802, %v10809
    %v10812 = vunpack.c.l.s4 1934713408
    %v10813 = vunpack.c.0.s8 %v10812
    %v10814 = vlaneseq
    %v10815 = vshrl.u32 %v10814, 7
    %v10816 = vsub.s32 %v10813, %v10815
    %v10817 = vrot.slane %v10803, %v10816
    %v10818 = vcombine.low %v10753, %v10769
    %v10819 = vcombine.high %v10753, %v10769
    %v10821 = vunpack.c.l.s4 1934713408
    %v10822 = vunpack.c.0.s8 %v10821
    %v10823 = vlaneseq
    %v10824 = vshrl.u32 %v10823, 7
    %v10825 = vsub.s32 %v10822, %v10824
    %v10826 = vrot.slane %v10818, %v10825
    %v10828 = vunpack.c.l.s4 1934713408
    %v10829 = vunpack.c.0.s8 %v10828
    %v10830 = vlaneseq
    %v10831 = vshrl.u32 %v10830, 7
    %v10832 = vsub.s32 %v10829, %v10831
    %v10833 = vrot.slane %v10819, %v10832
    %v10834 = vcombine.low %v10778, %v10794
    %v10835 = vcombine.high %v10778, %v10794
    %v10837 = vunpack.c.l.s4 1934713408
    %v10838 = vunpack.c.0.s8 %v10837
    %v10839 = vlaneseq
    %v10840 = vshrl.u32 %v10839, 7
    %v10841 = vsub.s32 %v10838, %v10840
    %v10842 = vrot.slane %v10834, %v10841
    %v10844 = vunpack.c.l.s4 1934713408
    %v10845 = vunpack.c.0.s8 %v10844
    %v10846 = vlaneseq
    %v10847 = vshrl.u32 %v10846, 7
    %v10848 = vsub.s32 %v10845, %v10847
    %v10849 = vrot.slane %v10835, %v10848
    %v10850 = vcombine.low %v10785, %v10801
    %v10851 = vcombine.high %v10785, %v10801
    %v10853 = vunpack.c.l.s4 1934713408
    %v10854 = vunpack.c.0.s8 %v10853
    %v10855 = vlaneseq
    %v10856 = vshrl.u32 %v10855, 7
    %v10857 = vsub.s32 %v10854, %v10856
    %v10858 = vrot.slane %v10850, %v10857
    %v10860 = vunpack.c.l.s4 1934713408
    %v10861 = vunpack.c.0.s8 %v10860
    %v10862 = vlaneseq
    %v10863 = vshrl.u32 %v10862, 7
    %v10864 = vsub.s32 %v10861, %v10863
    %v10865 = vrot.slane %v10851, %v10864
    %v10866 = vcombine.low %v10810, %v10842
    %v10867 = vcombine.high %v10810, %v10842
    %v10868 = vcombine.low %v10817, %v10849
    %v10869 = vcombine.high %v10817, %v10849
    %v10870 = vcombine.low %v10826, %v10858
    %v10871 = vcombine.high %v10826, %v10858
    %v10872 = vcombine.low %v10833, %v10865
    %v10873 = vcombine.high %v10833, %v10865
    %10892 = vrot.lane.b32.xlu0 %v6107, 16
    %v10893 = vpop.permute.xlu0 %10892
    %10894 = vrot.lane.b32.xlu0 %v6243, 16
    %v10895 = vpop.permute.xlu0 %10894
    %10896 = vrot.lane.b32.xlu0 %v6379, 16
    %v10897 = vpop.permute.xlu0 %10896
    %10898 = vrot.lane.b32.xlu0 %v6515, 16
    %v10899 = vpop.permute.xlu0 %10898
    %10900 = vrot.lane.b32.xlu0 %v6651, 16
    %v10901 = vpop.permute.xlu0 %10900
    %10902 = vrot.lane.b32.xlu0 %v6787, 16
    %v10903 = vpop.permute.xlu0 %10902
    %10904 = vrot.lane.b32.xlu0 %v6923, 16
    %v10905 = vpop.permute.xlu0 %10904
    %10906 = vrot.lane.b32.xlu0 %v7059, 16
    %v10907 = vpop.permute.xlu0 %10906
    %10908 = vrot.lane.b32.xlu0 %v7195, 16
    %v10909 = vpop.permute.xlu0 %10908
    %10910 = vrot.lane.b32.xlu0 %v8555, 16
    %v10911 = vpop.permute.xlu0 %10910
    %10912 = vrot.lane.b32.xlu0 %v8691, 16
    %v10913 = vpop.permute.xlu0 %10912
    %10914 = vrot.lane.b32.xlu0 %v8827, 16
    %v10915 = vpop.permute.xlu0 %10914
    %10916 = vrot.lane.b32.xlu0 %v8963, 16
    %v10917 = vpop.permute.xlu0 %10916
    %10918 = vrot.lane.b32.xlu0 %v9099, 16
    %v10919 = vpop.permute.xlu0 %10918
    %10920 = vrot.lane.b32.xlu0 %v9235, 16
    %v10921 = vpop.permute.xlu0 %10920
    %10922 = vrot.lane.b32.xlu0 %v9371, 16
    %v10923 = vpop.permute.xlu0 %10922
    %10924 = vrot.lane.b32.xlu0 %v9507, 16
    %v10925 = vpop.permute.xlu0 %10924
    %10926 = vrot.lane.b32.xlu0 %v9643, 16
    %v10927 = vpop.permute.xlu0 %10926
    %10964 = vrot.lane.b32.xlu0 %v6108, 32
    %v10965 = vpop.permute.xlu0 %10964
    %10966 = vrot.lane.b32.xlu0 %v6244, 32
    %v10967 = vpop.permute.xlu0 %10966
    %10968 = vrot.lane.b32.xlu0 %v6380, 32
    %v10969 = vpop.permute.xlu0 %10968
    %10970 = vrot.lane.b32.xlu0 %v6516, 32
    %v10971 = vpop.permute.xlu0 %10970
    %10972 = vrot.lane.b32.xlu0 %v6652, 32
    %v10973 = vpop.permute.xlu0 %10972
    %10974 = vrot.lane.b32.xlu0 %v6788, 32
    %v10975 = vpop.permute.xlu0 %10974
    %10976 = vrot.lane.b32.xlu0 %v6924, 32
    %v10977 = vpop.permute.xlu0 %10976
    %10978 = vrot.lane.b32.xlu0 %v7060, 32
    %v10979 = vpop.permute.xlu0 %10978
    %10980 = vrot.lane.b32.xlu0 %v7196, 32
    %v10981 = vpop.permute.xlu0 %10980
    %10982 = vrot.lane.b32.xlu0 %v8556, 32
    %v10983 = vpop.permute.xlu0 %10982
    %10984 = vrot.lane.b32.xlu0 %v8692, 32
    %v10985 = vpop.permute.xlu0 %10984
    %10986 = vrot.lane.b32.xlu0 %v8828, 32
    %v10987 = vpop.permute.xlu0 %10986
    %10988 = vrot.lane.b32.xlu0 %v8964, 32
    %v10989 = vpop.permute.xlu0 %10988
    %10990 = vrot.lane.b32.xlu0 %v9100, 32
    %v10991 = vpop.permute.xlu0 %10990
    %10992 = vrot.lane.b32.xlu0 %v9236, 32
    %v10993 = vpop.permute.xlu0 %10992
    %10994 = vrot.lane.b32.xlu0 %v9372, 32
    %v10995 = vpop.permute.xlu0 %10994
    %10996 = vrot.lane.b32.xlu0 %v9508, 32
    %v10997 = vpop.permute.xlu0 %10996
    %10998 = vrot.lane.b32.xlu0 %v9644, 32
    %v10999 = vpop.permute.xlu0 %10998
    %11036 = vrot.lane.b32.xlu0 %v6109, 48
    %v11037 = vpop.permute.xlu0 %11036
    %11038 = vrot.lane.b32.xlu0 %v6245, 48
    %v11039 = vpop.permute.xlu0 %11038
    %11040 = vrot.lane.b32.xlu0 %v6381, 48
    %v11041 = vpop.permute.xlu0 %11040
    %11042 = vrot.lane.b32.xlu0 %v6517, 48
    %v11043 = vpop.permute.xlu0 %11042
    %11044 = vrot.lane.b32.xlu0 %v6653, 48
    %v11045 = vpop.permute.xlu0 %11044
    %11046 = vrot.lane.b32.xlu0 %v6789, 48
    %v11047 = vpop.permute.xlu0 %11046
    %11048 = vrot.lane.b32.xlu0 %v6925, 48
    %v11049 = vpop.permute.xlu0 %11048
    %11050 = vrot.lane.b32.xlu0 %v7061, 48
    %v11051 = vpop.permute.xlu0 %11050
    %11052 = vrot.lane.b32.xlu0 %v7197, 48
    %v11053 = vpop.permute.xlu0 %11052
    %11054 = vrot.lane.b32.xlu0 %v8557, 48
    %v11055 = vpop.permute.xlu0 %11054
    %11056 = vrot.lane.b32.xlu0 %v8693, 48
    %v11057 = vpop.permute.xlu0 %11056
    %11058 = vrot.lane.b32.xlu0 %v8829, 48
    %v11059 = vpop.permute.xlu0 %11058
    %11060 = vrot.lane.b32.xlu0 %v8965, 48
    %v11061 = vpop.permute.xlu0 %11060
    %11062 = vrot.lane.b32.xlu0 %v9101, 48
    %v11063 = vpop.permute.xlu0 %11062
    %11064 = vrot.lane.b32.xlu0 %v9237, 48
    %v11065 = vpop.permute.xlu0 %11064
    %11066 = vrot.lane.b32.xlu0 %v9373, 48
    %v11067 = vpop.permute.xlu0 %11066
    %11068 = vrot.lane.b32.xlu0 %v9509, 48
    %v11069 = vpop.permute.xlu0 %11068
    %11070 = vrot.lane.b32.xlu0 %v9645, 48
    %v11071 = vpop.permute.xlu0 %11070
    %11108 = vrot.lane.b32.xlu0 %v6110, 64
    %v11109 = vpop.permute.xlu0 %11108
    %11110 = vrot.lane.b32.xlu0 %v6246, 64
    %v11111 = vpop.permute.xlu0 %11110
    %11112 = vrot.lane.b32.xlu0 %v6382, 64
    %v11113 = vpop.permute.xlu0 %11112
    %11114 = vrot.lane.b32.xlu0 %v6518, 64
    %v11115 = vpop.permute.xlu0 %11114
    %11116 = vrot.lane.b32.xlu0 %v6654, 64
    %v11117 = vpop.permute.xlu0 %11116
    %11118 = vrot.lane.b32.xlu0 %v6790, 64
    %v11119 = vpop.permute.xlu0 %11118
    %11120 = vrot.lane.b32.xlu0 %v6926, 64
    %v11121 = vpop.permute.xlu0 %11120
    %11122 = vrot.lane.b32.xlu0 %v7062, 64
    %v11123 = vpop.permute.xlu0 %11122
    %11124 = vrot.lane.b32.xlu0 %v7198, 64
    %v11125 = vpop.permute.xlu0 %11124
    %11126 = vrot.lane.b32.xlu0 %v8558, 64
    %v11127 = vpop.permute.xlu0 %11126
    %11128 = vrot.lane.b32.xlu0 %v8694, 64
    %v11129 = vpop.permute.xlu0 %11128
    %11130 = vrot.lane.b32.xlu0 %v8830, 64
    %v11131 = vpop.permute.xlu0 %11130
    %11132 = vrot.lane.b32.xlu0 %v8966, 64
    %v11133 = vpop.permute.xlu0 %11132
    %11134 = vrot.lane.b32.xlu0 %v9102, 64
    %v11135 = vpop.permute.xlu0 %11134
    %11136 = vrot.lane.b32.xlu0 %v9238, 64
    %v11137 = vpop.permute.xlu0 %11136
    %11138 = vrot.lane.b32.xlu0 %v9374, 64
    %v11139 = vpop.permute.xlu0 %11138
    %11140 = vrot.lane.b32.xlu0 %v9510, 64
    %v11141 = vpop.permute.xlu0 %11140
    %11142 = vrot.lane.b32.xlu0 %v9646, 64
    %v11143 = vpop.permute.xlu0 %11142
    %11180 = vrot.lane.b32.xlu0 %v6111, 80
    %v11181 = vpop.permute.xlu0 %11180
    %11182 = vrot.lane.b32.xlu0 %v6247, 80
    %v11183 = vpop.permute.xlu0 %11182
    %11184 = vrot.lane.b32.xlu0 %v6383, 80
    %v11185 = vpop.permute.xlu0 %11184
    %11186 = vrot.lane.b32.xlu0 %v6519, 80
    %v11187 = vpop.permute.xlu0 %11186
    %11188 = vrot.lane.b32.xlu0 %v6655, 80
    %v11189 = vpop.permute.xlu0 %11188
    %11190 = vrot.lane.b32.xlu0 %v6791, 80
    %v11191 = vpop.permute.xlu0 %11190
    %11192 = vrot.lane.b32.xlu0 %v6927, 80
    %v11193 = vpop.permute.xlu0 %11192
    %11194 = vrot.lane.b32.xlu0 %v7063, 80
    %v11195 = vpop.permute.xlu0 %11194
    %11196 = vrot.lane.b32.xlu0 %v7199, 80
    %v11197 = vpop.permute.xlu0 %11196
    %11198 = vrot.lane.b32.xlu0 %v8559, 80
    %v11199 = vpop.permute.xlu0 %11198
    %11200 = vrot.lane.b32.xlu0 %v8695, 80
    %v11201 = vpop.permute.xlu0 %11200
    %11202 = vrot.lane.b32.xlu0 %v8831, 80
    %v11203 = vpop.permute.xlu0 %11202
    %11204 = vrot.lane.b32.xlu0 %v8967, 80
    %v11205 = vpop.permute.xlu0 %11204
    %11206 = vrot.lane.b32.xlu0 %v9103, 80
    %v11207 = vpop.permute.xlu0 %11206
    %11208 = vrot.lane.b32.xlu0 %v9239, 80
    %v11209 = vpop.permute.xlu0 %11208
    %11210 = vrot.lane.b32.xlu0 %v9375, 80
    %v11211 = vpop.permute.xlu0 %11210
    %11212 = vrot.lane.b32.xlu0 %v9511, 80
    %v11213 = vpop.permute.xlu0 %11212
    %11214 = vrot.lane.b32.xlu0 %v9647, 80
    %v11215 = vpop.permute.xlu0 %11214
    %11252 = vrot.lane.b32.xlu0 %v6112, 96
    %v11253 = vpop.permute.xlu0 %11252
    %11254 = vrot.lane.b32.xlu0 %v6248, 96
    %v11255 = vpop.permute.xlu0 %11254
    %11256 = vrot.lane.b32.xlu0 %v6384, 96
    %v11257 = vpop.permute.xlu0 %11256
    %11258 = vrot.lane.b32.xlu0 %v6520, 96
    %v11259 = vpop.permute.xlu0 %11258
    %11260 = vrot.lane.b32.xlu0 %v6656, 96
    %v11261 = vpop.permute.xlu0 %11260
    %11262 = vrot.lane.b32.xlu0 %v6792, 96
    %v11263 = vpop.permute.xlu0 %11262
    %11264 = vrot.lane.b32.xlu0 %v6928, 96
    %v11265 = vpop.permute.xlu0 %11264
    %11266 = vrot.lane.b32.xlu0 %v7064, 96
    %v11267 = vpop.permute.xlu0 %11266
    %11268 = vrot.lane.b32.xlu0 %v7200, 96
    %v11269 = vpop.permute.xlu0 %11268
    %11270 = vrot.lane.b32.xlu0 %v8560, 96
    %v11271 = vpop.permute.xlu0 %11270
    %11272 = vrot.lane.b32.xlu0 %v8696, 96
    %v11273 = vpop.permute.xlu0 %11272
    %11274 = vrot.lane.b32.xlu0 %v8832, 96
    %v11275 = vpop.permute.xlu0 %11274
    %11276 = vrot.lane.b32.xlu0 %v8968, 96
    %v11277 = vpop.permute.xlu0 %11276
    %11278 = vrot.lane.b32.xlu0 %v9104, 96
    %v11279 = vpop.permute.xlu0 %11278
    %11280 = vrot.lane.b32.xlu0 %v9240, 96
    %v11281 = vpop.permute.xlu0 %11280
    %11282 = vrot.lane.b32.xlu0 %v9376, 96
    %v11283 = vpop.permute.xlu0 %11282
    %11284 = vrot.lane.b32.xlu0 %v9512, 96
    %v11285 = vpop.permute.xlu0 %11284
    %11286 = vrot.lane.b32.xlu0 %v9648, 96
    %v11287 = vpop.permute.xlu0 %11286
    %11324 = vrot.lane.b32.xlu0 %v6113, 112
    %v11325 = vpop.permute.xlu0 %11324
    %11326 = vrot.lane.b32.xlu0 %v6249, 112
    %v11327 = vpop.permute.xlu0 %11326
    %11328 = vrot.lane.b32.xlu0 %v6385, 112
    %v11329 = vpop.permute.xlu0 %11328
    %11330 = vrot.lane.b32.xlu0 %v6521, 112
    %v11331 = vpop.permute.xlu0 %11330
    %11332 = vrot.lane.b32.xlu0 %v6657, 112
    %v11333 = vpop.permute.xlu0 %11332
    %11334 = vrot.lane.b32.xlu0 %v6793, 112
    %v11335 = vpop.permute.xlu0 %11334
    %11336 = vrot.lane.b32.xlu0 %v6929, 112
    %v11337 = vpop.permute.xlu0 %11336
    %11338 = vrot.lane.b32.xlu0 %v7065, 112
    %v11339 = vpop.permute.xlu0 %11338
    %11340 = vrot.lane.b32.xlu0 %v7201, 112
    %v11341 = vpop.permute.xlu0 %11340
    %11342 = vrot.lane.b32.xlu0 %v8561, 112
    %v11343 = vpop.permute.xlu0 %11342
    %11344 = vrot.lane.b32.xlu0 %v8697, 112
    %v11345 = vpop.permute.xlu0 %11344
    %11346 = vrot.lane.b32.xlu0 %v8833, 112
    %v11347 = vpop.permute.xlu0 %11346
    %11348 = vrot.lane.b32.xlu0 %v8969, 112
    %v11349 = vpop.permute.xlu0 %11348
    %11350 = vrot.lane.b32.xlu0 %v9105, 112
    %v11351 = vpop.permute.xlu0 %11350
    %11352 = vrot.lane.b32.xlu0 %v9241, 112
    %v11353 = vpop.permute.xlu0 %11352
    %11354 = vrot.lane.b32.xlu0 %v9377, 112
    %v11355 = vpop.permute.xlu0 %11354
    %11356 = vrot.lane.b32.xlu0 %v9513, 112
    %v11357 = vpop.permute.xlu0 %11356
    %11358 = vrot.lane.b32.xlu0 %v9649, 112
    %v11359 = vpop.permute.xlu0 %11358
    %11396 = vrot.lane.b32.xlu0 %v7331, 16
    %v11397 = vpop.permute.xlu0 %11396
    %11398 = vrot.lane.b32.xlu0 %v7467, 16
    %v11399 = vpop.permute.xlu0 %11398
    %11400 = vrot.lane.b32.xlu0 %v7603, 16
    %v11401 = vpop.permute.xlu0 %11400
    %11402 = vrot.lane.b32.xlu0 %v7739, 16
    %v11403 = vpop.permute.xlu0 %11402
    %11404 = vrot.lane.b32.xlu0 %v7875, 16
    %v11405 = vpop.permute.xlu0 %11404
    %11406 = vrot.lane.b32.xlu0 %v8011, 16
    %v11407 = vpop.permute.xlu0 %11406
    %11408 = vrot.lane.b32.xlu0 %v8147, 16
    %v11409 = vpop.permute.xlu0 %11408
    %11410 = vrot.lane.b32.xlu0 %v8283, 16
    %v11411 = vpop.permute.xlu0 %11410
    %11412 = vrot.lane.b32.xlu0 %v8419, 16
    %v11413 = vpop.permute.xlu0 %11412
    %11414 = vrot.lane.b32.xlu0 %v9779, 16
    %v11415 = vpop.permute.xlu0 %11414
    %11416 = vrot.lane.b32.xlu0 %v9915, 16
    %v11417 = vpop.permute.xlu0 %11416
    %11418 = vrot.lane.b32.xlu0 %v10051, 16
    %v11419 = vpop.permute.xlu0 %11418
    %11420 = vrot.lane.b32.xlu0 %v10187, 16
    %v11421 = vpop.permute.xlu0 %11420
    %11422 = vrot.lane.b32.xlu0 %v10323, 16
    %v11423 = vpop.permute.xlu0 %11422
    %11424 = vrot.lane.b32.xlu0 %v10459, 16
    %v11425 = vpop.permute.xlu0 %11424
    %11426 = vrot.lane.b32.xlu0 %v10595, 16
    %v11427 = vpop.permute.xlu0 %11426
    %11428 = vrot.lane.b32.xlu0 %v10731, 16
    %v11429 = vpop.permute.xlu0 %11428
    %11430 = vrot.lane.b32.xlu0 %v10867, 16
    %v11431 = vpop.permute.xlu0 %11430
    %11468 = vrot.lane.b32.xlu0 %v7332, 32
    %v11469 = vpop.permute.xlu0 %11468
    %11470 = vrot.lane.b32.xlu0 %v7468, 32
    %v11471 = vpop.permute.xlu0 %11470
    %11472 = vrot.lane.b32.xlu0 %v7604, 32
    %v11473 = vpop.permute.xlu0 %11472
    %11474 = vrot.lane.b32.xlu0 %v7740, 32
    %v11475 = vpop.permute.xlu0 %11474
    %11476 = vrot.lane.b32.xlu0 %v7876, 32
    %v11477 = vpop.permute.xlu0 %11476
    %11478 = vrot.lane.b32.xlu0 %v8012, 32
    %v11479 = vpop.permute.xlu0 %11478
    %11480 = vrot.lane.b32.xlu0 %v8148, 32
    %v11481 = vpop.permute.xlu0 %11480
    %11482 = vrot.lane.b32.xlu0 %v8284, 32
    %v11483 = vpop.permute.xlu0 %11482
    %11484 = vrot.lane.b32.xlu0 %v8420, 32
    %v11485 = vpop.permute.xlu0 %11484
    %11486 = vrot.lane.b32.xlu0 %v9780, 32
    %v11487 = vpop.permute.xlu0 %11486
    %11488 = vrot.lane.b32.xlu0 %v9916, 32
    %v11489 = vpop.permute.xlu0 %11488
    %11490 = vrot.lane.b32.xlu0 %v10052, 32
    %v11491 = vpop.permute.xlu0 %11490
    %11492 = vrot.lane.b32.xlu0 %v10188, 32
    %v11493 = vpop.permute.xlu0 %11492
    %11494 = vrot.lane.b32.xlu0 %v10324, 32
    %v11495 = vpop.permute.xlu0 %11494
    %11496 = vrot.lane.b32.xlu0 %v10460, 32
    %v11497 = vpop.permute.xlu0 %11496
    %11498 = vrot.lane.b32.xlu0 %v10596, 32
    %v11499 = vpop.permute.xlu0 %11498
    %11500 = vrot.lane.b32.xlu0 %v10732, 32
    %v11501 = vpop.permute.xlu0 %11500
    %11502 = vrot.lane.b32.xlu0 %v10868, 32
    %v11503 = vpop.permute.xlu0 %11502
    %11540 = vrot.lane.b32.xlu0 %v7333, 48
    %v11541 = vpop.permute.xlu0 %11540
    %11542 = vrot.lane.b32.xlu0 %v7469, 48
    %v11543 = vpop.permute.xlu0 %11542
    %11544 = vrot.lane.b32.xlu0 %v7605, 48
    %v11545 = vpop.permute.xlu0 %11544
    %11546 = vrot.lane.b32.xlu0 %v7741, 48
    %v11547 = vpop.permute.xlu0 %11546
    %11548 = vrot.lane.b32.xlu0 %v7877, 48
    %v11549 = vpop.permute.xlu0 %11548
    %11550 = vrot.lane.b32.xlu0 %v8013, 48
    %v11551 = vpop.permute.xlu0 %11550
    %11552 = vrot.lane.b32.xlu0 %v8149, 48
    %v11553 = vpop.permute.xlu0 %11552
    %11554 = vrot.lane.b32.xlu0 %v8285, 48
    %v11555 = vpop.permute.xlu0 %11554
    %11556 = vrot.lane.b32.xlu0 %v8421, 48
    %v11557 = vpop.permute.xlu0 %11556
    %11558 = vrot.lane.b32.xlu0 %v9781, 48
    %v11559 = vpop.permute.xlu0 %11558
    %11560 = vrot.lane.b32.xlu0 %v9917, 48
    %v11561 = vpop.permute.xlu0 %11560
    %11562 = vrot.lane.b32.xlu0 %v10053, 48
    %v11563 = vpop.permute.xlu0 %11562
    %11564 = vrot.lane.b32.xlu0 %v10189, 48
    %v11565 = vpop.permute.xlu0 %11564
    %11566 = vrot.lane.b32.xlu0 %v10325, 48
    %v11567 = vpop.permute.xlu0 %11566
    %11568 = vrot.lane.b32.xlu0 %v10461, 48
    %v11569 = vpop.permute.xlu0 %11568
    %11570 = vrot.lane.b32.xlu0 %v10597, 48
    %v11571 = vpop.permute.xlu0 %11570
    %11572 = vrot.lane.b32.xlu0 %v10733, 48
    %v11573 = vpop.permute.xlu0 %11572
    %11574 = vrot.lane.b32.xlu0 %v10869, 48
    %v11575 = vpop.permute.xlu0 %11574
    %11612 = vrot.lane.b32.xlu0 %v7334, 64
    %v11613 = vpop.permute.xlu0 %11612
    %11614 = vrot.lane.b32.xlu0 %v7470, 64
    %v11615 = vpop.permute.xlu0 %11614
    %11616 = vrot.lane.b32.xlu0 %v7606, 64
    %v11617 = vpop.permute.xlu0 %11616
    %11618 = vrot.lane.b32.xlu0 %v7742, 64
    %v11619 = vpop.permute.xlu0 %11618
    %11620 = vrot.lane.b32.xlu0 %v7878, 64
    %v11621 = vpop.permute.xlu0 %11620
    %11622 = vrot.lane.b32.xlu0 %v8014, 64
    %v11623 = vpop.permute.xlu0 %11622
    %11624 = vrot.lane.b32.xlu0 %v8150, 64
    %v11625 = vpop.permute.xlu0 %11624
    %11626 = vrot.lane.b32.xlu0 %v8286, 64
    %v11627 = vpop.permute.xlu0 %11626
    %11628 = vrot.lane.b32.xlu0 %v8422, 64
    %v11629 = vpop.permute.xlu0 %11628
    %11630 = vrot.lane.b32.xlu0 %v9782, 64
    %v11631 = vpop.permute.xlu0 %11630
    %11632 = vrot.lane.b32.xlu0 %v9918, 64
    %v11633 = vpop.permute.xlu0 %11632
    %11634 = vrot.lane.b32.xlu0 %v10054, 64
    %v11635 = vpop.permute.xlu0 %11634
    %11636 = vrot.lane.b32.xlu0 %v10190, 64
    %v11637 = vpop.permute.xlu0 %11636
    %11638 = vrot.lane.b32.xlu0 %v10326, 64
    %v11639 = vpop.permute.xlu0 %11638
    %11640 = vrot.lane.b32.xlu0 %v10462, 64
    %v11641 = vpop.permute.xlu0 %11640
    %11642 = vrot.lane.b32.xlu0 %v10598, 64
    %v11643 = vpop.permute.xlu0 %11642
    %11644 = vrot.lane.b32.xlu0 %v10734, 64
    %v11645 = vpop.permute.xlu0 %11644
    %11646 = vrot.lane.b32.xlu0 %v10870, 64
    %v11647 = vpop.permute.xlu0 %11646
    %11684 = vrot.lane.b32.xlu0 %v7335, 80
    %v11685 = vpop.permute.xlu0 %11684
    %11686 = vrot.lane.b32.xlu0 %v7471, 80
    %v11687 = vpop.permute.xlu0 %11686
    %11688 = vrot.lane.b32.xlu0 %v7607, 80
    %v11689 = vpop.permute.xlu0 %11688
    %11690 = vrot.lane.b32.xlu0 %v7743, 80
    %v11691 = vpop.permute.xlu0 %11690
    %11692 = vrot.lane.b32.xlu0 %v7879, 80
    %v11693 = vpop.permute.xlu0 %11692
    %11694 = vrot.lane.b32.xlu0 %v8015, 80
    %v11695 = vpop.permute.xlu0 %11694
    %11696 = vrot.lane.b32.xlu0 %v8151, 80
    %v11697 = vpop.permute.xlu0 %11696
    %11698 = vrot.lane.b32.xlu0 %v8287, 80
    %v11699 = vpop.permute.xlu0 %11698
    %11700 = vrot.lane.b32.xlu0 %v8423, 80
    %v11701 = vpop.permute.xlu0 %11700
    %11702 = vrot.lane.b32.xlu0 %v9783, 80
    %v11703 = vpop.permute.xlu0 %11702
    %11704 = vrot.lane.b32.xlu0 %v9919, 80
    %v11705 = vpop.permute.xlu0 %11704
    %11706 = vrot.lane.b32.xlu0 %v10055, 80
    %v11707 = vpop.permute.xlu0 %11706
    %11708 = vrot.lane.b32.xlu0 %v10191, 80
    %v11709 = vpop.permute.xlu0 %11708
    %11710 = vrot.lane.b32.xlu0 %v10327, 80
    %v11711 = vpop.permute.xlu0 %11710
    %11712 = vrot.lane.b32.xlu0 %v10463, 80
    %v11713 = vpop.permute.xlu0 %11712
    %11714 = vrot.lane.b32.xlu0 %v10599, 80
    %v11715 = vpop.permute.xlu0 %11714
    %11716 = vrot.lane.b32.xlu0 %v10735, 80
    %v11717 = vpop.permute.xlu0 %11716
    %11718 = vrot.lane.b32.xlu0 %v10871, 80
    %v11719 = vpop.permute.xlu0 %11718
    %11756 = vrot.lane.b32.xlu0 %v7336, 96
    %v11757 = vpop.permute.xlu0 %11756
    %11758 = vrot.lane.b32.xlu0 %v7472, 96
    %v11759 = vpop.permute.xlu0 %11758
    %11760 = vrot.lane.b32.xlu0 %v7608, 96
    %v11761 = vpop.permute.xlu0 %11760
    %11762 = vrot.lane.b32.xlu0 %v7744, 96
    %v11763 = vpop.permute.xlu0 %11762
    %11764 = vrot.lane.b32.xlu0 %v7880, 96
    %v11765 = vpop.permute.xlu0 %11764
    %11766 = vrot.lane.b32.xlu0 %v8016, 96
    %v11767 = vpop.permute.xlu0 %11766
    %11768 = vrot.lane.b32.xlu0 %v8152, 96
    %v11769 = vpop.permute.xlu0 %11768
    %11770 = vrot.lane.b32.xlu0 %v8288, 96
    %v11771 = vpop.permute.xlu0 %11770
    %11772 = vrot.lane.b32.xlu0 %v8424, 96
    %v11773 = vpop.permute.xlu0 %11772
    %11774 = vrot.lane.b32.xlu0 %v9784, 96
    %v11775 = vpop.permute.xlu0 %11774
    %11776 = vrot.lane.b32.xlu0 %v9920, 96
    %v11777 = vpop.permute.xlu0 %11776
    %11778 = vrot.lane.b32.xlu0 %v10056, 96
    %v11779 = vpop.permute.xlu0 %11778
    %11780 = vrot.lane.b32.xlu0 %v10192, 96
    %v11781 = vpop.permute.xlu0 %11780
    %11782 = vrot.lane.b32.xlu0 %v10328, 96
    %v11783 = vpop.permute.xlu0 %11782
    %11784 = vrot.lane.b32.xlu0 %v10464, 96
    %v11785 = vpop.permute.xlu0 %11784
    %11786 = vrot.lane.b32.xlu0 %v10600, 96
    %v11787 = vpop.permute.xlu0 %11786
    %11788 = vrot.lane.b32.xlu0 %v10736, 96
    %v11789 = vpop.permute.xlu0 %11788
    %11790 = vrot.lane.b32.xlu0 %v10872, 96
    %v11791 = vpop.permute.xlu0 %11790
    %11828 = vrot.lane.b32.xlu0 %v7337, 112
    %v11829 = vpop.permute.xlu0 %11828
    %11830 = vrot.lane.b32.xlu0 %v7473, 112
    %v11831 = vpop.permute.xlu0 %11830
    %11832 = vrot.lane.b32.xlu0 %v7609, 112
    %v11833 = vpop.permute.xlu0 %11832
    %11834 = vrot.lane.b32.xlu0 %v7745, 112
    %v11835 = vpop.permute.xlu0 %11834
    %11836 = vrot.lane.b32.xlu0 %v7881, 112
    %v11837 = vpop.permute.xlu0 %11836
    %11838 = vrot.lane.b32.xlu0 %v8017, 112
    %v11839 = vpop.permute.xlu0 %11838
    %11840 = vrot.lane.b32.xlu0 %v8153, 112
    %v11841 = vpop.permute.xlu0 %11840
    %11842 = vrot.lane.b32.xlu0 %v8289, 112
    %v11843 = vpop.permute.xlu0 %11842
    %11844 = vrot.lane.b32.xlu0 %v8425, 112
    %v11845 = vpop.permute.xlu0 %11844
    %11846 = vrot.lane.b32.xlu0 %v9785, 112
    %v11847 = vpop.permute.xlu0 %11846
    %11848 = vrot.lane.b32.xlu0 %v9921, 112
    %v11849 = vpop.permute.xlu0 %11848
    %11850 = vrot.lane.b32.xlu0 %v10057, 112
    %v11851 = vpop.permute.xlu0 %11850
    %11852 = vrot.lane.b32.xlu0 %v10193, 112
    %v11853 = vpop.permute.xlu0 %11852
    %11854 = vrot.lane.b32.xlu0 %v10329, 112
    %v11855 = vpop.permute.xlu0 %11854
    %11856 = vrot.lane.b32.xlu0 %v10465, 112
    %v11857 = vpop.permute.xlu0 %11856
    %11858 = vrot.lane.b32.xlu0 %v10601, 112
    %v11859 = vpop.permute.xlu0 %11858
    %11860 = vrot.lane.b32.xlu0 %v10737, 112
    %v11861 = vpop.permute.xlu0 %11860
    %11862 = vrot.lane.b32.xlu0 %v10873, 112
    %v11863 = vpop.permute.xlu0 %11862
    %v11882 = vsel %vm188, %v6106, %v10893
    %v11883 = vsel %vm188, %v6242, %v10895
    %v11884 = vsel %vm188, %v6378, %v10897
    %v11885 = vsel %vm188, %v6514, %v10899
    %v11886 = vsel %vm188, %v6650, %v10901
    %v11887 = vsel %vm188, %v6786, %v10903
    %v11888 = vsel %vm188, %v6922, %v10905
    %v11889 = vsel %vm188, %v7058, %v10907
    %v11890 = vsel %vm188, %v7194, %v10909
    %v11891 = vsel %vm188, %v8554, %v10911
    %v11892 = vsel %vm188, %v8690, %v10913
    %v11893 = vsel %vm188, %v8826, %v10915
    %v11894 = vsel %vm188, %v8962, %v10917
    %v11895 = vsel %vm188, %v9098, %v10919
    %v11896 = vsel %vm188, %v9234, %v10921
    %v11897 = vsel %vm188, %v9370, %v10923
    %v11898 = vsel %vm188, %v9506, %v10925
    %v11899 = vsel %vm188, %v9642, %v10927
    %v11900 = vsel %vm3723, %v11882, %v10965
    %v11901 = vsel %vm3723, %v11883, %v10967
    %v11902 = vsel %vm3723, %v11884, %v10969
    %v11903 = vsel %vm3723, %v11885, %v10971
    %v11904 = vsel %vm3723, %v11886, %v10973
    %v11905 = vsel %vm3723, %v11887, %v10975
    %v11906 = vsel %vm3723, %v11888, %v10977
    %v11907 = vsel %vm3723, %v11889, %v10979
    %v11908 = vsel %vm3723, %v11890, %v10981
    %v11909 = vsel %vm3723, %v11891, %v10983
    %v11910 = vsel %vm3723, %v11892, %v10985
    %v11911 = vsel %vm3723, %v11893, %v10987
    %v11912 = vsel %vm3723, %v11894, %v10989
    %v11913 = vsel %vm3723, %v11895, %v10991
    %v11914 = vsel %vm3723, %v11896, %v10993
    %v11915 = vsel %vm3723, %v11897, %v10995
    %v11916 = vsel %vm3723, %v11898, %v10997
    %v11917 = vsel %vm3723, %v11899, %v10999
    %v11918 = vsel %vm3734, %v11900, %v11037
    %v11919 = vsel %vm3734, %v11901, %v11039
    %v11920 = vsel %vm3734, %v11902, %v11041
    %v11921 = vsel %vm3734, %v11903, %v11043
    %v11922 = vsel %vm3734, %v11904, %v11045
    %v11923 = vsel %vm3734, %v11905, %v11047
    %v11924 = vsel %vm3734, %v11906, %v11049
    %v11925 = vsel %vm3734, %v11907, %v11051
    %v11926 = vsel %vm3734, %v11908, %v11053
    %v11927 = vsel %vm3734, %v11909, %v11055
    %v11928 = vsel %vm3734, %v11910, %v11057
    %v11929 = vsel %vm3734, %v11911, %v11059
    %v11930 = vsel %vm3734, %v11912, %v11061
    %v11931 = vsel %vm3734, %v11913, %v11063
    %v11932 = vsel %vm3734, %v11914, %v11065
    %v11933 = vsel %vm3734, %v11915, %v11067
    %v11934 = vsel %vm3734, %v11916, %v11069
    %v11935 = vsel %vm3734, %v11917, %v11071
    %v11936 = vsel %vm3745, %v11918, %v11109
    %v11937 = vsel %vm3745, %v11919, %v11111
    %v11938 = vsel %vm3745, %v11920, %v11113
    %v11939 = vsel %vm3745, %v11921, %v11115
    %v11940 = vsel %vm3745, %v11922, %v11117
    %v11941 = vsel %vm3745, %v11923, %v11119
    %v11942 = vsel %vm3745, %v11924, %v11121
    %v11943 = vsel %vm3745, %v11925, %v11123
    %v11944 = vsel %vm3745, %v11926, %v11125
    %v11945 = vsel %vm3745, %v11927, %v11127
    %v11946 = vsel %vm3745, %v11928, %v11129
    %v11947 = vsel %vm3745, %v11929, %v11131
    %v11948 = vsel %vm3745, %v11930, %v11133
    %v11949 = vsel %vm3745, %v11931, %v11135
    %v11950 = vsel %vm3745, %v11932, %v11137
    %v11951 = vsel %vm3745, %v11933, %v11139
    %v11952 = vsel %vm3745, %v11934, %v11141
    %v11953 = vsel %vm3745, %v11935, %v11143
    %v11954 = vsel %vm3756, %v11936, %v11181
    %v11955 = vsel %vm3756, %v11937, %v11183
    %v11956 = vsel %vm3756, %v11938, %v11185
    %v11957 = vsel %vm3756, %v11939, %v11187
    %v11958 = vsel %vm3756, %v11940, %v11189
    %v11959 = vsel %vm3756, %v11941, %v11191
    %v11960 = vsel %vm3756, %v11942, %v11193
    %v11961 = vsel %vm3756, %v11943, %v11195
    %v11962 = vsel %vm3756, %v11944, %v11197
    %v11963 = vsel %vm3756, %v11945, %v11199
    %v11964 = vsel %vm3756, %v11946, %v11201
    %v11965 = vsel %vm3756, %v11947, %v11203
    %v11966 = vsel %vm3756, %v11948, %v11205
    %v11967 = vsel %vm3756, %v11949, %v11207
    %v11968 = vsel %vm3756, %v11950, %v11209
    %v11969 = vsel %vm3756, %v11951, %v11211
    %v11970 = vsel %vm3756, %v11952, %v11213
    %v11971 = vsel %vm3756, %v11953, %v11215
    %v11972 = vsel %vm3767, %v11954, %v11253
    %v11973 = vsel %vm3767, %v11955, %v11255
    %v11974 = vsel %vm3767, %v11956, %v11257
    %v11975 = vsel %vm3767, %v11957, %v11259
    %v11976 = vsel %vm3767, %v11958, %v11261
    %v11977 = vsel %vm3767, %v11959, %v11263
    %v11978 = vsel %vm3767, %v11960, %v11265
    %v11979 = vsel %vm3767, %v11961, %v11267
    %v11980 = vsel %vm3767, %v11962, %v11269
    %v11981 = vsel %vm3767, %v11963, %v11271
    %v11982 = vsel %vm3767, %v11964, %v11273
    %v11983 = vsel %vm3767, %v11965, %v11275
    %v11984 = vsel %vm3767, %v11966, %v11277
    %v11985 = vsel %vm3767, %v11967, %v11279
    %v11986 = vsel %vm3767, %v11968, %v11281
    %v11987 = vsel %vm3767, %v11969, %v11283
    %v11988 = vsel %vm3767, %v11970, %v11285
    %v11989 = vsel %vm3767, %v11971, %v11287
    %v11990 = vsel %vm3778, %v11972, %v11325
    %v11991 = vsel %vm3778, %v11973, %v11327
    %v11992 = vsel %vm3778, %v11974, %v11329
    %v11993 = vsel %vm3778, %v11975, %v11331
    %v11994 = vsel %vm3778, %v11976, %v11333
    %v11995 = vsel %vm3778, %v11977, %v11335
    %v11996 = vsel %vm3778, %v11978, %v11337
    %v11997 = vsel %vm3778, %v11979, %v11339
    %v11998 = vsel %vm3778, %v11980, %v11341
    %v11999 = vsel %vm3778, %v11981, %v11343
    %v12000 = vsel %vm3778, %v11982, %v11345
    %v12001 = vsel %vm3778, %v11983, %v11347
    %v12002 = vsel %vm3778, %v11984, %v11349
    %v12003 = vsel %vm3778, %v11985, %v11351
    %v12004 = vsel %vm3778, %v11986, %v11353
    %v12005 = vsel %vm3778, %v11987, %v11355
    %v12006 = vsel %vm3778, %v11988, %v11357
    %v12007 = vsel %vm3778, %v11989, %v11359
    %v12008 = vsel %vm188, %v7330, %v11397
    %v12009 = vsel %vm188, %v7466, %v11399
    %v12010 = vsel %vm188, %v7602, %v11401
    %v12011 = vsel %vm188, %v7738, %v11403
    %v12012 = vsel %vm188, %v7874, %v11405
    %v12013 = vsel %vm188, %v8010, %v11407
    %v12014 = vsel %vm188, %v8146, %v11409
    %v12015 = vsel %vm188, %v8282, %v11411
    %v12016 = vsel %vm188, %v8418, %v11413
    %v12017 = vsel %vm188, %v9778, %v11415
    %v12018 = vsel %vm188, %v9914, %v11417
    %v12019 = vsel %vm188, %v10050, %v11419
    %v12020 = vsel %vm188, %v10186, %v11421
    %v12021 = vsel %vm188, %v10322, %v11423
    %v12022 = vsel %vm188, %v10458, %v11425
    %v12023 = vsel %vm188, %v10594, %v11427
    %v12024 = vsel %vm188, %v10730, %v11429
    %v12025 = vsel %vm188, %v10866, %v11431
    %v12026 = vsel %vm3723, %v12008, %v11469
    %v12027 = vsel %vm3723, %v12009, %v11471
    %v12028 = vsel %vm3723, %v12010, %v11473
    %v12029 = vsel %vm3723, %v12011, %v11475
    %v12030 = vsel %vm3723, %v12012, %v11477
    %v12031 = vsel %vm3723, %v12013, %v11479
    %v12032 = vsel %vm3723, %v12014, %v11481
    %v12033 = vsel %vm3723, %v12015, %v11483
    %v12034 = vsel %vm3723, %v12016, %v11485
    %v12035 = vsel %vm3723, %v12017, %v11487
    %v12036 = vsel %vm3723, %v12018, %v11489
    %v12037 = vsel %vm3723, %v12019, %v11491
    %v12038 = vsel %vm3723, %v12020, %v11493
    %v12039 = vsel %vm3723, %v12021, %v11495
    %v12040 = vsel %vm3723, %v12022, %v11497
    %v12041 = vsel %vm3723, %v12023, %v11499
    %v12042 = vsel %vm3723, %v12024, %v11501
    %v12043 = vsel %vm3723, %v12025, %v11503
    %v12044 = vsel %vm3734, %v12026, %v11541
    %v12045 = vsel %vm3734, %v12027, %v11543
    %v12046 = vsel %vm3734, %v12028, %v11545
    %v12047 = vsel %vm3734, %v12029, %v11547
    %v12048 = vsel %vm3734, %v12030, %v11549
    %v12049 = vsel %vm3734, %v12031, %v11551
    %v12050 = vsel %vm3734, %v12032, %v11553
    %v12051 = vsel %vm3734, %v12033, %v11555
    %v12052 = vsel %vm3734, %v12034, %v11557
    %v12053 = vsel %vm3734, %v12035, %v11559
    %v12054 = vsel %vm3734, %v12036, %v11561
    %v12055 = vsel %vm3734, %v12037, %v11563
    %v12056 = vsel %vm3734, %v12038, %v11565
    %v12057 = vsel %vm3734, %v12039, %v11567
    %v12058 = vsel %vm3734, %v12040, %v11569
    %v12059 = vsel %vm3734, %v12041, %v11571
    %v12060 = vsel %vm3734, %v12042, %v11573
    %v12061 = vsel %vm3734, %v12043, %v11575
    %v12062 = vsel %vm3745, %v12044, %v11613
    %v12063 = vsel %vm3745, %v12045, %v11615
    %v12064 = vsel %vm3745, %v12046, %v11617
    %v12065 = vsel %vm3745, %v12047, %v11619
    %v12066 = vsel %vm3745, %v12048, %v11621
    %v12067 = vsel %vm3745, %v12049, %v11623
    %v12068 = vsel %vm3745, %v12050, %v11625
    %v12069 = vsel %vm3745, %v12051, %v11627
    %v12070 = vsel %vm3745, %v12052, %v11629
    %v12071 = vsel %vm3745, %v12053, %v11631
    %v12072 = vsel %vm3745, %v12054, %v11633
    %v12073 = vsel %vm3745, %v12055, %v11635
    %v12074 = vsel %vm3745, %v12056, %v11637
    %v12075 = vsel %vm3745, %v12057, %v11639
    %v12076 = vsel %vm3745, %v12058, %v11641
    %v12077 = vsel %vm3745, %v12059, %v11643
    %v12078 = vsel %vm3745, %v12060, %v11645
    %v12079 = vsel %vm3745, %v12061, %v11647
    %v12080 = vsel %vm3756, %v12062, %v11685
    %v12081 = vsel %vm3756, %v12063, %v11687
    %v12082 = vsel %vm3756, %v12064, %v11689
    %v12083 = vsel %vm3756, %v12065, %v11691
    %v12084 = vsel %vm3756, %v12066, %v11693
    %v12085 = vsel %vm3756, %v12067, %v11695
    %v12086 = vsel %vm3756, %v12068, %v11697
    %v12087 = vsel %vm3756, %v12069, %v11699
    %v12088 = vsel %vm3756, %v12070, %v11701
    %v12089 = vsel %vm3756, %v12071, %v11703
    %v12090 = vsel %vm3756, %v12072, %v11705
    %v12091 = vsel %vm3756, %v12073, %v11707
    %v12092 = vsel %vm3756, %v12074, %v11709
    %v12093 = vsel %vm3756, %v12075, %v11711
    %v12094 = vsel %vm3756, %v12076, %v11713
    %v12095 = vsel %vm3756, %v12077, %v11715
    %v12096 = vsel %vm3756, %v12078, %v11717
    %v12097 = vsel %vm3756, %v12079, %v11719
    %v12098 = vsel %vm3767, %v12080, %v11757
    %v12099 = vsel %vm3767, %v12081, %v11759
    %v12100 = vsel %vm3767, %v12082, %v11761
    %v12101 = vsel %vm3767, %v12083, %v11763
    %v12102 = vsel %vm3767, %v12084, %v11765
    %v12103 = vsel %vm3767, %v12085, %v11767
    %v12104 = vsel %vm3767, %v12086, %v11769
    %v12105 = vsel %vm3767, %v12087, %v11771
    %v12106 = vsel %vm3767, %v12088, %v11773
    %v12107 = vsel %vm3767, %v12089, %v11775
    %v12108 = vsel %vm3767, %v12090, %v11777
    %v12109 = vsel %vm3767, %v12091, %v11779
    %v12110 = vsel %vm3767, %v12092, %v11781
    %v12111 = vsel %vm3767, %v12093, %v11783
    %v12112 = vsel %vm3767, %v12094, %v11785
    %v12113 = vsel %vm3767, %v12095, %v11787
    %v12114 = vsel %vm3767, %v12096, %v11789
    %v12115 = vsel %vm3767, %v12097, %v11791
    %v12116 = vsel %vm3778, %v12098, %v11829
    %v12117 = vsel %vm3778, %v12099, %v11831
    %v12118 = vsel %vm3778, %v12100, %v11833
    %v12119 = vsel %vm3778, %v12101, %v11835
    %v12120 = vsel %vm3778, %v12102, %v11837
    %v12121 = vsel %vm3778, %v12103, %v11839
    %v12122 = vsel %vm3778, %v12104, %v11841
    %v12123 = vsel %vm3778, %v12105, %v11843
    %v12124 = vsel %vm3778, %v12106, %v11845
    %v12125 = vsel %vm3778, %v12107, %v11847
    %v12126 = vsel %vm3778, %v12108, %v11849
    %v12127 = vsel %vm3778, %v12109, %v11851
    %v12128 = vsel %vm3778, %v12110, %v11853
    %v12129 = vsel %vm3778, %v12111, %v11855
    %v12130 = vsel %vm3778, %v12112, %v11857
    %v12131 = vsel %vm3778, %v12113, %v11859
    %v12132 = vsel %vm3778, %v12114, %v11861
    %v12133 = vsel %vm3778, %v12115, %v11863
    %v12134 = vld [vmem:[%s4] sm:$0xff]
    %vm12135 = vcmask 588800
    %v12137 = vsel %vm12135, %v12134, 0
    %12139 = vmatprep.subr.mxu0 %v12116
    %12140 = vmatpush1.msra.mxu0 %v11990
    %12141 = vmatprep.subr.mxu0 %v12117
    %12142 = vmatpush1.msra.mxu0 %v11991
    %12143 = vmatprep.subr.mxu0 %v12118
    %12144 = vmatpush1.msra.mxu0 %v11992
    %12145 = vmatprep.subr.mxu0 %v12119
    %12146 = vmatpush1.msra.mxu0 %v11993
    %12147 = vmatprep.subr.mxu0 %v12120
    %12148 = vmatpush1.msra.mxu0 %v11994
    %12149 = vmatprep.subr.mxu0 %v12121
    %12150 = vmatpush1.msra.mxu0 %v11995
    %12151 = vmatprep.subr.mxu0 %v12122
    %12152 = vmatpush1.msra.mxu0 %v11996
    %12153 = vmatprep.subr.mxu0 %v12123
    %12154 = vmatpush1.msra.mxu0 %v11997
    %12155 = vmatprep.subr.mxu0 %v12124
    %12156 = vmatpush1.msra.mxu0 %v11998
    %12157 = vmatprep.subr.mxu0 0.0
    %12158 = vmatpush1.msra.mxu0 0.0
    %12159 = vmatprep.subr.mxu0 0.0
    %12160 = vmatpush1.msra.mxu0 0.0
    %12161 = vmatprep.subr.mxu0 0.0
    %12162 = vmatpush1.msra.mxu0 0.0
    %12163 = vmatprep.subr.mxu0 0.0
    %12164 = vmatpush1.msra.mxu0 0.0
    %12165 = vmatprep.subr.mxu0 0.0
    %12166 = vmatpush1.msra.mxu0 0.0
    %12167 = vmatprep.subr.mxu0 0.0
    %12168 = vmatpush1.msra.mxu0 0.0
    %12169 = vmatprep.subr.mxu0 0.0
    %12170 = vmatpush1.msra.mxu0 0.0
    %12171 = vmatprep.subr.mxu0 0.0
    %12172 = vmatpush1.msra.mxu0 0.0
    %12173 = vmatprep.subr.mxu0 0.0
    %12174 = vmatpush1.msra.mxu0 0.0
    %12175 = vmatprep.subr.mxu0 0.0
    %12176 = vmatpush1.msra.mxu0 0.0
    %12177 = vmatprep.subr.mxu0 0.0
    %12178 = vmatpush1.msra.mxu0 0.0
    %12179 = vmatprep.subr.mxu0 0.0
    %12180 = vmatpush1.msra.mxu0 0.0
    %12181 = vmatprep.subr.mxu0 0.0
    %12182 = vmatpush1.msra.mxu0 0.0
    %12183 = vmatprep.subr.mxu0 0.0
    %12184 = vmatpush1.msra.mxu0 0.0
    %12185 = vmatprep.subr.mxu0 0.0
    %12186 = vmatpush1.msra.mxu0 0.0
    %12187 = vmatprep.subr.mxu0 0.0
    %12188 = vmatpush1.msra.mxu0 0.0
    %12189 = vmatprep.subr.mxu0 0.0
    %12190 = vmatpush1.msra.mxu0 0.0
    %12191 = vmatprep.subr.mxu0 0.0
    %12192 = vmatpush1.msra.mxu0 0.0
    %12193 = vmatprep.subr.mxu0 0.0
    %12194 = vmatpush1.msra.mxu0 0.0
    %12195 = vmatprep.subr.mxu0 0.0
    %12196 = vmatpush1.msra.mxu0 0.0
    %12197 = vmatprep.subr.mxu0 0.0
    %12198 = vmatpush1.msra.mxu0 0.0
    %12199 = vmatprep.subr.mxu0 0.0
    %12200 = vmatpush1.msra.mxu0 0.0
    %12201 = vmatprep.subr.mxu0 0.0
    %12202 = vmatpush1.msra.mxu0 0.0
    %12203 = vmatprep.mubr.f32.mxu0 0.0
    %12204 = vmatmul.mubr.f32.gmra.mrb[0].mxu0 %v12137
    %v12205 = vpop.f32.mrb[0].mxu0
    %v12206 = vadd.f32 0.0, %v12205
    %v12207 = vpop.f32.mrb[0].mxu0
    %v12208 = vadd.f32 0.0, %v12207
    %12209 = vdwg.mxu0
    %12210 = vmatprep.subr.mxu0 %v12125
    %12211 = vmatpush1.msra.mxu0 %v11999
    %12212 = vmatprep.subr.mxu0 %v12126
    %12213 = vmatpush1.msra.mxu0 %v12000
    %12214 = vmatprep.subr.mxu0 %v12127
    %12215 = vmatpush1.msra.mxu0 %v12001
    %12216 = vmatprep.subr.mxu0 %v12128
    %12217 = vmatpush1.msra.mxu0 %v12002
    %12218 = vmatprep.subr.mxu0 %v12129
    %12219 = vmatpush1.msra.mxu0 %v12003
    %12220 = vmatprep.subr.mxu0 %v12130
    %12221 = vmatpush1.msra.mxu0 %v12004
    %12222 = vmatprep.subr.mxu0 %v12131
    %12223 = vmatpush1.msra.mxu0 %v12005
    %12224 = vmatprep.subr.mxu0 %v12132
    %12225 = vmatpush1.msra.mxu0 %v12006
    %12226 = vmatprep.subr.mxu0 %v12133
    %12227 = vmatpush1.msra.mxu0 %v12007
    %12228 = vmatprep.subr.mxu0 0.0
    %12229 = vmatpush1.msra.mxu0 0.0
    %12230 = vmatprep.subr.mxu0 0.0
    %12231 = vmatpush1.msra.mxu0 0.0
    %12232 = vmatprep.subr.mxu0 0.0
    %12233 = vmatpush1.msra.mxu0 0.0
    %12234 = vmatprep.subr.mxu0 0.0
    %12235 = vmatpush1.msra.mxu0 0.0
    %12236 = vmatprep.subr.mxu0 0.0
    %12237 = vmatpush1.msra.mxu0 0.0
    %12238 = vmatprep.subr.mxu0 0.0
    %12239 = vmatpush1.msra.mxu0 0.0
    %12240 = vmatprep.subr.mxu0 0.0
    %12241 = vmatpush1.msra.mxu0 0.0
    %12242 = vmatprep.subr.mxu0 0.0
    %12243 = vmatpush1.msra.mxu0 0.0
    %12244 = vmatprep.subr.mxu0 0.0
    %12245 = vmatpush1.msra.mxu0 0.0
    %12246 = vmatprep.subr.mxu0 0.0
    %12247 = vmatpush1.msra.mxu0 0.0
    %12248 = vmatprep.subr.mxu0 0.0
    %12249 = vmatpush1.msra.mxu0 0.0
    %12250 = vmatprep.subr.mxu0 0.0
    %12251 = vmatpush1.msra.mxu0 0.0
    %12252 = vmatprep.subr.mxu0 0.0
    %12253 = vmatpush1.msra.mxu0 0.0
    %12254 = vmatprep.subr.mxu0 0.0
    %12255 = vmatpush1.msra.mxu0 0.0
    %12256 = vmatprep.subr.mxu0 0.0
    %12257 = vmatpush1.msra.mxu0 0.0
    %12258 = vmatprep.subr.mxu0 0.0
    %12259 = vmatpush1.msra.mxu0 0.0
    %12260 = vmatprep.subr.mxu0 0.0
    %12261 = vmatpush1.msra.mxu0 0.0
    %12262 = vmatprep.subr.mxu0 0.0
    %12263 = vmatpush1.msra.mxu0 0.0
    %12264 = vmatprep.subr.mxu0 0.0
    %12265 = vmatpush1.msra.mxu0 0.0
    %12266 = vmatprep.subr.mxu0 0.0
    %12267 = vmatpush1.msra.mxu0 0.0
    %12268 = vmatprep.subr.mxu0 0.0
    %12269 = vmatpush1.msra.mxu0 0.0
    %12270 = vmatprep.subr.mxu0 0.0
    %12271 = vmatpush1.msra.mxu0 0.0
    %12272 = vmatprep.subr.mxu0 0.0
    %12273 = vmatpush1.msra.mxu0 0.0
    %12274 = vmatprep.mubr.f32.mxu0 0.0
    %12275 = vmatmul.mubr.f32.gmra.mrb[0].mxu0 %v12137
    %v12276 = vpop.f32.mrb[0].mxu0
    %v12277 = vadd.f32 0.0, %v12276
    %v12278 = vpop.f32.mrb[0].mxu0
    %v12279 = vadd.f32 0.0, %v12278
    %12280 = vdwg.mxu0
    %v12281 = vld [vmem:[%s5] sm:$0xff]
    %v12282 = vld [vmem:[%s6] sm:$0xff]
    %v12283 = vadd.f32 %v12206, %v12208
    %12284 = vadd.xlane.f32.xlu0 %v12283
    %v12285 = vpop.xlane.xlu0 %12284
    %v12286 = vadd.f32 %v12277, %v12279
    %12287 = vadd.xlane.f32.xlu0 %v12286
    %v12288 = vpop.xlane.xlu0 %12287
    %v12289 = vadd.f32 %v12285, %v12288
    %v12290 = vmul.f32 %v12289, %v4028
    %v12291 = vsub.f32 %v12206, %v12290
    %v12292 = vsub.f32 %v12208, %v12290
    %v12293 = vsub.f32 %v12277, %v12290
    %v12294 = vsub.f32 %v12279, %v12290
    %v12295 = vmul.f32 %v12291, %v12291
    %v12296 = vmul.f32 %v12292, %v12292
    %v12297 = vmul.f32 %v12293, %v12293
    %v12298 = vmul.f32 %v12294, %v12294
    %v12299 = vadd.f32 %v12295, %v12296
    %12300 = vadd.xlane.f32.xlu0 %v12299
    %v12301 = vpop.xlane.xlu0 %12300
    %v12302 = vadd.f32 %v12297, %v12298
    %12303 = vadd.xlane.f32.xlu0 %v12302
    %v12304 = vpop.xlane.xlu0 %12303
    %v12305 = vadd.f32 %v12301, %v12304
    %v12306 = vmul.f32 %v12305, %v4028
    %v12307 = vadd.f32 %v12306, 1e-05
    %v12308 = vrsqrt.pop %v12307
    %v12309 = vmul.f32 %v12291, %v12308
    %v12310 = vmul.f32 %v12292, %v12308
    %v12311 = vmul.f32 %v12293, %v12308
    %v12312 = vmul.f32 %v12294, %v12308
    %12314 = vset.pattern.permute.xlu0 0
    %12315 = vperm.xlu0 %12314, %v12281
    %v12316 = vpop.permute.xlu0 %12315
    %v12318 = vmul.f32 %v12309, %v12316
    %v12319 = vmul.f32 %v12310, %v12316
    %v12320 = vmul.f32 %v12311, %v12316
    %v12321 = vmul.f32 %v12312, %v12316
    %12323 = vset.pattern.permute.xlu0 0
    %12324 = vperm.xlu0 %12323, %v12282
    %v12325 = vpop.permute.xlu0 %12324
    %v12327 = vadd.f32 %v12318, %v12325
    %v12328 = vadd.f32 %v12319, %v12325
    %v12329 = vadd.f32 %v12320, %v12325
    %v12330 = vadd.f32 %v12321, %v12325
    %v12331 = vmax.f32 %v12327, 0.0
    %v12332 = vmax.f32 %v12328, 0.0
    %v12333 = vmax.f32 %v12329, 0.0
    %v12334 = vmax.f32 %v12330, 0.0
    %12335 = vst [vmem:[#allocation9] sm:$0xff] %v12331
    %12336 = vst [vmem:[#allocation9 + $0x8] sm:$0xff] %v12332
    %12337 = vst [vmem:[#allocation9 + $0x10] sm:$0xff] %v12333
    %12338 = vst [vmem:[#allocation9 + $0x18] sm:$0xff] %v12334
    // Predicated region
    $region34: #{tpu_custom_call.1} parent=1 // pred_check
      _
    $region35: #{tpu_custom_call.1} parent=1 // pred_check_branch
      %12340 = sbr.rel (0) target = $region37
    $region36: #{tpu_custom_call.1} parent=1 // pred_region
      %s12342 = ssub.s32 512, 512
      %12343 = vsyncadd [#allocation8], %s12342
      %s12344 = sshll.u32 [#allocation9], 4
      %s12345 = int_to_ptr.vmem [resolvable:$true] %s12344
      %12350 = dma.vmem_to_hbm [thread:$0]  %s12345, 512, %s7, [#allocation8], 256, 256, 16
    $region37: #{tpu_custom_call.1} parent=1 // pred_fallthru
      _
    // Predicated region
    $region38: #{tpu_custom_call.1} parent=1 // pred_check
      _
    $region39: #{tpu_custom_call.1} parent=1 // pred_check_branch
      %12352 = sbr.rel (0) target = $region41
    $region40: #{tpu_custom_call.1} parent=1 // pred_region
      %12353 = dma.done [#allocation8], 512
    $region41: #{tpu_custom_call.1} parent=1 // pred_fallthru
      _
    %12354 = vsyncpa [#allocation7], 1
    %12355 = vsyncpa [#allocation8], 1

</llo_original>
